<compile_context>
chip_gen: v6e
topology: v6e:2x2x1
jax: 0.10.0
libtpu: 0.0.40
codegen_flags: <defaults>
</compile_context>

<pallas_src>
import functools

import jax
import jax.numpy as jnp
from jax import lax
from jax.experimental import pallas as pl
from jax.experimental.pallas import tpu as pltpu

_LANE = 128        # lane width (last-dim alignment)
_SUBLANE_F32 = 8   # f32 sublane tile
_SUBLANE_16B = 16  # bf16 sublane tile


def _round_up(n, m):
    return ((n + m - 1) // m) * m


def _vmem_limit_bytes(resident_bytes):
    """Explicit scoped-VMEM limit sized from the kernel's resident footprint."""
    try:
        cap = int(pltpu.get_tpu_info().vmem_capacity_bytes)
    except Exception:  # pragma: no cover - conservative fallback
        cap = 64 << 20                      # v7x per-TensorCore capacity
    want = int(resident_bytes * 1.5) + (4 << 20)   # pipelining/spill headroom
    return int(max(32 << 20, min(want, cap - (8 << 20))))


# ----------------------------------------------------------------------------- #
# Pallas kernels
# ----------------------------------------------------------------------------- #
def _sigmoid(x):
    # sigmoid(x) == 0.5 * tanh(0.5 * x) + 0.5 : one EUP push per gate instead
    # of exp + divide -> shorter serial per-step critical path.
    return 0.5 * jnp.tanh(0.5 * x) + 0.5


def _lstm_cell(gates, c_prev, hdim):
    """Standard LSTM cell math, PyTorch (i, f, g, o) gate order along 4H."""
    i_g = _sigmoid(gates[:, 0 * hdim:1 * hdim])
    f_g = _sigmoid(gates[:, 1 * hdim:2 * hdim])
    g_g = jnp.tanh(gates[:, 2 * hdim:3 * hdim])
    o_g = _sigmoid(gates[:, 3 * hdim:4 * hdim])
    c_new = f_g * c_prev + i_g * g_g
    h_new = o_g * jnp.tanh(c_new)
    return h_new, c_new


def _bilstm_layer_kernel(x_ref, w_ih_ref, b_ih_ref, whh_f_ref, whh_b_ref,
                         hseq_ref, gx_sc):
    """One full bidirectional LSTM layer (both directions, all T steps).

    x_ref    : (T, B, D)     time-major input (whole sequence in VMEM)
    w_ih_ref : (D, 8H)       merged [fwd | bwd] input->gates weights (MXU dtype)
    b_ih_ref : (1, 8H)       merged combined biases (f32)
    whh_*    : (H, 4H)       hidden->gates weights per direction (MXU dtype)
    hseq_ref : (T, B, 2H)    output: [:, :, :H] forward, [:, :, H:] backward
    gx_sc    : (T, B, 8H)    scratch for the hoisted input projections
    """
    T, B, D = x_ref.shape
    H = whh_f_ref.shape[0]
    G = 4 * H
    mxu = whh_f_ref.dtype

    # Hoisted, MERGED input projection: one (T*B, D) @ (D, 8H) MXU matmul for
    # both directions, f32 accumulation, stored once into the gate scratch.
    x2d = x_ref[...].reshape(T * B, D).astype(mxu)
    gx = jnp.dot(x2d, w_ih_ref[...],
                 preferred_element_type=jnp.float32) + b_ih_ref[...]
    gx_sc[...] = gx.reshape(T, B, 2 * G).astype(gx_sc.dtype)

    whh_f = whh_f_ref[...]
    whh_b = whh_b_ref[...]

    def step(t, carry):
        h_f, c_f, h_b, c_b = carry
        tb = T - 1 - t
        # Two independent MXU pushes per step (fwd + bwd) hide drain latency.
        g_f = gx_sc[t, :, 0:G].astype(jnp.float32) + jnp.dot(
            h_f.astype(mxu), whh_f, preferred_element_type=jnp.float32)
        g_b = gx_sc[tb, :, G:2 * G].astype(jnp.float32) + jnp.dot(
            h_b.astype(mxu), whh_b, preferred_element_type=jnp.float32)
        h_f, c_f = _lstm_cell(g_f, c_f, H)
        h_b, c_b = _lstm_cell(g_b, c_b, H)
        hseq_ref[t, :, 0:H] = h_f.astype(hseq_ref.dtype)        # forward half
        hseq_ref[tb, :, H:2 * H] = h_b.astype(hseq_ref.dtype)   # backward half
        return h_f, c_f, h_b, c_b

    z = jnp.zeros((B, H), jnp.float32)
    lax.fori_loop(0, T, step, (z, z, z, z), unroll=T if T <= 32 else 8)


def _bilstm_last_layer_fc_kernel(x_ref, w_ih_ref, b_ih_ref, whh_f_ref,
                                 fc_w_ref, fc_b_ref, out_ref, gx_f_sc):
    """Last bidirectional LSTM layer fused with the FC head.

    Only out[:, -1, :] of the original model is needed:
      * forward half  = forward hidden state after the full T-step recurrence,
      * backward half = backward hidden state at original t = T-1, which is a
        SINGLE LSTM step from zero state on x[T-1] (so h @ W_hh_b == 0 and the
        backward recurrence + its (T, B, H) writeback are skipped entirely).
    out_ref = [h_fwd | h_bwd] @ W_fc + b_fc.
    """
    T, B, D = x_ref.shape
    H = whh_f_ref.shape[0]
    G = 4 * H
    mxu = whh_f_ref.dtype

    # Hoisted forward input projection (only the fwd half of the merged W_ih).
    x2d = x_ref[...].reshape(T * B, D).astype(mxu)
    gx_f = jnp.dot(x2d, w_ih_ref[:, 0:G],
                   preferred_element_type=jnp.float32) + b_ih_ref[:, 0:G]
    gx_f_sc[...] = gx_f.reshape(T, B, G).astype(gx_f_sc.dtype)

    whh_f = whh_f_ref[...]

    def step(t, carry):
        h_f, c_f = carry
        g = gx_f_sc[t].astype(jnp.float32) + jnp.dot(
            h_f.astype(mxu), whh_f, preferred_element_type=jnp.float32)
        return _lstm_cell(g, c_f, H)

    z = jnp.zeros((B, H), jnp.float32)
    h_f, _ = lax.fori_loop(0, T, step, (z, z), unroll=T if T <= 32 else 8)

    # Backward direction: one step from zero (h, c) on x[T-1]; W_hh_b drops out.
    g_b = jnp.dot(x_ref[T - 1].astype(mxu), w_ih_ref[:, G:2 * G],
                  preferred_element_type=jnp.float32) + b_ih_ref[:, G:2 * G]
    h_b, _ = _lstm_cell(g_b, jnp.zeros((B, H), jnp.float32), H)

    # Fused FC head; split W_fc rows (fwd / bwd) to avoid a lane concat.
    logits = (jnp.dot(h_f.astype(mxu), fc_w_ref[0:H, :],
                      preferred_element_type=jnp.float32)
              + jnp.dot(h_b.astype(mxu), fc_w_ref[H:2 * H, :],
                        preferred_element_type=jnp.float32)
              + fc_b_ref[...])
    out_ref[...] = logits.astype(out_ref.dtype)


# ----------------------------------------------------------------------------- #
# Pallas wrappers
# ----------------------------------------------------------------------------- #
def bilstm_layer(x_tbd, p):
    """x (T, B, D) -> hseq (T, B, 2H); fwd in [:, :, :H], bwd in [:, :, H:]."""
    T, B, D = x_tbd.shape
    H = p["w_hh_f"].shape[0]
    store_dtype = x_tbd.dtype
    sb = jnp.dtype(store_dtype).itemsize
    resident = (x_tbd.size * x_tbd.dtype.itemsize
                + sum(int(p[k].size) * p[k].dtype.itemsize
                      for k in ("w_ih", "b_ih", "w_hh_f", "w_hh_b"))
                + T * B * 8 * H * sb          # merged gate scratch
                + T * B * 2 * H * sb)         # hseq output
    return pl.pallas_call(
        _bilstm_layer_kernel,
        out_shape=jax.ShapeDtypeStruct((T, B, 2 * H), store_dtype),
        scratch_shapes=[pltpu.VMEM((T, B, 8 * H), store_dtype)],
        compiler_params=pltpu.CompilerParams(
            vmem_limit_bytes=_vmem_limit_bytes(resident)),
    )(x_tbd, p["w_ih"], p["b_ih"], p["w_hh_f"], p["w_hh_b"])


def bilstm_last_layer_fc(x_tbd, p, fc_w, fc_b):
    """x (T, B, D) -> logits (B, C) (last layer + FC head fused)."""
    T, B, D = x_tbd.shape
    H = p["w_hh_f"].shape[0]
    C = fc_w.shape[1]
    store_dtype = x_tbd.dtype
    sb = jnp.dtype(store_dtype).itemsize
    resident = (x_tbd.size * x_tbd.dtype.itemsize
                + sum(int(a.size) * a.dtype.itemsize
                      for a in (p["w_ih"], p["b_ih"], p["w_hh_f"], fc_w, fc_b))
                + T * B * 4 * H * sb          # forward gate scratch
                + B * C * 4)                  # logits output
    return pl.pallas_call(
        _bilstm_last_layer_fc_kernel,
        out_shape=jax.ShapeDtypeStruct((B, C), jnp.float32),
        scratch_shapes=[pltpu.VMEM((T, B, 4 * H), store_dtype)],
        compiler_params=pltpu.CompilerParams(
            vmem_limit_bytes=_vmem_limit_bytes(resident)),
    )(x_tbd, p["w_ih"], p["b_ih"], p["w_hh_f"], fc_w, fc_b)


def brnn_forward(x_btd, padded_params, *, num_layers, num_classes):
    """Full BRNN forward: x (B, T, D) -> logits (B, num_classes)."""
    B, T, D = x_btd.shape
    Dp = padded_params["lstm"][0]["w_ih"].shape[0]
    # MXU / storage dtype is whatever prepare_params baked the weights into.
    store_dtype = padded_params["lstm"][0]["w_ih"].dtype
    sub = _SUBLANE_16B if jnp.dtype(store_dtype).itemsize == 2 else _SUBLANE_F32
    Bp = _round_up(B, sub)

    x = jnp.transpose(x_btd, (1, 0, 2))                     # (T, B, D) time-major
    x = jnp.pad(x, ((0, 0), (0, Bp - B), (0, Dp - D)))      # pad batch + features
    x = x.astype(store_dtype)                               # stream bf16 on fast path

    for layer in range(num_layers - 1):
        x = bilstm_layer(x, padded_params["lstm"][layer])

    logits = bilstm_last_layer_fc(
        x, padded_params["lstm"][num_layers - 1],
        padded_params["fc_w"], padded_params["fc_b"])
    return logits[:B, :num_classes]


# ----------------------------------------------------------------------------- #
# Parameter padding / packing to TPU-friendly (lane/sublane aligned) shapes.
# Padded hidden units remain exactly zero through the recurrence (zero weights
# and biases => c_pad = 0 and h_pad = sigmoid(0)*tanh(0) = 0), so padding is
# numerically transparent.
# ----------------------------------------------------------------------------- #
def _pad_gate_cols(w, H, Hp):
    """(..., 4H) -> (..., 4Hp): zero-pad each (i, f, g, o) block separately."""
    lead = w.shape[:-1]
    w4 = w.reshape(lead + (4, H))
    pad = [(0, 0)] * len(lead) + [(0, 0), (0, Hp - H)]
    return jnp.pad(w4, pad).reshape(lead + (4 * Hp,))


def _pad_rows(w, rows_to):
    return jnp.pad(w, ((0, rows_to - w.shape[0]), (0, 0)))


def _pad_bidir_rows(w, H, Hp):
    """(2H, N) -> (2Hp, N): rows [0:H]->[0:H] (fwd), [H:2H]->[Hp:Hp+H] (bwd)."""
    return jnp.concatenate([_pad_rows(w[:H], Hp), _pad_rows(w[H:], Hp)], axis=0)


def prepare_params(params, *, input_size, hidden_size, num_layers, num_classes,
                   mxu_dtype=jnp.float32):
    """Pad, merge (fwd|bwd) input-projection weights, and pre-cast to MXU dtype."""
    H = hidden_size
    Hp = _round_up(H, _LANE)
    Dp = _round_up(input_size, _LANE)
    Cp = _round_up(num_classes, _LANE)

    out = {"lstm": []}
    for layer in range(num_layers):
        src = params["lstm"][layer]
        w_ih_parts, b_parts = [], []
        for tag in ("f", "b"):
            w_ih = _pad_gate_cols(src[f"w_ih_{tag}"], H, Hp)        # (d_in, 4Hp)
            if layer == 0:
                w_ih = _pad_rows(w_ih, Dp)                          # (Dp, 4Hp)
            else:
                w_ih = _pad_bidir_rows(w_ih, H, Hp)                 # (2Hp, 4Hp)
            w_ih_parts.append(w_ih)
            b_parts.append(_pad_gate_cols(src[f"b_{tag}"], H, Hp))  # (1, 4Hp)
        out["lstm"].append({
            # Merged column-wise: one (d_in_p, 8Hp) RHS for both directions.
            "w_ih": jnp.concatenate(w_ih_parts, axis=1).astype(mxu_dtype),
            "b_ih": jnp.concatenate(b_parts, axis=1),               # (1, 8Hp) f32
            "w_hh_f": _pad_rows(_pad_gate_cols(src["w_hh_f"], H, Hp),
                                Hp).astype(mxu_dtype),
            "w_hh_b": _pad_rows(_pad_gate_cols(src["w_hh_b"], H, Hp),
                                Hp).astype(mxu_dtype),
        })

    fc_w = _pad_bidir_rows(params["fc_w"], H, Hp)                   # (2Hp, C)
    out["fc_w"] = jnp.pad(
        fc_w, ((0, 0), (0, Cp - num_classes))).astype(mxu_dtype)    # (2Hp, Cp)
    out["fc_b"] = jnp.pad(params["fc_b"], ((0, 0), (0, Cp - num_classes)))
    return out


# ----------------------------------------------------------------------------- #
# Pure-JAX reference (unpadded, f32) for correctness checks
# ----------------------------------------------------------------------------- #
def _lstm_direction_ref(x_tbd, w_ih, w_hh, bias, *, reverse):
    T, B, _ = x_tbd.shape
    H = w_hh.shape[0]
    xs = x_tbd[::-1] if reverse else x_tbd

    def step(carry, x_t):
        h, c = carry
        gates = x_t @ w_ih + h @ w_hh + bias
        i_g = jax.nn.sigmoid(gates[:, 0 * H:1 * H])
        f_g = jax.nn.sigmoid(gates[:, 1 * H:2 * H])
        g_g = jnp.tanh(gates[:, 2 * H:3 * H])
        o_g = jax.nn.sigmoid(gates[:, 3 * H:4 * H])
        c = f_g * c + i_g * g_g
        h = o_g * jnp.tanh(c)
        return (h, c), h

    init = (jnp.zeros((B, H), jnp.float32), jnp.zeros((B, H), jnp.float32))
    _, hs = lax.scan(step, init, xs)
    return hs[::-1] if reverse else hs


def brnn_forward_ref(x_btd, params, *, num_layers):
    x = jnp.transpose(x_btd, (1, 0, 2))
    for layer in range(num_layers):
        p = params["lstm"][layer]
        h_fwd = _lstm_direction_ref(x, p["w_ih_f"], p["w_hh_f"], p["b_f"],
                                    reverse=False)
        h_bwd = _lstm_direction_ref(x, p["w_ih_b"], p["w_hh_b"], p["b_b"],
                                    reverse=True)
        x = jnp.concatenate([h_fwd, h_bwd], axis=-1)
    return x[-1] @ params["fc_w"] + params["fc_b"]


# ----------------------------------------------------------------------------- #
# Deterministic parameter init (matches PyTorch LSTM/Linear shapes, transposed)
# ----------------------------------------------------------------------------- #
def init_params(key, input_size, hidden_size, num_layers, num_classes):
    k = 1.0 / jnp.sqrt(hidden_size)
    params = {"lstm": []}
    for layer in range(num_layers):
        d_in = input_size if layer == 0 else 2 * hidden_size
        layer_p = {}
        for tag in ("f", "b"):  # forward / backward direction
            key, k1, k2, k3, k4 = jax.random.split(key, 5)
            layer_p[f"w_ih_{tag}"] = jax.random.uniform(
                k1, (d_in, 4 * hidden_size), jnp.float32, -k, k)
            layer_p[f"w_hh_{tag}"] = jax.random.uniform(
                k2, (hidden_size, 4 * hidden_size), jnp.float32, -k, k)
            b_ih = jax.random.uniform(k3, (4 * hidden_size,), jnp.float32, -k, k)
            b_hh = jax.random.uniform(k4, (4 * hidden_size,), jnp.float32, -k, k)
            layer_p[f"b_{tag}"] = (b_ih + b_hh)[None, :]  # (1, 4H)
        params["lstm"].append(layer_p)
    key, k5, k6 = jax.random.split(key, 3)
    kf = 1.0 / jnp.sqrt(2 * hidden_size)
    params["fc_w"] = jax.random.uniform(
        k5, (2 * hidden_size, num_classes), jnp.float32, -kf, kf)
    params["fc_b"] = jax.random.uniform(
        k6, (1, num_classes), jnp.float32, -kf, kf)
    return params


# ----------------------------------------------------------------------------- #
if __name__ == "__main__":
    # Small shapes consistent with the module (input_size=28 like MNIST rows).
    batch, seq_len = 2, 8
    input_size, hidden_size, num_layers, num_classes = 28, 32, 2, 10

    key = jax.random.PRNGKey(0)
    key, xk = jax.random.split(key)
    x = jax.random.normal(xk, (batch, seq_len, input_size), jnp.float32)

    params = init_params(key, input_size, hidden_size, num_layers, num_classes)
    ref = jax.block_until_ready(
        brnn_forward_ref(x, params, num_layers=num_layers))

    fwd = jax.jit(functools.partial(
        brnn_forward, num_layers=num_layers, num_classes=num_classes))

    # f32-operand / f32-storage path: tight check against the pure-JAX reference.
    padded_f32 = prepare_params(
        params, input_size=input_size, hidden_size=hidden_size,
        num_layers=num_layers, num_classes=num_classes, mxu_dtype=jnp.float32)
    out = jax.block_until_ready(fwd(x, padded_f32))
    assert out.shape == (batch, num_classes), out.shape
    assert jnp.allclose(out, ref, rtol=1e-3, atol=1e-3), (
        "f32 mismatch vs reference:\n%r\n%r" % (out, ref))

    # bf16 MXU-operand + bf16 gate/hseq storage fast path (v6e/v7x), f32 gate
    # math and accumulation: looser check (bf16 rounding compounds over T).
    padded_bf16 = prepare_params(
        params, input_size=input_size, hidden_size=hidden_size,
        num_layers=num_layers, num_classes=num_classes, mxu_dtype=jnp.bfloat16)
    out_bf16 = jax.block_until_ready(fwd(x, padded_bf16))
    assert out_bf16.shape == (batch, num_classes), out_bf16.shape
    assert jnp.allclose(out_bf16, ref, rtol=1e-1, atol=1e-1), (
        "bf16 mismatch vs reference:\n%r\n%r" % (out_bf16, ref))

    print("KERNEL_OK")
</pallas_src>

<mosaic_0001>
module attributes {stable_mosaic.version = 11 : i64} {
  func.func @_bilstm_last_layer_fc_kernel(%arg0: memref<8x8x256xf32, #tpu.memory_space<vmem>>, %arg1: memref<256x1024xf32, #tpu.memory_space<vmem>>, %arg2: memref<1x1024xf32, #tpu.memory_space<vmem>>, %arg3: memref<128x512xf32, #tpu.memory_space<vmem>>, %arg4: memref<256x128xf32, #tpu.memory_space<vmem>>, %arg5: memref<1x128xf32, #tpu.memory_space<vmem>>, %arg6: memref<8x128xf32, #tpu.memory_space<vmem>>, %arg7: memref<8x8x512xf32, #tpu.memory_space<vmem>>) attributes {dimension_semantics = [], scalar_prefetch = 0 : i64, scratch_operands = 1 : i64, tpu.core_type = #tpu.core_type<tc>} {
    %c0 = arith.constant 0 : index
    %c0_0 = arith.constant 0 : index
    %c0_1 = arith.constant 0 : index
    %0 = vector.load %arg0[%c0, %c0_0, %c0_1] : memref<8x8x256xf32, #tpu.memory_space<vmem>>, vector<8x8x256xf32>
    %1 = vector.shape_cast %0 : vector<8x8x256xf32> to vector<64x256xf32>
    %c0_2 = arith.constant 0 : index
    %c0_3 = arith.constant 0 : index
    %2 = vector.load %arg1[%c0_2, %c0_3] : memref<256x1024xf32, #tpu.memory_space<vmem>>, vector<256x512xf32>
    %cst = arith.constant dense<0.000000e+00> : vector<64x512xf32>
    %3 = tpu.matmul %1, %2, %cst {dimension_numbers = #tpu.dot_dimension_numbers<[1], [0], [0], [1], [0, 0, 1, 1], [], []>} : vector<64x256xf32>, vector<256x512xf32>, vector<64x512xf32> -> vector<64x512xf32>
    %c0_4 = arith.constant 0 : index
    %c0_5 = arith.constant 0 : index
    %4 = vector.load %arg2[%c0_4, %c0_5] : memref<1x1024xf32, #tpu.memory_space<vmem>>, vector<1x512xf32>
    %5 = vector.broadcast %4 : vector<1x512xf32> to vector<64x512xf32>
    %6 = arith.addf %3, %5 : vector<64x512xf32>
    %7 = vector.shape_cast %6 : vector<64x512xf32> to vector<8x8x512xf32>
    %c0_6 = arith.constant 0 : index
    %c0_7 = arith.constant 0 : index
    %c0_8 = arith.constant 0 : index
    %8 = vector.load %arg7[%c0_6, %c0_7, %c0_8] : memref<8x8x512xf32, #tpu.memory_space<vmem>>, vector<8x8x512xf32>
    tpu.vector_store %arg7[%c0_6, %c0_7, %c0_8], %7 {strides = array<i32>} : memref<8x8x512xf32, #tpu.memory_space<vmem>>, vector<8x8x512xf32>,
    %c0_9 = arith.constant 0 : index
    %c0_10 = arith.constant 0 : index
    %9 = vector.load %arg3[%c0_9, %c0_10] : memref<128x512xf32, #tpu.memory_space<vmem>>, vector<128x512xf32>
    %cst_11 = arith.constant 0.000000e+00 : f32
    %10 = vector.broadcast %cst_11 : f32 to vector<8x128xf32>
    %c0_i32 = arith.constant 0 : i32
    %11 = arith.index_cast %c0_i32 : i32 to index
    %c0_12 = arith.constant 0 : index
    %c0_13 = arith.constant 0 : index
    %12 = vector.load %arg7[%11, %c0_12, %c0_13] : memref<8x8x512xf32, #tpu.memory_space<vmem>>, vector<1x8x512xf32>
    %13 = vector.shape_cast %12 : vector<1x8x512xf32> to vector<8x512xf32>
    %cst_14 = arith.constant dense<0.000000e+00> : vector<8x512xf32>
    %14 = tpu.matmul %10, %9, %cst_14 {dimension_numbers = #tpu.dot_dimension_numbers<[1], [0], [0], [1], [0, 0, 1, 1], [], []>} : vector<8x128xf32>, vector<128x512xf32>, vector<8x512xf32> -> vector<8x512xf32>
    %15 = arith.addf %13, %14 : vector<8x512xf32>
    %16 = vector.extract_strided_slice %15 {offsets = [0, 0], sizes = [8, 128], strides = [1, 1]} : vector<8x512xf32> to vector<8x128xf32>
    %cst_15 = arith.constant 5.000000e-01 : f32
    %17 = vector.broadcast %cst_15 : f32 to vector<8x128xf32>
    %18 = arith.mulf %17, %16 : vector<8x128xf32>
    %19 = math.tanh %18 : vector<8x128xf32>
    %cst_16 = arith.constant 5.000000e-01 : f32
    %20 = vector.broadcast %cst_16 : f32 to vector<8x128xf32>
    %21 = arith.mulf %20, %19 : vector<8x128xf32>
    %cst_17 = arith.constant 5.000000e-01 : f32
    %22 = vector.broadcast %cst_17 : f32 to vector<8x128xf32>
    %23 = arith.addf %21, %22 : vector<8x128xf32>
    %24 = vector.extract_strided_slice %15 {offsets = [0, 128], sizes = [8, 128], strides = [1, 1]} : vector<8x512xf32> to vector<8x128xf32>
    %cst_18 = arith.constant 5.000000e-01 : f32
    %25 = vector.broadcast %cst_18 : f32 to vector<8x128xf32>
    %26 = arith.mulf %25, %24 : vector<8x128xf32>
    %27 = math.tanh %26 : vector<8x128xf32>
    %cst_19 = arith.constant 5.000000e-01 : f32
    %28 = vector.broadcast %cst_19 : f32 to vector<8x128xf32>
    %29 = arith.mulf %28, %27 : vector<8x128xf32>
    %cst_20 = arith.constant 5.000000e-01 : f32
    %30 = vector.broadcast %cst_20 : f32 to vector<8x128xf32>
    %31 = arith.addf %29, %30 : vector<8x128xf32>
    %32 = vector.extract_strided_slice %15 {offsets = [0, 256], sizes = [8, 128], strides = [1, 1]} : vector<8x512xf32> to vector<8x128xf32>
    %33 = math.tanh %32 : vector<8x128xf32>
    %34 = vector.extract_strided_slice %15 {offsets = [0, 384], sizes = [8, 128], strides = [1, 1]} : vector<8x512xf32> to vector<8x128xf32>
    %cst_21 = arith.constant 5.000000e-01 : f32
    %35 = vector.broadcast %cst_21 : f32 to vector<8x128xf32>
    %36 = arith.mulf %35, %34 : vector<8x128xf32>
    %37 = math.tanh %36 : vector<8x128xf32>
    %cst_22 = arith.constant 5.000000e-01 : f32
    %38 = vector.broadcast %cst_22 : f32 to vector<8x128xf32>
    %39 = arith.mulf %38, %37 : vector<8x128xf32>
    %cst_23 = arith.constant 5.000000e-01 : f32
    %40 = vector.broadcast %cst_23 : f32 to vector<8x128xf32>
    %41 = arith.addf %39, %40 : vector<8x128xf32>
    %42 = arith.mulf %31, %10 : vector<8x128xf32>
    %43 = arith.mulf %23, %33 : vector<8x128xf32>
    %44 = arith.addf %42, %43 : vector<8x128xf32>
    %45 = math.tanh %44 : vector<8x128xf32>
    %46 = arith.mulf %41, %45 : vector<8x128xf32>
    %c1_i32 = arith.constant 1 : i32
    %47 = arith.index_cast %c1_i32 : i32 to index
    %c0_24 = arith.constant 0 : index
    %c0_25 = arith.constant 0 : index
    %48 = vector.load %arg7[%47, %c0_24, %c0_25] : memref<8x8x512xf32, #tpu.memory_space<vmem>>, vector<1x8x512xf32>
    %49 = vector.shape_cast %48 : vector<1x8x512xf32> to vector<8x512xf32>
    %cst_26 = arith.constant dense<0.000000e+00> : vector<8x512xf32>
    %50 = tpu.matmul %46, %9, %cst_26 {dimension_numbers = #tpu.dot_dimension_numbers<[1], [0], [0], [1], [0, 0, 1, 1], [], []>} : vector<8x128xf32>, vector<128x512xf32>, vector<8x512xf32> -> vector<8x512xf32>
    %51 = arith.addf %49, %50 : vector<8x512xf32>
    %52 = vector.extract_strided_slice %51 {offsets = [0, 0], sizes = [8, 128], strides = [1, 1]} : vector<8x512xf32> to vector<8x128xf32>
    %cst_27 = arith.constant 5.000000e-01 : f32
    %53 = vector.broadcast %cst_27 : f32 to vector<8x128xf32>
    %54 = arith.mulf %53, %52 : vector<8x128xf32>
    %55 = math.tanh %54 : vector<8x128xf32>
    %cst_28 = arith.constant 5.000000e-01 : f32
    %56 = vector.broadcast %cst_28 : f32 to vector<8x128xf32>
    %57 = arith.mulf %56, %55 : vector<8x128xf32>
    %cst_29 = arith.constant 5.000000e-01 : f32
    %58 = vector.broadcast %cst_29 : f32 to vector<8x128xf32>
    %59 = arith.addf %57, %58 : vector<8x128xf32>
    %60 = vector.extract_strided_slice %51 {offsets = [0, 128], sizes = [8, 128], strides = [1, 1]} : vector<8x512xf32> to vector<8x128xf32>
    %cst_30 = arith.constant 5.000000e-01 : f32
    %61 = vector.broadcast %cst_30 : f32 to vector<8x128xf32>
    %62 = arith.mulf %61, %60 : vector<8x128xf32>
    %63 = math.tanh %62 : vector<8x128xf32>
    %cst_31 = arith.constant 5.000000e-01 : f32
    %64 = vector.broadcast %cst_31 : f32 to vector<8x128xf32>
    %65 = arith.mulf %64, %63 : vector<8x128xf32>
    %cst_32 = arith.constant 5.000000e-01 : f32
    %66 = vector.broadcast %cst_32 : f32 to vector<8x128xf32>
    %67 = arith.addf %65, %66 : vector<8x128xf32>
    %68 = vector.extract_strided_slice %51 {offsets = [0, 256], sizes = [8, 128], strides = [1, 1]} : vector<8x512xf32> to vector<8x128xf32>
    %69 = math.tanh %68 : vector<8x128xf32>
    %70 = vector.extract_strided_slice %51 {offsets = [0, 384], sizes = [8, 128], strides = [1, 1]} : vector<8x512xf32> to vector<8x128xf32>
    %cst_33 = arith.constant 5.000000e-01 : f32
    %71 = vector.broadcast %cst_33 : f32 to vector<8x128xf32>
    %72 = arith.mulf %71, %70 : vector<8x128xf32>
    %73 = math.tanh %72 : vector<8x128xf32>
    %cst_34 = arith.constant 5.000000e-01 : f32
    %74 = vector.broadcast %cst_34 : f32 to vector<8x128xf32>
    %75 = arith.mulf %74, %73 : vector<8x128xf32>
    %cst_35 = arith.constant 5.000000e-01 : f32
    %76 = vector.broadcast %cst_35 : f32 to vector<8x128xf32>
    %77 = arith.addf %75, %76 : vector<8x128xf32>
    %78 = arith.mulf %67, %44 : vector<8x128xf32>
    %79 = arith.mulf %59, %69 : vector<8x128xf32>
    %80 = arith.addf %78, %79 : vector<8x128xf32>
    %81 = math.tanh %80 : vector<8x128xf32>
    %82 = arith.mulf %77, %81 : vector<8x128xf32>
    %c2_i32 = arith.constant 2 : i32
    %83 = arith.index_cast %c2_i32 : i32 to index
    %c0_36 = arith.constant 0 : index
    %c0_37 = arith.constant 0 : index
    %84 = vector.load %arg7[%83, %c0_36, %c0_37] : memref<8x8x512xf32, #tpu.memory_space<vmem>>, vector<1x8x512xf32>
    %85 = vector.shape_cast %84 : vector<1x8x512xf32> to vector<8x512xf32>
    %cst_38 = arith.constant dense<0.000000e+00> : vector<8x512xf32>
    %86 = tpu.matmul %82, %9, %cst_38 {dimension_numbers = #tpu.dot_dimension_numbers<[1], [0], [0], [1], [0, 0, 1, 1], [], []>} : vector<8x128xf32>, vector<128x512xf32>, vector<8x512xf32> -> vector<8x512xf32>
    %87 = arith.addf %85, %86 : vector<8x512xf32>
    %88 = vector.extract_strided_slice %87 {offsets = [0, 0], sizes = [8, 128], strides = [1, 1]} : vector<8x512xf32> to vector<8x128xf32>
    %cst_39 = arith.constant 5.000000e-01 : f32
    %89 = vector.broadcast %cst_39 : f32 to vector<8x128xf32>
    %90 = arith.mulf %89, %88 : vector<8x128xf32>
    %91 = math.tanh %90 : vector<8x128xf32>
    %cst_40 = arith.constant 5.000000e-01 : f32
    %92 = vector.broadcast %cst_40 : f32 to vector<8x128xf32>
    %93 = arith.mulf %92, %91 : vector<8x128xf32>
    %cst_41 = arith.constant 5.000000e-01 : f32
    %94 = vector.broadcast %cst_41 : f32 to vector<8x128xf32>
    %95 = arith.addf %93, %94 : vector<8x128xf32>
    %96 = vector.extract_strided_slice %87 {offsets = [0, 128], sizes = [8, 128], strides = [1, 1]} : vector<8x512xf32> to vector<8x128xf32>
    %cst_42 = arith.constant 5.000000e-01 : f32
    %97 = vector.broadcast %cst_42 : f32 to vector<8x128xf32>
    %98 = arith.mulf %97, %96 : vector<8x128xf32>
    %99 = math.tanh %98 : vector<8x128xf32>
    %cst_43 = arith.constant 5.000000e-01 : f32
    %100 = vector.broadcast %cst_43 : f32 to vector<8x128xf32>
    %101 = arith.mulf %100, %99 : vector<8x128xf32>
    %cst_44 = arith.constant 5.000000e-01 : f32
    %102 = vector.broadcast %cst_44 : f32 to vector<8x128xf32>
    %103 = arith.addf %101, %102 : vector<8x128xf32>
    %104 = vector.extract_strided_slice %87 {offsets = [0, 256], sizes = [8, 128], strides = [1, 1]} : vector<8x512xf32> to vector<8x128xf32>
    %105 = math.tanh %104 : vector<8x128xf32>
    %106 = vector.extract_strided_slice %87 {offsets = [0, 384], sizes = [8, 128], strides = [1, 1]} : vector<8x512xf32> to vector<8x128xf32>
    %cst_45 = arith.constant 5.000000e-01 : f32
    %107 = vector.broadcast %cst_45 : f32 to vector<8x128xf32>
    %108 = arith.mulf %107, %106 : vector<8x128xf32>
    %109 = math.tanh %108 : vector<8x128xf32>
    %cst_46 = arith.constant 5.000000e-01 : f32
    %110 = vector.broadcast %cst_46 : f32 to vector<8x128xf32>
    %111 = arith.mulf %110, %109 : vector<8x128xf32>
    %cst_47 = arith.constant 5.000000e-01 : f32
    %112 = vector.broadcast %cst_47 : f32 to vector<8x128xf32>
    %113 = arith.addf %111, %112 : vector<8x128xf32>
    %114 = arith.mulf %103, %80 : vector<8x128xf32>
    %115 = arith.mulf %95, %105 : vector<8x128xf32>
    %116 = arith.addf %114, %115 : vector<8x128xf32>
    %117 = math.tanh %116 : vector<8x128xf32>
    %118 = arith.mulf %113, %117 : vector<8x128xf32>
    %c3_i32 = arith.constant 3 : i32
    %119 = arith.index_cast %c3_i32 : i32 to index
    %c0_48 = arith.constant 0 : index
    %c0_49 = arith.constant 0 : index
    %120 = vector.load %arg7[%119, %c0_48, %c0_49] : memref<8x8x512xf32, #tpu.memory_space<vmem>>, vector<1x8x512xf32>
    %121 = vector.shape_cast %120 : vector<1x8x512xf32> to vector<8x512xf32>
    %cst_50 = arith.constant dense<0.000000e+00> : vector<8x512xf32>
    %122 = tpu.matmul %118, %9, %cst_50 {dimension_numbers = #tpu.dot_dimension_numbers<[1], [0], [0], [1], [0, 0, 1, 1], [], []>} : vector<8x128xf32>, vector<128x512xf32>, vector<8x512xf32> -> vector<8x512xf32>
    %123 = arith.addf %121, %122 : vector<8x512xf32>
    %124 = vector.extract_strided_slice %123 {offsets = [0, 0], sizes = [8, 128], strides = [1, 1]} : vector<8x512xf32> to vector<8x128xf32>
    %cst_51 = arith.constant 5.000000e-01 : f32
    %125 = vector.broadcast %cst_51 : f32 to vector<8x128xf32>
    %126 = arith.mulf %125, %124 : vector<8x128xf32>
    %127 = math.tanh %126 : vector<8x128xf32>
    %cst_52 = arith.constant 5.000000e-01 : f32
    %128 = vector.broadcast %cst_52 : f32 to vector<8x128xf32>
    %129 = arith.mulf %128, %127 : vector<8x128xf32>
    %cst_53 = arith.constant 5.000000e-01 : f32
    %130 = vector.broadcast %cst_53 : f32 to vector<8x128xf32>
    %131 = arith.addf %129, %130 : vector<8x128xf32>
    %132 = vector.extract_strided_slice %123 {offsets = [0, 128], sizes = [8, 128], strides = [1, 1]} : vector<8x512xf32> to vector<8x128xf32>
    %cst_54 = arith.constant 5.000000e-01 : f32
    %133 = vector.broadcast %cst_54 : f32 to vector<8x128xf32>
    %134 = arith.mulf %133, %132 : vector<8x128xf32>
    %135 = math.tanh %134 : vector<8x128xf32>
    %cst_55 = arith.constant 5.000000e-01 : f32
    %136 = vector.broadcast %cst_55 : f32 to vector<8x128xf32>
    %137 = arith.mulf %136, %135 : vector<8x128xf32>
    %cst_56 = arith.constant 5.000000e-01 : f32
    %138 = vector.broadcast %cst_56 : f32 to vector<8x128xf32>
    %139 = arith.addf %137, %138 : vector<8x128xf32>
    %140 = vector.extract_strided_slice %123 {offsets = [0, 256], sizes = [8, 128], strides = [1, 1]} : vector<8x512xf32> to vector<8x128xf32>
    %141 = math.tanh %140 : vector<8x128xf32>
    %142 = vector.extract_strided_slice %123 {offsets = [0, 384], sizes = [8, 128], strides = [1, 1]} : vector<8x512xf32> to vector<8x128xf32>
    %cst_57 = arith.constant 5.000000e-01 : f32
    %143 = vector.broadcast %cst_57 : f32 to vector<8x128xf32>
    %144 = arith.mulf %143, %142 : vector<8x128xf32>
    %145 = math.tanh %144 : vector<8x128xf32>
    %cst_58 = arith.constant 5.000000e-01 : f32
    %146 = vector.broadcast %cst_58 : f32 to vector<8x128xf32>
    %147 = arith.mulf %146, %145 : vector<8x128xf32>
    %cst_59 = arith.constant 5.000000e-01 : f32
    %148 = vector.broadcast %cst_59 : f32 to vector<8x128xf32>
    %149 = arith.addf %147, %148 : vector<8x128xf32>
    %150 = arith.mulf %139, %116 : vector<8x128xf32>
    %151 = arith.mulf %131, %141 : vector<8x128xf32>
    %152 = arith.addf %150, %151 : vector<8x128xf32>
    %153 = math.tanh %152 : vector<8x128xf32>
    %154 = arith.mulf %149, %153 : vector<8x128xf32>
    %c4_i32 = arith.constant 4 : i32
    %155 = arith.index_cast %c4_i32 : i32 to index
    %c0_60 = arith.constant 0 : index
    %c0_61 = arith.constant 0 : index
    %156 = vector.load %arg7[%155, %c0_60, %c0_61] : memref<8x8x512xf32, #tpu.memory_space<vmem>>, vector<1x8x512xf32>
    %157 = vector.shape_cast %156 : vector<1x8x512xf32> to vector<8x512xf32>
    %cst_62 = arith.constant dense<0.000000e+00> : vector<8x512xf32>
    %158 = tpu.matmul %154, %9, %cst_62 {dimension_numbers = #tpu.dot_dimension_numbers<[1], [0], [0], [1], [0, 0, 1, 1], [], []>} : vector<8x128xf32>, vector<128x512xf32>, vector<8x512xf32> -> vector<8x512xf32>
    %159 = arith.addf %157, %158 : vector<8x512xf32>
    %160 = vector.extract_strided_slice %159 {offsets = [0, 0], sizes = [8, 128], strides = [1, 1]} : vector<8x512xf32> to vector<8x128xf32>
    %cst_63 = arith.constant 5.000000e-01 : f32
    %161 = vector.broadcast %cst_63 : f32 to vector<8x128xf32>
    %162 = arith.mulf %161, %160 : vector<8x128xf32>
    %163 = math.tanh %162 : vector<8x128xf32>
    %cst_64 = arith.constant 5.000000e-01 : f32
    %164 = vector.broadcast %cst_64 : f32 to vector<8x128xf32>
    %165 = arith.mulf %164, %163 : vector<8x128xf32>
    %cst_65 = arith.constant 5.000000e-01 : f32
    %166 = vector.broadcast %cst_65 : f32 to vector<8x128xf32>
    %167 = arith.addf %165, %166 : vector<8x128xf32>
    %168 = vector.extract_strided_slice %159 {offsets = [0, 128], sizes = [8, 128], strides = [1, 1]} : vector<8x512xf32> to vector<8x128xf32>
    %cst_66 = arith.constant 5.000000e-01 : f32
    %169 = vector.broadcast %cst_66 : f32 to vector<8x128xf32>
    %170 = arith.mulf %169, %168 : vector<8x128xf32>
    %171 = math.tanh %170 : vector<8x128xf32>
    %cst_67 = arith.constant 5.000000e-01 : f32
    %172 = vector.broadcast %cst_67 : f32 to vector<8x128xf32>
    %173 = arith.mulf %172, %171 : vector<8x128xf32>
    %cst_68 = arith.constant 5.000000e-01 : f32
    %174 = vector.broadcast %cst_68 : f32 to vector<8x128xf32>
    %175 = arith.addf %173, %174 : vector<8x128xf32>
    %176 = vector.extract_strided_slice %159 {offsets = [0, 256], sizes = [8, 128], strides = [1, 1]} : vector<8x512xf32> to vector<8x128xf32>
    %177 = math.tanh %176 : vector<8x128xf32>
    %178 = vector.extract_strided_slice %159 {offsets = [0, 384], sizes = [8, 128], strides = [1, 1]} : vector<8x512xf32> to vector<8x128xf32>
    %cst_69 = arith.constant 5.000000e-01 : f32
    %179 = vector.broadcast %cst_69 : f32 to vector<8x128xf32>
    %180 = arith.mulf %179, %178 : vector<8x128xf32>
    %181 = math.tanh %180 : vector<8x128xf32>
    %cst_70 = arith.constant 5.000000e-01 : f32
    %182 = vector.broadcast %cst_70 : f32 to vector<8x128xf32>
    %183 = arith.mulf %182, %181 : vector<8x128xf32>
    %cst_71 = arith.constant 5.000000e-01 : f32
    %184 = vector.broadcast %cst_71 : f32 to vector<8x128xf32>
    %185 = arith.addf %183, %184 : vector<8x128xf32>
    %186 = arith.mulf %175, %152 : vector<8x128xf32>
    %187 = arith.mulf %167, %177 : vector<8x128xf32>
    %188 = arith.addf %186, %187 : vector<8x128xf32>
    %189 = math.tanh %188 : vector<8x128xf32>
    %190 = arith.mulf %185, %189 : vector<8x128xf32>
    %c5_i32 = arith.constant 5 : i32
    %191 = arith.index_cast %c5_i32 : i32 to index
    %c0_72 = arith.constant 0 : index
    %c0_73 = arith.constant 0 : index
    %192 = vector.load %arg7[%191, %c0_72, %c0_73] : memref<8x8x512xf32, #tpu.memory_space<vmem>>, vector<1x8x512xf32>
    %193 = vector.shape_cast %192 : vector<1x8x512xf32> to vector<8x512xf32>
    %cst_74 = arith.constant dense<0.000000e+00> : vector<8x512xf32>
    %194 = tpu.matmul %190, %9, %cst_74 {dimension_numbers = #tpu.dot_dimension_numbers<[1], [0], [0], [1], [0, 0, 1, 1], [], []>} : vector<8x128xf32>, vector<128x512xf32>, vector<8x512xf32> -> vector<8x512xf32>
    %195 = arith.addf %193, %194 : vector<8x512xf32>
    %196 = vector.extract_strided_slice %195 {offsets = [0, 0], sizes = [8, 128], strides = [1, 1]} : vector<8x512xf32> to vector<8x128xf32>
    %cst_75 = arith.constant 5.000000e-01 : f32
    %197 = vector.broadcast %cst_75 : f32 to vector<8x128xf32>
    %198 = arith.mulf %197, %196 : vector<8x128xf32>
    %199 = math.tanh %198 : vector<8x128xf32>
    %cst_76 = arith.constant 5.000000e-01 : f32
    %200 = vector.broadcast %cst_76 : f32 to vector<8x128xf32>
    %201 = arith.mulf %200, %199 : vector<8x128xf32>
    %cst_77 = arith.constant 5.000000e-01 : f32
    %202 = vector.broadcast %cst_77 : f32 to vector<8x128xf32>
    %203 = arith.addf %201, %202 : vector<8x128xf32>
    %204 = vector.extract_strided_slice %195 {offsets = [0, 128], sizes = [8, 128], strides = [1, 1]} : vector<8x512xf32> to vector<8x128xf32>
    %cst_78 = arith.constant 5.000000e-01 : f32
    %205 = vector.broadcast %cst_78 : f32 to vector<8x128xf32>
    %206 = arith.mulf %205, %204 : vector<8x128xf32>
    %207 = math.tanh %206 : vector<8x128xf32>
    %cst_79 = arith.constant 5.000000e-01 : f32
    %208 = vector.broadcast %cst_79 : f32 to vector<8x128xf32>
    %209 = arith.mulf %208, %207 : vector<8x128xf32>
    %cst_80 = arith.constant 5.000000e-01 : f32
    %210 = vector.broadcast %cst_80 : f32 to vector<8x128xf32>
    %211 = arith.addf %209, %210 : vector<8x128xf32>
    %212 = vector.extract_strided_slice %195 {offsets = [0, 256], sizes = [8, 128], strides = [1, 1]} : vector<8x512xf32> to vector<8x128xf32>
    %213 = math.tanh %212 : vector<8x128xf32>
    %214 = vector.extract_strided_slice %195 {offsets = [0, 384], sizes = [8, 128], strides = [1, 1]} : vector<8x512xf32> to vector<8x128xf32>
    %cst_81 = arith.constant 5.000000e-01 : f32
    %215 = vector.broadcast %cst_81 : f32 to vector<8x128xf32>
    %216 = arith.mulf %215, %214 : vector<8x128xf32>
    %217 = math.tanh %216 : vector<8x128xf32>
    %cst_82 = arith.constant 5.000000e-01 : f32
    %218 = vector.broadcast %cst_82 : f32 to vector<8x128xf32>
    %219 = arith.mulf %218, %217 : vector<8x128xf32>
    %cst_83 = arith.constant 5.000000e-01 : f32
    %220 = vector.broadcast %cst_83 : f32 to vector<8x128xf32>
    %221 = arith.addf %219, %220 : vector<8x128xf32>
    %222 = arith.mulf %211, %188 : vector<8x128xf32>
    %223 = arith.mulf %203, %213 : vector<8x128xf32>
    %224 = arith.addf %222, %223 : vector<8x128xf32>
    %225 = math.tanh %224 : vector<8x128xf32>
    %226 = arith.mulf %221, %225 : vector<8x128xf32>
    %c6_i32 = arith.constant 6 : i32
    %227 = arith.index_cast %c6_i32 : i32 to index
    %c0_84 = arith.constant 0 : index
    %c0_85 = arith.constant 0 : index
    %228 = vector.load %arg7[%227, %c0_84, %c0_85] : memref<8x8x512xf32, #tpu.memory_space<vmem>>, vector<1x8x512xf32>
    %229 = vector.shape_cast %228 : vector<1x8x512xf32> to vector<8x512xf32>
    %cst_86 = arith.constant dense<0.000000e+00> : vector<8x512xf32>
    %230 = tpu.matmul %226, %9, %cst_86 {dimension_numbers = #tpu.dot_dimension_numbers<[1], [0], [0], [1], [0, 0, 1, 1], [], []>} : vector<8x128xf32>, vector<128x512xf32>, vector<8x512xf32> -> vector<8x512xf32>
    %231 = arith.addf %229, %230 : vector<8x512xf32>
    %232 = vector.extract_strided_slice %231 {offsets = [0, 0], sizes = [8, 128], strides = [1, 1]} : vector<8x512xf32> to vector<8x128xf32>
    %cst_87 = arith.constant 5.000000e-01 : f32
    %233 = vector.broadcast %cst_87 : f32 to vector<8x128xf32>
    %234 = arith.mulf %233, %232 : vector<8x128xf32>
    %235 = math.tanh %234 : vector<8x128xf32>
    %cst_88 = arith.constant 5.000000e-01 : f32
    %236 = vector.broadcast %cst_88 : f32 to vector<8x128xf32>
    %237 = arith.mulf %236, %235 : vector<8x128xf32>
    %cst_89 = arith.constant 5.000000e-01 : f32
    %238 = vector.broadcast %cst_89 : f32 to vector<8x128xf32>
    %239 = arith.addf %237, %238 : vector<8x128xf32>
    %240 = vector.extract_strided_slice %231 {offsets = [0, 128], sizes = [8, 128], strides = [1, 1]} : vector<8x512xf32> to vector<8x128xf32>
    %cst_90 = arith.constant 5.000000e-01 : f32
    %241 = vector.broadcast %cst_90 : f32 to vector<8x128xf32>
    %242 = arith.mulf %241, %240 : vector<8x128xf32>
    %243 = math.tanh %242 : vector<8x128xf32>
    %cst_91 = arith.constant 5.000000e-01 : f32
    %244 = vector.broadcast %cst_91 : f32 to vector<8x128xf32>
    %245 = arith.mulf %244, %243 : vector<8x128xf32>
    %cst_92 = arith.constant 5.000000e-01 : f32
    %246 = vector.broadcast %cst_92 : f32 to vector<8x128xf32>
    %247 = arith.addf %245, %246 : vector<8x128xf32>
    %248 = vector.extract_strided_slice %231 {offsets = [0, 256], sizes = [8, 128], strides = [1, 1]} : vector<8x512xf32> to vector<8x128xf32>
    %249 = math.tanh %248 : vector<8x128xf32>
    %250 = vector.extract_strided_slice %231 {offsets = [0, 384], sizes = [8, 128], strides = [1, 1]} : vector<8x512xf32> to vector<8x128xf32>
    %cst_93 = arith.constant 5.000000e-01 : f32
    %251 = vector.broadcast %cst_93 : f32 to vector<8x128xf32>
    %252 = arith.mulf %251, %250 : vector<8x128xf32>
    %253 = math.tanh %252 : vector<8x128xf32>
    %cst_94 = arith.constant 5.000000e-01 : f32
    %254 = vector.broadcast %cst_94 : f32 to vector<8x128xf32>
    %255 = arith.mulf %254, %253 : vector<8x128xf32>
    %cst_95 = arith.constant 5.000000e-01 : f32
    %256 = vector.broadcast %cst_95 : f32 to vector<8x128xf32>
    %257 = arith.addf %255, %256 : vector<8x128xf32>
    %258 = arith.mulf %247, %224 : vector<8x128xf32>
    %259 = arith.mulf %239, %249 : vector<8x128xf32>
    %260 = arith.addf %258, %259 : vector<8x128xf32>
    %261 = math.tanh %260 : vector<8x128xf32>
    %262 = arith.mulf %257, %261 : vector<8x128xf32>
    %c7_i32 = arith.constant 7 : i32
    %263 = arith.index_cast %c7_i32 : i32 to index
    %c0_96 = arith.constant 0 : index
    %c0_97 = arith.constant 0 : index
    %264 = vector.load %arg7[%263, %c0_96, %c0_97] : memref<8x8x512xf32, #tpu.memory_space<vmem>>, vector<1x8x512xf32>
    %265 = vector.shape_cast %264 : vector<1x8x512xf32> to vector<8x512xf32>
    %cst_98 = arith.constant dense<0.000000e+00> : vector<8x512xf32>
    %266 = tpu.matmul %262, %9, %cst_98 {dimension_numbers = #tpu.dot_dimension_numbers<[1], [0], [0], [1], [0, 0, 1, 1], [], []>} : vector<8x128xf32>, vector<128x512xf32>, vector<8x512xf32> -> vector<8x512xf32>
    %267 = arith.addf %265, %266 : vector<8x512xf32>
    %268 = vector.extract_strided_slice %267 {offsets = [0, 0], sizes = [8, 128], strides = [1, 1]} : vector<8x512xf32> to vector<8x128xf32>
    %cst_99 = arith.constant 5.000000e-01 : f32
    %269 = vector.broadcast %cst_99 : f32 to vector<8x128xf32>
    %270 = arith.mulf %269, %268 : vector<8x128xf32>
    %271 = math.tanh %270 : vector<8x128xf32>
    %cst_100 = arith.constant 5.000000e-01 : f32
    %272 = vector.broadcast %cst_100 : f32 to vector<8x128xf32>
    %273 = arith.mulf %272, %271 : vector<8x128xf32>
    %cst_101 = arith.constant 5.000000e-01 : f32
    %274 = vector.broadcast %cst_101 : f32 to vector<8x128xf32>
    %275 = arith.addf %273, %274 : vector<8x128xf32>
    %276 = vector.extract_strided_slice %267 {offsets = [0, 128], sizes = [8, 128], strides = [1, 1]} : vector<8x512xf32> to vector<8x128xf32>
    %cst_102 = arith.constant 5.000000e-01 : f32
    %277 = vector.broadcast %cst_102 : f32 to vector<8x128xf32>
    %278 = arith.mulf %277, %276 : vector<8x128xf32>
    %279 = math.tanh %278 : vector<8x128xf32>
    %cst_103 = arith.constant 5.000000e-01 : f32
    %280 = vector.broadcast %cst_103 : f32 to vector<8x128xf32>
    %281 = arith.mulf %280, %279 : vector<8x128xf32>
    %cst_104 = arith.constant 5.000000e-01 : f32
    %282 = vector.broadcast %cst_104 : f32 to vector<8x128xf32>
    %283 = arith.addf %281, %282 : vector<8x128xf32>
    %284 = vector.extract_strided_slice %267 {offsets = [0, 256], sizes = [8, 128], strides = [1, 1]} : vector<8x512xf32> to vector<8x128xf32>
    %285 = math.tanh %284 : vector<8x128xf32>
    %286 = vector.extract_strided_slice %267 {offsets = [0, 384], sizes = [8, 128], strides = [1, 1]} : vector<8x512xf32> to vector<8x128xf32>
    %cst_105 = arith.constant 5.000000e-01 : f32
    %287 = vector.broadcast %cst_105 : f32 to vector<8x128xf32>
    %288 = arith.mulf %287, %286 : vector<8x128xf32>
    %289 = math.tanh %288 : vector<8x128xf32>
    %cst_106 = arith.constant 5.000000e-01 : f32
    %290 = vector.broadcast %cst_106 : f32 to vector<8x128xf32>
    %291 = arith.mulf %290, %289 : vector<8x128xf32>
    %cst_107 = arith.constant 5.000000e-01 : f32
    %292 = vector.broadcast %cst_107 : f32 to vector<8x128xf32>
    %293 = arith.addf %291, %292 : vector<8x128xf32>
    %294 = arith.mulf %283, %260 : vector<8x128xf32>
    %295 = arith.mulf %275, %285 : vector<8x128xf32>
    %296 = arith.addf %294, %295 : vector<8x128xf32>
    %297 = math.tanh %296 : vector<8x128xf32>
    %298 = arith.mulf %293, %297 : vector<8x128xf32>
    %c8_i32 = arith.constant 8 : i32
    %c7 = arith.constant 7 : index
    %c0_108 = arith.constant 0 : index
    %c0_109 = arith.constant 0 : index
    %299 = vector.load %arg0[%c7, %c0_108, %c0_109] : memref<8x8x256xf32, #tpu.memory_space<vmem>>, vector<1x8x256xf32>
    %300 = vector.shape_cast %299 : vector<1x8x256xf32> to vector<8x256xf32>
    %c0_110 = arith.constant 0 : index
    %c512 = arith.constant 512 : index
    %301 = vector.load %arg1[%c0_110, %c512] : memref<256x1024xf32, #tpu.memory_space<vmem>>, vector<256x512xf32>
    %cst_111 = arith.constant dense<0.000000e+00> : vector<8x512xf32>
    %302 = tpu.matmul %300, %301, %cst_111 {dimension_numbers = #tpu.dot_dimension_numbers<[1], [0], [0], [1], [0, 0, 1, 1], [], []>} : vector<8x256xf32>, vector<256x512xf32>, vector<8x512xf32> -> vector<8x512xf32>
    %c0_112 = arith.constant 0 : index
    %c512_113 = arith.constant 512 : index
    %303 = vector.load %arg2[%c0_112, %c512_113] : memref<1x1024xf32, #tpu.memory_space<vmem>>, vector<1x512xf32>
    %304 = vector.broadcast %303 : vector<1x512xf32> to vector<8x512xf32>
    %305 = arith.addf %302, %304 : vector<8x512xf32>
    %cst_114 = arith.constant 0.000000e+00 : f32
    %306 = vector.broadcast %cst_114 : f32 to vector<8x128xf32>
    %307 = vector.extract_strided_slice %305 {offsets = [0, 0], sizes = [8, 128], strides = [1, 1]} : vector<8x512xf32> to vector<8x128xf32>
    %cst_115 = arith.constant 5.000000e-01 : f32
    %308 = vector.broadcast %cst_115 : f32 to vector<8x128xf32>
    %309 = arith.mulf %308, %307 : vector<8x128xf32>
    %310 = math.tanh %309 : vector<8x128xf32>
    %cst_116 = arith.constant 5.000000e-01 : f32
    %311 = vector.broadcast %cst_116 : f32 to vector<8x128xf32>
    %312 = arith.mulf %311, %310 : vector<8x128xf32>
    %cst_117 = arith.constant 5.000000e-01 : f32
    %313 = vector.broadcast %cst_117 : f32 to vector<8x128xf32>
    %314 = arith.addf %312, %313 : vector<8x128xf32>
    %315 = vector.extract_strided_slice %305 {offsets = [0, 128], sizes = [8, 128], strides = [1, 1]} : vector<8x512xf32> to vector<8x128xf32>
    %cst_118 = arith.constant 5.000000e-01 : f32
    %316 = vector.broadcast %cst_118 : f32 to vector<8x128xf32>
    %317 = arith.mulf %316, %315 : vector<8x128xf32>
    %318 = math.tanh %317 : vector<8x128xf32>
    %cst_119 = arith.constant 5.000000e-01 : f32
    %319 = vector.broadcast %cst_119 : f32 to vector<8x128xf32>
    %320 = arith.mulf %319, %318 : vector<8x128xf32>
    %cst_120 = arith.constant 5.000000e-01 : f32
    %321 = vector.broadcast %cst_120 : f32 to vector<8x128xf32>
    %322 = arith.addf %320, %321 : vector<8x128xf32>
    %323 = vector.extract_strided_slice %305 {offsets = [0, 256], sizes = [8, 128], strides = [1, 1]} : vector<8x512xf32> to vector<8x128xf32>
    %324 = math.tanh %323 : vector<8x128xf32>
    %325 = vector.extract_strided_slice %305 {offsets = [0, 384], sizes = [8, 128], strides = [1, 1]} : vector<8x512xf32> to vector<8x128xf32>
    %cst_121 = arith.constant 5.000000e-01 : f32
    %326 = vector.broadcast %cst_121 : f32 to vector<8x128xf32>
    %327 = arith.mulf %326, %325 : vector<8x128xf32>
    %328 = math.tanh %327 : vector<8x128xf32>
    %cst_122 = arith.constant 5.000000e-01 : f32
    %329 = vector.broadcast %cst_122 : f32 to vector<8x128xf32>
    %330 = arith.mulf %329, %328 : vector<8x128xf32>
    %cst_123 = arith.constant 5.000000e-01 : f32
    %331 = vector.broadcast %cst_123 : f32 to vector<8x128xf32>
    %332 = arith.addf %330, %331 : vector<8x128xf32>
    %333 = arith.mulf %322, %306 : vector<8x128xf32>
    %334 = arith.mulf %314, %324 : vector<8x128xf32>
    %335 = arith.addf %333, %334 : vector<8x128xf32>
    %336 = math.tanh %335 : vector<8x128xf32>
    %337 = arith.mulf %332, %336 : vector<8x128xf32>
    %c0_124 = arith.constant 0 : index
    %c0_125 = arith.constant 0 : index
    %338 = vector.load %arg4[%c0_124, %c0_125] : memref<256x128xf32, #tpu.memory_space<vmem>>, vector<128x128xf32>
    %cst_126 = arith.constant dense<0.000000e+00> : vector<8x128xf32>
    %339 = tpu.matmul %298, %338, %cst_126 {dimension_numbers = #tpu.dot_dimension_numbers<[1], [0], [0], [1], [0, 0, 1, 1], [], []>} : vector<8x128xf32>, vector<128x128xf32>, vector<8x128xf32> -> vector<8x128xf32>
    %c128 = arith.constant 128 : index
    %c0_127 = arith.constant 0 : index
    %340 = vector.load %arg4[%c128, %c0_127] : memref<256x128xf32, #tpu.memory_space<vmem>>, vector<128x128xf32>
    %cst_128 = arith.constant dense<0.000000e+00> : vector<8x128xf32>
    %341 = tpu.matmul %337, %340, %cst_128 {dimension_numbers = #tpu.dot_dimension_numbers<[1], [0], [0], [1], [0, 0, 1, 1], [], []>} : vector<8x128xf32>, vector<128x128xf32>, vector<8x128xf32> -> vector<8x128xf32>
    %342 = arith.addf %339, %341 : vector<8x128xf32>
    %c0_129 = arith.constant 0 : index
    %c0_130 = arith.constant 0 : index
    %343 = vector.load %arg5[%c0_129, %c0_130] : memref<1x128xf32, #tpu.memory_space<vmem>>, vector<1x128xf32>
    %344 = vector.broadcast %343 : vector<1x128xf32> to vector<8x128xf32>
    %345 = arith.addf %342, %344 : vector<8x128xf32>
    %c0_131 = arith.constant 0 : index
    %c0_132 = arith.constant 0 : index
    %346 = vector.load %arg6[%c0_131, %c0_132] : memref<8x128xf32, #tpu.memory_space<vmem>>, vector<8x128xf32>
    tpu.vector_store %arg6[%c0_131, %c0_132], %345 {strides = array<i32>} : memref<8x128xf32, #tpu.memory_space<vmem>>, vector<8x128xf32>,
    return
  }
}

module attributes {stable_mosaic.version = 11 : i64} {
  func.func @_bilstm_layer_kernel(%arg0: memref<8x8x128xf32, #tpu.memory_space<vmem>>, %arg1: memref<128x1024xf32, #tpu.memory_space<vmem>>, %arg2: memref<1x1024xf32, #tpu.memory_space<vmem>>, %arg3: memref<128x512xf32, #tpu.memory_space<vmem>>, %arg4: memref<128x512xf32, #tpu.memory_space<vmem>>, %arg5: memref<8x8x256xf32, #tpu.memory_space<vmem>>, %arg6: memref<8x8x1024xf32, #tpu.memory_space<vmem>>) attributes {dimension_semantics = [], scalar_prefetch = 0 : i64, scratch_operands = 1 : i64, tpu.core_type = #tpu.core_type<tc>} {
    %c0 = arith.constant 0 : index
    %c0_0 = arith.constant 0 : index
    %c0_1 = arith.constant 0 : index
    %0 = vector.load %arg0[%c0, %c0_0, %c0_1] : memref<8x8x128xf32, #tpu.memory_space<vmem>>, vector<8x8x128xf32>
    %1 = vector.shape_cast %0 : vector<8x8x128xf32> to vector<64x128xf32>
    %c0_2 = arith.constant 0 : index
    %c0_3 = arith.constant 0 : index
    %2 = vector.load %arg1[%c0_2, %c0_3] : memref<128x1024xf32, #tpu.memory_space<vmem>>, vector<128x1024xf32>
    %cst = arith.constant dense<0.000000e+00> : vector<64x1024xf32>
    %3 = tpu.matmul %1, %2, %cst {dimension_numbers = #tpu.dot_dimension_numbers<[1], [0], [0], [1], [0, 0, 1, 1], [], []>} : vector<64x128xf32>, vector<128x1024xf32>, vector<64x1024xf32> -> vector<64x1024xf32>
    %c0_4 = arith.constant 0 : index
    %c0_5 = arith.constant 0 : index
    %4 = vector.load %arg2[%c0_4, %c0_5] : memref<1x1024xf32, #tpu.memory_space<vmem>>, vector<1x1024xf32>
    %5 = vector.broadcast %4 : vector<1x1024xf32> to vector<64x1024xf32>
    %6 = arith.addf %3, %5 : vector<64x1024xf32>
    %7 = vector.shape_cast %6 : vector<64x1024xf32> to vector<8x8x1024xf32>
    %c0_6 = arith.constant 0 : index
    %c0_7 = arith.constant 0 : index
    %c0_8 = arith.constant 0 : index
    %8 = vector.load %arg6[%c0_6, %c0_7, %c0_8] : memref<8x8x1024xf32, #tpu.memory_space<vmem>>, vector<8x8x1024xf32>
    tpu.vector_store %arg6[%c0_6, %c0_7, %c0_8], %7 {strides = array<i32>} : memref<8x8x1024xf32, #tpu.memory_space<vmem>>, vector<8x8x1024xf32>,
    %c0_9 = arith.constant 0 : index
    %c0_10 = arith.constant 0 : index
    %9 = vector.load %arg3[%c0_9, %c0_10] : memref<128x512xf32, #tpu.memory_space<vmem>>, vector<128x512xf32>
    %c0_11 = arith.constant 0 : index
    %c0_12 = arith.constant 0 : index
    %10 = vector.load %arg4[%c0_11, %c0_12] : memref<128x512xf32, #tpu.memory_space<vmem>>, vector<128x512xf32>
    %cst_13 = arith.constant 0.000000e+00 : f32
    %11 = vector.broadcast %cst_13 : f32 to vector<8x128xf32>
    %c0_i32 = arith.constant 0 : i32
    %c7_i32 = arith.constant 7 : i32
    %12 = arith.subi %c7_i32, %c0_i32 : i32
    %13 = arith.index_cast %c0_i32 : i32 to index
    %c0_14 = arith.constant 0 : index
    %c0_15 = arith.constant 0 : index
    %14 = vector.load %arg6[%13, %c0_14, %c0_15] : memref<8x8x1024xf32, #tpu.memory_space<vmem>>, vector<1x8x512xf32>
    %15 = vector.shape_cast %14 : vector<1x8x512xf32> to vector<8x512xf32>
    %cst_16 = arith.constant dense<0.000000e+00> : vector<8x512xf32>
    %16 = tpu.matmul %11, %9, %cst_16 {dimension_numbers = #tpu.dot_dimension_numbers<[1], [0], [0], [1], [0, 0, 1, 1], [], []>} : vector<8x128xf32>, vector<128x512xf32>, vector<8x512xf32> -> vector<8x512xf32>
    %17 = arith.addf %15, %16 : vector<8x512xf32>
    %18 = arith.index_cast %12 : i32 to index
    %c0_17 = arith.constant 0 : index
    %c512 = arith.constant 512 : index
    %19 = vector.load %arg6[%18, %c0_17, %c512] : memref<8x8x1024xf32, #tpu.memory_space<vmem>>, vector<1x8x512xf32>
    %20 = vector.shape_cast %19 : vector<1x8x512xf32> to vector<8x512xf32>
    %cst_18 = arith.constant dense<0.000000e+00> : vector<8x512xf32>
    %21 = tpu.matmul %11, %10, %cst_18 {dimension_numbers = #tpu.dot_dimension_numbers<[1], [0], [0], [1], [0, 0, 1, 1], [], []>} : vector<8x128xf32>, vector<128x512xf32>, vector<8x512xf32> -> vector<8x512xf32>
    %22 = arith.addf %20, %21 : vector<8x512xf32>
    %23 = vector.extract_strided_slice %17 {offsets = [0, 0], sizes = [8, 128], strides = [1, 1]} : vector<8x512xf32> to vector<8x128xf32>
    %cst_19 = arith.constant 5.000000e-01 : f32
    %24 = vector.broadcast %cst_19 : f32 to vector<8x128xf32>
    %25 = arith.mulf %24, %23 : vector<8x128xf32>
    %26 = math.tanh %25 : vector<8x128xf32>
    %cst_20 = arith.constant 5.000000e-01 : f32
    %27 = vector.broadcast %cst_20 : f32 to vector<8x128xf32>
    %28 = arith.mulf %27, %26 : vector<8x128xf32>
    %cst_21 = arith.constant 5.000000e-01 : f32
    %29 = vector.broadcast %cst_21 : f32 to vector<8x128xf32>
    %30 = arith.addf %28, %29 : vector<8x128xf32>
    %31 = vector.extract_strided_slice %17 {offsets = [0, 128], sizes = [8, 128], strides = [1, 1]} : vector<8x512xf32> to vector<8x128xf32>
    %cst_22 = arith.constant 5.000000e-01 : f32
    %32 = vector.broadcast %cst_22 : f32 to vector<8x128xf32>
    %33 = arith.mulf %32, %31 : vector<8x128xf32>
    %34 = math.tanh %33 : vector<8x128xf32>
    %cst_23 = arith.constant 5.000000e-01 : f32
    %35 = vector.broadcast %cst_23 : f32 to vector<8x128xf32>
    %36 = arith.mulf %35, %34 : vector<8x128xf32>
    %cst_24 = arith.constant 5.000000e-01 : f32
    %37 = vector.broadcast %cst_24 : f32 to vector<8x128xf32>
    %38 = arith.addf %36, %37 : vector<8x128xf32>
    %39 = vector.extract_strided_slice %17 {offsets = [0, 256], sizes = [8, 128], strides = [1, 1]} : vector<8x512xf32> to vector<8x128xf32>
    %40 = math.tanh %39 : vector<8x128xf32>
    %41 = vector.extract_strided_slice %17 {offsets = [0, 384], sizes = [8, 128], strides = [1, 1]} : vector<8x512xf32> to vector<8x128xf32>
    %cst_25 = arith.constant 5.000000e-01 : f32
    %42 = vector.broadcast %cst_25 : f32 to vector<8x128xf32>
    %43 = arith.mulf %42, %41 : vector<8x128xf32>
    %44 = math.tanh %43 : vector<8x128xf32>
    %cst_26 = arith.constant 5.000000e-01 : f32
    %45 = vector.broadcast %cst_26 : f32 to vector<8x128xf32>
    %46 = arith.mulf %45, %44 : vector<8x128xf32>
    %cst_27 = arith.constant 5.000000e-01 : f32
    %47 = vector.broadcast %cst_27 : f32 to vector<8x128xf32>
    %48 = arith.addf %46, %47 : vector<8x128xf32>
    %49 = arith.mulf %38, %11 : vector<8x128xf32>
    %50 = arith.mulf %30, %40 : vector<8x128xf32>
    %51 = arith.addf %49, %50 : vector<8x128xf32>
    %52 = math.tanh %51 : vector<8x128xf32>
    %53 = arith.mulf %48, %52 : vector<8x128xf32>
    %54 = vector.extract_strided_slice %22 {offsets = [0, 0], sizes = [8, 128], strides = [1, 1]} : vector<8x512xf32> to vector<8x128xf32>
    %cst_28 = arith.constant 5.000000e-01 : f32
    %55 = vector.broadcast %cst_28 : f32 to vector<8x128xf32>
    %56 = arith.mulf %55, %54 : vector<8x128xf32>
    %57 = math.tanh %56 : vector<8x128xf32>
    %cst_29 = arith.constant 5.000000e-01 : f32
    %58 = vector.broadcast %cst_29 : f32 to vector<8x128xf32>
    %59 = arith.mulf %58, %57 : vector<8x128xf32>
    %cst_30 = arith.constant 5.000000e-01 : f32
    %60 = vector.broadcast %cst_30 : f32 to vector<8x128xf32>
    %61 = arith.addf %59, %60 : vector<8x128xf32>
    %62 = vector.extract_strided_slice %22 {offsets = [0, 128], sizes = [8, 128], strides = [1, 1]} : vector<8x512xf32> to vector<8x128xf32>
    %cst_31 = arith.constant 5.000000e-01 : f32
    %63 = vector.broadcast %cst_31 : f32 to vector<8x128xf32>
    %64 = arith.mulf %63, %62 : vector<8x128xf32>
    %65 = math.tanh %64 : vector<8x128xf32>
    %cst_32 = arith.constant 5.000000e-01 : f32
    %66 = vector.broadcast %cst_32 : f32 to vector<8x128xf32>
    %67 = arith.mulf %66, %65 : vector<8x128xf32>
    %cst_33 = arith.constant 5.000000e-01 : f32
    %68 = vector.broadcast %cst_33 : f32 to vector<8x128xf32>
    %69 = arith.addf %67, %68 : vector<8x128xf32>
    %70 = vector.extract_strided_slice %22 {offsets = [0, 256], sizes = [8, 128], strides = [1, 1]} : vector<8x512xf32> to vector<8x128xf32>
    %71 = math.tanh %70 : vector<8x128xf32>
    %72 = vector.extract_strided_slice %22 {offsets = [0, 384], sizes = [8, 128], strides = [1, 1]} : vector<8x512xf32> to vector<8x128xf32>
    %cst_34 = arith.constant 5.000000e-01 : f32
    %73 = vector.broadcast %cst_34 : f32 to vector<8x128xf32>
    %74 = arith.mulf %73, %72 : vector<8x128xf32>
    %75 = math.tanh %74 : vector<8x128xf32>
    %cst_35 = arith.constant 5.000000e-01 : f32
    %76 = vector.broadcast %cst_35 : f32 to vector<8x128xf32>
    %77 = arith.mulf %76, %75 : vector<8x128xf32>
    %cst_36 = arith.constant 5.000000e-01 : f32
    %78 = vector.broadcast %cst_36 : f32 to vector<8x128xf32>
    %79 = arith.addf %77, %78 : vector<8x128xf32>
    %80 = arith.mulf %69, %11 : vector<8x128xf32>
    %81 = arith.mulf %61, %71 : vector<8x128xf32>
    %82 = arith.addf %80, %81 : vector<8x128xf32>
    %83 = math.tanh %82 : vector<8x128xf32>
    %84 = arith.mulf %79, %83 : vector<8x128xf32>
    %85 = arith.index_cast %c0_i32 : i32 to index
    %c0_37 = arith.constant 0 : index
    %c0_38 = arith.constant 0 : index
    %86 = vector.load %arg5[%85, %c0_37, %c0_38] : memref<8x8x256xf32, #tpu.memory_space<vmem>>, vector<1x8x128xf32>
    %87 = vector.shape_cast %86 : vector<1x8x128xf32> to vector<8x128xf32>
    %88 = vector.shape_cast %53 : vector<8x128xf32> to vector<1x8x128xf32>
    tpu.vector_store %arg5[%85, %c0_37, %c0_38], %88 {strides = array<i32>} : memref<8x8x256xf32, #tpu.memory_space<vmem>>, vector<1x8x128xf32>,
    %89 = arith.index_cast %12 : i32 to index
    %c0_39 = arith.constant 0 : index
    %c128 = arith.constant 128 : index
    %90 = vector.load %arg5[%89, %c0_39, %c128] : memref<8x8x256xf32, #tpu.memory_space<vmem>>, vector<1x8x128xf32>
    %91 = vector.shape_cast %90 : vector<1x8x128xf32> to vector<8x128xf32>
    %92 = vector.shape_cast %84 : vector<8x128xf32> to vector<1x8x128xf32>
    tpu.vector_store %arg5[%89, %c0_39, %c128], %92 {strides = array<i32>} : memref<8x8x256xf32, #tpu.memory_space<vmem>>, vector<1x8x128xf32>,
    %c1_i32 = arith.constant 1 : i32
    %c7_i32_40 = arith.constant 7 : i32
    %93 = arith.subi %c7_i32_40, %c1_i32 : i32
    %94 = arith.index_cast %c1_i32 : i32 to index
    %c0_41 = arith.constant 0 : index
    %c0_42 = arith.constant 0 : index
    %95 = vector.load %arg6[%94, %c0_41, %c0_42] : memref<8x8x1024xf32, #tpu.memory_space<vmem>>, vector<1x8x512xf32>
    %96 = vector.shape_cast %95 : vector<1x8x512xf32> to vector<8x512xf32>
    %cst_43 = arith.constant dense<0.000000e+00> : vector<8x512xf32>
    %97 = tpu.matmul %53, %9, %cst_43 {dimension_numbers = #tpu.dot_dimension_numbers<[1], [0], [0], [1], [0, 0, 1, 1], [], []>} : vector<8x128xf32>, vector<128x512xf32>, vector<8x512xf32> -> vector<8x512xf32>
    %98 = arith.addf %96, %97 : vector<8x512xf32>
    %99 = arith.index_cast %93 : i32 to index
    %c0_44 = arith.constant 0 : index
    %c512_45 = arith.constant 512 : index
    %100 = vector.load %arg6[%99, %c0_44, %c512_45] : memref<8x8x1024xf32, #tpu.memory_space<vmem>>, vector<1x8x512xf32>
    %101 = vector.shape_cast %100 : vector<1x8x512xf32> to vector<8x512xf32>
    %cst_46 = arith.constant dense<0.000000e+00> : vector<8x512xf32>
    %102 = tpu.matmul %84, %10, %cst_46 {dimension_numbers = #tpu.dot_dimension_numbers<[1], [0], [0], [1], [0, 0, 1, 1], [], []>} : vector<8x128xf32>, vector<128x512xf32>, vector<8x512xf32> -> vector<8x512xf32>
    %103 = arith.addf %101, %102 : vector<8x512xf32>
    %104 = vector.extract_strided_slice %98 {offsets = [0, 0], sizes = [8, 128], strides = [1, 1]} : vector<8x512xf32> to vector<8x128xf32>
    %cst_47 = arith.constant 5.000000e-01 : f32
    %105 = vector.broadcast %cst_47 : f32 to vector<8x128xf32>
    %106 = arith.mulf %105, %104 : vector<8x128xf32>
    %107 = math.tanh %106 : vector<8x128xf32>
    %cst_48 = arith.constant 5.000000e-01 : f32
    %108 = vector.broadcast %cst_48 : f32 to vector<8x128xf32>
    %109 = arith.mulf %108, %107 : vector<8x128xf32>
    %cst_49 = arith.constant 5.000000e-01 : f32
    %110 = vector.broadcast %cst_49 : f32 to vector<8x128xf32>
    %111 = arith.addf %109, %110 : vector<8x128xf32>
    %112 = vector.extract_strided_slice %98 {offsets = [0, 128], sizes = [8, 128], strides = [1, 1]} : vector<8x512xf32> to vector<8x128xf32>
    %cst_50 = arith.constant 5.000000e-01 : f32
    %113 = vector.broadcast %cst_50 : f32 to vector<8x128xf32>
    %114 = arith.mulf %113, %112 : vector<8x128xf32>
    %115 = math.tanh %114 : vector<8x128xf32>
    %cst_51 = arith.constant 5.000000e-01 : f32
    %116 = vector.broadcast %cst_51 : f32 to vector<8x128xf32>
    %117 = arith.mulf %116, %115 : vector<8x128xf32>
    %cst_52 = arith.constant 5.000000e-01 : f32
    %118 = vector.broadcast %cst_52 : f32 to vector<8x128xf32>
    %119 = arith.addf %117, %118 : vector<8x128xf32>
    %120 = vector.extract_strided_slice %98 {offsets = [0, 256], sizes = [8, 128], strides = [1, 1]} : vector<8x512xf32> to vector<8x128xf32>
    %121 = math.tanh %120 : vector<8x128xf32>
    %122 = vector.extract_strided_slice %98 {offsets = [0, 384], sizes = [8, 128], strides = [1, 1]} : vector<8x512xf32> to vector<8x128xf32>
    %cst_53 = arith.constant 5.000000e-01 : f32
    %123 = vector.broadcast %cst_53 : f32 to vector<8x128xf32>
    %124 = arith.mulf %123, %122 : vector<8x128xf32>
    %125 = math.tanh %124 : vector<8x128xf32>
    %cst_54 = arith.constant 5.000000e-01 : f32
    %126 = vector.broadcast %cst_54 : f32 to vector<8x128xf32>
    %127 = arith.mulf %126, %125 : vector<8x128xf32>
    %cst_55 = arith.constant 5.000000e-01 : f32
    %128 = vector.broadcast %cst_55 : f32 to vector<8x128xf32>
    %129 = arith.addf %127, %128 : vector<8x128xf32>
    %130 = arith.mulf %119, %51 : vector<8x128xf32>
    %131 = arith.mulf %111, %121 : vector<8x128xf32>
    %132 = arith.addf %130, %131 : vector<8x128xf32>
    %133 = math.tanh %132 : vector<8x128xf32>
    %134 = arith.mulf %129, %133 : vector<8x128xf32>
    %135 = vector.extract_strided_slice %103 {offsets = [0, 0], sizes = [8, 128], strides = [1, 1]} : vector<8x512xf32> to vector<8x128xf32>
    %cst_56 = arith.constant 5.000000e-01 : f32
    %136 = vector.broadcast %cst_56 : f32 to vector<8x128xf32>
    %137 = arith.mulf %136, %135 : vector<8x128xf32>
    %138 = math.tanh %137 : vector<8x128xf32>
    %cst_57 = arith.constant 5.000000e-01 : f32
    %139 = vector.broadcast %cst_57 : f32 to vector<8x128xf32>
    %140 = arith.mulf %139, %138 : vector<8x128xf32>
    %cst_58 = arith.constant 5.000000e-01 : f32
    %141 = vector.broadcast %cst_58 : f32 to vector<8x128xf32>
    %142 = arith.addf %140, %141 : vector<8x128xf32>
    %143 = vector.extract_strided_slice %103 {offsets = [0, 128], sizes = [8, 128], strides = [1, 1]} : vector<8x512xf32> to vector<8x128xf32>
    %cst_59 = arith.constant 5.000000e-01 : f32
    %144 = vector.broadcast %cst_59 : f32 to vector<8x128xf32>
    %145 = arith.mulf %144, %143 : vector<8x128xf32>
    %146 = math.tanh %145 : vector<8x128xf32>
    %cst_60 = arith.constant 5.000000e-01 : f32
    %147 = vector.broadcast %cst_60 : f32 to vector<8x128xf32>
    %148 = arith.mulf %147, %146 : vector<8x128xf32>
    %cst_61 = arith.constant 5.000000e-01 : f32
    %149 = vector.broadcast %cst_61 : f32 to vector<8x128xf32>
    %150 = arith.addf %148, %149 : vector<8x128xf32>
    %151 = vector.extract_strided_slice %103 {offsets = [0, 256], sizes = [8, 128], strides = [1, 1]} : vector<8x512xf32> to vector<8x128xf32>
    %152 = math.tanh %151 : vector<8x128xf32>
    %153 = vector.extract_strided_slice %103 {offsets = [0, 384], sizes = [8, 128], strides = [1, 1]} : vector<8x512xf32> to vector<8x128xf32>
    %cst_62 = arith.constant 5.000000e-01 : f32
    %154 = vector.broadcast %cst_62 : f32 to vector<8x128xf32>
    %155 = arith.mulf %154, %153 : vector<8x128xf32>
    %156 = math.tanh %155 : vector<8x128xf32>
    %cst_63 = arith.constant 5.000000e-01 : f32
    %157 = vector.broadcast %cst_63 : f32 to vector<8x128xf32>
    %158 = arith.mulf %157, %156 : vector<8x128xf32>
    %cst_64 = arith.constant 5.000000e-01 : f32
    %159 = vector.broadcast %cst_64 : f32 to vector<8x128xf32>
    %160 = arith.addf %158, %159 : vector<8x128xf32>
    %161 = arith.mulf %150, %82 : vector<8x128xf32>
    %162 = arith.mulf %142, %152 : vector<8x128xf32>
    %163 = arith.addf %161, %162 : vector<8x128xf32>
    %164 = math.tanh %163 : vector<8x128xf32>
    %165 = arith.mulf %160, %164 : vector<8x128xf32>
    %166 = arith.index_cast %c1_i32 : i32 to index
    %c0_65 = arith.constant 0 : index
    %c0_66 = arith.constant 0 : index
    %167 = vector.load %arg5[%166, %c0_65, %c0_66] : memref<8x8x256xf32, #tpu.memory_space<vmem>>, vector<1x8x128xf32>
    %168 = vector.shape_cast %167 : vector<1x8x128xf32> to vector<8x128xf32>
    %169 = vector.shape_cast %134 : vector<8x128xf32> to vector<1x8x128xf32>
    tpu.vector_store %arg5[%166, %c0_65, %c0_66], %169 {strides = array<i32>} : memref<8x8x256xf32, #tpu.memory_space<vmem>>, vector<1x8x128xf32>,
    %170 = arith.index_cast %93 : i32 to index
    %c0_67 = arith.constant 0 : index
    %c128_68 = arith.constant 128 : index
    %171 = vector.load %arg5[%170, %c0_67, %c128_68] : memref<8x8x256xf32, #tpu.memory_space<vmem>>, vector<1x8x128xf32>
    %172 = vector.shape_cast %171 : vector<1x8x128xf32> to vector<8x128xf32>
    %173 = vector.shape_cast %165 : vector<8x128xf32> to vector<1x8x128xf32>
    tpu.vector_store %arg5[%170, %c0_67, %c128_68], %173 {strides = array<i32>} : memref<8x8x256xf32, #tpu.memory_space<vmem>>, vector<1x8x128xf32>,
    %c2_i32 = arith.constant 2 : i32
    %c7_i32_69 = arith.constant 7 : i32
    %174 = arith.subi %c7_i32_69, %c2_i32 : i32
    %175 = arith.index_cast %c2_i32 : i32 to index
    %c0_70 = arith.constant 0 : index
    %c0_71 = arith.constant 0 : index
    %176 = vector.load %arg6[%175, %c0_70, %c0_71] : memref<8x8x1024xf32, #tpu.memory_space<vmem>>, vector<1x8x512xf32>
    %177 = vector.shape_cast %176 : vector<1x8x512xf32> to vector<8x512xf32>
    %cst_72 = arith.constant dense<0.000000e+00> : vector<8x512xf32>
    %178 = tpu.matmul %134, %9, %cst_72 {dimension_numbers = #tpu.dot_dimension_numbers<[1], [0], [0], [1], [0, 0, 1, 1], [], []>} : vector<8x128xf32>, vector<128x512xf32>, vector<8x512xf32> -> vector<8x512xf32>
    %179 = arith.addf %177, %178 : vector<8x512xf32>
    %180 = arith.index_cast %174 : i32 to index
    %c0_73 = arith.constant 0 : index
    %c512_74 = arith.constant 512 : index
    %181 = vector.load %arg6[%180, %c0_73, %c512_74] : memref<8x8x1024xf32, #tpu.memory_space<vmem>>, vector<1x8x512xf32>
    %182 = vector.shape_cast %181 : vector<1x8x512xf32> to vector<8x512xf32>
    %cst_75 = arith.constant dense<0.000000e+00> : vector<8x512xf32>
    %183 = tpu.matmul %165, %10, %cst_75 {dimension_numbers = #tpu.dot_dimension_numbers<[1], [0], [0], [1], [0, 0, 1, 1], [], []>} : vector<8x128xf32>, vector<128x512xf32>, vector<8x512xf32> -> vector<8x512xf32>
    %184 = arith.addf %182, %183 : vector<8x512xf32>
    %185 = vector.extract_strided_slice %179 {offsets = [0, 0], sizes = [8, 128], strides = [1, 1]} : vector<8x512xf32> to vector<8x128xf32>
    %cst_76 = arith.constant 5.000000e-01 : f32
    %186 = vector.broadcast %cst_76 : f32 to vector<8x128xf32>
    %187 = arith.mulf %186, %185 : vector<8x128xf32>
    %188 = math.tanh %187 : vector<8x128xf32>
    %cst_77 = arith.constant 5.000000e-01 : f32
    %189 = vector.broadcast %cst_77 : f32 to vector<8x128xf32>
    %190 = arith.mulf %189, %188 : vector<8x128xf32>
    %cst_78 = arith.constant 5.000000e-01 : f32
    %191 = vector.broadcast %cst_78 : f32 to vector<8x128xf32>
    %192 = arith.addf %190, %191 : vector<8x128xf32>
    %193 = vector.extract_strided_slice %179 {offsets = [0, 128], sizes = [8, 128], strides = [1, 1]} : vector<8x512xf32> to vector<8x128xf32>
    %cst_79 = arith.constant 5.000000e-01 : f32
    %194 = vector.broadcast %cst_79 : f32 to vector<8x128xf32>
    %195 = arith.mulf %194, %193 : vector<8x128xf32>
    %196 = math.tanh %195 : vector<8x128xf32>
    %cst_80 = arith.constant 5.000000e-01 : f32
    %197 = vector.broadcast %cst_80 : f32 to vector<8x128xf32>
    %198 = arith.mulf %197, %196 : vector<8x128xf32>
    %cst_81 = arith.constant 5.000000e-01 : f32
    %199 = vector.broadcast %cst_81 : f32 to vector<8x128xf32>
    %200 = arith.addf %198, %199 : vector<8x128xf32>
    %201 = vector.extract_strided_slice %179 {offsets = [0, 256], sizes = [8, 128], strides = [1, 1]} : vector<8x512xf32> to vector<8x128xf32>
    %202 = math.tanh %201 : vector<8x128xf32>
    %203 = vector.extract_strided_slice %179 {offsets = [0, 384], sizes = [8, 128], strides = [1, 1]} : vector<8x512xf32> to vector<8x128xf32>
    %cst_82 = arith.constant 5.000000e-01 : f32
    %204 = vector.broadcast %cst_82 : f32 to vector<8x128xf32>
    %205 = arith.mulf %204, %203 : vector<8x128xf32>
    %206 = math.tanh %205 : vector<8x128xf32>
    %cst_83 = arith.constant 5.000000e-01 : f32
    %207 = vector.broadcast %cst_83 : f32 to vector<8x128xf32>
    %208 = arith.mulf %207, %206 : vector<8x128xf32>
    %cst_84 = arith.constant 5.000000e-01 : f32
    %209 = vector.broadcast %cst_84 : f32 to vector<8x128xf32>
    %210 = arith.addf %208, %209 : vector<8x128xf32>
    %211 = arith.mulf %200, %132 : vector<8x128xf32>
    %212 = arith.mulf %192, %202 : vector<8x128xf32>
    %213 = arith.addf %211, %212 : vector<8x128xf32>
    %214 = math.tanh %213 : vector<8x128xf32>
    %215 = arith.mulf %210, %214 : vector<8x128xf32>
    %216 = vector.extract_strided_slice %184 {offsets = [0, 0], sizes = [8, 128], strides = [1, 1]} : vector<8x512xf32> to vector<8x128xf32>
    %cst_85 = arith.constant 5.000000e-01 : f32
    %217 = vector.broadcast %cst_85 : f32 to vector<8x128xf32>
    %218 = arith.mulf %217, %216 : vector<8x128xf32>
    %219 = math.tanh %218 : vector<8x128xf32>
    %cst_86 = arith.constant 5.000000e-01 : f32
    %220 = vector.broadcast %cst_86 : f32 to vector<8x128xf32>
    %221 = arith.mulf %220, %219 : vector<8x128xf32>
    %cst_87 = arith.constant 5.000000e-01 : f32
    %222 = vector.broadcast %cst_87 : f32 to vector<8x128xf32>
    %223 = arith.addf %221, %222 : vector<8x128xf32>
    %224 = vector.extract_strided_slice %184 {offsets = [0, 128], sizes = [8, 128], strides = [1, 1]} : vector<8x512xf32> to vector<8x128xf32>
    %cst_88 = arith.constant 5.000000e-01 : f32
    %225 = vector.broadcast %cst_88 : f32 to vector<8x128xf32>
    %226 = arith.mulf %225, %224 : vector<8x128xf32>
    %227 = math.tanh %226 : vector<8x128xf32>
    %cst_89 = arith.constant 5.000000e-01 : f32
    %228 = vector.broadcast %cst_89 : f32 to vector<8x128xf32>
    %229 = arith.mulf %228, %227 : vector<8x128xf32>
    %cst_90 = arith.constant 5.000000e-01 : f32
    %230 = vector.broadcast %cst_90 : f32 to vector<8x128xf32>
    %231 = arith.addf %229, %230 : vector<8x128xf32>
    %232 = vector.extract_strided_slice %184 {offsets = [0, 256], sizes = [8, 128], strides = [1, 1]} : vector<8x512xf32> to vector<8x128xf32>
    %233 = math.tanh %232 : vector<8x128xf32>
    %234 = vector.extract_strided_slice %184 {offsets = [0, 384], sizes = [8, 128], strides = [1, 1]} : vector<8x512xf32> to vector<8x128xf32>
    %cst_91 = arith.constant 5.000000e-01 : f32
    %235 = vector.broadcast %cst_91 : f32 to vector<8x128xf32>
    %236 = arith.mulf %235, %234 : vector<8x128xf32>
    %237 = math.tanh %236 : vector<8x128xf32>
    %cst_92 = arith.constant 5.000000e-01 : f32
    %238 = vector.broadcast %cst_92 : f32 to vector<8x128xf32>
    %239 = arith.mulf %238, %237 : vector<8x128xf32>
    %cst_93 = arith.constant 5.000000e-01 : f32
    %240 = vector.broadcast %cst_93 : f32 to vector<8x128xf32>
    %241 = arith.addf %239, %240 : vector<8x128xf32>
    %242 = arith.mulf %231, %163 : vector<8x128xf32>
    %243 = arith.mulf %223, %233 : vector<8x128xf32>
    %244 = arith.addf %242, %243 : vector<8x128xf32>
    %245 = math.tanh %244 : vector<8x128xf32>
    %246 = arith.mulf %241, %245 : vector<8x128xf32>
    %247 = arith.index_cast %c2_i32 : i32 to index
    %c0_94 = arith.constant 0 : index
    %c0_95 = arith.constant 0 : index
    %248 = vector.load %arg5[%247, %c0_94, %c0_95] : memref<8x8x256xf32, #tpu.memory_space<vmem>>, vector<1x8x128xf32>
    %249 = vector.shape_cast %248 : vector<1x8x128xf32> to vector<8x128xf32>
    %250 = vector.shape_cast %215 : vector<8x128xf32> to vector<1x8x128xf32>
    tpu.vector_store %arg5[%247, %c0_94, %c0_95], %250 {strides = array<i32>} : memref<8x8x256xf32, #tpu.memory_space<vmem>>, vector<1x8x128xf32>,
    %251 = arith.index_cast %174 : i32 to index
    %c0_96 = arith.constant 0 : index
    %c128_97 = arith.constant 128 : index
    %252 = vector.load %arg5[%251, %c0_96, %c128_97] : memref<8x8x256xf32, #tpu.memory_space<vmem>>, vector<1x8x128xf32>
    %253 = vector.shape_cast %252 : vector<1x8x128xf32> to vector<8x128xf32>
    %254 = vector.shape_cast %246 : vector<8x128xf32> to vector<1x8x128xf32>
    tpu.vector_store %arg5[%251, %c0_96, %c128_97], %254 {strides = array<i32>} : memref<8x8x256xf32, #tpu.memory_space<vmem>>, vector<1x8x128xf32>,
    %c3_i32 = arith.constant 3 : i32
    %c7_i32_98 = arith.constant 7 : i32
    %255 = arith.subi %c7_i32_98, %c3_i32 : i32
    %256 = arith.index_cast %c3_i32 : i32 to index
    %c0_99 = arith.constant 0 : index
    %c0_100 = arith.constant 0 : index
    %257 = vector.load %arg6[%256, %c0_99, %c0_100] : memref<8x8x1024xf32, #tpu.memory_space<vmem>>, vector<1x8x512xf32>
    %258 = vector.shape_cast %257 : vector<1x8x512xf32> to vector<8x512xf32>
    %cst_101 = arith.constant dense<0.000000e+00> : vector<8x512xf32>
    %259 = tpu.matmul %215, %9, %cst_101 {dimension_numbers = #tpu.dot_dimension_numbers<[1], [0], [0], [1], [0, 0, 1, 1], [], []>} : vector<8x128xf32>, vector<128x512xf32>, vector<8x512xf32> -> vector<8x512xf32>
    %260 = arith.addf %258, %259 : vector<8x512xf32>
    %261 = arith.index_cast %255 : i32 to index
    %c0_102 = arith.constant 0 : index
    %c512_103 = arith.constant 512 : index
    %262 = vector.load %arg6[%261, %c0_102, %c512_103] : memref<8x8x1024xf32, #tpu.memory_space<vmem>>, vector<1x8x512xf32>
    %263 = vector.shape_cast %262 : vector<1x8x512xf32> to vector<8x512xf32>
    %cst_104 = arith.constant dense<0.000000e+00> : vector<8x512xf32>
    %264 = tpu.matmul %246, %10, %cst_104 {dimension_numbers = #tpu.dot_dimension_numbers<[1], [0], [0], [1], [0, 0, 1, 1], [], []>} : vector<8x128xf32>, vector<128x512xf32>, vector<8x512xf32> -> vector<8x512xf32>
    %265 = arith.addf %263, %264 : vector<8x512xf32>
    %266 = vector.extract_strided_slice %260 {offsets = [0, 0], sizes = [8, 128], strides = [1, 1]} : vector<8x512xf32> to vector<8x128xf32>
    %cst_105 = arith.constant 5.000000e-01 : f32
    %267 = vector.broadcast %cst_105 : f32 to vector<8x128xf32>
    %268 = arith.mulf %267, %266 : vector<8x128xf32>
    %269 = math.tanh %268 : vector<8x128xf32>
    %cst_106 = arith.constant 5.000000e-01 : f32
    %270 = vector.broadcast %cst_106 : f32 to vector<8x128xf32>
    %271 = arith.mulf %270, %269 : vector<8x128xf32>
    %cst_107 = arith.constant 5.000000e-01 : f32
    %272 = vector.broadcast %cst_107 : f32 to vector<8x128xf32>
    %273 = arith.addf %271, %272 : vector<8x128xf32>
    %274 = vector.extract_strided_slice %260 {offsets = [0, 128], sizes = [8, 128], strides = [1, 1]} : vector<8x512xf32> to vector<8x128xf32>
    %cst_108 = arith.constant 5.000000e-01 : f32
    %275 = vector.broadcast %cst_108 : f32 to vector<8x128xf32>
    %276 = arith.mulf %275, %274 : vector<8x128xf32>
    %277 = math.tanh %276 : vector<8x128xf32>
    %cst_109 = arith.constant 5.000000e-01 : f32
    %278 = vector.broadcast %cst_109 : f32 to vector<8x128xf32>
    %279 = arith.mulf %278, %277 : vector<8x128xf32>
    %cst_110 = arith.constant 5.000000e-01 : f32
    %280 = vector.broadcast %cst_110 : f32 to vector<8x128xf32>
    %281 = arith.addf %279, %280 : vector<8x128xf32>
    %282 = vector.extract_strided_slice %260 {offsets = [0, 256], sizes = [8, 128], strides = [1, 1]} : vector<8x512xf32> to vector<8x128xf32>
    %283 = math.tanh %282 : vector<8x128xf32>
    %284 = vector.extract_strided_slice %260 {offsets = [0, 384], sizes = [8, 128], strides = [1, 1]} : vector<8x512xf32> to vector<8x128xf32>
    %cst_111 = arith.constant 5.000000e-01 : f32
    %285 = vector.broadcast %cst_111 : f32 to vector<8x128xf32>
    %286 = arith.mulf %285, %284 : vector<8x128xf32>
    %287 = math.tanh %286 : vector<8x128xf32>
    %cst_112 = arith.constant 5.000000e-01 : f32
    %288 = vector.broadcast %cst_112 : f32 to vector<8x128xf32>
    %289 = arith.mulf %288, %287 : vector<8x128xf32>
    %cst_113 = arith.constant 5.000000e-01 : f32
    %290 = vector.broadcast %cst_113 : f32 to vector<8x128xf32>
    %291 = arith.addf %289, %290 : vector<8x128xf32>
    %292 = arith.mulf %281, %213 : vector<8x128xf32>
    %293 = arith.mulf %273, %283 : vector<8x128xf32>
    %294 = arith.addf %292, %293 : vector<8x128xf32>
    %295 = math.tanh %294 : vector<8x128xf32>
    %296 = arith.mulf %291, %295 : vector<8x128xf32>
    %297 = vector.extract_strided_slice %265 {offsets = [0, 0], sizes = [8, 128], strides = [1, 1]} : vector<8x512xf32> to vector<8x128xf32>
    %cst_114 = arith.constant 5.000000e-01 : f32
    %298 = vector.broadcast %cst_114 : f32 to vector<8x128xf32>
    %299 = arith.mulf %298, %297 : vector<8x128xf32>
    %300 = math.tanh %299 : vector<8x128xf32>
    %cst_115 = arith.constant 5.000000e-01 : f32
    %301 = vector.broadcast %cst_115 : f32 to vector<8x128xf32>
    %302 = arith.mulf %301, %300 : vector<8x128xf32>
    %cst_116 = arith.constant 5.000000e-01 : f32
    %303 = vector.broadcast %cst_116 : f32 to vector<8x128xf32>
    %304 = arith.addf %302, %303 : vector<8x128xf32>
    %305 = vector.extract_strided_slice %265 {offsets = [0, 128], sizes = [8, 128], strides = [1, 1]} : vector<8x512xf32> to vector<8x128xf32>
    %cst_117 = arith.constant 5.000000e-01 : f32
    %306 = vector.broadcast %cst_117 : f32 to vector<8x128xf32>
    %307 = arith.mulf %306, %305 : vector<8x128xf32>
    %308 = math.tanh %307 : vector<8x128xf32>
    %cst_118 = arith.constant 5.000000e-01 : f32
    %309 = vector.broadcast %cst_118 : f32 to vector<8x128xf32>
    %310 = arith.mulf %309, %308 : vector<8x128xf32>
    %cst_119 = arith.constant 5.000000e-01 : f32
    %311 = vector.broadcast %cst_119 : f32 to vector<8x128xf32>
    %312 = arith.addf %310, %311 : vector<8x128xf32>
    %313 = vector.extract_strided_slice %265 {offsets = [0, 256], sizes = [8, 128], strides = [1, 1]} : vector<8x512xf32> to vector<8x128xf32>
    %314 = math.tanh %313 : vector<8x128xf32>
    %315 = vector.extract_strided_slice %265 {offsets = [0, 384], sizes = [8, 128], strides = [1, 1]} : vector<8x512xf32> to vector<8x128xf32>
    %cst_120 = arith.constant 5.000000e-01 : f32
    %316 = vector.broadcast %cst_120 : f32 to vector<8x128xf32>
    %317 = arith.mulf %316, %315 : vector<8x128xf32>
    %318 = math.tanh %317 : vector<8x128xf32>
    %cst_121 = arith.constant 5.000000e-01 : f32
    %319 = vector.broadcast %cst_121 : f32 to vector<8x128xf32>
    %320 = arith.mulf %319, %318 : vector<8x128xf32>
    %cst_122 = arith.constant 5.000000e-01 : f32
    %321 = vector.broadcast %cst_122 : f32 to vector<8x128xf32>
    %322 = arith.addf %320, %321 : vector<8x128xf32>
    %323 = arith.mulf %312, %244 : vector<8x128xf32>
    %324 = arith.mulf %304, %314 : vector<8x128xf32>
    %325 = arith.addf %323, %324 : vector<8x128xf32>
    %326 = math.tanh %325 : vector<8x128xf32>
    %327 = arith.mulf %322, %326 : vector<8x128xf32>
    %328 = arith.index_cast %c3_i32 : i32 to index
    %c0_123 = arith.constant 0 : index
    %c0_124 = arith.constant 0 : index
    %329 = vector.load %arg5[%328, %c0_123, %c0_124] : memref<8x8x256xf32, #tpu.memory_space<vmem>>, vector<1x8x128xf32>
    %330 = vector.shape_cast %329 : vector<1x8x128xf32> to vector<8x128xf32>
    %331 = vector.shape_cast %296 : vector<8x128xf32> to vector<1x8x128xf32>
    tpu.vector_store %arg5[%328, %c0_123, %c0_124], %331 {strides = array<i32>} : memref<8x8x256xf32, #tpu.memory_space<vmem>>, vector<1x8x128xf32>,
    %332 = arith.index_cast %255 : i32 to index
    %c0_125 = arith.constant 0 : index
    %c128_126 = arith.constant 128 : index
    %333 = vector.load %arg5[%332, %c0_125, %c128_126] : memref<8x8x256xf32, #tpu.memory_space<vmem>>, vector<1x8x128xf32>
    %334 = vector.shape_cast %333 : vector<1x8x128xf32> to vector<8x128xf32>
    %335 = vector.shape_cast %327 : vector<8x128xf32> to vector<1x8x128xf32>
    tpu.vector_store %arg5[%332, %c0_125, %c128_126], %335 {strides = array<i32>} : memref<8x8x256xf32, #tpu.memory_space<vmem>>, vector<1x8x128xf32>,
    %c4_i32 = arith.constant 4 : i32
    %c7_i32_127 = arith.constant 7 : i32
    %336 = arith.subi %c7_i32_127, %c4_i32 : i32
    %337 = arith.index_cast %c4_i32 : i32 to index
    %c0_128 = arith.constant 0 : index
    %c0_129 = arith.constant 0 : index
    %338 = vector.load %arg6[%337, %c0_128, %c0_129] : memref<8x8x1024xf32, #tpu.memory_space<vmem>>, vector<1x8x512xf32>
    %339 = vector.shape_cast %338 : vector<1x8x512xf32> to vector<8x512xf32>
    %cst_130 = arith.constant dense<0.000000e+00> : vector<8x512xf32>
    %340 = tpu.matmul %296, %9, %cst_130 {dimension_numbers = #tpu.dot_dimension_numbers<[1], [0], [0], [1], [0, 0, 1, 1], [], []>} : vector<8x128xf32>, vector<128x512xf32>, vector<8x512xf32> -> vector<8x512xf32>
    %341 = arith.addf %339, %340 : vector<8x512xf32>
    %342 = arith.index_cast %336 : i32 to index
    %c0_131 = arith.constant 0 : index
    %c512_132 = arith.constant 512 : index
    %343 = vector.load %arg6[%342, %c0_131, %c512_132] : memref<8x8x1024xf32, #tpu.memory_space<vmem>>, vector<1x8x512xf32>
    %344 = vector.shape_cast %343 : vector<1x8x512xf32> to vector<8x512xf32>
    %cst_133 = arith.constant dense<0.000000e+00> : vector<8x512xf32>
    %345 = tpu.matmul %327, %10, %cst_133 {dimension_numbers = #tpu.dot_dimension_numbers<[1], [0], [0], [1], [0, 0, 1, 1], [], []>} : vector<8x128xf32>, vector<128x512xf32>, vector<8x512xf32> -> vector<8x512xf32>
    %346 = arith.addf %344, %345 : vector<8x512xf32>
    %347 = vector.extract_strided_slice %341 {offsets = [0, 0], sizes = [8, 128], strides = [1, 1]} : vector<8x512xf32> to vector<8x128xf32>
    %cst_134 = arith.constant 5.000000e-01 : f32
    %348 = vector.broadcast %cst_134 : f32 to vector<8x128xf32>
    %349 = arith.mulf %348, %347 : vector<8x128xf32>
    %350 = math.tanh %349 : vector<8x128xf32>
    %cst_135 = arith.constant 5.000000e-01 : f32
    %351 = vector.broadcast %cst_135 : f32 to vector<8x128xf32>
    %352 = arith.mulf %351, %350 : vector<8x128xf32>
    %cst_136 = arith.constant 5.000000e-01 : f32
    %353 = vector.broadcast %cst_136 : f32 to vector<8x128xf32>
    %354 = arith.addf %352, %353 : vector<8x128xf32>
    %355 = vector.extract_strided_slice %341 {offsets = [0, 128], sizes = [8, 128], strides = [1, 1]} : vector<8x512xf32> to vector<8x128xf32>
    %cst_137 = arith.constant 5.000000e-01 : f32
    %356 = vector.broadcast %cst_137 : f32 to vector<8x128xf32>
    %357 = arith.mulf %356, %355 : vector<8x128xf32>
    %358 = math.tanh %357 : vector<8x128xf32>
    %cst_138 = arith.constant 5.000000e-01 : f32
    %359 = vector.broadcast %cst_138 : f32 to vector<8x128xf32>
    %360 = arith.mulf %359, %358 : vector<8x128xf32>
    %cst_139 = arith.constant 5.000000e-01 : f32
    %361 = vector.broadcast %cst_139 : f32 to vector<8x128xf32>
    %362 = arith.addf %360, %361 : vector<8x128xf32>
    %363 = vector.extract_strided_slice %341 {offsets = [0, 256], sizes = [8, 128], strides = [1, 1]} : vector<8x512xf32> to vector<8x128xf32>
    %364 = math.tanh %363 : vector<8x128xf32>
    %365 = vector.extract_strided_slice %341 {offsets = [0, 384], sizes = [8, 128], strides = [1, 1]} : vector<8x512xf32> to vector<8x128xf32>
    %cst_140 = arith.constant 5.000000e-01 : f32
    %366 = vector.broadcast %cst_140 : f32 to vector<8x128xf32>
    %367 = arith.mulf %366, %365 : vector<8x128xf32>
    %368 = math.tanh %367 : vector<8x128xf32>
    %cst_141 = arith.constant 5.000000e-01 : f32
    %369 = vector.broadcast %cst_141 : f32 to vector<8x128xf32>
    %370 = arith.mulf %369, %368 : vector<8x128xf32>
    %cst_142 = arith.constant 5.000000e-01 : f32
    %371 = vector.broadcast %cst_142 : f32 to vector<8x128xf32>
    %372 = arith.addf %370, %371 : vector<8x128xf32>
    %373 = arith.mulf %362, %294 : vector<8x128xf32>
    %374 = arith.mulf %354, %364 : vector<8x128xf32>
    %375 = arith.addf %373, %374 : vector<8x128xf32>
    %376 = math.tanh %375 : vector<8x128xf32>
    %377 = arith.mulf %372, %376 : vector<8x128xf32>
    %378 = vector.extract_strided_slice %346 {offsets = [0, 0], sizes = [8, 128], strides = [1, 1]} : vector<8x512xf32> to vector<8x128xf32>
    %cst_143 = arith.constant 5.000000e-01 : f32
    %379 = vector.broadcast %cst_143 : f32 to vector<8x128xf32>
    %380 = arith.mulf %379, %378 : vector<8x128xf32>
    %381 = math.tanh %380 : vector<8x128xf32>
    %cst_144 = arith.constant 5.000000e-01 : f32
    %382 = vector.broadcast %cst_144 : f32 to vector<8x128xf32>
    %383 = arith.mulf %382, %381 : vector<8x128xf32>
    %cst_145 = arith.constant 5.000000e-01 : f32
    %384 = vector.broadcast %cst_145 : f32 to vector<8x128xf32>
    %385 = arith.addf %383, %384 : vector<8x128xf32>
    %386 = vector.extract_strided_slice %346 {offsets = [0, 128], sizes = [8, 128], strides = [1, 1]} : vector<8x512xf32> to vector<8x128xf32>
    %cst_146 = arith.constant 5.000000e-01 : f32
    %387 = vector.broadcast %cst_146 : f32 to vector<8x128xf32>
    %388 = arith.mulf %387, %386 : vector<8x128xf32>
    %389 = math.tanh %388 : vector<8x128xf32>
    %cst_147 = arith.constant 5.000000e-01 : f32
    %390 = vector.broadcast %cst_147 : f32 to vector<8x128xf32>
    %391 = arith.mulf %390, %389 : vector<8x128xf32>
    %cst_148 = arith.constant 5.000000e-01 : f32
    %392 = vector.broadcast %cst_148 : f32 to vector<8x128xf32>
    %393 = arith.addf %391, %392 : vector<8x128xf32>
    %394 = vector.extract_strided_slice %346 {offsets = [0, 256], sizes = [8, 128], strides = [1, 1]} : vector<8x512xf32> to vector<8x128xf32>
    %395 = math.tanh %394 : vector<8x128xf32>
    %396 = vector.extract_strided_slice %346 {offsets = [0, 384], sizes = [8, 128], strides = [1, 1]} : vector<8x512xf32> to vector<8x128xf32>
    %cst_149 = arith.constant 5.000000e-01 : f32
    %397 = vector.broadcast %cst_149 : f32 to vector<8x128xf32>
    %398 = arith.mulf %397, %396 : vector<8x128xf32>
    %399 = math.tanh %398 : vector<8x128xf32>
    %cst_150 = arith.constant 5.000000e-01 : f32
    %400 = vector.broadcast %cst_150 : f32 to vector<8x128xf32>
    %401 = arith.mulf %400, %399 : vector<8x128xf32>
    %cst_151 = arith.constant 5.000000e-01 : f32
    %402 = vector.broadcast %cst_151 : f32 to vector<8x128xf32>
    %403 = arith.addf %401, %402 : vector<8x128xf32>
    %404 = arith.mulf %393, %325 : vector<8x128xf32>
    %405 = arith.mulf %385, %395 : vector<8x128xf32>
    %406 = arith.addf %404, %405 : vector<8x128xf32>
    %407 = math.tanh %406 : vector<8x128xf32>
    %408 = arith.mulf %403, %407 : vector<8x128xf32>
    %409 = arith.index_cast %c4_i32 : i32 to index
    %c0_152 = arith.constant 0 : index
    %c0_153 = arith.constant 0 : index
    %410 = vector.load %arg5[%409, %c0_152, %c0_153] : memref<8x8x256xf32, #tpu.memory_space<vmem>>, vector<1x8x128xf32>
    %411 = vector.shape_cast %410 : vector<1x8x128xf32> to vector<8x128xf32>
    %412 = vector.shape_cast %377 : vector<8x128xf32> to vector<1x8x128xf32>
    tpu.vector_store %arg5[%409, %c0_152, %c0_153], %412 {strides = array<i32>} : memref<8x8x256xf32, #tpu.memory_space<vmem>>, vector<1x8x128xf32>,
    %413 = arith.index_cast %336 : i32 to index
    %c0_154 = arith.constant 0 : index
    %c128_155 = arith.constant 128 : index
    %414 = vector.load %arg5[%413, %c0_154, %c128_155] : memref<8x8x256xf32, #tpu.memory_space<vmem>>, vector<1x8x128xf32>
    %415 = vector.shape_cast %414 : vector<1x8x128xf32> to vector<8x128xf32>
    %416 = vector.shape_cast %408 : vector<8x128xf32> to vector<1x8x128xf32>
    tpu.vector_store %arg5[%413, %c0_154, %c128_155], %416 {strides = array<i32>} : memref<8x8x256xf32, #tpu.memory_space<vmem>>, vector<1x8x128xf32>,
    %c5_i32 = arith.constant 5 : i32
    %c7_i32_156 = arith.constant 7 : i32
    %417 = arith.subi %c7_i32_156, %c5_i32 : i32
    %418 = arith.index_cast %c5_i32 : i32 to index
    %c0_157 = arith.constant 0 : index
    %c0_158 = arith.constant 0 : index
    %419 = vector.load %arg6[%418, %c0_157, %c0_158] : memref<8x8x1024xf32, #tpu.memory_space<vmem>>, vector<1x8x512xf32>
    %420 = vector.shape_cast %419 : vector<1x8x512xf32> to vector<8x512xf32>
    %cst_159 = arith.constant dense<0.000000e+00> : vector<8x512xf32>
    %421 = tpu.matmul %377, %9, %cst_159 {dimension_numbers = #tpu.dot_dimension_numbers<[1], [0], [0], [1], [0, 0, 1, 1], [], []>} : vector<8x128xf32>, vector<128x512xf32>, vector<8x512xf32> -> vector<8x512xf32>
    %422 = arith.addf %420, %421 : vector<8x512xf32>
    %423 = arith.index_cast %417 : i32 to index
    %c0_160 = arith.constant 0 : index
    %c512_161 = arith.constant 512 : index
    %424 = vector.load %arg6[%423, %c0_160, %c512_161] : memref<8x8x1024xf32, #tpu.memory_space<vmem>>, vector<1x8x512xf32>
    %425 = vector.shape_cast %424 : vector<1x8x512xf32> to vector<8x512xf32>
    %cst_162 = arith.constant dense<0.000000e+00> : vector<8x512xf32>
    %426 = tpu.matmul %408, %10, %cst_162 {dimension_numbers = #tpu.dot_dimension_numbers<[1], [0], [0], [1], [0, 0, 1, 1], [], []>} : vector<8x128xf32>, vector<128x512xf32>, vector<8x512xf32> -> vector<8x512xf32>
    %427 = arith.addf %425, %426 : vector<8x512xf32>
    %428 = vector.extract_strided_slice %422 {offsets = [0, 0], sizes = [8, 128], strides = [1, 1]} : vector<8x512xf32> to vector<8x128xf32>
    %cst_163 = arith.constant 5.000000e-01 : f32
    %429 = vector.broadcast %cst_163 : f32 to vector<8x128xf32>
    %430 = arith.mulf %429, %428 : vector<8x128xf32>
    %431 = math.tanh %430 : vector<8x128xf32>
    %cst_164 = arith.constant 5.000000e-01 : f32
    %432 = vector.broadcast %cst_164 : f32 to vector<8x128xf32>
    %433 = arith.mulf %432, %431 : vector<8x128xf32>
    %cst_165 = arith.constant 5.000000e-01 : f32
    %434 = vector.broadcast %cst_165 : f32 to vector<8x128xf32>
    %435 = arith.addf %433, %434 : vector<8x128xf32>
    %436 = vector.extract_strided_slice %422 {offsets = [0, 128], sizes = [8, 128], strides = [1, 1]} : vector<8x512xf32> to vector<8x128xf32>
    %cst_166 = arith.constant 5.000000e-01 : f32
    %437 = vector.broadcast %cst_166 : f32 to vector<8x128xf32>
    %438 = arith.mulf %437, %436 : vector<8x128xf32>
    %439 = math.tanh %438 : vector<8x128xf32>
    %cst_167 = arith.constant 5.000000e-01 : f32
    %440 = vector.broadcast %cst_167 : f32 to vector<8x128xf32>
    %441 = arith.mulf %440, %439 : vector<8x128xf32>
    %cst_168 = arith.constant 5.000000e-01 : f32
    %442 = vector.broadcast %cst_168 : f32 to vector<8x128xf32>
    %443 = arith.addf %441, %442 : vector<8x128xf32>
    %444 = vector.extract_strided_slice %422 {offsets = [0, 256], sizes = [8, 128], strides = [1, 1]} : vector<8x512xf32> to vector<8x128xf32>
    %445 = math.tanh %444 : vector<8x128xf32>
    %446 = vector.extract_strided_slice %422 {offsets = [0, 384], sizes = [8, 128], strides = [1, 1]} : vector<8x512xf32> to vector<8x128xf32>
    %cst_169 = arith.constant 5.000000e-01 : f32
    %447 = vector.broadcast %cst_169 : f32 to vector<8x128xf32>
    %448 = arith.mulf %447, %446 : vector<8x128xf32>
    %449 = math.tanh %448 : vector<8x128xf32>
    %cst_170 = arith.constant 5.000000e-01 : f32
    %450 = vector.broadcast %cst_170 : f32 to vector<8x128xf32>
    %451 = arith.mulf %450, %449 : vector<8x128xf32>
    %cst_171 = arith.constant 5.000000e-01 : f32
    %452 = vector.broadcast %cst_171 : f32 to vector<8x128xf32>
    %453 = arith.addf %451, %452 : vector<8x128xf32>
    %454 = arith.mulf %443, %375 : vector<8x128xf32>
    %455 = arith.mulf %435, %445 : vector<8x128xf32>
    %456 = arith.addf %454, %455 : vector<8x128xf32>
    %457 = math.tanh %456 : vector<8x128xf32>
    %458 = arith.mulf %453, %457 : vector<8x128xf32>
    %459 = vector.extract_strided_slice %427 {offsets = [0, 0], sizes = [8, 128], strides = [1, 1]} : vector<8x512xf32> to vector<8x128xf32>
    %cst_172 = arith.constant 5.000000e-01 : f32
    %460 = vector.broadcast %cst_172 : f32 to vector<8x128xf32>
    %461 = arith.mulf %460, %459 : vector<8x128xf32>
    %462 = math.tanh %461 : vector<8x128xf32>
    %cst_173 = arith.constant 5.000000e-01 : f32
    %463 = vector.broadcast %cst_173 : f32 to vector<8x128xf32>
    %464 = arith.mulf %463, %462 : vector<8x128xf32>
    %cst_174 = arith.constant 5.000000e-01 : f32
    %465 = vector.broadcast %cst_174 : f32 to vector<8x128xf32>
    %466 = arith.addf %464, %465 : vector<8x128xf32>
    %467 = vector.extract_strided_slice %427 {offsets = [0, 128], sizes = [8, 128], strides = [1, 1]} : vector<8x512xf32> to vector<8x128xf32>
    %cst_175 = arith.constant 5.000000e-01 : f32
    %468 = vector.broadcast %cst_175 : f32 to vector<8x128xf32>
    %469 = arith.mulf %468, %467 : vector<8x128xf32>
    %470 = math.tanh %469 : vector<8x128xf32>
    %cst_176 = arith.constant 5.000000e-01 : f32
    %471 = vector.broadcast %cst_176 : f32 to vector<8x128xf32>
    %472 = arith.mulf %471, %470 : vector<8x128xf32>
    %cst_177 = arith.constant 5.000000e-01 : f32
    %473 = vector.broadcast %cst_177 : f32 to vector<8x128xf32>
    %474 = arith.addf %472, %473 : vector<8x128xf32>
    %475 = vector.extract_strided_slice %427 {offsets = [0, 256], sizes = [8, 128], strides = [1, 1]} : vector<8x512xf32> to vector<8x128xf32>
    %476 = math.tanh %475 : vector<8x128xf32>
    %477 = vector.extract_strided_slice %427 {offsets = [0, 384], sizes = [8, 128], strides = [1, 1]} : vector<8x512xf32> to vector<8x128xf32>
    %cst_178 = arith.constant 5.000000e-01 : f32
    %478 = vector.broadcast %cst_178 : f32 to vector<8x128xf32>
    %479 = arith.mulf %478, %477 : vector<8x128xf32>
    %480 = math.tanh %479 : vector<8x128xf32>
    %cst_179 = arith.constant 5.000000e-01 : f32
    %481 = vector.broadcast %cst_179 : f32 to vector<8x128xf32>
    %482 = arith.mulf %481, %480 : vector<8x128xf32>
    %cst_180 = arith.constant 5.000000e-01 : f32
    %483 = vector.broadcast %cst_180 : f32 to vector<8x128xf32>
    %484 = arith.addf %482, %483 : vector<8x128xf32>
    %485 = arith.mulf %474, %406 : vector<8x128xf32>
    %486 = arith.mulf %466, %476 : vector<8x128xf32>
    %487 = arith.addf %485, %486 : vector<8x128xf32>
    %488 = math.tanh %487 : vector<8x128xf32>
    %489 = arith.mulf %484, %488 : vector<8x128xf32>
    %490 = arith.index_cast %c5_i32 : i32 to index
    %c0_181 = arith.constant 0 : index
    %c0_182 = arith.constant 0 : index
    %491 = vector.load %arg5[%490, %c0_181, %c0_182] : memref<8x8x256xf32, #tpu.memory_space<vmem>>, vector<1x8x128xf32>
    %492 = vector.shape_cast %491 : vector<1x8x128xf32> to vector<8x128xf32>
    %493 = vector.shape_cast %458 : vector<8x128xf32> to vector<1x8x128xf32>
    tpu.vector_store %arg5[%490, %c0_181, %c0_182], %493 {strides = array<i32>} : memref<8x8x256xf32, #tpu.memory_space<vmem>>, vector<1x8x128xf32>,
    %494 = arith.index_cast %417 : i32 to index
    %c0_183 = arith.constant 0 : index
    %c128_184 = arith.constant 128 : index
    %495 = vector.load %arg5[%494, %c0_183, %c128_184] : memref<8x8x256xf32, #tpu.memory_space<vmem>>, vector<1x8x128xf32>
    %496 = vector.shape_cast %495 : vector<1x8x128xf32> to vector<8x128xf32>
    %497 = vector.shape_cast %489 : vector<8x128xf32> to vector<1x8x128xf32>
    tpu.vector_store %arg5[%494, %c0_183, %c128_184], %497 {strides = array<i32>} : memref<8x8x256xf32, #tpu.memory_space<vmem>>, vector<1x8x128xf32>,
    %c6_i32 = arith.constant 6 : i32
    %c7_i32_185 = arith.constant 7 : i32
    %498 = arith.subi %c7_i32_185, %c6_i32 : i32
    %499 = arith.index_cast %c6_i32 : i32 to index
    %c0_186 = arith.constant 0 : index
    %c0_187 = arith.constant 0 : index
    %500 = vector.load %arg6[%499, %c0_186, %c0_187] : memref<8x8x1024xf32, #tpu.memory_space<vmem>>, vector<1x8x512xf32>
    %501 = vector.shape_cast %500 : vector<1x8x512xf32> to vector<8x512xf32>
    %cst_188 = arith.constant dense<0.000000e+00> : vector<8x512xf32>
    %502 = tpu.matmul %458, %9, %cst_188 {dimension_numbers = #tpu.dot_dimension_numbers<[1], [0], [0], [1], [0, 0, 1, 1], [], []>} : vector<8x128xf32>, vector<128x512xf32>, vector<8x512xf32> -> vector<8x512xf32>
    %503 = arith.addf %501, %502 : vector<8x512xf32>
    %504 = arith.index_cast %498 : i32 to index
    %c0_189 = arith.constant 0 : index
    %c512_190 = arith.constant 512 : index
    %505 = vector.load %arg6[%504, %c0_189, %c512_190] : memref<8x8x1024xf32, #tpu.memory_space<vmem>>, vector<1x8x512xf32>
    %506 = vector.shape_cast %505 : vector<1x8x512xf32> to vector<8x512xf32>
    %cst_191 = arith.constant dense<0.000000e+00> : vector<8x512xf32>
    %507 = tpu.matmul %489, %10, %cst_191 {dimension_numbers = #tpu.dot_dimension_numbers<[1], [0], [0], [1], [0, 0, 1, 1], [], []>} : vector<8x128xf32>, vector<128x512xf32>, vector<8x512xf32> -> vector<8x512xf32>
    %508 = arith.addf %506, %507 : vector<8x512xf32>
    %509 = vector.extract_strided_slice %503 {offsets = [0, 0], sizes = [8, 128], strides = [1, 1]} : vector<8x512xf32> to vector<8x128xf32>
    %cst_192 = arith.constant 5.000000e-01 : f32
    %510 = vector.broadcast %cst_192 : f32 to vector<8x128xf32>
    %511 = arith.mulf %510, %509 : vector<8x128xf32>
    %512 = math.tanh %511 : vector<8x128xf32>
    %cst_193 = arith.constant 5.000000e-01 : f32
    %513 = vector.broadcast %cst_193 : f32 to vector<8x128xf32>
    %514 = arith.mulf %513, %512 : vector<8x128xf32>
    %cst_194 = arith.constant 5.000000e-01 : f32
    %515 = vector.broadcast %cst_194 : f32 to vector<8x128xf32>
    %516 = arith.addf %514, %515 : vector<8x128xf32>
    %517 = vector.extract_strided_slice %503 {offsets = [0, 128], sizes = [8, 128], strides = [1, 1]} : vector<8x512xf32> to vector<8x128xf32>
    %cst_195 = arith.constant 5.000000e-01 : f32
    %518 = vector.broadcast %cst_195 : f32 to vector<8x128xf32>
    %519 = arith.mulf %518, %517 : vector<8x128xf32>
    %520 = math.tanh %519 : vector<8x128xf32>
    %cst_196 = arith.constant 5.000000e-01 : f32
    %521 = vector.broadcast %cst_196 : f32 to vector<8x128xf32>
    %522 = arith.mulf %521, %520 : vector<8x128xf32>
    %cst_197 = arith.constant 5.000000e-01 : f32
    %523 = vector.broadcast %cst_197 : f32 to vector<8x128xf32>
    %524 = arith.addf %522, %523 : vector<8x128xf32>
    %525 = vector.extract_strided_slice %503 {offsets = [0, 256], sizes = [8, 128], strides = [1, 1]} : vector<8x512xf32> to vector<8x128xf32>
    %526 = math.tanh %525 : vector<8x128xf32>
    %527 = vector.extract_strided_slice %503 {offsets = [0, 384], sizes = [8, 128], strides = [1, 1]} : vector<8x512xf32> to vector<8x128xf32>
    %cst_198 = arith.constant 5.000000e-01 : f32
    %528 = vector.broadcast %cst_198 : f32 to vector<8x128xf32>
    %529 = arith.mulf %528, %527 : vector<8x128xf32>
    %530 = math.tanh %529 : vector<8x128xf32>
    %cst_199 = arith.constant 5.000000e-01 : f32
    %531 = vector.broadcast %cst_199 : f32 to vector<8x128xf32>
    %532 = arith.mulf %531, %530 : vector<8x128xf32>
    %cst_200 = arith.constant 5.000000e-01 : f32
    %533 = vector.broadcast %cst_200 : f32 to vector<8x128xf32>
    %534 = arith.addf %532, %533 : vector<8x128xf32>
    %535 = arith.mulf %524, %456 : vector<8x128xf32>
    %536 = arith.mulf %516, %526 : vector<8x128xf32>
    %537 = arith.addf %535, %536 : vector<8x128xf32>
    %538 = math.tanh %537 : vector<8x128xf32>
    %539 = arith.mulf %534, %538 : vector<8x128xf32>
    %540 = vector.extract_strided_slice %508 {offsets = [0, 0], sizes = [8, 128], strides = [1, 1]} : vector<8x512xf32> to vector<8x128xf32>
    %cst_201 = arith.constant 5.000000e-01 : f32
    %541 = vector.broadcast %cst_201 : f32 to vector<8x128xf32>
    %542 = arith.mulf %541, %540 : vector<8x128xf32>
    %543 = math.tanh %542 : vector<8x128xf32>
    %cst_202 = arith.constant 5.000000e-01 : f32
    %544 = vector.broadcast %cst_202 : f32 to vector<8x128xf32>
    %545 = arith.mulf %544, %543 : vector<8x128xf32>
    %cst_203 = arith.constant 5.000000e-01 : f32
    %546 = vector.broadcast %cst_203 : f32 to vector<8x128xf32>
    %547 = arith.addf %545, %546 : vector<8x128xf32>
    %548 = vector.extract_strided_slice %508 {offsets = [0, 128], sizes = [8, 128], strides = [1, 1]} : vector<8x512xf32> to vector<8x128xf32>
    %cst_204 = arith.constant 5.000000e-01 : f32
    %549 = vector.broadcast %cst_204 : f32 to vector<8x128xf32>
    %550 = arith.mulf %549, %548 : vector<8x128xf32>
    %551 = math.tanh %550 : vector<8x128xf32>
    %cst_205 = arith.constant 5.000000e-01 : f32
    %552 = vector.broadcast %cst_205 : f32 to vector<8x128xf32>
    %553 = arith.mulf %552, %551 : vector<8x128xf32>
    %cst_206 = arith.constant 5.000000e-01 : f32
    %554 = vector.broadcast %cst_206 : f32 to vector<8x128xf32>
    %555 = arith.addf %553, %554 : vector<8x128xf32>
    %556 = vector.extract_strided_slice %508 {offsets = [0, 256], sizes = [8, 128], strides = [1, 1]} : vector<8x512xf32> to vector<8x128xf32>
    %557 = math.tanh %556 : vector<8x128xf32>
    %558 = vector.extract_strided_slice %508 {offsets = [0, 384], sizes = [8, 128], strides = [1, 1]} : vector<8x512xf32> to vector<8x128xf32>
    %cst_207 = arith.constant 5.000000e-01 : f32
    %559 = vector.broadcast %cst_207 : f32 to vector<8x128xf32>
    %560 = arith.mulf %559, %558 : vector<8x128xf32>
    %561 = math.tanh %560 : vector<8x128xf32>
    %cst_208 = arith.constant 5.000000e-01 : f32
    %562 = vector.broadcast %cst_208 : f32 to vector<8x128xf32>
    %563 = arith.mulf %562, %561 : vector<8x128xf32>
    %cst_209 = arith.constant 5.000000e-01 : f32
    %564 = vector.broadcast %cst_209 : f32 to vector<8x128xf32>
    %565 = arith.addf %563, %564 : vector<8x128xf32>
    %566 = arith.mulf %555, %487 : vector<8x128xf32>
    %567 = arith.mulf %547, %557 : vector<8x128xf32>
    %568 = arith.addf %566, %567 : vector<8x128xf32>
    %569 = math.tanh %568 : vector<8x128xf32>
    %570 = arith.mulf %565, %569 : vector<8x128xf32>
    %571 = arith.index_cast %c6_i32 : i32 to index
    %c0_210 = arith.constant 0 : index
    %c0_211 = arith.constant 0 : index
    %572 = vector.load %arg5[%571, %c0_210, %c0_211] : memref<8x8x256xf32, #tpu.memory_space<vmem>>, vector<1x8x128xf32>
    %573 = vector.shape_cast %572 : vector<1x8x128xf32> to vector<8x128xf32>
    %574 = vector.shape_cast %539 : vector<8x128xf32> to vector<1x8x128xf32>
    tpu.vector_store %arg5[%571, %c0_210, %c0_211], %574 {strides = array<i32>} : memref<8x8x256xf32, #tpu.memory_space<vmem>>, vector<1x8x128xf32>,
    %575 = arith.index_cast %498 : i32 to index
    %c0_212 = arith.constant 0 : index
    %c128_213 = arith.constant 128 : index
    %576 = vector.load %arg5[%575, %c0_212, %c128_213] : memref<8x8x256xf32, #tpu.memory_space<vmem>>, vector<1x8x128xf32>
    %577 = vector.shape_cast %576 : vector<1x8x128xf32> to vector<8x128xf32>
    %578 = vector.shape_cast %570 : vector<8x128xf32> to vector<1x8x128xf32>
    tpu.vector_store %arg5[%575, %c0_212, %c128_213], %578 {strides = array<i32>} : memref<8x8x256xf32, #tpu.memory_space<vmem>>, vector<1x8x128xf32>,
    %c7_i32_214 = arith.constant 7 : i32
    %c7_i32_215 = arith.constant 7 : i32
    %579 = arith.subi %c7_i32_215, %c7_i32_214 : i32
    %580 = arith.index_cast %c7_i32_214 : i32 to index
    %c0_216 = arith.constant 0 : index
    %c0_217 = arith.constant 0 : index
    %581 = vector.load %arg6[%580, %c0_216, %c0_217] : memref<8x8x1024xf32, #tpu.memory_space<vmem>>, vector<1x8x512xf32>
    %582 = vector.shape_cast %581 : vector<1x8x512xf32> to vector<8x512xf32>
    %cst_218 = arith.constant dense<0.000000e+00> : vector<8x512xf32>
    %583 = tpu.matmul %539, %9, %cst_218 {dimension_numbers = #tpu.dot_dimension_numbers<[1], [0], [0], [1], [0, 0, 1, 1], [], []>} : vector<8x128xf32>, vector<128x512xf32>, vector<8x512xf32> -> vector<8x512xf32>
    %584 = arith.addf %582, %583 : vector<8x512xf32>
    %585 = arith.index_cast %579 : i32 to index
    %c0_219 = arith.constant 0 : index
    %c512_220 = arith.constant 512 : index
    %586 = vector.load %arg6[%585, %c0_219, %c512_220] : memref<8x8x1024xf32, #tpu.memory_space<vmem>>, vector<1x8x512xf32>
    %587 = vector.shape_cast %586 : vector<1x8x512xf32> to vector<8x512xf32>
    %cst_221 = arith.constant dense<0.000000e+00> : vector<8x512xf32>
    %588 = tpu.matmul %570, %10, %cst_221 {dimension_numbers = #tpu.dot_dimension_numbers<[1], [0], [0], [1], [0, 0, 1, 1], [], []>} : vector<8x128xf32>, vector<128x512xf32>, vector<8x512xf32> -> vector<8x512xf32>
    %589 = arith.addf %587, %588 : vector<8x512xf32>
    %590 = vector.extract_strided_slice %584 {offsets = [0, 0], sizes = [8, 128], strides = [1, 1]} : vector<8x512xf32> to vector<8x128xf32>
    %cst_222 = arith.constant 5.000000e-01 : f32
    %591 = vector.broadcast %cst_222 : f32 to vector<8x128xf32>
    %592 = arith.mulf %591, %590 : vector<8x128xf32>
    %593 = math.tanh %592 : vector<8x128xf32>
    %cst_223 = arith.constant 5.000000e-01 : f32
    %594 = vector.broadcast %cst_223 : f32 to vector<8x128xf32>
    %595 = arith.mulf %594, %593 : vector<8x128xf32>
    %cst_224 = arith.constant 5.000000e-01 : f32
    %596 = vector.broadcast %cst_224 : f32 to vector<8x128xf32>
    %597 = arith.addf %595, %596 : vector<8x128xf32>
    %598 = vector.extract_strided_slice %584 {offsets = [0, 128], sizes = [8, 128], strides = [1, 1]} : vector<8x512xf32> to vector<8x128xf32>
    %cst_225 = arith.constant 5.000000e-01 : f32
    %599 = vector.broadcast %cst_225 : f32 to vector<8x128xf32>
    %600 = arith.mulf %599, %598 : vector<8x128xf32>
    %601 = math.tanh %600 : vector<8x128xf32>
    %cst_226 = arith.constant 5.000000e-01 : f32
    %602 = vector.broadcast %cst_226 : f32 to vector<8x128xf32>
    %603 = arith.mulf %602, %601 : vector<8x128xf32>
    %cst_227 = arith.constant 5.000000e-01 : f32
    %604 = vector.broadcast %cst_227 : f32 to vector<8x128xf32>
    %605 = arith.addf %603, %604 : vector<8x128xf32>
    %606 = vector.extract_strided_slice %584 {offsets = [0, 256], sizes = [8, 128], strides = [1, 1]} : vector<8x512xf32> to vector<8x128xf32>
    %607 = math.tanh %606 : vector<8x128xf32>
    %608 = vector.extract_strided_slice %584 {offsets = [0, 384], sizes = [8, 128], strides = [1, 1]} : vector<8x512xf32> to vector<8x128xf32>
    %cst_228 = arith.constant 5.000000e-01 : f32
    %609 = vector.broadcast %cst_228 : f32 to vector<8x128xf32>
    %610 = arith.mulf %609, %608 : vector<8x128xf32>
    %611 = math.tanh %610 : vector<8x128xf32>
    %cst_229 = arith.constant 5.000000e-01 : f32
    %612 = vector.broadcast %cst_229 : f32 to vector<8x128xf32>
    %613 = arith.mulf %612, %611 : vector<8x128xf32>
    %cst_230 = arith.constant 5.000000e-01 : f32
    %614 = vector.broadcast %cst_230 : f32 to vector<8x128xf32>
    %615 = arith.addf %613, %614 : vector<8x128xf32>
    %616 = arith.mulf %605, %537 : vector<8x128xf32>
    %617 = arith.mulf %597, %607 : vector<8x128xf32>
    %618 = arith.addf %616, %617 : vector<8x128xf32>
    %619 = math.tanh %618 : vector<8x128xf32>
    %620 = arith.mulf %615, %619 : vector<8x128xf32>
    %621 = vector.extract_strided_slice %589 {offsets = [0, 0], sizes = [8, 128], strides = [1, 1]} : vector<8x512xf32> to vector<8x128xf32>
    %cst_231 = arith.constant 5.000000e-01 : f32
    %622 = vector.broadcast %cst_231 : f32 to vector<8x128xf32>
    %623 = arith.mulf %622, %621 : vector<8x128xf32>
    %624 = math.tanh %623 : vector<8x128xf32>
    %cst_232 = arith.constant 5.000000e-01 : f32
    %625 = vector.broadcast %cst_232 : f32 to vector<8x128xf32>
    %626 = arith.mulf %625, %624 : vector<8x128xf32>
    %cst_233 = arith.constant 5.000000e-01 : f32
    %627 = vector.broadcast %cst_233 : f32 to vector<8x128xf32>
    %628 = arith.addf %626, %627 : vector<8x128xf32>
    %629 = vector.extract_strided_slice %589 {offsets = [0, 128], sizes = [8, 128], strides = [1, 1]} : vector<8x512xf32> to vector<8x128xf32>
    %cst_234 = arith.constant 5.000000e-01 : f32
    %630 = vector.broadcast %cst_234 : f32 to vector<8x128xf32>
    %631 = arith.mulf %630, %629 : vector<8x128xf32>
    %632 = math.tanh %631 : vector<8x128xf32>
    %cst_235 = arith.constant 5.000000e-01 : f32
    %633 = vector.broadcast %cst_235 : f32 to vector<8x128xf32>
    %634 = arith.mulf %633, %632 : vector<8x128xf32>
    %cst_236 = arith.constant 5.000000e-01 : f32
    %635 = vector.broadcast %cst_236 : f32 to vector<8x128xf32>
    %636 = arith.addf %634, %635 : vector<8x128xf32>
    %637 = vector.extract_strided_slice %589 {offsets = [0, 256], sizes = [8, 128], strides = [1, 1]} : vector<8x512xf32> to vector<8x128xf32>
    %638 = math.tanh %637 : vector<8x128xf32>
    %639 = vector.extract_strided_slice %589 {offsets = [0, 384], sizes = [8, 128], strides = [1, 1]} : vector<8x512xf32> to vector<8x128xf32>
    %cst_237 = arith.constant 5.000000e-01 : f32
    %640 = vector.broadcast %cst_237 : f32 to vector<8x128xf32>
    %641 = arith.mulf %640, %639 : vector<8x128xf32>
    %642 = math.tanh %641 : vector<8x128xf32>
    %cst_238 = arith.constant 5.000000e-01 : f32
    %643 = vector.broadcast %cst_238 : f32 to vector<8x128xf32>
    %644 = arith.mulf %643, %642 : vector<8x128xf32>
    %cst_239 = arith.constant 5.000000e-01 : f32
    %645 = vector.broadcast %cst_239 : f32 to vector<8x128xf32>
    %646 = arith.addf %644, %645 : vector<8x128xf32>
    %647 = arith.mulf %636, %568 : vector<8x128xf32>
    %648 = arith.mulf %628, %638 : vector<8x128xf32>
    %649 = arith.addf %647, %648 : vector<8x128xf32>
    %650 = math.tanh %649 : vector<8x128xf32>
    %651 = arith.mulf %646, %650 : vector<8x128xf32>
    %652 = arith.index_cast %c7_i32_214 : i32 to index
    %c0_240 = arith.constant 0 : index
    %c0_241 = arith.constant 0 : index
    %653 = vector.load %arg5[%652, %c0_240, %c0_241] : memref<8x8x256xf32, #tpu.memory_space<vmem>>, vector<1x8x128xf32>
    %654 = vector.shape_cast %653 : vector<1x8x128xf32> to vector<8x128xf32>
    %655 = vector.shape_cast %620 : vector<8x128xf32> to vector<1x8x128xf32>
    tpu.vector_store %arg5[%652, %c0_240, %c0_241], %655 {strides = array<i32>} : memref<8x8x256xf32, #tpu.memory_space<vmem>>, vector<1x8x128xf32>,
    %656 = arith.index_cast %579 : i32 to index
    %c0_242 = arith.constant 0 : index
    %c128_243 = arith.constant 128 : index
    %657 = vector.load %arg5[%656, %c0_242, %c128_243] : memref<8x8x256xf32, #tpu.memory_space<vmem>>, vector<1x8x128xf32>
    %658 = vector.shape_cast %657 : vector<1x8x128xf32> to vector<8x128xf32>
    %659 = vector.shape_cast %651 : vector<8x128xf32> to vector<1x8x128xf32>
    tpu.vector_store %arg5[%656, %c0_242, %c128_243], %659 {strides = array<i32>} : memref<8x8x256xf32, #tpu.memory_space<vmem>>, vector<1x8x128xf32>,
    %c8_i32 = arith.constant 8 : i32
    return
  }
}

</mosaic_0001>

<llo_original>
// kernel: brnn_forward.3
$region0: #{brnn_forward.3}
  #allocation0 [shape = 'u32[]', space=smem, size = 0x4, offset = 0x4, fixed_abs, tag = 'smem constant byte address 0x4 - core index']
  #allocation1 [shape = 'u32[144,128]{1,0:T(1,128)}', space=vmem, size = 0x12000, scoped, tag = 'internal scratch']
  #allocation2 [shape = 'f32[8,8,512]{2,1,0:T(8,128)}', space=vmem, size = 0x20000, scoped, tag = 'scratch operand']
  %s0 = inlined_call_operand.vmem [shape: f32[8,8,256], index: 0, kind: input, shape index: {}]
  %s1 = inlined_call_operand.vmem [shape: f32[256,1024], index: 1, kind: input, shape index: {}]
  %s2 = inlined_call_operand.vmem [shape: f32[1,1024], index: 2, kind: input, shape index: {}]
  %s3 = inlined_call_operand.hbm [shape: f32[128,512], index: 3, kind: input, shape index: {}]
  %s4 = inlined_call_operand.vmem [shape: f32[256,128], index: 4, kind: input, shape index: {}]
  %s5 = inlined_call_operand.vmem [shape: f32[1,128], index: 5, kind: input, shape index: {}]
  %s6 = inlined_call_operand.vmem [shape: f32[8,128], index: 6, kind: output, shape index: {}]
  %s7 = sld [smem:[#allocation0]]
  $region38: #{brnn_forward.3} parent=0
    _
  %s9 = ssub.s32 1, %s7
  %s10 = scalar_select 0, %s9, %s7
  $region1: #{brnn_forward.3} parent=0
    #allocation3 [shape = 'u8[262144]{0}', space=vmem, size = 0x40000, scoped, tag = 'input window, operand 3, single buffered']
    #allocation4 [shape = 's32[1]{0}', space=sflag, size = 0x4, scoped, tag = 'scoped memory for brnn_forward.3']
    %11 = vsyncpa [#allocation4], 0
    // Predicated region
    $region2: #{brnn_forward.3} parent=1 // pred_check
      _
    $region3: #{brnn_forward.3} parent=1 // pred_check_branch
      %13 = sbr.rel (0) target = $region5
    $region4: #{brnn_forward.3} parent=1 // pred_region
      _
    $region5: #{brnn_forward.3} parent=1 // pred_fallthru
      _
    // Predicated region
    $region6: #{brnn_forward.3} parent=1 // pred_check
      _
    $region7: #{brnn_forward.3} parent=1 // pred_check_branch
      %15 = sbr.rel (0) target = $region9
    $region8: #{brnn_forward.3} parent=1 // pred_region
      _
    $region9: #{brnn_forward.3} parent=1 // pred_fallthru
      _
    // Predicated region
    $region10: #{brnn_forward.3} parent=1 // pred_check
      _
    $region11: #{brnn_forward.3} parent=1 // pred_check_branch
      %17 = sbr.rel (0) target = $region13
    $region12: #{brnn_forward.3} parent=1 // pred_region
      _
    $region13: #{brnn_forward.3} parent=1 // pred_fallthru
      _
    // Predicated region
    $region14: #{brnn_forward.3} parent=1 // pred_check
      _
    $region15: #{brnn_forward.3} parent=1 // pred_check_branch
      %19 = sbr.rel (0) target = $region17
    $region16: #{brnn_forward.3} parent=1 // pred_region
      %s21 = ssub.s32 8192, 8192
      %22 = vsyncadd [#allocation4], %s21
      %s23 = sshll.u32 [#allocation3], 4
      %s24 = int_to_ptr.vmem [resolvable:$true] %s23
      %29 = dma.hbm_to_vmem [thread:$0]  %s3, 8192, %s24, [#allocation4], 512, 512, 32
    $region17: #{brnn_forward.3} parent=1 // pred_fallthru
      _
    // Predicated region
    $region18: #{brnn_forward.3} parent=1 // pred_check
      _
    $region19: #{brnn_forward.3} parent=1 // pred_check_branch
      %31 = sbr.rel (0) target = $region21
    $region20: #{brnn_forward.3} parent=1 // pred_region
      _
    $region21: #{brnn_forward.3} parent=1 // pred_fallthru
      _
    // Predicated region
    $region22: #{brnn_forward.3} parent=1 // pred_check
      _
    $region23: #{brnn_forward.3} parent=1 // pred_check_branch
      %33 = sbr.rel (0) target = $region25
    $region24: #{brnn_forward.3} parent=1 // pred_region
      _
    $region25: #{brnn_forward.3} parent=1 // pred_fallthru
      _
    // Predicated region
    $region26: #{brnn_forward.3} parent=1 // pred_check
      _
    $region27: #{brnn_forward.3} parent=1 // pred_check_branch
      %35 = sbr.rel (0) target = $region29
    $region28: #{brnn_forward.3} parent=1 // pred_region
      %36 = dma.done [#allocation4], 8192
    $region29: #{brnn_forward.3} parent=1 // pred_fallthru
      _
    %v37 = vld [vmem:[%s0] sm:$0xff]
    %v38 = vld [vmem:[%s0 + $0x8] sm:$0xff]
    %v39 = vld [vmem:[%s0 + $0x10] sm:$0xff]
    %v40 = vld [vmem:[%s0 + $0x18] sm:$0xff]
    %v41 = vld [vmem:[%s0 + $0x20] sm:$0xff]
    %v42 = vld [vmem:[%s0 + $0x28] sm:$0xff]
    %v43 = vld [vmem:[%s0 + $0x30] sm:$0xff]
    %v44 = vld [vmem:[%s0 + $0x38] sm:$0xff]
    %v45 = vld [vmem:[%s0 + $0x40] sm:$0xff]
    %v46 = vld [vmem:[%s0 + $0x48] sm:$0xff]
    %v47 = vld [vmem:[%s0 + $0x50] sm:$0xff]
    %v48 = vld [vmem:[%s0 + $0x58] sm:$0xff]
    %v49 = vld [vmem:[%s0 + $0x60] sm:$0xff]
    %v50 = vld [vmem:[%s0 + $0x68] sm:$0xff]
    %v51 = vld [vmem:[%s0 + $0x70] sm:$0xff]
    %v52 = vld [vmem:[%s0 + $0x78] sm:$0xff]
    %v53 = vld [vmem:[%s1] sm:$0xff]
    %v54 = vld [vmem:[%s1 + $0x8] sm:$0xff]
    %v55 = vld [vmem:[%s1 + $0x10] sm:$0xff]
    %v56 = vld [vmem:[%s1 + $0x18] sm:$0xff]
    %v57 = vld [vmem:[%s1 + $0x40] sm:$0xff]
    %v58 = vld [vmem:[%s1 + $0x48] sm:$0xff]
    %v59 = vld [vmem:[%s1 + $0x50] sm:$0xff]
    %v60 = vld [vmem:[%s1 + $0x58] sm:$0xff]
    %v61 = vld [vmem:[%s1 + $0x80] sm:$0xff]
    %v62 = vld [vmem:[%s1 + $0x88] sm:$0xff]
    %v63 = vld [vmem:[%s1 + $0x90] sm:$0xff]
    %v64 = vld [vmem:[%s1 + $0x98] sm:$0xff]
    %v65 = vld [vmem:[%s1 + $0xc0] sm:$0xff]
    %v66 = vld [vmem:[%s1 + $0xc8] sm:$0xff]
    %v67 = vld [vmem:[%s1 + $0xd0] sm:$0xff]
    %v68 = vld [vmem:[%s1 + $0xd8] sm:$0xff]
    %v69 = vld [vmem:[%s1 + $0x100] sm:$0xff]
    %v70 = vld [vmem:[%s1 + $0x108] sm:$0xff]
    %v71 = vld [vmem:[%s1 + $0x110] sm:$0xff]
    %v72 = vld [vmem:[%s1 + $0x118] sm:$0xff]
    %v73 = vld [vmem:[%s1 + $0x140] sm:$0xff]
    %v74 = vld [vmem:[%s1 + $0x148] sm:$0xff]
    %v75 = vld [vmem:[%s1 + $0x150] sm:$0xff]
    %v76 = vld [vmem:[%s1 + $0x158] sm:$0xff]
    %v77 = vld [vmem:[%s1 + $0x180] sm:$0xff]
    %v78 = vld [vmem:[%s1 + $0x188] sm:$0xff]
    %v79 = vld [vmem:[%s1 + $0x190] sm:$0xff]
    %v80 = vld [vmem:[%s1 + $0x198] sm:$0xff]
    %v81 = vld [vmem:[%s1 + $0x1c0] sm:$0xff]
    %v82 = vld [vmem:[%s1 + $0x1c8] sm:$0xff]
    %v83 = vld [vmem:[%s1 + $0x1d0] sm:$0xff]
    %v84 = vld [vmem:[%s1 + $0x1d8] sm:$0xff]
    %v85 = vld [vmem:[%s1 + $0x200] sm:$0xff]
    %v86 = vld [vmem:[%s1 + $0x208] sm:$0xff]
    %v87 = vld [vmem:[%s1 + $0x210] sm:$0xff]
    %v88 = vld [vmem:[%s1 + $0x218] sm:$0xff]
    %v89 = vld [vmem:[%s1 + $0x240] sm:$0xff]
    %v90 = vld [vmem:[%s1 + $0x248] sm:$0xff]
    %v91 = vld [vmem:[%s1 + $0x250] sm:$0xff]
    %v92 = vld [vmem:[%s1 + $0x258] sm:$0xff]
    %v93 = vld [vmem:[%s1 + $0x280] sm:$0xff]
    %v94 = vld [vmem:[%s1 + $0x288] sm:$0xff]
    %v95 = vld [vmem:[%s1 + $0x290] sm:$0xff]
    %v96 = vld [vmem:[%s1 + $0x298] sm:$0xff]
    %v97 = vld [vmem:[%s1 + $0x2c0] sm:$0xff]
    %v98 = vld [vmem:[%s1 + $0x2c8] sm:$0xff]
    %v99 = vld [vmem:[%s1 + $0x2d0] sm:$0xff]
    %v100 = vld [vmem:[%s1 + $0x2d8] sm:$0xff]
    %v101 = vld [vmem:[%s1 + $0x300] sm:$0xff]
    %v102 = vld [vmem:[%s1 + $0x308] sm:$0xff]
    %v103 = vld [vmem:[%s1 + $0x310] sm:$0xff]
    %v104 = vld [vmem:[%s1 + $0x318] sm:$0xff]
    %v105 = vld [vmem:[%s1 + $0x340] sm:$0xff]
    %v106 = vld [vmem:[%s1 + $0x348] sm:$0xff]
    %v107 = vld [vmem:[%s1 + $0x350] sm:$0xff]
    %v108 = vld [vmem:[%s1 + $0x358] sm:$0xff]
    %v109 = vld [vmem:[%s1 + $0x380] sm:$0xff]
    %v110 = vld [vmem:[%s1 + $0x388] sm:$0xff]
    %v111 = vld [vmem:[%s1 + $0x390] sm:$0xff]
    %v112 = vld [vmem:[%s1 + $0x398] sm:$0xff]
    %v113 = vld [vmem:[%s1 + $0x3c0] sm:$0xff]
    %v114 = vld [vmem:[%s1 + $0x3c8] sm:$0xff]
    %v115 = vld [vmem:[%s1 + $0x3d0] sm:$0xff]
    %v116 = vld [vmem:[%s1 + $0x3d8] sm:$0xff]
    %v117 = vld [vmem:[%s1 + $0x400] sm:$0xff]
    %v118 = vld [vmem:[%s1 + $0x408] sm:$0xff]
    %v119 = vld [vmem:[%s1 + $0x410] sm:$0xff]
    %v120 = vld [vmem:[%s1 + $0x418] sm:$0xff]
    %v121 = vld [vmem:[%s1 + $0x440] sm:$0xff]
    %v122 = vld [vmem:[%s1 + $0x448] sm:$0xff]
    %v123 = vld [vmem:[%s1 + $0x450] sm:$0xff]
    %v124 = vld [vmem:[%s1 + $0x458] sm:$0xff]
    %v125 = vld [vmem:[%s1 + $0x480] sm:$0xff]
    %v126 = vld [vmem:[%s1 + $0x488] sm:$0xff]
    %v127 = vld [vmem:[%s1 + $0x490] sm:$0xff]
    %v128 = vld [vmem:[%s1 + $0x498] sm:$0xff]
    %v129 = vld [vmem:[%s1 + $0x4c0] sm:$0xff]
    %v130 = vld [vmem:[%s1 + $0x4c8] sm:$0xff]
    %v131 = vld [vmem:[%s1 + $0x4d0] sm:$0xff]
    %v132 = vld [vmem:[%s1 + $0x4d8] sm:$0xff]
    %v133 = vld [vmem:[%s1 + $0x500] sm:$0xff]
    %v134 = vld [vmem:[%s1 + $0x508] sm:$0xff]
    %v135 = vld [vmem:[%s1 + $0x510] sm:$0xff]
    %v136 = vld [vmem:[%s1 + $0x518] sm:$0xff]
    %v137 = vld [vmem:[%s1 + $0x540] sm:$0xff]
    %v138 = vld [vmem:[%s1 + $0x548] sm:$0xff]
    %v139 = vld [vmem:[%s1 + $0x550] sm:$0xff]
    %v140 = vld [vmem:[%s1 + $0x558] sm:$0xff]
    %v141 = vld [vmem:[%s1 + $0x580] sm:$0xff]
    %v142 = vld [vmem:[%s1 + $0x588] sm:$0xff]
    %v143 = vld [vmem:[%s1 + $0x590] sm:$0xff]
    %v144 = vld [vmem:[%s1 + $0x598] sm:$0xff]
    %v145 = vld [vmem:[%s1 + $0x5c0] sm:$0xff]
    %v146 = vld [vmem:[%s1 + $0x5c8] sm:$0xff]
    %v147 = vld [vmem:[%s1 + $0x5d0] sm:$0xff]
    %v148 = vld [vmem:[%s1 + $0x5d8] sm:$0xff]
    %v149 = vld [vmem:[%s1 + $0x600] sm:$0xff]
    %v150 = vld [vmem:[%s1 + $0x608] sm:$0xff]
    %v151 = vld [vmem:[%s1 + $0x610] sm:$0xff]
    %v152 = vld [vmem:[%s1 + $0x618] sm:$0xff]
    %v153 = vld [vmem:[%s1 + $0x640] sm:$0xff]
    %v154 = vld [vmem:[%s1 + $0x648] sm:$0xff]
    %v155 = vld [vmem:[%s1 + $0x650] sm:$0xff]
    %v156 = vld [vmem:[%s1 + $0x658] sm:$0xff]
    %v157 = vld [vmem:[%s1 + $0x680] sm:$0xff]
    %v158 = vld [vmem:[%s1 + $0x688] sm:$0xff]
    %v159 = vld [vmem:[%s1 + $0x690] sm:$0xff]
    %v160 = vld [vmem:[%s1 + $0x698] sm:$0xff]
    %v161 = vld [vmem:[%s1 + $0x6c0] sm:$0xff]
    %v162 = vld [vmem:[%s1 + $0x6c8] sm:$0xff]
    %v163 = vld [vmem:[%s1 + $0x6d0] sm:$0xff]
    %v164 = vld [vmem:[%s1 + $0x6d8] sm:$0xff]
    %v165 = vld [vmem:[%s1 + $0x700] sm:$0xff]
    %v166 = vld [vmem:[%s1 + $0x708] sm:$0xff]
    %v167 = vld [vmem:[%s1 + $0x710] sm:$0xff]
    %v168 = vld [vmem:[%s1 + $0x718] sm:$0xff]
    %v169 = vld [vmem:[%s1 + $0x740] sm:$0xff]
    %v170 = vld [vmem:[%s1 + $0x748] sm:$0xff]
    %v171 = vld [vmem:[%s1 + $0x750] sm:$0xff]
    %v172 = vld [vmem:[%s1 + $0x758] sm:$0xff]
    %v173 = vld [vmem:[%s1 + $0x780] sm:$0xff]
    %v174 = vld [vmem:[%s1 + $0x788] sm:$0xff]
    %v175 = vld [vmem:[%s1 + $0x790] sm:$0xff]
    %v176 = vld [vmem:[%s1 + $0x798] sm:$0xff]
    %v177 = vld [vmem:[%s1 + $0x7c0] sm:$0xff]
    %v178 = vld [vmem:[%s1 + $0x7c8] sm:$0xff]
    %v179 = vld [vmem:[%s1 + $0x7d0] sm:$0xff]
    %v180 = vld [vmem:[%s1 + $0x7d8] sm:$0xff]
    %v181 = vld [vmem:[%s2] sm:$0xf]
    %v183 = vlaneseq
    %v184 = vshrl.u32 %v183, 7
    %v185 = vsub.s32 0, %v184
    %v186 = vrot.slane %v181, %v185
    %v187 = vlaneseq
    %v188 = vshrl.u32 %v187, 7
    %v189 = vsub.s32 1, %v188
    %v190 = vrot.slane %v181, %v189
    %v191 = vlaneseq
    %v192 = vshrl.u32 %v191, 7
    %v193 = vsub.s32 2, %v192
    %v194 = vrot.slane %v181, %v193
    %v195 = vlaneseq
    %v196 = vshrl.u32 %v195, 7
    %v197 = vsub.s32 3, %v196
    %v198 = vrot.slane %v181, %v197
    %203 = vmatprep.subr.mxu0 %v114
    %204 = vmatpush1.msra.mxu0 %v113
    %205 = vmatprep.subr.mxu0 %v110
    %206 = vmatpush1.msra.mxu0 %v109
    %207 = vmatprep.subr.mxu0 %v106
    %208 = vmatpush1.msra.mxu0 %v105
    %209 = vmatprep.subr.mxu0 %v102
    %210 = vmatpush1.msra.mxu0 %v101
    %211 = vmatprep.subr.mxu0 %v98
    %212 = vmatpush1.msra.mxu0 %v97
    %213 = vmatprep.subr.mxu0 %v94
    %214 = vmatpush1.msra.mxu0 %v93
    %215 = vmatprep.subr.mxu0 %v90
    %216 = vmatpush1.msra.mxu0 %v89
    %217 = vmatprep.subr.mxu0 %v86
    %218 = vmatpush1.msra.mxu0 %v85
    %219 = vmatprep.subr.mxu0 %v82
    %220 = vmatpush1.msra.mxu0 %v81
    %221 = vmatprep.subr.mxu0 %v78
    %222 = vmatpush1.msra.mxu0 %v77
    %223 = vmatprep.subr.mxu0 %v74
    %224 = vmatpush1.msra.mxu0 %v73
    %225 = vmatprep.subr.mxu0 %v70
    %226 = vmatpush1.msra.mxu0 %v69
    %227 = vmatprep.subr.mxu0 %v66
    %228 = vmatpush1.msra.mxu0 %v65
    %229 = vmatprep.subr.mxu0 %v62
    %230 = vmatpush1.msra.mxu0 %v61
    %231 = vmatprep.subr.mxu0 %v58
    %232 = vmatpush1.msra.mxu0 %v57
    %233 = vmatprep.subr.mxu0 %v54
    %234 = vmatpush1.msra.mxu0 %v53
    %235 = vmatprep.subr.mxu0 %v178
    %236 = vmatpush2.msra.mxu0 %v177
    %237 = vmatprep.subr.mxu0 %v174
    %238 = vmatpush2.msra.mxu0 %v173
    %239 = vmatprep.subr.mxu0 %v170
    %240 = vmatpush2.msra.mxu0 %v169
    %241 = vmatprep.subr.mxu0 %v166
    %242 = vmatpush2.msra.mxu0 %v165
    %243 = vmatprep.subr.mxu0 %v162
    %244 = vmatpush2.msra.mxu0 %v161
    %245 = vmatprep.subr.mxu0 %v158
    %246 = vmatpush2.msra.mxu0 %v157
    %247 = vmatprep.subr.mxu0 %v154
    %248 = vmatpush2.msra.mxu0 %v153
    %249 = vmatprep.subr.mxu0 %v150
    %250 = vmatpush2.msra.mxu0 %v149
    %251 = vmatprep.subr.mxu0 %v146
    %252 = vmatpush2.msra.mxu0 %v145
    %253 = vmatprep.subr.mxu0 %v142
    %254 = vmatpush2.msra.mxu0 %v141
    %255 = vmatprep.subr.mxu0 %v138
    %256 = vmatpush2.msra.mxu0 %v137
    %257 = vmatprep.subr.mxu0 %v134
    %258 = vmatpush2.msra.mxu0 %v133
    %259 = vmatprep.subr.mxu0 %v130
    %260 = vmatpush2.msra.mxu0 %v129
    %261 = vmatprep.subr.mxu0 %v126
    %262 = vmatpush2.msra.mxu0 %v125
    %263 = vmatprep.subr.mxu0 %v122
    %264 = vmatpush2.msra.mxu0 %v121
    %265 = vmatprep.subr.mxu0 %v118
    %266 = vmatpush2.msra.mxu0 %v117
    %267 = vmatprep.mubr.f32.mxu0 %v38
    %268 = vmatmul.mubr.f32.gmra.mxu0 %v37
    %v269 = vpop.f32.mrf.mxu0
    %v270 = vadd.f32 %v186, %v269
    %v271 = vpop.f32.mrf.mxu0
    %v272 = vadd.f32 %v190, %v271
    %273 = vmatprep.mubr.f32.mxu0 %v40
    %274 = vmatmul.mubr.f32.gmra.mxu0 %v39
    %v275 = vpop.f32.mrf.mxu0
    %v276 = vadd.f32 %v186, %v275
    %v277 = vpop.f32.mrf.mxu0
    %v278 = vadd.f32 %v190, %v277
    %279 = vmatprep.mubr.f32.mxu0 %v42
    %280 = vmatmul.mubr.f32.gmra.mxu0 %v41
    %v281 = vpop.f32.mrf.mxu0
    %v282 = vadd.f32 %v186, %v281
    %v283 = vpop.f32.mrf.mxu0
    %v284 = vadd.f32 %v190, %v283
    %285 = vmatprep.mubr.f32.mxu0 %v44
    %286 = vmatmul.mubr.f32.gmra.mxu0 %v43
    %v287 = vpop.f32.mrf.mxu0
    %v288 = vadd.f32 %v186, %v287
    %v289 = vpop.f32.mrf.mxu0
    %v290 = vadd.f32 %v190, %v289
    %291 = vmatprep.mubr.f32.mxu0 %v46
    %292 = vmatmul.mubr.f32.gmra.mxu0 %v45
    %v293 = vpop.f32.mrf.mxu0
    %v294 = vadd.f32 %v186, %v293
    %v295 = vpop.f32.mrf.mxu0
    %v296 = vadd.f32 %v190, %v295
    %297 = vmatprep.mubr.f32.mxu0 %v48
    %298 = vmatmul.mubr.f32.gmra.mxu0 %v47
    %v299 = vpop.f32.mrf.mxu0
    %v300 = vadd.f32 %v186, %v299
    %v301 = vpop.f32.mrf.mxu0
    %v302 = vadd.f32 %v190, %v301
    %303 = vmatprep.mubr.f32.mxu0 %v50
    %304 = vmatmul.mubr.f32.gmra.mxu0 %v49
    %v305 = vpop.f32.mrf.mxu0
    %v306 = vadd.f32 %v186, %v305
    %v307 = vpop.f32.mrf.mxu0
    %v308 = vadd.f32 %v190, %v307
    %309 = vmatprep.mubr.f32.mxu0 %v52
    %310 = vmatmul.mubr.f32.gmra.mxu0 %v51
    %v311 = vpop.f32.mrf.mxu0
    %v312 = vadd.f32 %v186, %v311
    %v313 = vpop.f32.mrf.mxu0
    %v314 = vadd.f32 %v190, %v313
    %315 = vdwg.mxu0
    %316 = vmatprep.subr.mxu0 %v116
    %317 = vmatpush1.msra.mxu0 %v115
    %318 = vmatprep.subr.mxu0 %v112
    %319 = vmatpush1.msra.mxu0 %v111
    %320 = vmatprep.subr.mxu0 %v108
    %321 = vmatpush1.msra.mxu0 %v107
    %322 = vmatprep.subr.mxu0 %v104
    %323 = vmatpush1.msra.mxu0 %v103
    %324 = vmatprep.subr.mxu0 %v100
    %325 = vmatpush1.msra.mxu0 %v99
    %326 = vmatprep.subr.mxu0 %v96
    %327 = vmatpush1.msra.mxu0 %v95
    %328 = vmatprep.subr.mxu0 %v92
    %329 = vmatpush1.msra.mxu0 %v91
    %330 = vmatprep.subr.mxu0 %v88
    %331 = vmatpush1.msra.mxu0 %v87
    %332 = vmatprep.subr.mxu0 %v84
    %333 = vmatpush1.msra.mxu0 %v83
    %334 = vmatprep.subr.mxu0 %v80
    %335 = vmatpush1.msra.mxu0 %v79
    %336 = vmatprep.subr.mxu0 %v76
    %337 = vmatpush1.msra.mxu0 %v75
    %338 = vmatprep.subr.mxu0 %v72
    %339 = vmatpush1.msra.mxu0 %v71
    %340 = vmatprep.subr.mxu0 %v68
    %341 = vmatpush1.msra.mxu0 %v67
    %342 = vmatprep.subr.mxu0 %v64
    %343 = vmatpush1.msra.mxu0 %v63
    %344 = vmatprep.subr.mxu0 %v60
    %345 = vmatpush1.msra.mxu0 %v59
    %346 = vmatprep.subr.mxu0 %v56
    %347 = vmatpush1.msra.mxu0 %v55
    %348 = vmatprep.subr.mxu0 %v180
    %349 = vmatpush2.msra.mxu0 %v179
    %350 = vmatprep.subr.mxu0 %v176
    %351 = vmatpush2.msra.mxu0 %v175
    %352 = vmatprep.subr.mxu0 %v172
    %353 = vmatpush2.msra.mxu0 %v171
    %354 = vmatprep.subr.mxu0 %v168
    %355 = vmatpush2.msra.mxu0 %v167
    %356 = vmatprep.subr.mxu0 %v164
    %357 = vmatpush2.msra.mxu0 %v163
    %358 = vmatprep.subr.mxu0 %v160
    %359 = vmatpush2.msra.mxu0 %v159
    %360 = vmatprep.subr.mxu0 %v156
    %361 = vmatpush2.msra.mxu0 %v155
    %362 = vmatprep.subr.mxu0 %v152
    %363 = vmatpush2.msra.mxu0 %v151
    %364 = vmatprep.subr.mxu0 %v148
    %365 = vmatpush2.msra.mxu0 %v147
    %366 = vmatprep.subr.mxu0 %v144
    %367 = vmatpush2.msra.mxu0 %v143
    %368 = vmatprep.subr.mxu0 %v140
    %369 = vmatpush2.msra.mxu0 %v139
    %370 = vmatprep.subr.mxu0 %v136
    %371 = vmatpush2.msra.mxu0 %v135
    %372 = vmatprep.subr.mxu0 %v132
    %373 = vmatpush2.msra.mxu0 %v131
    %374 = vmatprep.subr.mxu0 %v128
    %375 = vmatpush2.msra.mxu0 %v127
    %376 = vmatprep.subr.mxu0 %v124
    %377 = vmatpush2.msra.mxu0 %v123
    %378 = vmatprep.subr.mxu0 %v120
    %379 = vmatpush2.msra.mxu0 %v119
    %380 = vmatprep.mubr.f32.mxu0 %v38
    %381 = vmatmul.mubr.f32.gmra.mxu0 %v37
    %v382 = vpop.f32.mrf.mxu0
    %v383 = vadd.f32 %v194, %v382
    %v384 = vpop.f32.mrf.mxu0
    %v385 = vadd.f32 %v198, %v384
    %386 = vmatprep.mubr.f32.mxu0 %v40
    %387 = vmatmul.mubr.f32.gmra.mxu0 %v39
    %v388 = vpop.f32.mrf.mxu0
    %v389 = vadd.f32 %v194, %v388
    %v390 = vpop.f32.mrf.mxu0
    %v391 = vadd.f32 %v198, %v390
    %392 = vmatprep.mubr.f32.mxu0 %v42
    %393 = vmatmul.mubr.f32.gmra.mxu0 %v41
    %v394 = vpop.f32.mrf.mxu0
    %v395 = vadd.f32 %v194, %v394
    %v396 = vpop.f32.mrf.mxu0
    %v397 = vadd.f32 %v198, %v396
    %398 = vmatprep.mubr.f32.mxu0 %v44
    %399 = vmatmul.mubr.f32.gmra.mxu0 %v43
    %v400 = vpop.f32.mrf.mxu0
    %v401 = vadd.f32 %v194, %v400
    %v402 = vpop.f32.mrf.mxu0
    %v403 = vadd.f32 %v198, %v402
    %404 = vmatprep.mubr.f32.mxu0 %v46
    %405 = vmatmul.mubr.f32.gmra.mxu0 %v45
    %v406 = vpop.f32.mrf.mxu0
    %v407 = vadd.f32 %v194, %v406
    %v408 = vpop.f32.mrf.mxu0
    %v409 = vadd.f32 %v198, %v408
    %410 = vmatprep.mubr.f32.mxu0 %v48
    %411 = vmatmul.mubr.f32.gmra.mxu0 %v47
    %v412 = vpop.f32.mrf.mxu0
    %v413 = vadd.f32 %v194, %v412
    %v414 = vpop.f32.mrf.mxu0
    %v415 = vadd.f32 %v198, %v414
    %416 = vmatprep.mubr.f32.mxu0 %v50
    %417 = vmatmul.mubr.f32.gmra.mxu0 %v49
    %v418 = vpop.f32.mrf.mxu0
    %v419 = vadd.f32 %v194, %v418
    %v420 = vpop.f32.mrf.mxu0
    %v421 = vadd.f32 %v198, %v420
    %422 = vmatprep.mubr.f32.mxu0 %v52
    %423 = vmatmul.mubr.f32.gmra.mxu0 %v51
    %v424 = vpop.f32.mrf.mxu0
    %v425 = vadd.f32 %v194, %v424
    %v426 = vpop.f32.mrf.mxu0
    %v427 = vadd.f32 %v198, %v426
    %428 = vdwg.mxu0
    %429 = vst [vmem:[#allocation2] sm:$0xff] %v270
    %430 = vst [vmem:[#allocation2 + $0x8] sm:$0xff] %v272
    %431 = vst [vmem:[#allocation2 + $0x10] sm:$0xff] %v383
    %432 = vst [vmem:[#allocation2 + $0x18] sm:$0xff] %v385
    %433 = vst [vmem:[#allocation2 + $0x20] sm:$0xff] %v276
    %434 = vst [vmem:[#allocation2 + $0x28] sm:$0xff] %v278
    %435 = vst [vmem:[#allocation2 + $0x30] sm:$0xff] %v389
    %436 = vst [vmem:[#allocation2 + $0x38] sm:$0xff] %v391
    %437 = vst [vmem:[#allocation2 + $0x40] sm:$0xff] %v282
    %438 = vst [vmem:[#allocation2 + $0x48] sm:$0xff] %v284
    %439 = vst [vmem:[#allocation2 + $0x50] sm:$0xff] %v395
    %440 = vst [vmem:[#allocation2 + $0x58] sm:$0xff] %v397
    %441 = vst [vmem:[#allocation2 + $0x60] sm:$0xff] %v288
    %442 = vst [vmem:[#allocation2 + $0x68] sm:$0xff] %v290
    %443 = vst [vmem:[#allocation2 + $0x70] sm:$0xff] %v401
    %444 = vst [vmem:[#allocation2 + $0x78] sm:$0xff] %v403
    %445 = vst [vmem:[#allocation2 + $0x80] sm:$0xff] %v294
    %446 = vst [vmem:[#allocation2 + $0x88] sm:$0xff] %v296
    %447 = vst [vmem:[#allocation2 + $0x90] sm:$0xff] %v407
    %448 = vst [vmem:[#allocation2 + $0x98] sm:$0xff] %v409
    %449 = vst [vmem:[#allocation2 + $0xa0] sm:$0xff] %v300
    %450 = vst [vmem:[#allocation2 + $0xa8] sm:$0xff] %v302
    %451 = vst [vmem:[#allocation2 + $0xb0] sm:$0xff] %v413
    %452 = vst [vmem:[#allocation2 + $0xb8] sm:$0xff] %v415
    %453 = vst [vmem:[#allocation2 + $0xc0] sm:$0xff] %v306
    %454 = vst [vmem:[#allocation2 + $0xc8] sm:$0xff] %v308
    %455 = vst [vmem:[#allocation2 + $0xd0] sm:$0xff] %v419
    %456 = vst [vmem:[#allocation2 + $0xd8] sm:$0xff] %v421
    %457 = vst [vmem:[#allocation2 + $0xe0] sm:$0xff] %v312
    %458 = vst [vmem:[#allocation2 + $0xe8] sm:$0xff] %v314
    %459 = vst [vmem:[#allocation2 + $0xf0] sm:$0xff] %v425
    %460 = vst [vmem:[#allocation2 + $0xf8] sm:$0xff] %v427
    %v461 = vld [vmem:[#allocation3] sm:$0xff]
    %v462 = vld [vmem:[#allocation3 + $0x8] sm:$0xff]
    %v463 = vld [vmem:[#allocation3 + $0x10] sm:$0xff]
    %v464 = vld [vmem:[#allocation3 + $0x18] sm:$0xff]
    %v465 = vld [vmem:[#allocation3 + $0x20] sm:$0xff]
    %v466 = vld [vmem:[#allocation3 + $0x28] sm:$0xff]
    %v467 = vld [vmem:[#allocation3 + $0x30] sm:$0xff]
    %v468 = vld [vmem:[#allocation3 + $0x38] sm:$0xff]
    %v469 = vld [vmem:[#allocation3 + $0x40] sm:$0xff]
    %v470 = vld [vmem:[#allocation3 + $0x48] sm:$0xff]
    %v471 = vld [vmem:[#allocation3 + $0x50] sm:$0xff]
    %v472 = vld [vmem:[#allocation3 + $0x58] sm:$0xff]
    %v473 = vld [vmem:[#allocation3 + $0x60] sm:$0xff]
    %v474 = vld [vmem:[#allocation3 + $0x68] sm:$0xff]
    %v475 = vld [vmem:[#allocation3 + $0x70] sm:$0xff]
    %v476 = vld [vmem:[#allocation3 + $0x78] sm:$0xff]
    %v477 = vld [vmem:[#allocation3 + $0x80] sm:$0xff]
    %v478 = vld [vmem:[#allocation3 + $0x88] sm:$0xff]
    %v479 = vld [vmem:[#allocation3 + $0x90] sm:$0xff]
    %v480 = vld [vmem:[#allocation3 + $0x98] sm:$0xff]
    %v481 = vld [vmem:[#allocation3 + $0xa0] sm:$0xff]
    %v482 = vld [vmem:[#allocation3 + $0xa8] sm:$0xff]
    %v483 = vld [vmem:[#allocation3 + $0xb0] sm:$0xff]
    %v484 = vld [vmem:[#allocation3 + $0xb8] sm:$0xff]
    %v485 = vld [vmem:[#allocation3 + $0xc0] sm:$0xff]
    %v486 = vld [vmem:[#allocation3 + $0xc8] sm:$0xff]
    %v487 = vld [vmem:[#allocation3 + $0xd0] sm:$0xff]
    %v488 = vld [vmem:[#allocation3 + $0xd8] sm:$0xff]
    %v489 = vld [vmem:[#allocation3 + $0xe0] sm:$0xff]
    %v490 = vld [vmem:[#allocation3 + $0xe8] sm:$0xff]
    %v491 = vld [vmem:[#allocation3 + $0xf0] sm:$0xff]
    %v492 = vld [vmem:[#allocation3 + $0xf8] sm:$0xff]
    %v493 = vld [vmem:[#allocation3 + $0x100] sm:$0xff]
    %v494 = vld [vmem:[#allocation3 + $0x108] sm:$0xff]
    %v495 = vld [vmem:[#allocation3 + $0x110] sm:$0xff]
    %v496 = vld [vmem:[#allocation3 + $0x118] sm:$0xff]
    %v497 = vld [vmem:[#allocation3 + $0x120] sm:$0xff]
    %v498 = vld [vmem:[#allocation3 + $0x128] sm:$0xff]
    %v499 = vld [vmem:[#allocation3 + $0x130] sm:$0xff]
    %v500 = vld [vmem:[#allocation3 + $0x138] sm:$0xff]
    %v501 = vld [vmem:[#allocation3 + $0x140] sm:$0xff]
    %v502 = vld [vmem:[#allocation3 + $0x148] sm:$0xff]
    %v503 = vld [vmem:[#allocation3 + $0x150] sm:$0xff]
    %v504 = vld [vmem:[#allocation3 + $0x158] sm:$0xff]
    %v505 = vld [vmem:[#allocation3 + $0x160] sm:$0xff]
    %v506 = vld [vmem:[#allocation3 + $0x168] sm:$0xff]
    %v507 = vld [vmem:[#allocation3 + $0x170] sm:$0xff]
    %v508 = vld [vmem:[#allocation3 + $0x178] sm:$0xff]
    %v509 = vld [vmem:[#allocation3 + $0x180] sm:$0xff]
    %v510 = vld [vmem:[#allocation3 + $0x188] sm:$0xff]
    %v511 = vld [vmem:[#allocation3 + $0x190] sm:$0xff]
    %v512 = vld [vmem:[#allocation3 + $0x198] sm:$0xff]
    %v513 = vld [vmem:[#allocation3 + $0x1a0] sm:$0xff]
    %v514 = vld [vmem:[#allocation3 + $0x1a8] sm:$0xff]
    %v515 = vld [vmem:[#allocation3 + $0x1b0] sm:$0xff]
    %v516 = vld [vmem:[#allocation3 + $0x1b8] sm:$0xff]
    %v517 = vld [vmem:[#allocation3 + $0x1c0] sm:$0xff]
    %v518 = vld [vmem:[#allocation3 + $0x1c8] sm:$0xff]
    %v519 = vld [vmem:[#allocation3 + $0x1d0] sm:$0xff]
    %v520 = vld [vmem:[#allocation3 + $0x1d8] sm:$0xff]
    %v521 = vld [vmem:[#allocation3 + $0x1e0] sm:$0xff]
    %v522 = vld [vmem:[#allocation3 + $0x1e8] sm:$0xff]
    %v523 = vld [vmem:[#allocation3 + $0x1f0] sm:$0xff]
    %v524 = vld [vmem:[#allocation3 + $0x1f8] sm:$0xff]
    %v525 = vld [vmem:[#allocation2] sm:$0xff]
    %v526 = vld [vmem:[#allocation2 + $0x8] sm:$0xff]
    %v527 = vld [vmem:[#allocation2 + $0x10] sm:$0xff]
    %v528 = vld [vmem:[#allocation2 + $0x18] sm:$0xff]
    %529 = vmatprep.subr.mxu0 %v522
    %530 = vmatpush1.msra.mxu0 %v521
    %531 = vmatprep.subr.mxu0 %v518
    %532 = vmatpush1.msra.mxu0 %v517
    %533 = vmatprep.subr.mxu0 %v514
    %534 = vmatpush1.msra.mxu0 %v513
    %535 = vmatprep.subr.mxu0 %v510
    %536 = vmatpush1.msra.mxu0 %v509
    %537 = vmatprep.subr.mxu0 %v506
    %538 = vmatpush1.msra.mxu0 %v505
    %539 = vmatprep.subr.mxu0 %v502
    %540 = vmatpush1.msra.mxu0 %v501
    %541 = vmatprep.subr.mxu0 %v498
    %542 = vmatpush1.msra.mxu0 %v497
    %543 = vmatprep.subr.mxu0 %v494
    %544 = vmatpush1.msra.mxu0 %v493
    %545 = vmatprep.subr.mxu0 %v490
    %546 = vmatpush1.msra.mxu0 %v489
    %547 = vmatprep.subr.mxu0 %v486
    %548 = vmatpush1.msra.mxu0 %v485
    %549 = vmatprep.subr.mxu0 %v482
    %550 = vmatpush1.msra.mxu0 %v481
    %551 = vmatprep.subr.mxu0 %v478
    %552 = vmatpush1.msra.mxu0 %v477
    %553 = vmatprep.subr.mxu0 %v474
    %554 = vmatpush1.msra.mxu0 %v473
    %555 = vmatprep.subr.mxu0 %v470
    %556 = vmatpush1.msra.mxu0 %v469
    %557 = vmatprep.subr.mxu0 %v466
    %558 = vmatpush1.msra.mxu0 %v465
    %559 = vmatprep.subr.mxu0 %v462
    %560 = vmatpush1.msra.mxu0 %v461
    %561 = vmatprep.subr.mxu0 0.0
    %562 = vmatpush2.msra.mxu0 0.0
    %563 = vmatprep.subr.mxu0 0.0
    %564 = vmatpush2.msra.mxu0 0.0
    %565 = vmatprep.subr.mxu0 0.0
    %566 = vmatpush2.msra.mxu0 0.0
    %567 = vmatprep.subr.mxu0 0.0
    %568 = vmatpush2.msra.mxu0 0.0
    %569 = vmatprep.subr.mxu0 0.0
    %570 = vmatpush2.msra.mxu0 0.0
    %571 = vmatprep.subr.mxu0 0.0
    %572 = vmatpush2.msra.mxu0 0.0
    %573 = vmatprep.subr.mxu0 0.0
    %574 = vmatpush2.msra.mxu0 0.0
    %575 = vmatprep.subr.mxu0 0.0
    %576 = vmatpush2.msra.mxu0 0.0
    %577 = vmatprep.subr.mxu0 0.0
    %578 = vmatpush2.msra.mxu0 0.0
    %579 = vmatprep.subr.mxu0 0.0
    %580 = vmatpush2.msra.mxu0 0.0
    %581 = vmatprep.subr.mxu0 0.0
    %582 = vmatpush2.msra.mxu0 0.0
    %583 = vmatprep.subr.mxu0 0.0
    %584 = vmatpush2.msra.mxu0 0.0
    %585 = vmatprep.subr.mxu0 0.0
    %586 = vmatpush2.msra.mxu0 0.0
    %587 = vmatprep.subr.mxu0 0.0
    %588 = vmatpush2.msra.mxu0 0.0
    %589 = vmatprep.subr.mxu0 0.0
    %590 = vmatpush2.msra.mxu0 0.0
    %591 = vmatprep.subr.mxu0 0.0
    %592 = vmatpush2.msra.mxu0 0.0
    %593 = vmatprep.mubr.f32.mxu0 0.0
    %594 = vmatmul.mubr.f32.gmra.mxu0 0.0
    %v595 = vpop.f32.mrf.mxu0
    %v596 = vadd.f32 0.0, %v595
    %v597 = vpop.f32.mrf.mxu0
    %v598 = vadd.f32 0.0, %v597
    %599 = vdwg.mxu0
    %600 = vmatprep.subr.mxu0 %v524
    %601 = vmatpush1.msra.mxu0 %v523
    %602 = vmatprep.subr.mxu0 %v520
    %603 = vmatpush1.msra.mxu0 %v519
    %604 = vmatprep.subr.mxu0 %v516
    %605 = vmatpush1.msra.mxu0 %v515
    %606 = vmatprep.subr.mxu0 %v512
    %607 = vmatpush1.msra.mxu0 %v511
    %608 = vmatprep.subr.mxu0 %v508
    %609 = vmatpush1.msra.mxu0 %v507
    %610 = vmatprep.subr.mxu0 %v504
    %611 = vmatpush1.msra.mxu0 %v503
    %612 = vmatprep.subr.mxu0 %v500
    %613 = vmatpush1.msra.mxu0 %v499
    %614 = vmatprep.subr.mxu0 %v496
    %615 = vmatpush1.msra.mxu0 %v495
    %616 = vmatprep.subr.mxu0 %v492
    %617 = vmatpush1.msra.mxu0 %v491
    %618 = vmatprep.subr.mxu0 %v488
    %619 = vmatpush1.msra.mxu0 %v487
    %620 = vmatprep.subr.mxu0 %v484
    %621 = vmatpush1.msra.mxu0 %v483
    %622 = vmatprep.subr.mxu0 %v480
    %623 = vmatpush1.msra.mxu0 %v479
    %624 = vmatprep.subr.mxu0 %v476
    %625 = vmatpush1.msra.mxu0 %v475
    %626 = vmatprep.subr.mxu0 %v472
    %627 = vmatpush1.msra.mxu0 %v471
    %628 = vmatprep.subr.mxu0 %v468
    %629 = vmatpush1.msra.mxu0 %v467
    %630 = vmatprep.subr.mxu0 %v464
    %631 = vmatpush1.msra.mxu0 %v463
    %632 = vmatprep.subr.mxu0 0.0
    %633 = vmatpush2.msra.mxu0 0.0
    %634 = vmatprep.subr.mxu0 0.0
    %635 = vmatpush2.msra.mxu0 0.0
    %636 = vmatprep.subr.mxu0 0.0
    %637 = vmatpush2.msra.mxu0 0.0
    %638 = vmatprep.subr.mxu0 0.0
    %639 = vmatpush2.msra.mxu0 0.0
    %640 = vmatprep.subr.mxu0 0.0
    %641 = vmatpush2.msra.mxu0 0.0
    %642 = vmatprep.subr.mxu0 0.0
    %643 = vmatpush2.msra.mxu0 0.0
    %644 = vmatprep.subr.mxu0 0.0
    %645 = vmatpush2.msra.mxu0 0.0
    %646 = vmatprep.subr.mxu0 0.0
    %647 = vmatpush2.msra.mxu0 0.0
    %648 = vmatprep.subr.mxu0 0.0
    %649 = vmatpush2.msra.mxu0 0.0
    %650 = vmatprep.subr.mxu0 0.0
    %651 = vmatpush2.msra.mxu0 0.0
    %652 = vmatprep.subr.mxu0 0.0
    %653 = vmatpush2.msra.mxu0 0.0
    %654 = vmatprep.subr.mxu0 0.0
    %655 = vmatpush2.msra.mxu0 0.0
    %656 = vmatprep.subr.mxu0 0.0
    %657 = vmatpush2.msra.mxu0 0.0
    %658 = vmatprep.subr.mxu0 0.0
    %659 = vmatpush2.msra.mxu0 0.0
    %660 = vmatprep.subr.mxu0 0.0
    %661 = vmatpush2.msra.mxu0 0.0
    %662 = vmatprep.subr.mxu0 0.0
    %663 = vmatpush2.msra.mxu0 0.0
    %664 = vmatprep.mubr.f32.mxu0 0.0
    %665 = vmatmul.mubr.f32.gmra.mxu0 0.0
    %v666 = vpop.f32.mrf.mxu0
    %v667 = vadd.f32 0.0, %v666
    %v668 = vpop.f32.mrf.mxu0
    %v669 = vadd.f32 0.0, %v668
    %670 = vdwg.mxu0
    %v671 = vadd.f32 %v525, %v596
    %v672 = vadd.f32 %v526, %v598
    %v673 = vadd.f32 %v527, %v667
    %v674 = vadd.f32 %v528, %v669
    %v675 = vmul.f32 %v671, 0.5
    %v676 = vtanh.pop %v675
    %v677 = vmul.f32 %v676, 0.5
    %v678 = vadd.f32 %v677, 0.5
    %v679 = vmul.f32 %v672, 0.5
    %v680 = vtanh.pop %v679
    %v681 = vmul.f32 %v680, 0.5
    %v682 = vadd.f32 %v681, 0.5
    %v683 = vtanh.pop %v673
    %v684 = vmul.f32 %v674, 0.5
    %v685 = vtanh.pop %v684
    %v686 = vmul.f32 %v685, 0.5
    %v687 = vadd.f32 %v686, 0.5
    %v688 = vmul.f32 %v682, 0.0
    %v689 = vmul.f32 %v678, %v683
    %v690 = vadd.f32 %v688, %v689
    %v691 = vtanh.pop %v690
    %v692 = vmul.f32 %v687, %v691
    %s693 = scalar_lea.vmem [#allocation2], 32
    %v694 = vld [vmem:[%s693] sm:$0xff]
    %v695 = vld [vmem:[%s693 + $0x8] sm:$0xff]
    %v696 = vld [vmem:[%s693 + $0x10] sm:$0xff]
    %v697 = vld [vmem:[%s693 + $0x18] sm:$0xff]
    %698 = vmatprep.subr.mxu0 %v522
    %699 = vmatpush1.msra.mxu0 %v521
    %700 = vmatprep.subr.mxu0 %v518
    %701 = vmatpush1.msra.mxu0 %v517
    %702 = vmatprep.subr.mxu0 %v514
    %703 = vmatpush1.msra.mxu0 %v513
    %704 = vmatprep.subr.mxu0 %v510
    %705 = vmatpush1.msra.mxu0 %v509
    %706 = vmatprep.subr.mxu0 %v506
    %707 = vmatpush1.msra.mxu0 %v505
    %708 = vmatprep.subr.mxu0 %v502
    %709 = vmatpush1.msra.mxu0 %v501
    %710 = vmatprep.subr.mxu0 %v498
    %711 = vmatpush1.msra.mxu0 %v497
    %712 = vmatprep.subr.mxu0 %v494
    %713 = vmatpush1.msra.mxu0 %v493
    %714 = vmatprep.subr.mxu0 %v490
    %715 = vmatpush1.msra.mxu0 %v489
    %716 = vmatprep.subr.mxu0 %v486
    %717 = vmatpush1.msra.mxu0 %v485
    %718 = vmatprep.subr.mxu0 %v482
    %719 = vmatpush1.msra.mxu0 %v481
    %720 = vmatprep.subr.mxu0 %v478
    %721 = vmatpush1.msra.mxu0 %v477
    %722 = vmatprep.subr.mxu0 %v474
    %723 = vmatpush1.msra.mxu0 %v473
    %724 = vmatprep.subr.mxu0 %v470
    %725 = vmatpush1.msra.mxu0 %v469
    %726 = vmatprep.subr.mxu0 %v466
    %727 = vmatpush1.msra.mxu0 %v465
    %728 = vmatprep.subr.mxu0 %v462
    %729 = vmatpush1.msra.mxu0 %v461
    %730 = vmatprep.subr.mxu0 0.0
    %731 = vmatpush2.msra.mxu0 0.0
    %732 = vmatprep.subr.mxu0 0.0
    %733 = vmatpush2.msra.mxu0 0.0
    %734 = vmatprep.subr.mxu0 0.0
    %735 = vmatpush2.msra.mxu0 0.0
    %736 = vmatprep.subr.mxu0 0.0
    %737 = vmatpush2.msra.mxu0 0.0
    %738 = vmatprep.subr.mxu0 0.0
    %739 = vmatpush2.msra.mxu0 0.0
    %740 = vmatprep.subr.mxu0 0.0
    %741 = vmatpush2.msra.mxu0 0.0
    %742 = vmatprep.subr.mxu0 0.0
    %743 = vmatpush2.msra.mxu0 0.0
    %744 = vmatprep.subr.mxu0 0.0
    %745 = vmatpush2.msra.mxu0 0.0
    %746 = vmatprep.subr.mxu0 0.0
    %747 = vmatpush2.msra.mxu0 0.0
    %748 = vmatprep.subr.mxu0 0.0
    %749 = vmatpush2.msra.mxu0 0.0
    %750 = vmatprep.subr.mxu0 0.0
    %751 = vmatpush2.msra.mxu0 0.0
    %752 = vmatprep.subr.mxu0 0.0
    %753 = vmatpush2.msra.mxu0 0.0
    %754 = vmatprep.subr.mxu0 0.0
    %755 = vmatpush2.msra.mxu0 0.0
    %756 = vmatprep.subr.mxu0 0.0
    %757 = vmatpush2.msra.mxu0 0.0
    %758 = vmatprep.subr.mxu0 0.0
    %759 = vmatpush2.msra.mxu0 0.0
    %760 = vmatprep.subr.mxu0 0.0
    %761 = vmatpush2.msra.mxu0 0.0
    %762 = vmatprep.mubr.f32.mxu0 0.0
    %763 = vmatmul.mubr.f32.gmra.mxu0 %v692
    %v764 = vpop.f32.mrf.mxu0
    %v765 = vadd.f32 0.0, %v764
    %v766 = vpop.f32.mrf.mxu0
    %v767 = vadd.f32 0.0, %v766
    %768 = vdwg.mxu0
    %769 = vmatprep.subr.mxu0 %v524
    %770 = vmatpush1.msra.mxu0 %v523
    %771 = vmatprep.subr.mxu0 %v520
    %772 = vmatpush1.msra.mxu0 %v519
    %773 = vmatprep.subr.mxu0 %v516
    %774 = vmatpush1.msra.mxu0 %v515
    %775 = vmatprep.subr.mxu0 %v512
    %776 = vmatpush1.msra.mxu0 %v511
    %777 = vmatprep.subr.mxu0 %v508
    %778 = vmatpush1.msra.mxu0 %v507
    %779 = vmatprep.subr.mxu0 %v504
    %780 = vmatpush1.msra.mxu0 %v503
    %781 = vmatprep.subr.mxu0 %v500
    %782 = vmatpush1.msra.mxu0 %v499
    %783 = vmatprep.subr.mxu0 %v496
    %784 = vmatpush1.msra.mxu0 %v495
    %785 = vmatprep.subr.mxu0 %v492
    %786 = vmatpush1.msra.mxu0 %v491
    %787 = vmatprep.subr.mxu0 %v488
    %788 = vmatpush1.msra.mxu0 %v487
    %789 = vmatprep.subr.mxu0 %v484
    %790 = vmatpush1.msra.mxu0 %v483
    %791 = vmatprep.subr.mxu0 %v480
    %792 = vmatpush1.msra.mxu0 %v479
    %793 = vmatprep.subr.mxu0 %v476
    %794 = vmatpush1.msra.mxu0 %v475
    %795 = vmatprep.subr.mxu0 %v472
    %796 = vmatpush1.msra.mxu0 %v471
    %797 = vmatprep.subr.mxu0 %v468
    %798 = vmatpush1.msra.mxu0 %v467
    %799 = vmatprep.subr.mxu0 %v464
    %800 = vmatpush1.msra.mxu0 %v463
    %801 = vmatprep.subr.mxu0 0.0
    %802 = vmatpush2.msra.mxu0 0.0
    %803 = vmatprep.subr.mxu0 0.0
    %804 = vmatpush2.msra.mxu0 0.0
    %805 = vmatprep.subr.mxu0 0.0
    %806 = vmatpush2.msra.mxu0 0.0
    %807 = vmatprep.subr.mxu0 0.0
    %808 = vmatpush2.msra.mxu0 0.0
    %809 = vmatprep.subr.mxu0 0.0
    %810 = vmatpush2.msra.mxu0 0.0
    %811 = vmatprep.subr.mxu0 0.0
    %812 = vmatpush2.msra.mxu0 0.0
    %813 = vmatprep.subr.mxu0 0.0
    %814 = vmatpush2.msra.mxu0 0.0
    %815 = vmatprep.subr.mxu0 0.0
    %816 = vmatpush2.msra.mxu0 0.0
    %817 = vmatprep.subr.mxu0 0.0
    %818 = vmatpush2.msra.mxu0 0.0
    %819 = vmatprep.subr.mxu0 0.0
    %820 = vmatpush2.msra.mxu0 0.0
    %821 = vmatprep.subr.mxu0 0.0
    %822 = vmatpush2.msra.mxu0 0.0
    %823 = vmatprep.subr.mxu0 0.0
    %824 = vmatpush2.msra.mxu0 0.0
    %825 = vmatprep.subr.mxu0 0.0
    %826 = vmatpush2.msra.mxu0 0.0
    %827 = vmatprep.subr.mxu0 0.0
    %828 = vmatpush2.msra.mxu0 0.0
    %829 = vmatprep.subr.mxu0 0.0
    %830 = vmatpush2.msra.mxu0 0.0
    %831 = vmatprep.subr.mxu0 0.0
    %832 = vmatpush2.msra.mxu0 0.0
    %833 = vmatprep.mubr.f32.mxu0 0.0
    %834 = vmatmul.mubr.f32.gmra.mxu0 %v692
    %v835 = vpop.f32.mrf.mxu0
    %v836 = vadd.f32 0.0, %v835
    %v837 = vpop.f32.mrf.mxu0
    %v838 = vadd.f32 0.0, %v837
    %839 = vdwg.mxu0
    %v840 = vadd.f32 %v694, %v765
    %v841 = vadd.f32 %v695, %v767
    %v842 = vadd.f32 %v696, %v836
    %v843 = vadd.f32 %v697, %v838
    %v844 = vmul.f32 %v840, 0.5
    %v845 = vtanh.pop %v844
    %v846 = vmul.f32 %v845, 0.5
    %v847 = vadd.f32 %v846, 0.5
    %v848 = vmul.f32 %v841, 0.5
    %v849 = vtanh.pop %v848
    %v850 = vmul.f32 %v849, 0.5
    %v851 = vadd.f32 %v850, 0.5
    %v852 = vtanh.pop %v842
    %v853 = vmul.f32 %v843, 0.5
    %v854 = vtanh.pop %v853
    %v855 = vmul.f32 %v854, 0.5
    %v856 = vadd.f32 %v855, 0.5
    %v857 = vmul.f32 %v851, %v690
    %v858 = vmul.f32 %v847, %v852
    %v859 = vadd.f32 %v857, %v858
    %v860 = vtanh.pop %v859
    %v861 = vmul.f32 %v856, %v860
    %s862 = scalar_lea.vmem [#allocation2], 64
    %v863 = vld [vmem:[%s862] sm:$0xff]
    %v864 = vld [vmem:[%s862 + $0x8] sm:$0xff]
    %v865 = vld [vmem:[%s862 + $0x10] sm:$0xff]
    %v866 = vld [vmem:[%s862 + $0x18] sm:$0xff]
    %867 = vmatprep.subr.mxu0 %v522
    %868 = vmatpush1.msra.mxu0 %v521
    %869 = vmatprep.subr.mxu0 %v518
    %870 = vmatpush1.msra.mxu0 %v517
    %871 = vmatprep.subr.mxu0 %v514
    %872 = vmatpush1.msra.mxu0 %v513
    %873 = vmatprep.subr.mxu0 %v510
    %874 = vmatpush1.msra.mxu0 %v509
    %875 = vmatprep.subr.mxu0 %v506
    %876 = vmatpush1.msra.mxu0 %v505
    %877 = vmatprep.subr.mxu0 %v502
    %878 = vmatpush1.msra.mxu0 %v501
    %879 = vmatprep.subr.mxu0 %v498
    %880 = vmatpush1.msra.mxu0 %v497
    %881 = vmatprep.subr.mxu0 %v494
    %882 = vmatpush1.msra.mxu0 %v493
    %883 = vmatprep.subr.mxu0 %v490
    %884 = vmatpush1.msra.mxu0 %v489
    %885 = vmatprep.subr.mxu0 %v486
    %886 = vmatpush1.msra.mxu0 %v485
    %887 = vmatprep.subr.mxu0 %v482
    %888 = vmatpush1.msra.mxu0 %v481
    %889 = vmatprep.subr.mxu0 %v478
    %890 = vmatpush1.msra.mxu0 %v477
    %891 = vmatprep.subr.mxu0 %v474
    %892 = vmatpush1.msra.mxu0 %v473
    %893 = vmatprep.subr.mxu0 %v470
    %894 = vmatpush1.msra.mxu0 %v469
    %895 = vmatprep.subr.mxu0 %v466
    %896 = vmatpush1.msra.mxu0 %v465
    %897 = vmatprep.subr.mxu0 %v462
    %898 = vmatpush1.msra.mxu0 %v461
    %899 = vmatprep.subr.mxu0 0.0
    %900 = vmatpush2.msra.mxu0 0.0
    %901 = vmatprep.subr.mxu0 0.0
    %902 = vmatpush2.msra.mxu0 0.0
    %903 = vmatprep.subr.mxu0 0.0
    %904 = vmatpush2.msra.mxu0 0.0
    %905 = vmatprep.subr.mxu0 0.0
    %906 = vmatpush2.msra.mxu0 0.0
    %907 = vmatprep.subr.mxu0 0.0
    %908 = vmatpush2.msra.mxu0 0.0
    %909 = vmatprep.subr.mxu0 0.0
    %910 = vmatpush2.msra.mxu0 0.0
    %911 = vmatprep.subr.mxu0 0.0
    %912 = vmatpush2.msra.mxu0 0.0
    %913 = vmatprep.subr.mxu0 0.0
    %914 = vmatpush2.msra.mxu0 0.0
    %915 = vmatprep.subr.mxu0 0.0
    %916 = vmatpush2.msra.mxu0 0.0
    %917 = vmatprep.subr.mxu0 0.0
    %918 = vmatpush2.msra.mxu0 0.0
    %919 = vmatprep.subr.mxu0 0.0
    %920 = vmatpush2.msra.mxu0 0.0
    %921 = vmatprep.subr.mxu0 0.0
    %922 = vmatpush2.msra.mxu0 0.0
    %923 = vmatprep.subr.mxu0 0.0
    %924 = vmatpush2.msra.mxu0 0.0
    %925 = vmatprep.subr.mxu0 0.0
    %926 = vmatpush2.msra.mxu0 0.0
    %927 = vmatprep.subr.mxu0 0.0
    %928 = vmatpush2.msra.mxu0 0.0
    %929 = vmatprep.subr.mxu0 0.0
    %930 = vmatpush2.msra.mxu0 0.0
    %931 = vmatprep.mubr.f32.mxu0 0.0
    %932 = vmatmul.mubr.f32.gmra.mxu0 %v861
    %v933 = vpop.f32.mrf.mxu0
    %v934 = vadd.f32 0.0, %v933
    %v935 = vpop.f32.mrf.mxu0
    %v936 = vadd.f32 0.0, %v935
    %937 = vdwg.mxu0
    %938 = vmatprep.subr.mxu0 %v524
    %939 = vmatpush1.msra.mxu0 %v523
    %940 = vmatprep.subr.mxu0 %v520
    %941 = vmatpush1.msra.mxu0 %v519
    %942 = vmatprep.subr.mxu0 %v516
    %943 = vmatpush1.msra.mxu0 %v515
    %944 = vmatprep.subr.mxu0 %v512
    %945 = vmatpush1.msra.mxu0 %v511
    %946 = vmatprep.subr.mxu0 %v508
    %947 = vmatpush1.msra.mxu0 %v507
    %948 = vmatprep.subr.mxu0 %v504
    %949 = vmatpush1.msra.mxu0 %v503
    %950 = vmatprep.subr.mxu0 %v500
    %951 = vmatpush1.msra.mxu0 %v499
    %952 = vmatprep.subr.mxu0 %v496
    %953 = vmatpush1.msra.mxu0 %v495
    %954 = vmatprep.subr.mxu0 %v492
    %955 = vmatpush1.msra.mxu0 %v491
    %956 = vmatprep.subr.mxu0 %v488
    %957 = vmatpush1.msra.mxu0 %v487
    %958 = vmatprep.subr.mxu0 %v484
    %959 = vmatpush1.msra.mxu0 %v483
    %960 = vmatprep.subr.mxu0 %v480
    %961 = vmatpush1.msra.mxu0 %v479
    %962 = vmatprep.subr.mxu0 %v476
    %963 = vmatpush1.msra.mxu0 %v475
    %964 = vmatprep.subr.mxu0 %v472
    %965 = vmatpush1.msra.mxu0 %v471
    %966 = vmatprep.subr.mxu0 %v468
    %967 = vmatpush1.msra.mxu0 %v467
    %968 = vmatprep.subr.mxu0 %v464
    %969 = vmatpush1.msra.mxu0 %v463
    %970 = vmatprep.subr.mxu0 0.0
    %971 = vmatpush2.msra.mxu0 0.0
    %972 = vmatprep.subr.mxu0 0.0
    %973 = vmatpush2.msra.mxu0 0.0
    %974 = vmatprep.subr.mxu0 0.0
    %975 = vmatpush2.msra.mxu0 0.0
    %976 = vmatprep.subr.mxu0 0.0
    %977 = vmatpush2.msra.mxu0 0.0
    %978 = vmatprep.subr.mxu0 0.0
    %979 = vmatpush2.msra.mxu0 0.0
    %980 = vmatprep.subr.mxu0 0.0
    %981 = vmatpush2.msra.mxu0 0.0
    %982 = vmatprep.subr.mxu0 0.0
    %983 = vmatpush2.msra.mxu0 0.0
    %984 = vmatprep.subr.mxu0 0.0
    %985 = vmatpush2.msra.mxu0 0.0
    %986 = vmatprep.subr.mxu0 0.0
    %987 = vmatpush2.msra.mxu0 0.0
    %988 = vmatprep.subr.mxu0 0.0
    %989 = vmatpush2.msra.mxu0 0.0
    %990 = vmatprep.subr.mxu0 0.0
    %991 = vmatpush2.msra.mxu0 0.0
    %992 = vmatprep.subr.mxu0 0.0
    %993 = vmatpush2.msra.mxu0 0.0
    %994 = vmatprep.subr.mxu0 0.0
    %995 = vmatpush2.msra.mxu0 0.0
    %996 = vmatprep.subr.mxu0 0.0
    %997 = vmatpush2.msra.mxu0 0.0
    %998 = vmatprep.subr.mxu0 0.0
    %999 = vmatpush2.msra.mxu0 0.0
    %1000 = vmatprep.subr.mxu0 0.0
    %1001 = vmatpush2.msra.mxu0 0.0
    %1002 = vmatprep.mubr.f32.mxu0 0.0
    %1003 = vmatmul.mubr.f32.gmra.mxu0 %v861
    %v1004 = vpop.f32.mrf.mxu0
    %v1005 = vadd.f32 0.0, %v1004
    %v1006 = vpop.f32.mrf.mxu0
    %v1007 = vadd.f32 0.0, %v1006
    %1008 = vdwg.mxu0
    %v1009 = vadd.f32 %v863, %v934
    %v1010 = vadd.f32 %v864, %v936
    %v1011 = vadd.f32 %v865, %v1005
    %v1012 = vadd.f32 %v866, %v1007
    %v1013 = vmul.f32 %v1009, 0.5
    %v1014 = vtanh.pop %v1013
    %v1015 = vmul.f32 %v1014, 0.5
    %v1016 = vadd.f32 %v1015, 0.5
    %v1017 = vmul.f32 %v1010, 0.5
    %v1018 = vtanh.pop %v1017
    %v1019 = vmul.f32 %v1018, 0.5
    %v1020 = vadd.f32 %v1019, 0.5
    %v1021 = vtanh.pop %v1011
    %v1022 = vmul.f32 %v1012, 0.5
    %v1023 = vtanh.pop %v1022
    %v1024 = vmul.f32 %v1023, 0.5
    %v1025 = vadd.f32 %v1024, 0.5
    %v1026 = vmul.f32 %v1020, %v859
    %v1027 = vmul.f32 %v1016, %v1021
    %v1028 = vadd.f32 %v1026, %v1027
    %v1029 = vtanh.pop %v1028
    %v1030 = vmul.f32 %v1025, %v1029
    %s1031 = scalar_lea.vmem [#allocation2], 96
    %v1032 = vld [vmem:[%s1031] sm:$0xff]
    %v1033 = vld [vmem:[%s1031 + $0x8] sm:$0xff]
    %v1034 = vld [vmem:[%s1031 + $0x10] sm:$0xff]
    %v1035 = vld [vmem:[%s1031 + $0x18] sm:$0xff]
    %1036 = vmatprep.subr.mxu0 %v522
    %1037 = vmatpush1.msra.mxu0 %v521
    %1038 = vmatprep.subr.mxu0 %v518
    %1039 = vmatpush1.msra.mxu0 %v517
    %1040 = vmatprep.subr.mxu0 %v514
    %1041 = vmatpush1.msra.mxu0 %v513
    %1042 = vmatprep.subr.mxu0 %v510
    %1043 = vmatpush1.msra.mxu0 %v509
    %1044 = vmatprep.subr.mxu0 %v506
    %1045 = vmatpush1.msra.mxu0 %v505
    %1046 = vmatprep.subr.mxu0 %v502
    %1047 = vmatpush1.msra.mxu0 %v501
    %1048 = vmatprep.subr.mxu0 %v498
    %1049 = vmatpush1.msra.mxu0 %v497
    %1050 = vmatprep.subr.mxu0 %v494
    %1051 = vmatpush1.msra.mxu0 %v493
    %1052 = vmatprep.subr.mxu0 %v490
    %1053 = vmatpush1.msra.mxu0 %v489
    %1054 = vmatprep.subr.mxu0 %v486
    %1055 = vmatpush1.msra.mxu0 %v485
    %1056 = vmatprep.subr.mxu0 %v482
    %1057 = vmatpush1.msra.mxu0 %v481
    %1058 = vmatprep.subr.mxu0 %v478
    %1059 = vmatpush1.msra.mxu0 %v477
    %1060 = vmatprep.subr.mxu0 %v474
    %1061 = vmatpush1.msra.mxu0 %v473
    %1062 = vmatprep.subr.mxu0 %v470
    %1063 = vmatpush1.msra.mxu0 %v469
    %1064 = vmatprep.subr.mxu0 %v466
    %1065 = vmatpush1.msra.mxu0 %v465
    %1066 = vmatprep.subr.mxu0 %v462
    %1067 = vmatpush1.msra.mxu0 %v461
    %1068 = vmatprep.subr.mxu0 0.0
    %1069 = vmatpush2.msra.mxu0 0.0
    %1070 = vmatprep.subr.mxu0 0.0
    %1071 = vmatpush2.msra.mxu0 0.0
    %1072 = vmatprep.subr.mxu0 0.0
    %1073 = vmatpush2.msra.mxu0 0.0
    %1074 = vmatprep.subr.mxu0 0.0
    %1075 = vmatpush2.msra.mxu0 0.0
    %1076 = vmatprep.subr.mxu0 0.0
    %1077 = vmatpush2.msra.mxu0 0.0
    %1078 = vmatprep.subr.mxu0 0.0
    %1079 = vmatpush2.msra.mxu0 0.0
    %1080 = vmatprep.subr.mxu0 0.0
    %1081 = vmatpush2.msra.mxu0 0.0
    %1082 = vmatprep.subr.mxu0 0.0
    %1083 = vmatpush2.msra.mxu0 0.0
    %1084 = vmatprep.subr.mxu0 0.0
    %1085 = vmatpush2.msra.mxu0 0.0
    %1086 = vmatprep.subr.mxu0 0.0
    %1087 = vmatpush2.msra.mxu0 0.0
    %1088 = vmatprep.subr.mxu0 0.0
    %1089 = vmatpush2.msra.mxu0 0.0
    %1090 = vmatprep.subr.mxu0 0.0
    %1091 = vmatpush2.msra.mxu0 0.0
    %1092 = vmatprep.subr.mxu0 0.0
    %1093 = vmatpush2.msra.mxu0 0.0
    %1094 = vmatprep.subr.mxu0 0.0
    %1095 = vmatpush2.msra.mxu0 0.0
    %1096 = vmatprep.subr.mxu0 0.0
    %1097 = vmatpush2.msra.mxu0 0.0
    %1098 = vmatprep.subr.mxu0 0.0
    %1099 = vmatpush2.msra.mxu0 0.0
    %1100 = vmatprep.mubr.f32.mxu0 0.0
    %1101 = vmatmul.mubr.f32.gmra.mxu0 %v1030
    %v1102 = vpop.f32.mrf.mxu0
    %v1103 = vadd.f32 0.0, %v1102
    %v1104 = vpop.f32.mrf.mxu0
    %v1105 = vadd.f32 0.0, %v1104
    %1106 = vdwg.mxu0
    %1107 = vmatprep.subr.mxu0 %v524
    %1108 = vmatpush1.msra.mxu0 %v523
    %1109 = vmatprep.subr.mxu0 %v520
    %1110 = vmatpush1.msra.mxu0 %v519
    %1111 = vmatprep.subr.mxu0 %v516
    %1112 = vmatpush1.msra.mxu0 %v515
    %1113 = vmatprep.subr.mxu0 %v512
    %1114 = vmatpush1.msra.mxu0 %v511
    %1115 = vmatprep.subr.mxu0 %v508
    %1116 = vmatpush1.msra.mxu0 %v507
    %1117 = vmatprep.subr.mxu0 %v504
    %1118 = vmatpush1.msra.mxu0 %v503
    %1119 = vmatprep.subr.mxu0 %v500
    %1120 = vmatpush1.msra.mxu0 %v499
    %1121 = vmatprep.subr.mxu0 %v496
    %1122 = vmatpush1.msra.mxu0 %v495
    %1123 = vmatprep.subr.mxu0 %v492
    %1124 = vmatpush1.msra.mxu0 %v491
    %1125 = vmatprep.subr.mxu0 %v488
    %1126 = vmatpush1.msra.mxu0 %v487
    %1127 = vmatprep.subr.mxu0 %v484
    %1128 = vmatpush1.msra.mxu0 %v483
    %1129 = vmatprep.subr.mxu0 %v480
    %1130 = vmatpush1.msra.mxu0 %v479
    %1131 = vmatprep.subr.mxu0 %v476
    %1132 = vmatpush1.msra.mxu0 %v475
    %1133 = vmatprep.subr.mxu0 %v472
    %1134 = vmatpush1.msra.mxu0 %v471
    %1135 = vmatprep.subr.mxu0 %v468
    %1136 = vmatpush1.msra.mxu0 %v467
    %1137 = vmatprep.subr.mxu0 %v464
    %1138 = vmatpush1.msra.mxu0 %v463
    %1139 = vmatprep.subr.mxu0 0.0
    %1140 = vmatpush2.msra.mxu0 0.0
    %1141 = vmatprep.subr.mxu0 0.0
    %1142 = vmatpush2.msra.mxu0 0.0
    %1143 = vmatprep.subr.mxu0 0.0
    %1144 = vmatpush2.msra.mxu0 0.0
    %1145 = vmatprep.subr.mxu0 0.0
    %1146 = vmatpush2.msra.mxu0 0.0
    %1147 = vmatprep.subr.mxu0 0.0
    %1148 = vmatpush2.msra.mxu0 0.0
    %1149 = vmatprep.subr.mxu0 0.0
    %1150 = vmatpush2.msra.mxu0 0.0
    %1151 = vmatprep.subr.mxu0 0.0
    %1152 = vmatpush2.msra.mxu0 0.0
    %1153 = vmatprep.subr.mxu0 0.0
    %1154 = vmatpush2.msra.mxu0 0.0
    %1155 = vmatprep.subr.mxu0 0.0
    %1156 = vmatpush2.msra.mxu0 0.0
    %1157 = vmatprep.subr.mxu0 0.0
    %1158 = vmatpush2.msra.mxu0 0.0
    %1159 = vmatprep.subr.mxu0 0.0
    %1160 = vmatpush2.msra.mxu0 0.0
    %1161 = vmatprep.subr.mxu0 0.0
    %1162 = vmatpush2.msra.mxu0 0.0
    %1163 = vmatprep.subr.mxu0 0.0
    %1164 = vmatpush2.msra.mxu0 0.0
    %1165 = vmatprep.subr.mxu0 0.0
    %1166 = vmatpush2.msra.mxu0 0.0
    %1167 = vmatprep.subr.mxu0 0.0
    %1168 = vmatpush2.msra.mxu0 0.0
    %1169 = vmatprep.subr.mxu0 0.0
    %1170 = vmatpush2.msra.mxu0 0.0
    %1171 = vmatprep.mubr.f32.mxu0 0.0
    %1172 = vmatmul.mubr.f32.gmra.mxu0 %v1030
    %v1173 = vpop.f32.mrf.mxu0
    %v1174 = vadd.f32 0.0, %v1173
    %v1175 = vpop.f32.mrf.mxu0
    %v1176 = vadd.f32 0.0, %v1175
    %1177 = vdwg.mxu0
    %v1178 = vadd.f32 %v1032, %v1103
    %v1179 = vadd.f32 %v1033, %v1105
    %v1180 = vadd.f32 %v1034, %v1174
    %v1181 = vadd.f32 %v1035, %v1176
    %v1182 = vmul.f32 %v1178, 0.5
    %v1183 = vtanh.pop %v1182
    %v1184 = vmul.f32 %v1183, 0.5
    %v1185 = vadd.f32 %v1184, 0.5
    %v1186 = vmul.f32 %v1179, 0.5
    %v1187 = vtanh.pop %v1186
    %v1188 = vmul.f32 %v1187, 0.5
    %v1189 = vadd.f32 %v1188, 0.5
    %v1190 = vtanh.pop %v1180
    %v1191 = vmul.f32 %v1181, 0.5
    %v1192 = vtanh.pop %v1191
    %v1193 = vmul.f32 %v1192, 0.5
    %v1194 = vadd.f32 %v1193, 0.5
    %v1195 = vmul.f32 %v1189, %v1028
    %v1196 = vmul.f32 %v1185, %v1190
    %v1197 = vadd.f32 %v1195, %v1196
    %v1198 = vtanh.pop %v1197
    %v1199 = vmul.f32 %v1194, %v1198
    %s1200 = scalar_lea.vmem [#allocation2], 128
    %v1201 = vld [vmem:[%s1200] sm:$0xff]
    %v1202 = vld [vmem:[%s1200 + $0x8] sm:$0xff]
    %v1203 = vld [vmem:[%s1200 + $0x10] sm:$0xff]
    %v1204 = vld [vmem:[%s1200 + $0x18] sm:$0xff]
    %1205 = vmatprep.subr.mxu0 %v522
    %1206 = vmatpush1.msra.mxu0 %v521
    %1207 = vmatprep.subr.mxu0 %v518
    %1208 = vmatpush1.msra.mxu0 %v517
    %1209 = vmatprep.subr.mxu0 %v514
    %1210 = vmatpush1.msra.mxu0 %v513
    %1211 = vmatprep.subr.mxu0 %v510
    %1212 = vmatpush1.msra.mxu0 %v509
    %1213 = vmatprep.subr.mxu0 %v506
    %1214 = vmatpush1.msra.mxu0 %v505
    %1215 = vmatprep.subr.mxu0 %v502
    %1216 = vmatpush1.msra.mxu0 %v501
    %1217 = vmatprep.subr.mxu0 %v498
    %1218 = vmatpush1.msra.mxu0 %v497
    %1219 = vmatprep.subr.mxu0 %v494
    %1220 = vmatpush1.msra.mxu0 %v493
    %1221 = vmatprep.subr.mxu0 %v490
    %1222 = vmatpush1.msra.mxu0 %v489
    %1223 = vmatprep.subr.mxu0 %v486
    %1224 = vmatpush1.msra.mxu0 %v485
    %1225 = vmatprep.subr.mxu0 %v482
    %1226 = vmatpush1.msra.mxu0 %v481
    %1227 = vmatprep.subr.mxu0 %v478
    %1228 = vmatpush1.msra.mxu0 %v477
    %1229 = vmatprep.subr.mxu0 %v474
    %1230 = vmatpush1.msra.mxu0 %v473
    %1231 = vmatprep.subr.mxu0 %v470
    %1232 = vmatpush1.msra.mxu0 %v469
    %1233 = vmatprep.subr.mxu0 %v466
    %1234 = vmatpush1.msra.mxu0 %v465
    %1235 = vmatprep.subr.mxu0 %v462
    %1236 = vmatpush1.msra.mxu0 %v461
    %1237 = vmatprep.subr.mxu0 0.0
    %1238 = vmatpush2.msra.mxu0 0.0
    %1239 = vmatprep.subr.mxu0 0.0
    %1240 = vmatpush2.msra.mxu0 0.0
    %1241 = vmatprep.subr.mxu0 0.0
    %1242 = vmatpush2.msra.mxu0 0.0
    %1243 = vmatprep.subr.mxu0 0.0
    %1244 = vmatpush2.msra.mxu0 0.0
    %1245 = vmatprep.subr.mxu0 0.0
    %1246 = vmatpush2.msra.mxu0 0.0
    %1247 = vmatprep.subr.mxu0 0.0
    %1248 = vmatpush2.msra.mxu0 0.0
    %1249 = vmatprep.subr.mxu0 0.0
    %1250 = vmatpush2.msra.mxu0 0.0
    %1251 = vmatprep.subr.mxu0 0.0
    %1252 = vmatpush2.msra.mxu0 0.0
    %1253 = vmatprep.subr.mxu0 0.0
    %1254 = vmatpush2.msra.mxu0 0.0
    %1255 = vmatprep.subr.mxu0 0.0
    %1256 = vmatpush2.msra.mxu0 0.0
    %1257 = vmatprep.subr.mxu0 0.0
    %1258 = vmatpush2.msra.mxu0 0.0
    %1259 = vmatprep.subr.mxu0 0.0
    %1260 = vmatpush2.msra.mxu0 0.0
    %1261 = vmatprep.subr.mxu0 0.0
    %1262 = vmatpush2.msra.mxu0 0.0
    %1263 = vmatprep.subr.mxu0 0.0
    %1264 = vmatpush2.msra.mxu0 0.0
    %1265 = vmatprep.subr.mxu0 0.0
    %1266 = vmatpush2.msra.mxu0 0.0
    %1267 = vmatprep.subr.mxu0 0.0
    %1268 = vmatpush2.msra.mxu0 0.0
    %1269 = vmatprep.mubr.f32.mxu0 0.0
    %1270 = vmatmul.mubr.f32.gmra.mxu0 %v1199
    %v1271 = vpop.f32.mrf.mxu0
    %v1272 = vadd.f32 0.0, %v1271
    %v1273 = vpop.f32.mrf.mxu0
    %v1274 = vadd.f32 0.0, %v1273
    %1275 = vdwg.mxu0
    %1276 = vmatprep.subr.mxu0 %v524
    %1277 = vmatpush1.msra.mxu0 %v523
    %1278 = vmatprep.subr.mxu0 %v520
    %1279 = vmatpush1.msra.mxu0 %v519
    %1280 = vmatprep.subr.mxu0 %v516
    %1281 = vmatpush1.msra.mxu0 %v515
    %1282 = vmatprep.subr.mxu0 %v512
    %1283 = vmatpush1.msra.mxu0 %v511
    %1284 = vmatprep.subr.mxu0 %v508
    %1285 = vmatpush1.msra.mxu0 %v507
    %1286 = vmatprep.subr.mxu0 %v504
    %1287 = vmatpush1.msra.mxu0 %v503
    %1288 = vmatprep.subr.mxu0 %v500
    %1289 = vmatpush1.msra.mxu0 %v499
    %1290 = vmatprep.subr.mxu0 %v496
    %1291 = vmatpush1.msra.mxu0 %v495
    %1292 = vmatprep.subr.mxu0 %v492
    %1293 = vmatpush1.msra.mxu0 %v491
    %1294 = vmatprep.subr.mxu0 %v488
    %1295 = vmatpush1.msra.mxu0 %v487
    %1296 = vmatprep.subr.mxu0 %v484
    %1297 = vmatpush1.msra.mxu0 %v483
    %1298 = vmatprep.subr.mxu0 %v480
    %1299 = vmatpush1.msra.mxu0 %v479
    %1300 = vmatprep.subr.mxu0 %v476
    %1301 = vmatpush1.msra.mxu0 %v475
    %1302 = vmatprep.subr.mxu0 %v472
    %1303 = vmatpush1.msra.mxu0 %v471
    %1304 = vmatprep.subr.mxu0 %v468
    %1305 = vmatpush1.msra.mxu0 %v467
    %1306 = vmatprep.subr.mxu0 %v464
    %1307 = vmatpush1.msra.mxu0 %v463
    %1308 = vmatprep.subr.mxu0 0.0
    %1309 = vmatpush2.msra.mxu0 0.0
    %1310 = vmatprep.subr.mxu0 0.0
    %1311 = vmatpush2.msra.mxu0 0.0
    %1312 = vmatprep.subr.mxu0 0.0
    %1313 = vmatpush2.msra.mxu0 0.0
    %1314 = vmatprep.subr.mxu0 0.0
    %1315 = vmatpush2.msra.mxu0 0.0
    %1316 = vmatprep.subr.mxu0 0.0
    %1317 = vmatpush2.msra.mxu0 0.0
    %1318 = vmatprep.subr.mxu0 0.0
    %1319 = vmatpush2.msra.mxu0 0.0
    %1320 = vmatprep.subr.mxu0 0.0
    %1321 = vmatpush2.msra.mxu0 0.0
    %1322 = vmatprep.subr.mxu0 0.0
    %1323 = vmatpush2.msra.mxu0 0.0
    %1324 = vmatprep.subr.mxu0 0.0
    %1325 = vmatpush2.msra.mxu0 0.0
    %1326 = vmatprep.subr.mxu0 0.0
    %1327 = vmatpush2.msra.mxu0 0.0
    %1328 = vmatprep.subr.mxu0 0.0
    %1329 = vmatpush2.msra.mxu0 0.0
    %1330 = vmatprep.subr.mxu0 0.0
    %1331 = vmatpush2.msra.mxu0 0.0
    %1332 = vmatprep.subr.mxu0 0.0
    %1333 = vmatpush2.msra.mxu0 0.0
    %1334 = vmatprep.subr.mxu0 0.0
    %1335 = vmatpush2.msra.mxu0 0.0
    %1336 = vmatprep.subr.mxu0 0.0
    %1337 = vmatpush2.msra.mxu0 0.0
    %1338 = vmatprep.subr.mxu0 0.0
    %1339 = vmatpush2.msra.mxu0 0.0
    %1340 = vmatprep.mubr.f32.mxu0 0.0
    %1341 = vmatmul.mubr.f32.gmra.mxu0 %v1199
    %v1342 = vpop.f32.mrf.mxu0
    %v1343 = vadd.f32 0.0, %v1342
    %v1344 = vpop.f32.mrf.mxu0
    %v1345 = vadd.f32 0.0, %v1344
    %1346 = vdwg.mxu0
    %v1347 = vadd.f32 %v1201, %v1272
    %v1348 = vadd.f32 %v1202, %v1274
    %v1349 = vadd.f32 %v1203, %v1343
    %v1350 = vadd.f32 %v1204, %v1345
    %v1351 = vmul.f32 %v1347, 0.5
    %v1352 = vtanh.pop %v1351
    %v1353 = vmul.f32 %v1352, 0.5
    %v1354 = vadd.f32 %v1353, 0.5
    %v1355 = vmul.f32 %v1348, 0.5
    %v1356 = vtanh.pop %v1355
    %v1357 = vmul.f32 %v1356, 0.5
    %v1358 = vadd.f32 %v1357, 0.5
    %v1359 = vtanh.pop %v1349
    %v1360 = vmul.f32 %v1350, 0.5
    %v1361 = vtanh.pop %v1360
    %v1362 = vmul.f32 %v1361, 0.5
    %v1363 = vadd.f32 %v1362, 0.5
    %v1364 = vmul.f32 %v1358, %v1197
    %v1365 = vmul.f32 %v1354, %v1359
    %v1366 = vadd.f32 %v1364, %v1365
    %v1367 = vtanh.pop %v1366
    %v1368 = vmul.f32 %v1363, %v1367
    %s1369 = scalar_lea.vmem [#allocation2], 160
    %v1370 = vld [vmem:[%s1369] sm:$0xff]
    %v1371 = vld [vmem:[%s1369 + $0x8] sm:$0xff]
    %v1372 = vld [vmem:[%s1369 + $0x10] sm:$0xff]
    %v1373 = vld [vmem:[%s1369 + $0x18] sm:$0xff]
    %1374 = vmatprep.subr.mxu0 %v522
    %1375 = vmatpush1.msra.mxu0 %v521
    %1376 = vmatprep.subr.mxu0 %v518
    %1377 = vmatpush1.msra.mxu0 %v517
    %1378 = vmatprep.subr.mxu0 %v514
    %1379 = vmatpush1.msra.mxu0 %v513
    %1380 = vmatprep.subr.mxu0 %v510
    %1381 = vmatpush1.msra.mxu0 %v509
    %1382 = vmatprep.subr.mxu0 %v506
    %1383 = vmatpush1.msra.mxu0 %v505
    %1384 = vmatprep.subr.mxu0 %v502
    %1385 = vmatpush1.msra.mxu0 %v501
    %1386 = vmatprep.subr.mxu0 %v498
    %1387 = vmatpush1.msra.mxu0 %v497
    %1388 = vmatprep.subr.mxu0 %v494
    %1389 = vmatpush1.msra.mxu0 %v493
    %1390 = vmatprep.subr.mxu0 %v490
    %1391 = vmatpush1.msra.mxu0 %v489
    %1392 = vmatprep.subr.mxu0 %v486
    %1393 = vmatpush1.msra.mxu0 %v485
    %1394 = vmatprep.subr.mxu0 %v482
    %1395 = vmatpush1.msra.mxu0 %v481
    %1396 = vmatprep.subr.mxu0 %v478
    %1397 = vmatpush1.msra.mxu0 %v477
    %1398 = vmatprep.subr.mxu0 %v474
    %1399 = vmatpush1.msra.mxu0 %v473
    %1400 = vmatprep.subr.mxu0 %v470
    %1401 = vmatpush1.msra.mxu0 %v469
    %1402 = vmatprep.subr.mxu0 %v466
    %1403 = vmatpush1.msra.mxu0 %v465
    %1404 = vmatprep.subr.mxu0 %v462
    %1405 = vmatpush1.msra.mxu0 %v461
    %1406 = vmatprep.subr.mxu0 0.0
    %1407 = vmatpush2.msra.mxu0 0.0
    %1408 = vmatprep.subr.mxu0 0.0
    %1409 = vmatpush2.msra.mxu0 0.0
    %1410 = vmatprep.subr.mxu0 0.0
    %1411 = vmatpush2.msra.mxu0 0.0
    %1412 = vmatprep.subr.mxu0 0.0
    %1413 = vmatpush2.msra.mxu0 0.0
    %1414 = vmatprep.subr.mxu0 0.0
    %1415 = vmatpush2.msra.mxu0 0.0
    %1416 = vmatprep.subr.mxu0 0.0
    %1417 = vmatpush2.msra.mxu0 0.0
    %1418 = vmatprep.subr.mxu0 0.0
    %1419 = vmatpush2.msra.mxu0 0.0
    %1420 = vmatprep.subr.mxu0 0.0
    %1421 = vmatpush2.msra.mxu0 0.0
    %1422 = vmatprep.subr.mxu0 0.0
    %1423 = vmatpush2.msra.mxu0 0.0
    %1424 = vmatprep.subr.mxu0 0.0
    %1425 = vmatpush2.msra.mxu0 0.0
    %1426 = vmatprep.subr.mxu0 0.0
    %1427 = vmatpush2.msra.mxu0 0.0
    %1428 = vmatprep.subr.mxu0 0.0
    %1429 = vmatpush2.msra.mxu0 0.0
    %1430 = vmatprep.subr.mxu0 0.0
    %1431 = vmatpush2.msra.mxu0 0.0
    %1432 = vmatprep.subr.mxu0 0.0
    %1433 = vmatpush2.msra.mxu0 0.0
    %1434 = vmatprep.subr.mxu0 0.0
    %1435 = vmatpush2.msra.mxu0 0.0
    %1436 = vmatprep.subr.mxu0 0.0
    %1437 = vmatpush2.msra.mxu0 0.0
    %1438 = vmatprep.mubr.f32.mxu0 0.0
    %1439 = vmatmul.mubr.f32.gmra.mxu0 %v1368
    %v1440 = vpop.f32.mrf.mxu0
    %v1441 = vadd.f32 0.0, %v1440
    %v1442 = vpop.f32.mrf.mxu0
    %v1443 = vadd.f32 0.0, %v1442
    %1444 = vdwg.mxu0
    %1445 = vmatprep.subr.mxu0 %v524
    %1446 = vmatpush1.msra.mxu0 %v523
    %1447 = vmatprep.subr.mxu0 %v520
    %1448 = vmatpush1.msra.mxu0 %v519
    %1449 = vmatprep.subr.mxu0 %v516
    %1450 = vmatpush1.msra.mxu0 %v515
    %1451 = vmatprep.subr.mxu0 %v512
    %1452 = vmatpush1.msra.mxu0 %v511
    %1453 = vmatprep.subr.mxu0 %v508
    %1454 = vmatpush1.msra.mxu0 %v507
    %1455 = vmatprep.subr.mxu0 %v504
    %1456 = vmatpush1.msra.mxu0 %v503
    %1457 = vmatprep.subr.mxu0 %v500
    %1458 = vmatpush1.msra.mxu0 %v499
    %1459 = vmatprep.subr.mxu0 %v496
    %1460 = vmatpush1.msra.mxu0 %v495
    %1461 = vmatprep.subr.mxu0 %v492
    %1462 = vmatpush1.msra.mxu0 %v491
    %1463 = vmatprep.subr.mxu0 %v488
    %1464 = vmatpush1.msra.mxu0 %v487
    %1465 = vmatprep.subr.mxu0 %v484
    %1466 = vmatpush1.msra.mxu0 %v483
    %1467 = vmatprep.subr.mxu0 %v480
    %1468 = vmatpush1.msra.mxu0 %v479
    %1469 = vmatprep.subr.mxu0 %v476
    %1470 = vmatpush1.msra.mxu0 %v475
    %1471 = vmatprep.subr.mxu0 %v472
    %1472 = vmatpush1.msra.mxu0 %v471
    %1473 = vmatprep.subr.mxu0 %v468
    %1474 = vmatpush1.msra.mxu0 %v467
    %1475 = vmatprep.subr.mxu0 %v464
    %1476 = vmatpush1.msra.mxu0 %v463
    %1477 = vmatprep.subr.mxu0 0.0
    %1478 = vmatpush2.msra.mxu0 0.0
    %1479 = vmatprep.subr.mxu0 0.0
    %1480 = vmatpush2.msra.mxu0 0.0
    %1481 = vmatprep.subr.mxu0 0.0
    %1482 = vmatpush2.msra.mxu0 0.0
    %1483 = vmatprep.subr.mxu0 0.0
    %1484 = vmatpush2.msra.mxu0 0.0
    %1485 = vmatprep.subr.mxu0 0.0
    %1486 = vmatpush2.msra.mxu0 0.0
    %1487 = vmatprep.subr.mxu0 0.0
    %1488 = vmatpush2.msra.mxu0 0.0
    %1489 = vmatprep.subr.mxu0 0.0
    %1490 = vmatpush2.msra.mxu0 0.0
    %1491 = vmatprep.subr.mxu0 0.0
    %1492 = vmatpush2.msra.mxu0 0.0
    %1493 = vmatprep.subr.mxu0 0.0
    %1494 = vmatpush2.msra.mxu0 0.0
    %1495 = vmatprep.subr.mxu0 0.0
    %1496 = vmatpush2.msra.mxu0 0.0
    %1497 = vmatprep.subr.mxu0 0.0
    %1498 = vmatpush2.msra.mxu0 0.0
    %1499 = vmatprep.subr.mxu0 0.0
    %1500 = vmatpush2.msra.mxu0 0.0
    %1501 = vmatprep.subr.mxu0 0.0
    %1502 = vmatpush2.msra.mxu0 0.0
    %1503 = vmatprep.subr.mxu0 0.0
    %1504 = vmatpush2.msra.mxu0 0.0
    %1505 = vmatprep.subr.mxu0 0.0
    %1506 = vmatpush2.msra.mxu0 0.0
    %1507 = vmatprep.subr.mxu0 0.0
    %1508 = vmatpush2.msra.mxu0 0.0
    %1509 = vmatprep.mubr.f32.mxu0 0.0
    %1510 = vmatmul.mubr.f32.gmra.mxu0 %v1368
    %v1511 = vpop.f32.mrf.mxu0
    %v1512 = vadd.f32 0.0, %v1511
    %v1513 = vpop.f32.mrf.mxu0
    %v1514 = vadd.f32 0.0, %v1513
    %1515 = vdwg.mxu0
    %v1516 = vadd.f32 %v1370, %v1441
    %v1517 = vadd.f32 %v1371, %v1443
    %v1518 = vadd.f32 %v1372, %v1512
    %v1519 = vadd.f32 %v1373, %v1514
    %v1520 = vmul.f32 %v1516, 0.5
    %v1521 = vtanh.pop %v1520
    %v1522 = vmul.f32 %v1521, 0.5
    %v1523 = vadd.f32 %v1522, 0.5
    %v1524 = vmul.f32 %v1517, 0.5
    %v1525 = vtanh.pop %v1524
    %v1526 = vmul.f32 %v1525, 0.5
    %v1527 = vadd.f32 %v1526, 0.5
    %v1528 = vtanh.pop %v1518
    %v1529 = vmul.f32 %v1519, 0.5
    %v1530 = vtanh.pop %v1529
    %v1531 = vmul.f32 %v1530, 0.5
    %v1532 = vadd.f32 %v1531, 0.5
    %v1533 = vmul.f32 %v1527, %v1366
    %v1534 = vmul.f32 %v1523, %v1528
    %v1535 = vadd.f32 %v1533, %v1534
    %v1536 = vtanh.pop %v1535
    %v1537 = vmul.f32 %v1532, %v1536
    %s1538 = scalar_lea.vmem [#allocation2], 192
    %v1539 = vld [vmem:[%s1538] sm:$0xff]
    %v1540 = vld [vmem:[%s1538 + $0x8] sm:$0xff]
    %v1541 = vld [vmem:[%s1538 + $0x10] sm:$0xff]
    %v1542 = vld [vmem:[%s1538 + $0x18] sm:$0xff]
    %1543 = vmatprep.subr.mxu0 %v522
    %1544 = vmatpush1.msra.mxu0 %v521
    %1545 = vmatprep.subr.mxu0 %v518
    %1546 = vmatpush1.msra.mxu0 %v517
    %1547 = vmatprep.subr.mxu0 %v514
    %1548 = vmatpush1.msra.mxu0 %v513
    %1549 = vmatprep.subr.mxu0 %v510
    %1550 = vmatpush1.msra.mxu0 %v509
    %1551 = vmatprep.subr.mxu0 %v506
    %1552 = vmatpush1.msra.mxu0 %v505
    %1553 = vmatprep.subr.mxu0 %v502
    %1554 = vmatpush1.msra.mxu0 %v501
    %1555 = vmatprep.subr.mxu0 %v498
    %1556 = vmatpush1.msra.mxu0 %v497
    %1557 = vmatprep.subr.mxu0 %v494
    %1558 = vmatpush1.msra.mxu0 %v493
    %1559 = vmatprep.subr.mxu0 %v490
    %1560 = vmatpush1.msra.mxu0 %v489
    %1561 = vmatprep.subr.mxu0 %v486
    %1562 = vmatpush1.msra.mxu0 %v485
    %1563 = vmatprep.subr.mxu0 %v482
    %1564 = vmatpush1.msra.mxu0 %v481
    %1565 = vmatprep.subr.mxu0 %v478
    %1566 = vmatpush1.msra.mxu0 %v477
    %1567 = vmatprep.subr.mxu0 %v474
    %1568 = vmatpush1.msra.mxu0 %v473
    %1569 = vmatprep.subr.mxu0 %v470
    %1570 = vmatpush1.msra.mxu0 %v469
    %1571 = vmatprep.subr.mxu0 %v466
    %1572 = vmatpush1.msra.mxu0 %v465
    %1573 = vmatprep.subr.mxu0 %v462
    %1574 = vmatpush1.msra.mxu0 %v461
    %1575 = vmatprep.subr.mxu0 0.0
    %1576 = vmatpush2.msra.mxu0 0.0
    %1577 = vmatprep.subr.mxu0 0.0
    %1578 = vmatpush2.msra.mxu0 0.0
    %1579 = vmatprep.subr.mxu0 0.0
    %1580 = vmatpush2.msra.mxu0 0.0
    %1581 = vmatprep.subr.mxu0 0.0
    %1582 = vmatpush2.msra.mxu0 0.0
    %1583 = vmatprep.subr.mxu0 0.0
    %1584 = vmatpush2.msra.mxu0 0.0
    %1585 = vmatprep.subr.mxu0 0.0
    %1586 = vmatpush2.msra.mxu0 0.0
    %1587 = vmatprep.subr.mxu0 0.0
    %1588 = vmatpush2.msra.mxu0 0.0
    %1589 = vmatprep.subr.mxu0 0.0
    %1590 = vmatpush2.msra.mxu0 0.0
    %1591 = vmatprep.subr.mxu0 0.0
    %1592 = vmatpush2.msra.mxu0 0.0
    %1593 = vmatprep.subr.mxu0 0.0
    %1594 = vmatpush2.msra.mxu0 0.0
    %1595 = vmatprep.subr.mxu0 0.0
    %1596 = vmatpush2.msra.mxu0 0.0
    %1597 = vmatprep.subr.mxu0 0.0
    %1598 = vmatpush2.msra.mxu0 0.0
    %1599 = vmatprep.subr.mxu0 0.0
    %1600 = vmatpush2.msra.mxu0 0.0
    %1601 = vmatprep.subr.mxu0 0.0
    %1602 = vmatpush2.msra.mxu0 0.0
    %1603 = vmatprep.subr.mxu0 0.0
    %1604 = vmatpush2.msra.mxu0 0.0
    %1605 = vmatprep.subr.mxu0 0.0
    %1606 = vmatpush2.msra.mxu0 0.0
    %1607 = vmatprep.mubr.f32.mxu0 0.0
    %1608 = vmatmul.mubr.f32.gmra.mxu0 %v1537
    %v1609 = vpop.f32.mrf.mxu0
    %v1610 = vadd.f32 0.0, %v1609
    %v1611 = vpop.f32.mrf.mxu0
    %v1612 = vadd.f32 0.0, %v1611
    %1613 = vdwg.mxu0
    %1614 = vmatprep.subr.mxu0 %v524
    %1615 = vmatpush1.msra.mxu0 %v523
    %1616 = vmatprep.subr.mxu0 %v520
    %1617 = vmatpush1.msra.mxu0 %v519
    %1618 = vmatprep.subr.mxu0 %v516
    %1619 = vmatpush1.msra.mxu0 %v515
    %1620 = vmatprep.subr.mxu0 %v512
    %1621 = vmatpush1.msra.mxu0 %v511
    %1622 = vmatprep.subr.mxu0 %v508
    %1623 = vmatpush1.msra.mxu0 %v507
    %1624 = vmatprep.subr.mxu0 %v504
    %1625 = vmatpush1.msra.mxu0 %v503
    %1626 = vmatprep.subr.mxu0 %v500
    %1627 = vmatpush1.msra.mxu0 %v499
    %1628 = vmatprep.subr.mxu0 %v496
    %1629 = vmatpush1.msra.mxu0 %v495
    %1630 = vmatprep.subr.mxu0 %v492
    %1631 = vmatpush1.msra.mxu0 %v491
    %1632 = vmatprep.subr.mxu0 %v488
    %1633 = vmatpush1.msra.mxu0 %v487
    %1634 = vmatprep.subr.mxu0 %v484
    %1635 = vmatpush1.msra.mxu0 %v483
    %1636 = vmatprep.subr.mxu0 %v480
    %1637 = vmatpush1.msra.mxu0 %v479
    %1638 = vmatprep.subr.mxu0 %v476
    %1639 = vmatpush1.msra.mxu0 %v475
    %1640 = vmatprep.subr.mxu0 %v472
    %1641 = vmatpush1.msra.mxu0 %v471
    %1642 = vmatprep.subr.mxu0 %v468
    %1643 = vmatpush1.msra.mxu0 %v467
    %1644 = vmatprep.subr.mxu0 %v464
    %1645 = vmatpush1.msra.mxu0 %v463
    %1646 = vmatprep.subr.mxu0 0.0
    %1647 = vmatpush2.msra.mxu0 0.0
    %1648 = vmatprep.subr.mxu0 0.0
    %1649 = vmatpush2.msra.mxu0 0.0
    %1650 = vmatprep.subr.mxu0 0.0
    %1651 = vmatpush2.msra.mxu0 0.0
    %1652 = vmatprep.subr.mxu0 0.0
    %1653 = vmatpush2.msra.mxu0 0.0
    %1654 = vmatprep.subr.mxu0 0.0
    %1655 = vmatpush2.msra.mxu0 0.0
    %1656 = vmatprep.subr.mxu0 0.0
    %1657 = vmatpush2.msra.mxu0 0.0
    %1658 = vmatprep.subr.mxu0 0.0
    %1659 = vmatpush2.msra.mxu0 0.0
    %1660 = vmatprep.subr.mxu0 0.0
    %1661 = vmatpush2.msra.mxu0 0.0
    %1662 = vmatprep.subr.mxu0 0.0
    %1663 = vmatpush2.msra.mxu0 0.0
    %1664 = vmatprep.subr.mxu0 0.0
    %1665 = vmatpush2.msra.mxu0 0.0
    %1666 = vmatprep.subr.mxu0 0.0
    %1667 = vmatpush2.msra.mxu0 0.0
    %1668 = vmatprep.subr.mxu0 0.0
    %1669 = vmatpush2.msra.mxu0 0.0
    %1670 = vmatprep.subr.mxu0 0.0
    %1671 = vmatpush2.msra.mxu0 0.0
    %1672 = vmatprep.subr.mxu0 0.0
    %1673 = vmatpush2.msra.mxu0 0.0
    %1674 = vmatprep.subr.mxu0 0.0
    %1675 = vmatpush2.msra.mxu0 0.0
    %1676 = vmatprep.subr.mxu0 0.0
    %1677 = vmatpush2.msra.mxu0 0.0
    %1678 = vmatprep.mubr.f32.mxu0 0.0
    %1679 = vmatmul.mubr.f32.gmra.mxu0 %v1537
    %v1680 = vpop.f32.mrf.mxu0
    %v1681 = vadd.f32 0.0, %v1680
    %v1682 = vpop.f32.mrf.mxu0
    %v1683 = vadd.f32 0.0, %v1682
    %1684 = vdwg.mxu0
    %v1685 = vadd.f32 %v1539, %v1610
    %v1686 = vadd.f32 %v1540, %v1612
    %v1687 = vadd.f32 %v1541, %v1681
    %v1688 = vadd.f32 %v1542, %v1683
    %v1689 = vmul.f32 %v1685, 0.5
    %v1690 = vtanh.pop %v1689
    %v1691 = vmul.f32 %v1690, 0.5
    %v1692 = vadd.f32 %v1691, 0.5
    %v1693 = vmul.f32 %v1686, 0.5
    %v1694 = vtanh.pop %v1693
    %v1695 = vmul.f32 %v1694, 0.5
    %v1696 = vadd.f32 %v1695, 0.5
    %v1697 = vtanh.pop %v1687
    %v1698 = vmul.f32 %v1688, 0.5
    %v1699 = vtanh.pop %v1698
    %v1700 = vmul.f32 %v1699, 0.5
    %v1701 = vadd.f32 %v1700, 0.5
    %v1702 = vmul.f32 %v1696, %v1535
    %v1703 = vmul.f32 %v1692, %v1697
    %v1704 = vadd.f32 %v1702, %v1703
    %v1705 = vtanh.pop %v1704
    %v1706 = vmul.f32 %v1701, %v1705
    %s1707 = scalar_lea.vmem [#allocation2], 224
    %v1708 = vld [vmem:[%s1707] sm:$0xff]
    %v1709 = vld [vmem:[%s1707 + $0x8] sm:$0xff]
    %v1710 = vld [vmem:[%s1707 + $0x10] sm:$0xff]
    %v1711 = vld [vmem:[%s1707 + $0x18] sm:$0xff]
    %1712 = vmatprep.subr.mxu0 %v522
    %1713 = vmatpush1.msra.mxu0 %v521
    %1714 = vmatprep.subr.mxu0 %v518
    %1715 = vmatpush1.msra.mxu0 %v517
    %1716 = vmatprep.subr.mxu0 %v514
    %1717 = vmatpush1.msra.mxu0 %v513
    %1718 = vmatprep.subr.mxu0 %v510
    %1719 = vmatpush1.msra.mxu0 %v509
    %1720 = vmatprep.subr.mxu0 %v506
    %1721 = vmatpush1.msra.mxu0 %v505
    %1722 = vmatprep.subr.mxu0 %v502
    %1723 = vmatpush1.msra.mxu0 %v501
    %1724 = vmatprep.subr.mxu0 %v498
    %1725 = vmatpush1.msra.mxu0 %v497
    %1726 = vmatprep.subr.mxu0 %v494
    %1727 = vmatpush1.msra.mxu0 %v493
    %1728 = vmatprep.subr.mxu0 %v490
    %1729 = vmatpush1.msra.mxu0 %v489
    %1730 = vmatprep.subr.mxu0 %v486
    %1731 = vmatpush1.msra.mxu0 %v485
    %1732 = vmatprep.subr.mxu0 %v482
    %1733 = vmatpush1.msra.mxu0 %v481
    %1734 = vmatprep.subr.mxu0 %v478
    %1735 = vmatpush1.msra.mxu0 %v477
    %1736 = vmatprep.subr.mxu0 %v474
    %1737 = vmatpush1.msra.mxu0 %v473
    %1738 = vmatprep.subr.mxu0 %v470
    %1739 = vmatpush1.msra.mxu0 %v469
    %1740 = vmatprep.subr.mxu0 %v466
    %1741 = vmatpush1.msra.mxu0 %v465
    %1742 = vmatprep.subr.mxu0 %v462
    %1743 = vmatpush1.msra.mxu0 %v461
    %1744 = vmatprep.subr.mxu0 0.0
    %1745 = vmatpush2.msra.mxu0 0.0
    %1746 = vmatprep.subr.mxu0 0.0
    %1747 = vmatpush2.msra.mxu0 0.0
    %1748 = vmatprep.subr.mxu0 0.0
    %1749 = vmatpush2.msra.mxu0 0.0
    %1750 = vmatprep.subr.mxu0 0.0
    %1751 = vmatpush2.msra.mxu0 0.0
    %1752 = vmatprep.subr.mxu0 0.0
    %1753 = vmatpush2.msra.mxu0 0.0
    %1754 = vmatprep.subr.mxu0 0.0
    %1755 = vmatpush2.msra.mxu0 0.0
    %1756 = vmatprep.subr.mxu0 0.0
    %1757 = vmatpush2.msra.mxu0 0.0
    %1758 = vmatprep.subr.mxu0 0.0
    %1759 = vmatpush2.msra.mxu0 0.0
    %1760 = vmatprep.subr.mxu0 0.0
    %1761 = vmatpush2.msra.mxu0 0.0
    %1762 = vmatprep.subr.mxu0 0.0
    %1763 = vmatpush2.msra.mxu0 0.0
    %1764 = vmatprep.subr.mxu0 0.0
    %1765 = vmatpush2.msra.mxu0 0.0
    %1766 = vmatprep.subr.mxu0 0.0
    %1767 = vmatpush2.msra.mxu0 0.0
    %1768 = vmatprep.subr.mxu0 0.0
    %1769 = vmatpush2.msra.mxu0 0.0
    %1770 = vmatprep.subr.mxu0 0.0
    %1771 = vmatpush2.msra.mxu0 0.0
    %1772 = vmatprep.subr.mxu0 0.0
    %1773 = vmatpush2.msra.mxu0 0.0
    %1774 = vmatprep.subr.mxu0 0.0
    %1775 = vmatpush2.msra.mxu0 0.0
    %1776 = vmatprep.mubr.f32.mxu0 0.0
    %1777 = vmatmul.mubr.f32.gmra.mxu0 %v1706
    %v1778 = vpop.f32.mrf.mxu0
    %v1779 = vadd.f32 0.0, %v1778
    %v1780 = vpop.f32.mrf.mxu0
    %v1781 = vadd.f32 0.0, %v1780
    %1782 = vdwg.mxu0
    %1783 = vmatprep.subr.mxu0 %v524
    %1784 = vmatpush1.msra.mxu0 %v523
    %1785 = vmatprep.subr.mxu0 %v520
    %1786 = vmatpush1.msra.mxu0 %v519
    %1787 = vmatprep.subr.mxu0 %v516
    %1788 = vmatpush1.msra.mxu0 %v515
    %1789 = vmatprep.subr.mxu0 %v512
    %1790 = vmatpush1.msra.mxu0 %v511
    %1791 = vmatprep.subr.mxu0 %v508
    %1792 = vmatpush1.msra.mxu0 %v507
    %1793 = vmatprep.subr.mxu0 %v504
    %1794 = vmatpush1.msra.mxu0 %v503
    %1795 = vmatprep.subr.mxu0 %v500
    %1796 = vmatpush1.msra.mxu0 %v499
    %1797 = vmatprep.subr.mxu0 %v496
    %1798 = vmatpush1.msra.mxu0 %v495
    %1799 = vmatprep.subr.mxu0 %v492
    %1800 = vmatpush1.msra.mxu0 %v491
    %1801 = vmatprep.subr.mxu0 %v488
    %1802 = vmatpush1.msra.mxu0 %v487
    %1803 = vmatprep.subr.mxu0 %v484
    %1804 = vmatpush1.msra.mxu0 %v483
    %1805 = vmatprep.subr.mxu0 %v480
    %1806 = vmatpush1.msra.mxu0 %v479
    %1807 = vmatprep.subr.mxu0 %v476
    %1808 = vmatpush1.msra.mxu0 %v475
    %1809 = vmatprep.subr.mxu0 %v472
    %1810 = vmatpush1.msra.mxu0 %v471
    %1811 = vmatprep.subr.mxu0 %v468
    %1812 = vmatpush1.msra.mxu0 %v467
    %1813 = vmatprep.subr.mxu0 %v464
    %1814 = vmatpush1.msra.mxu0 %v463
    %1815 = vmatprep.subr.mxu0 0.0
    %1816 = vmatpush2.msra.mxu0 0.0
    %1817 = vmatprep.subr.mxu0 0.0
    %1818 = vmatpush2.msra.mxu0 0.0
    %1819 = vmatprep.subr.mxu0 0.0
    %1820 = vmatpush2.msra.mxu0 0.0
    %1821 = vmatprep.subr.mxu0 0.0
    %1822 = vmatpush2.msra.mxu0 0.0
    %1823 = vmatprep.subr.mxu0 0.0
    %1824 = vmatpush2.msra.mxu0 0.0
    %1825 = vmatprep.subr.mxu0 0.0
    %1826 = vmatpush2.msra.mxu0 0.0
    %1827 = vmatprep.subr.mxu0 0.0
    %1828 = vmatpush2.msra.mxu0 0.0
    %1829 = vmatprep.subr.mxu0 0.0
    %1830 = vmatpush2.msra.mxu0 0.0
    %1831 = vmatprep.subr.mxu0 0.0
    %1832 = vmatpush2.msra.mxu0 0.0
    %1833 = vmatprep.subr.mxu0 0.0
    %1834 = vmatpush2.msra.mxu0 0.0
    %1835 = vmatprep.subr.mxu0 0.0
    %1836 = vmatpush2.msra.mxu0 0.0
    %1837 = vmatprep.subr.mxu0 0.0
    %1838 = vmatpush2.msra.mxu0 0.0
    %1839 = vmatprep.subr.mxu0 0.0
    %1840 = vmatpush2.msra.mxu0 0.0
    %1841 = vmatprep.subr.mxu0 0.0
    %1842 = vmatpush2.msra.mxu0 0.0
    %1843 = vmatprep.subr.mxu0 0.0
    %1844 = vmatpush2.msra.mxu0 0.0
    %1845 = vmatprep.subr.mxu0 0.0
    %1846 = vmatpush2.msra.mxu0 0.0
    %1847 = vmatprep.mubr.f32.mxu0 0.0
    %1848 = vmatmul.mubr.f32.gmra.mxu0 %v1706
    %v1849 = vpop.f32.mrf.mxu0
    %v1850 = vadd.f32 0.0, %v1849
    %v1851 = vpop.f32.mrf.mxu0
    %v1852 = vadd.f32 0.0, %v1851
    %1853 = vdwg.mxu0
    %v1854 = vadd.f32 %v1708, %v1779
    %v1855 = vadd.f32 %v1709, %v1781
    %v1856 = vadd.f32 %v1710, %v1850
    %v1857 = vadd.f32 %v1711, %v1852
    %v1858 = vmul.f32 %v1854, 0.5
    %v1859 = vtanh.pop %v1858
    %v1860 = vmul.f32 %v1859, 0.5
    %v1861 = vadd.f32 %v1860, 0.5
    %v1862 = vmul.f32 %v1855, 0.5
    %v1863 = vtanh.pop %v1862
    %v1864 = vmul.f32 %v1863, 0.5
    %v1865 = vadd.f32 %v1864, 0.5
    %v1866 = vtanh.pop %v1856
    %v1867 = vmul.f32 %v1857, 0.5
    %v1868 = vtanh.pop %v1867
    %v1869 = vmul.f32 %v1868, 0.5
    %v1870 = vadd.f32 %v1869, 0.5
    %v1871 = vmul.f32 %v1865, %v1704
    %v1872 = vmul.f32 %v1861, %v1866
    %v1873 = vadd.f32 %v1871, %v1872
    %v1874 = vtanh.pop %v1873
    %v1875 = vmul.f32 %v1870, %v1874
    %s1876 = scalar_lea.vmem %s0, 112
    %v1877 = vld [vmem:[%s1876] sm:$0xff]
    %v1878 = vld [vmem:[%s1876 + $0x8] sm:$0xff]
    %v1879 = vld [vmem:[%s1 + $0x20] sm:$0xff]
    %v1880 = vld [vmem:[%s1 + $0x28] sm:$0xff]
    %v1881 = vld [vmem:[%s1 + $0x30] sm:$0xff]
    %v1882 = vld [vmem:[%s1 + $0x38] sm:$0xff]
    %v1883 = vld [vmem:[%s1 + $0x60] sm:$0xff]
    %v1884 = vld [vmem:[%s1 + $0x68] sm:$0xff]
    %v1885 = vld [vmem:[%s1 + $0x70] sm:$0xff]
    %v1886 = vld [vmem:[%s1 + $0x78] sm:$0xff]
    %v1887 = vld [vmem:[%s1 + $0xa0] sm:$0xff]
    %v1888 = vld [vmem:[%s1 + $0xa8] sm:$0xff]
    %v1889 = vld [vmem:[%s1 + $0xb0] sm:$0xff]
    %v1890 = vld [vmem:[%s1 + $0xb8] sm:$0xff]
    %v1891 = vld [vmem:[%s1 + $0xe0] sm:$0xff]
    %v1892 = vld [vmem:[%s1 + $0xe8] sm:$0xff]
    %v1893 = vld [vmem:[%s1 + $0xf0] sm:$0xff]
    %v1894 = vld [vmem:[%s1 + $0xf8] sm:$0xff]
    %v1895 = vld [vmem:[%s1 + $0x120] sm:$0xff]
    %v1896 = vld [vmem:[%s1 + $0x128] sm:$0xff]
    %v1897 = vld [vmem:[%s1 + $0x130] sm:$0xff]
    %v1898 = vld [vmem:[%s1 + $0x138] sm:$0xff]
    %v1899 = vld [vmem:[%s1 + $0x160] sm:$0xff]
    %v1900 = vld [vmem:[%s1 + $0x168] sm:$0xff]
    %v1901 = vld [vmem:[%s1 + $0x170] sm:$0xff]
    %v1902 = vld [vmem:[%s1 + $0x178] sm:$0xff]
    %v1903 = vld [vmem:[%s1 + $0x1a0] sm:$0xff]
    %v1904 = vld [vmem:[%s1 + $0x1a8] sm:$0xff]
    %v1905 = vld [vmem:[%s1 + $0x1b0] sm:$0xff]
    %v1906 = vld [vmem:[%s1 + $0x1b8] sm:$0xff]
    %v1907 = vld [vmem:[%s1 + $0x1e0] sm:$0xff]
    %v1908 = vld [vmem:[%s1 + $0x1e8] sm:$0xff]
    %v1909 = vld [vmem:[%s1 + $0x1f0] sm:$0xff]
    %v1910 = vld [vmem:[%s1 + $0x1f8] sm:$0xff]
    %v1911 = vld [vmem:[%s1 + $0x220] sm:$0xff]
    %v1912 = vld [vmem:[%s1 + $0x228] sm:$0xff]
    %v1913 = vld [vmem:[%s1 + $0x230] sm:$0xff]
    %v1914 = vld [vmem:[%s1 + $0x238] sm:$0xff]
    %v1915 = vld [vmem:[%s1 + $0x260] sm:$0xff]
    %v1916 = vld [vmem:[%s1 + $0x268] sm:$0xff]
    %v1917 = vld [vmem:[%s1 + $0x270] sm:$0xff]
    %v1918 = vld [vmem:[%s1 + $0x278] sm:$0xff]
    %v1919 = vld [vmem:[%s1 + $0x2a0] sm:$0xff]
    %v1920 = vld [vmem:[%s1 + $0x2a8] sm:$0xff]
    %v1921 = vld [vmem:[%s1 + $0x2b0] sm:$0xff]
    %v1922 = vld [vmem:[%s1 + $0x2b8] sm:$0xff]
    %v1923 = vld [vmem:[%s1 + $0x2e0] sm:$0xff]
    %v1924 = vld [vmem:[%s1 + $0x2e8] sm:$0xff]
    %v1925 = vld [vmem:[%s1 + $0x2f0] sm:$0xff]
    %v1926 = vld [vmem:[%s1 + $0x2f8] sm:$0xff]
    %v1927 = vld [vmem:[%s1 + $0x320] sm:$0xff]
    %v1928 = vld [vmem:[%s1 + $0x328] sm:$0xff]
    %v1929 = vld [vmem:[%s1 + $0x330] sm:$0xff]
    %v1930 = vld [vmem:[%s1 + $0x338] sm:$0xff]
    %v1931 = vld [vmem:[%s1 + $0x360] sm:$0xff]
    %v1932 = vld [vmem:[%s1 + $0x368] sm:$0xff]
    %v1933 = vld [vmem:[%s1 + $0x370] sm:$0xff]
    %v1934 = vld [vmem:[%s1 + $0x378] sm:$0xff]
    %v1935 = vld [vmem:[%s1 + $0x3a0] sm:$0xff]
    %v1936 = vld [vmem:[%s1 + $0x3a8] sm:$0xff]
    %v1937 = vld [vmem:[%s1 + $0x3b0] sm:$0xff]
    %v1938 = vld [vmem:[%s1 + $0x3b8] sm:$0xff]
    %v1939 = vld [vmem:[%s1 + $0x3e0] sm:$0xff]
    %v1940 = vld [vmem:[%s1 + $0x3e8] sm:$0xff]
    %v1941 = vld [vmem:[%s1 + $0x3f0] sm:$0xff]
    %v1942 = vld [vmem:[%s1 + $0x3f8] sm:$0xff]
    %v1943 = vld [vmem:[%s1 + $0x420] sm:$0xff]
    %v1944 = vld [vmem:[%s1 + $0x428] sm:$0xff]
    %v1945 = vld [vmem:[%s1 + $0x430] sm:$0xff]
    %v1946 = vld [vmem:[%s1 + $0x438] sm:$0xff]
    %v1947 = vld [vmem:[%s1 + $0x460] sm:$0xff]
    %v1948 = vld [vmem:[%s1 + $0x468] sm:$0xff]
    %v1949 = vld [vmem:[%s1 + $0x470] sm:$0xff]
    %v1950 = vld [vmem:[%s1 + $0x478] sm:$0xff]
    %v1951 = vld [vmem:[%s1 + $0x4a0] sm:$0xff]
    %v1952 = vld [vmem:[%s1 + $0x4a8] sm:$0xff]
    %v1953 = vld [vmem:[%s1 + $0x4b0] sm:$0xff]
    %v1954 = vld [vmem:[%s1 + $0x4b8] sm:$0xff]
    %v1955 = vld [vmem:[%s1 + $0x4e0] sm:$0xff]
    %v1956 = vld [vmem:[%s1 + $0x4e8] sm:$0xff]
    %v1957 = vld [vmem:[%s1 + $0x4f0] sm:$0xff]
    %v1958 = vld [vmem:[%s1 + $0x4f8] sm:$0xff]
    %v1959 = vld [vmem:[%s1 + $0x520] sm:$0xff]
    %v1960 = vld [vmem:[%s1 + $0x528] sm:$0xff]
    %v1961 = vld [vmem:[%s1 + $0x530] sm:$0xff]
    %v1962 = vld [vmem:[%s1 + $0x538] sm:$0xff]
    %v1963 = vld [vmem:[%s1 + $0x560] sm:$0xff]
    %v1964 = vld [vmem:[%s1 + $0x568] sm:$0xff]
    %v1965 = vld [vmem:[%s1 + $0x570] sm:$0xff]
    %v1966 = vld [vmem:[%s1 + $0x578] sm:$0xff]
    %v1967 = vld [vmem:[%s1 + $0x5a0] sm:$0xff]
    %v1968 = vld [vmem:[%s1 + $0x5a8] sm:$0xff]
    %v1969 = vld [vmem:[%s1 + $0x5b0] sm:$0xff]
    %v1970 = vld [vmem:[%s1 + $0x5b8] sm:$0xff]
    %v1971 = vld [vmem:[%s1 + $0x5e0] sm:$0xff]
    %v1972 = vld [vmem:[%s1 + $0x5e8] sm:$0xff]
    %v1973 = vld [vmem:[%s1 + $0x5f0] sm:$0xff]
    %v1974 = vld [vmem:[%s1 + $0x5f8] sm:$0xff]
    %v1975 = vld [vmem:[%s1 + $0x620] sm:$0xff]
    %v1976 = vld [vmem:[%s1 + $0x628] sm:$0xff]
    %v1977 = vld [vmem:[%s1 + $0x630] sm:$0xff]
    %v1978 = vld [vmem:[%s1 + $0x638] sm:$0xff]
    %v1979 = vld [vmem:[%s1 + $0x660] sm:$0xff]
    %v1980 = vld [vmem:[%s1 + $0x668] sm:$0xff]
    %v1981 = vld [vmem:[%s1 + $0x670] sm:$0xff]
    %v1982 = vld [vmem:[%s1 + $0x678] sm:$0xff]
    %v1983 = vld [vmem:[%s1 + $0x6a0] sm:$0xff]
    %v1984 = vld [vmem:[%s1 + $0x6a8] sm:$0xff]
    %v1985 = vld [vmem:[%s1 + $0x6b0] sm:$0xff]
    %v1986 = vld [vmem:[%s1 + $0x6b8] sm:$0xff]
    %v1987 = vld [vmem:[%s1 + $0x6e0] sm:$0xff]
    %v1988 = vld [vmem:[%s1 + $0x6e8] sm:$0xff]
    %v1989 = vld [vmem:[%s1 + $0x6f0] sm:$0xff]
    %v1990 = vld [vmem:[%s1 + $0x6f8] sm:$0xff]
    %v1991 = vld [vmem:[%s1 + $0x720] sm:$0xff]
    %v1992 = vld [vmem:[%s1 + $0x728] sm:$0xff]
    %v1993 = vld [vmem:[%s1 + $0x730] sm:$0xff]
    %v1994 = vld [vmem:[%s1 + $0x738] sm:$0xff]
    %v1995 = vld [vmem:[%s1 + $0x760] sm:$0xff]
    %v1996 = vld [vmem:[%s1 + $0x768] sm:$0xff]
    %v1997 = vld [vmem:[%s1 + $0x770] sm:$0xff]
    %v1998 = vld [vmem:[%s1 + $0x778] sm:$0xff]
    %v1999 = vld [vmem:[%s1 + $0x7a0] sm:$0xff]
    %v2000 = vld [vmem:[%s1 + $0x7a8] sm:$0xff]
    %v2001 = vld [vmem:[%s1 + $0x7b0] sm:$0xff]
    %v2002 = vld [vmem:[%s1 + $0x7b8] sm:$0xff]
    %v2003 = vld [vmem:[%s1 + $0x7e0] sm:$0xff]
    %v2004 = vld [vmem:[%s1 + $0x7e8] sm:$0xff]
    %v2005 = vld [vmem:[%s1 + $0x7f0] sm:$0xff]
    %v2006 = vld [vmem:[%s1 + $0x7f8] sm:$0xff]
    %v2007 = vld [vmem:[%s2 + $0x4] sm:$0xf]
    %v2009 = vlaneseq
    %v2010 = vshrl.u32 %v2009, 7
    %v2011 = vsub.s32 0, %v2010
    %v2012 = vrot.slane %v2007, %v2011
    %v2013 = vlaneseq
    %v2014 = vshrl.u32 %v2013, 7
    %v2015 = vsub.s32 1, %v2014
    %v2016 = vrot.slane %v2007, %v2015
    %v2017 = vlaneseq
    %v2018 = vshrl.u32 %v2017, 7
    %v2019 = vsub.s32 2, %v2018
    %v2020 = vrot.slane %v2007, %v2019
    %v2021 = vlaneseq
    %v2022 = vshrl.u32 %v2021, 7
    %v2023 = vsub.s32 3, %v2022
    %v2024 = vrot.slane %v2007, %v2023
    %2029 = vmatprep.subr.mxu0 %v1940
    %2030 = vmatpush1.msra.mxu0 %v1939
    %2031 = vmatprep.subr.mxu0 %v1936
    %2032 = vmatpush1.msra.mxu0 %v1935
    %2033 = vmatprep.subr.mxu0 %v1932
    %2034 = vmatpush1.msra.mxu0 %v1931
    %2035 = vmatprep.subr.mxu0 %v1928
    %2036 = vmatpush1.msra.mxu0 %v1927
    %2037 = vmatprep.subr.mxu0 %v1924
    %2038 = vmatpush1.msra.mxu0 %v1923
    %2039 = vmatprep.subr.mxu0 %v1920
    %2040 = vmatpush1.msra.mxu0 %v1919
    %2041 = vmatprep.subr.mxu0 %v1916
    %2042 = vmatpush1.msra.mxu0 %v1915
    %2043 = vmatprep.subr.mxu0 %v1912
    %2044 = vmatpush1.msra.mxu0 %v1911
    %2045 = vmatprep.subr.mxu0 %v1908
    %2046 = vmatpush1.msra.mxu0 %v1907
    %2047 = vmatprep.subr.mxu0 %v1904
    %2048 = vmatpush1.msra.mxu0 %v1903
    %2049 = vmatprep.subr.mxu0 %v1900
    %2050 = vmatpush1.msra.mxu0 %v1899
    %2051 = vmatprep.subr.mxu0 %v1896
    %2052 = vmatpush1.msra.mxu0 %v1895
    %2053 = vmatprep.subr.mxu0 %v1892
    %2054 = vmatpush1.msra.mxu0 %v1891
    %2055 = vmatprep.subr.mxu0 %v1888
    %2056 = vmatpush1.msra.mxu0 %v1887
    %2057 = vmatprep.subr.mxu0 %v1884
    %2058 = vmatpush1.msra.mxu0 %v1883
    %2059 = vmatprep.subr.mxu0 %v1880
    %2060 = vmatpush1.msra.mxu0 %v1879
    %2061 = vmatprep.subr.mxu0 %v2004
    %2062 = vmatpush2.msra.mxu0 %v2003
    %2063 = vmatprep.subr.mxu0 %v2000
    %2064 = vmatpush2.msra.mxu0 %v1999
    %2065 = vmatprep.subr.mxu0 %v1996
    %2066 = vmatpush2.msra.mxu0 %v1995
    %2067 = vmatprep.subr.mxu0 %v1992
    %2068 = vmatpush2.msra.mxu0 %v1991
    %2069 = vmatprep.subr.mxu0 %v1988
    %2070 = vmatpush2.msra.mxu0 %v1987
    %2071 = vmatprep.subr.mxu0 %v1984
    %2072 = vmatpush2.msra.mxu0 %v1983
    %2073 = vmatprep.subr.mxu0 %v1980
    %2074 = vmatpush2.msra.mxu0 %v1979
    %2075 = vmatprep.subr.mxu0 %v1976
    %2076 = vmatpush2.msra.mxu0 %v1975
    %2077 = vmatprep.subr.mxu0 %v1972
    %2078 = vmatpush2.msra.mxu0 %v1971
    %2079 = vmatprep.subr.mxu0 %v1968
    %2080 = vmatpush2.msra.mxu0 %v1967
    %2081 = vmatprep.subr.mxu0 %v1964
    %2082 = vmatpush2.msra.mxu0 %v1963
    %2083 = vmatprep.subr.mxu0 %v1960
    %2084 = vmatpush2.msra.mxu0 %v1959
    %2085 = vmatprep.subr.mxu0 %v1956
    %2086 = vmatpush2.msra.mxu0 %v1955
    %2087 = vmatprep.subr.mxu0 %v1952
    %2088 = vmatpush2.msra.mxu0 %v1951
    %2089 = vmatprep.subr.mxu0 %v1948
    %2090 = vmatpush2.msra.mxu0 %v1947
    %2091 = vmatprep.subr.mxu0 %v1944
    %2092 = vmatpush2.msra.mxu0 %v1943
    %2093 = vmatprep.mubr.f32.mxu0 %v1878
    %2094 = vmatmul.mubr.f32.gmra.mxu0 %v1877
    %v2095 = vpop.f32.mrf.mxu0
    %v2096 = vadd.f32 %v2012, %v2095
    %v2097 = vpop.f32.mrf.mxu0
    %v2098 = vadd.f32 %v2016, %v2097
    %2099 = vdwg.mxu0
    %2100 = vmatprep.subr.mxu0 %v1942
    %2101 = vmatpush1.msra.mxu0 %v1941
    %2102 = vmatprep.subr.mxu0 %v1938
    %2103 = vmatpush1.msra.mxu0 %v1937
    %2104 = vmatprep.subr.mxu0 %v1934
    %2105 = vmatpush1.msra.mxu0 %v1933
    %2106 = vmatprep.subr.mxu0 %v1930
    %2107 = vmatpush1.msra.mxu0 %v1929
    %2108 = vmatprep.subr.mxu0 %v1926
    %2109 = vmatpush1.msra.mxu0 %v1925
    %2110 = vmatprep.subr.mxu0 %v1922
    %2111 = vmatpush1.msra.mxu0 %v1921
    %2112 = vmatprep.subr.mxu0 %v1918
    %2113 = vmatpush1.msra.mxu0 %v1917
    %2114 = vmatprep.subr.mxu0 %v1914
    %2115 = vmatpush1.msra.mxu0 %v1913
    %2116 = vmatprep.subr.mxu0 %v1910
    %2117 = vmatpush1.msra.mxu0 %v1909
    %2118 = vmatprep.subr.mxu0 %v1906
    %2119 = vmatpush1.msra.mxu0 %v1905
    %2120 = vmatprep.subr.mxu0 %v1902
    %2121 = vmatpush1.msra.mxu0 %v1901
    %2122 = vmatprep.subr.mxu0 %v1898
    %2123 = vmatpush1.msra.mxu0 %v1897
    %2124 = vmatprep.subr.mxu0 %v1894
    %2125 = vmatpush1.msra.mxu0 %v1893
    %2126 = vmatprep.subr.mxu0 %v1890
    %2127 = vmatpush1.msra.mxu0 %v1889
    %2128 = vmatprep.subr.mxu0 %v1886
    %2129 = vmatpush1.msra.mxu0 %v1885
    %2130 = vmatprep.subr.mxu0 %v1882
    %2131 = vmatpush1.msra.mxu0 %v1881
    %2132 = vmatprep.subr.mxu0 %v2006
    %2133 = vmatpush2.msra.mxu0 %v2005
    %2134 = vmatprep.subr.mxu0 %v2002
    %2135 = vmatpush2.msra.mxu0 %v2001
    %2136 = vmatprep.subr.mxu0 %v1998
    %2137 = vmatpush2.msra.mxu0 %v1997
    %2138 = vmatprep.subr.mxu0 %v1994
    %2139 = vmatpush2.msra.mxu0 %v1993
    %2140 = vmatprep.subr.mxu0 %v1990
    %2141 = vmatpush2.msra.mxu0 %v1989
    %2142 = vmatprep.subr.mxu0 %v1986
    %2143 = vmatpush2.msra.mxu0 %v1985
    %2144 = vmatprep.subr.mxu0 %v1982
    %2145 = vmatpush2.msra.mxu0 %v1981
    %2146 = vmatprep.subr.mxu0 %v1978
    %2147 = vmatpush2.msra.mxu0 %v1977
    %2148 = vmatprep.subr.mxu0 %v1974
    %2149 = vmatpush2.msra.mxu0 %v1973
    %2150 = vmatprep.subr.mxu0 %v1970
    %2151 = vmatpush2.msra.mxu0 %v1969
    %2152 = vmatprep.subr.mxu0 %v1966
    %2153 = vmatpush2.msra.mxu0 %v1965
    %2154 = vmatprep.subr.mxu0 %v1962
    %2155 = vmatpush2.msra.mxu0 %v1961
    %2156 = vmatprep.subr.mxu0 %v1958
    %2157 = vmatpush2.msra.mxu0 %v1957
    %2158 = vmatprep.subr.mxu0 %v1954
    %2159 = vmatpush2.msra.mxu0 %v1953
    %2160 = vmatprep.subr.mxu0 %v1950
    %2161 = vmatpush2.msra.mxu0 %v1949
    %2162 = vmatprep.subr.mxu0 %v1946
    %2163 = vmatpush2.msra.mxu0 %v1945
    %2164 = vmatprep.mubr.f32.mxu0 %v1878
    %2165 = vmatmul.mubr.f32.gmra.mxu0 %v1877
    %v2166 = vpop.f32.mrf.mxu0
    %v2167 = vadd.f32 %v2020, %v2166
    %v2168 = vpop.f32.mrf.mxu0
    %v2169 = vadd.f32 %v2024, %v2168
    %2170 = vdwg.mxu0
    %v2171 = vmul.f32 %v2096, 0.5
    %v2172 = vtanh.pop %v2171
    %v2173 = vmul.f32 %v2172, 0.5
    %v2174 = vadd.f32 %v2173, 0.5
    %v2175 = vmul.f32 %v2098, 0.5
    %v2176 = vtanh.pop %v2175
    %v2177 = vmul.f32 %v2176, 0.5
    %v2178 = vadd.f32 %v2177, 0.5
    %v2179 = vtanh.pop %v2167
    %v2180 = vmul.f32 %v2169, 0.5
    %v2181 = vtanh.pop %v2180
    %v2182 = vmul.f32 %v2181, 0.5
    %v2183 = vadd.f32 %v2182, 0.5
    %v2184 = vmul.f32 %v2178, 0.0
    %v2185 = vmul.f32 %v2174, %v2179
    %v2186 = vadd.f32 %v2184, %v2185
    %v2187 = vtanh.pop %v2186
    %v2188 = vmul.f32 %v2183, %v2187
    %v2189 = vld [vmem:[%s4] sm:$0xff]
    %v2190 = vld [vmem:[%s4 + $0x8] sm:$0xff]
    %v2191 = vld [vmem:[%s4 + $0x10] sm:$0xff]
    %v2192 = vld [vmem:[%s4 + $0x18] sm:$0xff]
    %v2193 = vld [vmem:[%s4 + $0x20] sm:$0xff]
    %v2194 = vld [vmem:[%s4 + $0x28] sm:$0xff]
    %v2195 = vld [vmem:[%s4 + $0x30] sm:$0xff]
    %v2196 = vld [vmem:[%s4 + $0x38] sm:$0xff]
    %v2197 = vld [vmem:[%s4 + $0x40] sm:$0xff]
    %v2198 = vld [vmem:[%s4 + $0x48] sm:$0xff]
    %v2199 = vld [vmem:[%s4 + $0x50] sm:$0xff]
    %v2200 = vld [vmem:[%s4 + $0x58] sm:$0xff]
    %v2201 = vld [vmem:[%s4 + $0x60] sm:$0xff]
    %v2202 = vld [vmem:[%s4 + $0x68] sm:$0xff]
    %v2203 = vld [vmem:[%s4 + $0x70] sm:$0xff]
    %v2204 = vld [vmem:[%s4 + $0x78] sm:$0xff]
    %v2205 = vld [vmem:[%s4 + $0x80] sm:$0xff]
    %v2206 = vld [vmem:[%s4 + $0x88] sm:$0xff]
    %v2207 = vld [vmem:[%s4 + $0x90] sm:$0xff]
    %v2208 = vld [vmem:[%s4 + $0x98] sm:$0xff]
    %v2209 = vld [vmem:[%s4 + $0xa0] sm:$0xff]
    %v2210 = vld [vmem:[%s4 + $0xa8] sm:$0xff]
    %v2211 = vld [vmem:[%s4 + $0xb0] sm:$0xff]
    %v2212 = vld [vmem:[%s4 + $0xb8] sm:$0xff]
    %v2213 = vld [vmem:[%s4 + $0xc0] sm:$0xff]
    %v2214 = vld [vmem:[%s4 + $0xc8] sm:$0xff]
    %v2215 = vld [vmem:[%s4 + $0xd0] sm:$0xff]
    %v2216 = vld [vmem:[%s4 + $0xd8] sm:$0xff]
    %v2217 = vld [vmem:[%s4 + $0xe0] sm:$0xff]
    %v2218 = vld [vmem:[%s4 + $0xe8] sm:$0xff]
    %v2219 = vld [vmem:[%s4 + $0xf0] sm:$0xff]
    %v2220 = vld [vmem:[%s4 + $0xf8] sm:$0xff]
    %2221 = vmatprep.subr.mxu0 0.0
    %2222 = vmatpush1.msra.mxu0 %v2220
    %2223 = vmatprep.subr.mxu0 0.0
    %2224 = vmatpush1.msra.mxu0 %v2219
    %2225 = vmatprep.subr.mxu0 0.0
    %2226 = vmatpush1.msra.mxu0 %v2218
    %2227 = vmatprep.subr.mxu0 0.0
    %2228 = vmatpush1.msra.mxu0 %v2217
    %2229 = vmatprep.subr.mxu0 0.0
    %2230 = vmatpush1.msra.mxu0 %v2216
    %2231 = vmatprep.subr.mxu0 0.0
    %2232 = vmatpush1.msra.mxu0 %v2215
    %2233 = vmatprep.subr.mxu0 0.0
    %2234 = vmatpush1.msra.mxu0 %v2214
    %2235 = vmatprep.subr.mxu0 0.0
    %2236 = vmatpush1.msra.mxu0 %v2213
    %2237 = vmatprep.subr.mxu0 0.0
    %2238 = vmatpush1.msra.mxu0 %v2212
    %2239 = vmatprep.subr.mxu0 0.0
    %2240 = vmatpush1.msra.mxu0 %v2211
    %2241 = vmatprep.subr.mxu0 0.0
    %2242 = vmatpush1.msra.mxu0 %v2210
    %2243 = vmatprep.subr.mxu0 0.0
    %2244 = vmatpush1.msra.mxu0 %v2209
    %2245 = vmatprep.subr.mxu0 0.0
    %2246 = vmatpush1.msra.mxu0 %v2208
    %2247 = vmatprep.subr.mxu0 0.0
    %2248 = vmatpush1.msra.mxu0 %v2207
    %2249 = vmatprep.subr.mxu0 0.0
    %2250 = vmatpush1.msra.mxu0 %v2206
    %2251 = vmatprep.subr.mxu0 0.0
    %2252 = vmatpush1.msra.mxu0 %v2205
    %2253 = vmatprep.subr.mxu0 0.0
    %2254 = vmatpush2.msra.mxu0 0.0
    %2255 = vmatprep.subr.mxu0 0.0
    %2256 = vmatpush2.msra.mxu0 0.0
    %2257 = vmatprep.subr.mxu0 0.0
    %2258 = vmatpush2.msra.mxu0 0.0
    %2259 = vmatprep.subr.mxu0 0.0
    %2260 = vmatpush2.msra.mxu0 0.0
    %2261 = vmatprep.subr.mxu0 0.0
    %2262 = vmatpush2.msra.mxu0 0.0
    %2263 = vmatprep.subr.mxu0 0.0
    %2264 = vmatpush2.msra.mxu0 0.0
    %2265 = vmatprep.subr.mxu0 0.0
    %2266 = vmatpush2.msra.mxu0 0.0
    %2267 = vmatprep.subr.mxu0 0.0
    %2268 = vmatpush2.msra.mxu0 0.0
    %2269 = vmatprep.subr.mxu0 0.0
    %2270 = vmatpush2.msra.mxu0 0.0
    %2271 = vmatprep.subr.mxu0 0.0
    %2272 = vmatpush2.msra.mxu0 0.0
    %2273 = vmatprep.subr.mxu0 0.0
    %2274 = vmatpush2.msra.mxu0 0.0
    %2275 = vmatprep.subr.mxu0 0.0
    %2276 = vmatpush2.msra.mxu0 0.0
    %2277 = vmatprep.subr.mxu0 0.0
    %2278 = vmatpush2.msra.mxu0 0.0
    %2279 = vmatprep.subr.mxu0 0.0
    %2280 = vmatpush2.msra.mxu0 0.0
    %2281 = vmatprep.subr.mxu0 0.0
    %2282 = vmatpush2.msra.mxu0 0.0
    %2283 = vmatprep.subr.mxu0 0.0
    %2284 = vmatpush2.msra.mxu0 0.0
    %2285 = vmatprep.mubr.f32.mxu0 0.0
    %2286 = vmatmul.mubr.f32.gmra.mxu0 %v2188
    %v2287 = vpop.f32.mrf.mxu0
    %v2288 = vadd.f32 0.0, %v2287
    %v2289 = vpop.f32.mrf.mxu0
    %2290 = vdwg.mxu0
    %2291 = vmatprep.subr.mxu0 0.0
    %2292 = vmatpush1.msra.mxu0 %v2204
    %2293 = vmatprep.subr.mxu0 0.0
    %2294 = vmatpush1.msra.mxu0 %v2203
    %2295 = vmatprep.subr.mxu0 0.0
    %2296 = vmatpush1.msra.mxu0 %v2202
    %2297 = vmatprep.subr.mxu0 0.0
    %2298 = vmatpush1.msra.mxu0 %v2201
    %2299 = vmatprep.subr.mxu0 0.0
    %2300 = vmatpush1.msra.mxu0 %v2200
    %2301 = vmatprep.subr.mxu0 0.0
    %2302 = vmatpush1.msra.mxu0 %v2199
    %2303 = vmatprep.subr.mxu0 0.0
    %2304 = vmatpush1.msra.mxu0 %v2198
    %2305 = vmatprep.subr.mxu0 0.0
    %2306 = vmatpush1.msra.mxu0 %v2197
    %2307 = vmatprep.subr.mxu0 0.0
    %2308 = vmatpush1.msra.mxu0 %v2196
    %2309 = vmatprep.subr.mxu0 0.0
    %2310 = vmatpush1.msra.mxu0 %v2195
    %2311 = vmatprep.subr.mxu0 0.0
    %2312 = vmatpush1.msra.mxu0 %v2194
    %2313 = vmatprep.subr.mxu0 0.0
    %2314 = vmatpush1.msra.mxu0 %v2193
    %2315 = vmatprep.subr.mxu0 0.0
    %2316 = vmatpush1.msra.mxu0 %v2192
    %2317 = vmatprep.subr.mxu0 0.0
    %2318 = vmatpush1.msra.mxu0 %v2191
    %2319 = vmatprep.subr.mxu0 0.0
    %2320 = vmatpush1.msra.mxu0 %v2190
    %2321 = vmatprep.subr.mxu0 0.0
    %2322 = vmatpush1.msra.mxu0 %v2189
    %2323 = vmatprep.subr.mxu0 0.0
    %2324 = vmatpush2.msra.mxu0 0.0
    %2325 = vmatprep.subr.mxu0 0.0
    %2326 = vmatpush2.msra.mxu0 0.0
    %2327 = vmatprep.subr.mxu0 0.0
    %2328 = vmatpush2.msra.mxu0 0.0
    %2329 = vmatprep.subr.mxu0 0.0
    %2330 = vmatpush2.msra.mxu0 0.0
    %2331 = vmatprep.subr.mxu0 0.0
    %2332 = vmatpush2.msra.mxu0 0.0
    %2333 = vmatprep.subr.mxu0 0.0
    %2334 = vmatpush2.msra.mxu0 0.0
    %2335 = vmatprep.subr.mxu0 0.0
    %2336 = vmatpush2.msra.mxu0 0.0
    %2337 = vmatprep.subr.mxu0 0.0
    %2338 = vmatpush2.msra.mxu0 0.0
    %2339 = vmatprep.subr.mxu0 0.0
    %2340 = vmatpush2.msra.mxu0 0.0
    %2341 = vmatprep.subr.mxu0 0.0
    %2342 = vmatpush2.msra.mxu0 0.0
    %2343 = vmatprep.subr.mxu0 0.0
    %2344 = vmatpush2.msra.mxu0 0.0
    %2345 = vmatprep.subr.mxu0 0.0
    %2346 = vmatpush2.msra.mxu0 0.0
    %2347 = vmatprep.subr.mxu0 0.0
    %2348 = vmatpush2.msra.mxu0 0.0
    %2349 = vmatprep.subr.mxu0 0.0
    %2350 = vmatpush2.msra.mxu0 0.0
    %2351 = vmatprep.subr.mxu0 0.0
    %2352 = vmatpush2.msra.mxu0 0.0
    %2353 = vmatprep.subr.mxu0 0.0
    %2354 = vmatpush2.msra.mxu0 0.0
    %2355 = vmatprep.mubr.f32.mxu0 0.0
    %2356 = vmatmul.mubr.f32.gmra.mxu0 %v1875
    %v2357 = vpop.f32.mrf.mxu0
    %v2358 = vadd.f32 %v2288, %v2357
    %v2359 = vpop.f32.mrf.mxu0
    %2360 = vdwg.mxu0
    %v2361 = vld [vmem:[%s5] sm:$0x1]
    %v2363 = vlaneseq
    %v2364 = vshrl.u32 %v2363, 7
    %v2365 = vsub.s32 0, %v2364
    %v2366 = vrot.slane %v2361, %v2365
    %v2368 = vadd.f32 %v2358, %v2366
    %2369 = vst [vmem:[%s6] sm:$0xff] %v2368
    // Predicated region
    $region30: #{brnn_forward.3} parent=1 // pred_check
      _
    $region31: #{brnn_forward.3} parent=1 // pred_check_branch
      %2371 = sbr.rel (0) target = $region33
    $region32: #{brnn_forward.3} parent=1 // pred_region
      _
    $region33: #{brnn_forward.3} parent=1 // pred_fallthru
      _
    // Predicated region
    $region34: #{brnn_forward.3} parent=1 // pred_check
      _
    $region35: #{brnn_forward.3} parent=1 // pred_check_branch
      %2373 = sbr.rel (0) target = $region37
    $region36: #{brnn_forward.3} parent=1 // pred_region
      _
    $region37: #{brnn_forward.3} parent=1 // pred_fallthru
      _
    %2374 = vsyncpa [#allocation4], 1

// kernel: brnn_forward.2
$region0: #{brnn_forward.2}
  #allocation0 [shape = 'u32[]', space=smem, size = 0x4, offset = 0x4, fixed_abs, tag = 'smem constant byte address 0x4 - core index']
  #allocation1 [shape = 'u32[144,128]{1,0:T(1,128)}', space=vmem, size = 0x12000, scoped, tag = 'internal scratch']
  #allocation2 [shape = 'f32[8,8,1024]{2,1,0:T(8,128)}', space=vmem, size = 0x40000, scoped, tag = 'scratch operand']
  %s0 = inlined_call_operand.vmem [shape: f32[8,8,128], index: 0, kind: input, shape index: {}]
  %s1 = inlined_call_operand.hbm [shape: f32[128,1024], index: 1, kind: input, shape index: {}]
  %s2 = inlined_call_operand.hbm [shape: f32[1,1024], index: 2, kind: input, shape index: {}]
  %s3 = inlined_call_operand.hbm [shape: f32[128,512], index: 3, kind: input, shape index: {}]
  %s4 = inlined_call_operand.hbm [shape: f32[128,512], index: 4, kind: input, shape index: {}]
  %s5 = inlined_call_operand.vmem [shape: f32[8,8,256], index: 5, kind: output, shape index: {}]
  %s6 = sld [smem:[#allocation0]]
  $region46: #{brnn_forward.2} parent=0
    _
  %s8 = ssub.s32 1, %s6
  %s9 = scalar_select 0, %s8, %s6
  $region1: #{brnn_forward.2} parent=0
    #allocation3 [shape = 'u8[524288]{0}', space=vmem, size = 0x80000, scoped, tag = 'input window, operand 1, single buffered']
    #allocation4 [shape = 's32[1]{0}', space=sflag, size = 0x4, scoped, tag = 'scoped memory for brnn_forward.2']
    #allocation5 [shape = 'u8[4096]{0}', space=vmem, size = 0x1000, scoped, tag = 'input window, operand 2, single buffered']
    #allocation6 [shape = 's32[1]{0}', space=sflag, size = 0x4, scoped, tag = 'scoped memory for brnn_forward.2']
    #allocation7 [shape = 'u8[262144]{0}', space=vmem, size = 0x40000, scoped, tag = 'input window, operand 3, single buffered']
    #allocation8 [shape = 'u8[262144]{0}', space=vmem, size = 0x40000, scoped, tag = 'input window, operand 4, single buffered']
    #allocation9 [shape = 's32[1]{0}', space=sflag, size = 0x4, scoped, tag = 'scoped memory for brnn_forward.2']
    %10 = vsyncpa [#allocation4], 0
    %11 = vsyncpa [#allocation6], 0
    %12 = vsyncpa [#allocation9], 0
    // Predicated region
    $region2: #{brnn_forward.2} parent=1 // pred_check
      _
    $region3: #{brnn_forward.2} parent=1 // pred_check_branch
      %14 = sbr.rel (0) target = $region5
    $region4: #{brnn_forward.2} parent=1 // pred_region
      _
    $region5: #{brnn_forward.2} parent=1 // pred_fallthru
      _
    // Predicated region
    $region6: #{brnn_forward.2} parent=1 // pred_check
      _
    $region7: #{brnn_forward.2} parent=1 // pred_check_branch
      %16 = sbr.rel (0) target = $region9
    $region8: #{brnn_forward.2} parent=1 // pred_region
      %s18 = ssub.s32 16384, 16384
      %19 = vsyncadd [#allocation4], %s18
      %s20 = sshll.u32 [#allocation3], 4
      %s21 = int_to_ptr.vmem [resolvable:$true] %s20
      %26 = dma.hbm_to_vmem [thread:$0]  %s1, 16384, %s21, [#allocation4], 1024, 1024, 64
    $region9: #{brnn_forward.2} parent=1 // pred_fallthru
      _
    // Predicated region
    $region10: #{brnn_forward.2} parent=1 // pred_check
      _
    $region11: #{brnn_forward.2} parent=1 // pred_check_branch
      %28 = sbr.rel (0) target = $region13
    $region12: #{brnn_forward.2} parent=1 // pred_region
      %s30 = ssub.s32 128, 128
      %31 = vsyncadd [#allocation6], %s30
      %s33 = sshll.u32 [#allocation5], 4
      %s34 = int_to_ptr.vmem [resolvable:$true] %s33
      %36 = dma.hbm_to_vmem [thread:$0]  %s2, 128, %s34, [#allocation6]
    $region13: #{brnn_forward.2} parent=1 // pred_fallthru
      _
    // Predicated region
    $region14: #{brnn_forward.2} parent=1 // pred_check
      _
    $region15: #{brnn_forward.2} parent=1 // pred_check_branch
      %38 = sbr.rel (0) target = $region17
    $region16: #{brnn_forward.2} parent=1 // pred_region
      %s40 = ssub.s32 8192, 8192
      %41 = vsyncadd [#allocation6], %s40
      %s42 = sshll.u32 [#allocation7], 4
      %s43 = int_to_ptr.vmem [resolvable:$true] %s42
      %48 = dma.hbm_to_vmem [thread:$0]  %s3, 8192, %s43, [#allocation6], 512, 512, 32
    $region17: #{brnn_forward.2} parent=1 // pred_fallthru
      _
    // Predicated region
    $region18: #{brnn_forward.2} parent=1 // pred_check
      _
    $region19: #{brnn_forward.2} parent=1 // pred_check_branch
      %50 = sbr.rel (0) target = $region21
    $region20: #{brnn_forward.2} parent=1 // pred_region
      %s52 = ssub.s32 8192, 8192
      %53 = vsyncadd [#allocation9], %s52
      %s54 = sshll.u32 [#allocation8], 4
      %s55 = int_to_ptr.vmem [resolvable:$true] %s54
      %60 = dma.hbm_to_vmem [thread:$0]  %s4, 8192, %s55, [#allocation9], 512, 512, 32
    $region21: #{brnn_forward.2} parent=1 // pred_fallthru
      _
    // Predicated region
    $region22: #{brnn_forward.2} parent=1 // pred_check
      _
    $region23: #{brnn_forward.2} parent=1 // pred_check_branch
      %62 = sbr.rel (0) target = $region25
    $region24: #{brnn_forward.2} parent=1 // pred_region
      %63 = dma.done [#allocation4], 16384
    $region25: #{brnn_forward.2} parent=1 // pred_fallthru
      _
    // Predicated region
    $region26: #{brnn_forward.2} parent=1 // pred_check
      _
    $region27: #{brnn_forward.2} parent=1 // pred_check_branch
      %65 = sbr.rel (0) target = $region29
    $region28: #{brnn_forward.2} parent=1 // pred_region
      %66 = dma.done [#allocation6], 128
    $region29: #{brnn_forward.2} parent=1 // pred_fallthru
      _
    // Predicated region
    $region30: #{brnn_forward.2} parent=1 // pred_check
      _
    $region31: #{brnn_forward.2} parent=1 // pred_check_branch
      %68 = sbr.rel (0) target = $region33
    $region32: #{brnn_forward.2} parent=1 // pred_region
      %69 = dma.done [#allocation6], 8192
    $region33: #{brnn_forward.2} parent=1 // pred_fallthru
      _
    // Predicated region
    $region34: #{brnn_forward.2} parent=1 // pred_check
      _
    $region35: #{brnn_forward.2} parent=1 // pred_check_branch
      %71 = sbr.rel (0) target = $region37
    $region36: #{brnn_forward.2} parent=1 // pred_region
      %72 = dma.done [#allocation9], 8192
    $region37: #{brnn_forward.2} parent=1 // pred_fallthru
      _
    %v73 = vld [vmem:[%s0] sm:$0xff]
    %v74 = vld [vmem:[%s0 + $0x8] sm:$0xff]
    %v75 = vld [vmem:[%s0 + $0x10] sm:$0xff]
    %v76 = vld [vmem:[%s0 + $0x18] sm:$0xff]
    %v77 = vld [vmem:[%s0 + $0x20] sm:$0xff]
    %v78 = vld [vmem:[%s0 + $0x28] sm:$0xff]
    %v79 = vld [vmem:[%s0 + $0x30] sm:$0xff]
    %v80 = vld [vmem:[%s0 + $0x38] sm:$0xff]
    %v81 = vld [vmem:[#allocation3] sm:$0xff]
    %v82 = vld [vmem:[#allocation3 + $0x8] sm:$0xff]
    %v83 = vld [vmem:[#allocation3 + $0x10] sm:$0xff]
    %v84 = vld [vmem:[#allocation3 + $0x18] sm:$0xff]
    %v85 = vld [vmem:[#allocation3 + $0x20] sm:$0xff]
    %v86 = vld [vmem:[#allocation3 + $0x28] sm:$0xff]
    %v87 = vld [vmem:[#allocation3 + $0x30] sm:$0xff]
    %v88 = vld [vmem:[#allocation3 + $0x38] sm:$0xff]
    %v89 = vld [vmem:[#allocation3 + $0x40] sm:$0xff]
    %v90 = vld [vmem:[#allocation3 + $0x48] sm:$0xff]
    %v91 = vld [vmem:[#allocation3 + $0x50] sm:$0xff]
    %v92 = vld [vmem:[#allocation3 + $0x58] sm:$0xff]
    %v93 = vld [vmem:[#allocation3 + $0x60] sm:$0xff]
    %v94 = vld [vmem:[#allocation3 + $0x68] sm:$0xff]
    %v95 = vld [vmem:[#allocation3 + $0x70] sm:$0xff]
    %v96 = vld [vmem:[#allocation3 + $0x78] sm:$0xff]
    %v97 = vld [vmem:[#allocation3 + $0x80] sm:$0xff]
    %v98 = vld [vmem:[#allocation3 + $0x88] sm:$0xff]
    %v99 = vld [vmem:[#allocation3 + $0x90] sm:$0xff]
    %v100 = vld [vmem:[#allocation3 + $0x98] sm:$0xff]
    %v101 = vld [vmem:[#allocation3 + $0xa0] sm:$0xff]
    %v102 = vld [vmem:[#allocation3 + $0xa8] sm:$0xff]
    %v103 = vld [vmem:[#allocation3 + $0xb0] sm:$0xff]
    %v104 = vld [vmem:[#allocation3 + $0xb8] sm:$0xff]
    %v105 = vld [vmem:[#allocation3 + $0xc0] sm:$0xff]
    %v106 = vld [vmem:[#allocation3 + $0xc8] sm:$0xff]
    %v107 = vld [vmem:[#allocation3 + $0xd0] sm:$0xff]
    %v108 = vld [vmem:[#allocation3 + $0xd8] sm:$0xff]
    %v109 = vld [vmem:[#allocation3 + $0xe0] sm:$0xff]
    %v110 = vld [vmem:[#allocation3 + $0xe8] sm:$0xff]
    %v111 = vld [vmem:[#allocation3 + $0xf0] sm:$0xff]
    %v112 = vld [vmem:[#allocation3 + $0xf8] sm:$0xff]
    %v113 = vld [vmem:[#allocation3 + $0x100] sm:$0xff]
    %v114 = vld [vmem:[#allocation3 + $0x108] sm:$0xff]
    %v115 = vld [vmem:[#allocation3 + $0x110] sm:$0xff]
    %v116 = vld [vmem:[#allocation3 + $0x118] sm:$0xff]
    %v117 = vld [vmem:[#allocation3 + $0x120] sm:$0xff]
    %v118 = vld [vmem:[#allocation3 + $0x128] sm:$0xff]
    %v119 = vld [vmem:[#allocation3 + $0x130] sm:$0xff]
    %v120 = vld [vmem:[#allocation3 + $0x138] sm:$0xff]
    %v121 = vld [vmem:[#allocation3 + $0x140] sm:$0xff]
    %v122 = vld [vmem:[#allocation3 + $0x148] sm:$0xff]
    %v123 = vld [vmem:[#allocation3 + $0x150] sm:$0xff]
    %v124 = vld [vmem:[#allocation3 + $0x158] sm:$0xff]
    %v125 = vld [vmem:[#allocation3 + $0x160] sm:$0xff]
    %v126 = vld [vmem:[#allocation3 + $0x168] sm:$0xff]
    %v127 = vld [vmem:[#allocation3 + $0x170] sm:$0xff]
    %v128 = vld [vmem:[#allocation3 + $0x178] sm:$0xff]
    %v129 = vld [vmem:[#allocation3 + $0x180] sm:$0xff]
    %v130 = vld [vmem:[#allocation3 + $0x188] sm:$0xff]
    %v131 = vld [vmem:[#allocation3 + $0x190] sm:$0xff]
    %v132 = vld [vmem:[#allocation3 + $0x198] sm:$0xff]
    %v133 = vld [vmem:[#allocation3 + $0x1a0] sm:$0xff]
    %v134 = vld [vmem:[#allocation3 + $0x1a8] sm:$0xff]
    %v135 = vld [vmem:[#allocation3 + $0x1b0] sm:$0xff]
    %v136 = vld [vmem:[#allocation3 + $0x1b8] sm:$0xff]
    %v137 = vld [vmem:[#allocation3 + $0x1c0] sm:$0xff]
    %v138 = vld [vmem:[#allocation3 + $0x1c8] sm:$0xff]
    %v139 = vld [vmem:[#allocation3 + $0x1d0] sm:$0xff]
    %v140 = vld [vmem:[#allocation3 + $0x1d8] sm:$0xff]
    %v141 = vld [vmem:[#allocation3 + $0x1e0] sm:$0xff]
    %v142 = vld [vmem:[#allocation3 + $0x1e8] sm:$0xff]
    %v143 = vld [vmem:[#allocation3 + $0x1f0] sm:$0xff]
    %v144 = vld [vmem:[#allocation3 + $0x1f8] sm:$0xff]
    %v145 = vld [vmem:[#allocation3 + $0x200] sm:$0xff]
    %v146 = vld [vmem:[#allocation3 + $0x208] sm:$0xff]
    %v147 = vld [vmem:[#allocation3 + $0x210] sm:$0xff]
    %v148 = vld [vmem:[#allocation3 + $0x218] sm:$0xff]
    %v149 = vld [vmem:[#allocation3 + $0x220] sm:$0xff]
    %v150 = vld [vmem:[#allocation3 + $0x228] sm:$0xff]
    %v151 = vld [vmem:[#allocation3 + $0x230] sm:$0xff]
    %v152 = vld [vmem:[#allocation3 + $0x238] sm:$0xff]
    %v153 = vld [vmem:[#allocation3 + $0x240] sm:$0xff]
    %v154 = vld [vmem:[#allocation3 + $0x248] sm:$0xff]
    %v155 = vld [vmem:[#allocation3 + $0x250] sm:$0xff]
    %v156 = vld [vmem:[#allocation3 + $0x258] sm:$0xff]
    %v157 = vld [vmem:[#allocation3 + $0x260] sm:$0xff]
    %v158 = vld [vmem:[#allocation3 + $0x268] sm:$0xff]
    %v159 = vld [vmem:[#allocation3 + $0x270] sm:$0xff]
    %v160 = vld [vmem:[#allocation3 + $0x278] sm:$0xff]
    %v161 = vld [vmem:[#allocation3 + $0x280] sm:$0xff]
    %v162 = vld [vmem:[#allocation3 + $0x288] sm:$0xff]
    %v163 = vld [vmem:[#allocation3 + $0x290] sm:$0xff]
    %v164 = vld [vmem:[#allocation3 + $0x298] sm:$0xff]
    %v165 = vld [vmem:[#allocation3 + $0x2a0] sm:$0xff]
    %v166 = vld [vmem:[#allocation3 + $0x2a8] sm:$0xff]
    %v167 = vld [vmem:[#allocation3 + $0x2b0] sm:$0xff]
    %v168 = vld [vmem:[#allocation3 + $0x2b8] sm:$0xff]
    %v169 = vld [vmem:[#allocation3 + $0x2c0] sm:$0xff]
    %v170 = vld [vmem:[#allocation3 + $0x2c8] sm:$0xff]
    %v171 = vld [vmem:[#allocation3 + $0x2d0] sm:$0xff]
    %v172 = vld [vmem:[#allocation3 + $0x2d8] sm:$0xff]
    %v173 = vld [vmem:[#allocation3 + $0x2e0] sm:$0xff]
    %v174 = vld [vmem:[#allocation3 + $0x2e8] sm:$0xff]
    %v175 = vld [vmem:[#allocation3 + $0x2f0] sm:$0xff]
    %v176 = vld [vmem:[#allocation3 + $0x2f8] sm:$0xff]
    %v177 = vld [vmem:[#allocation3 + $0x300] sm:$0xff]
    %v178 = vld [vmem:[#allocation3 + $0x308] sm:$0xff]
    %v179 = vld [vmem:[#allocation3 + $0x310] sm:$0xff]
    %v180 = vld [vmem:[#allocation3 + $0x318] sm:$0xff]
    %v181 = vld [vmem:[#allocation3 + $0x320] sm:$0xff]
    %v182 = vld [vmem:[#allocation3 + $0x328] sm:$0xff]
    %v183 = vld [vmem:[#allocation3 + $0x330] sm:$0xff]
    %v184 = vld [vmem:[#allocation3 + $0x338] sm:$0xff]
    %v185 = vld [vmem:[#allocation3 + $0x340] sm:$0xff]
    %v186 = vld [vmem:[#allocation3 + $0x348] sm:$0xff]
    %v187 = vld [vmem:[#allocation3 + $0x350] sm:$0xff]
    %v188 = vld [vmem:[#allocation3 + $0x358] sm:$0xff]
    %v189 = vld [vmem:[#allocation3 + $0x360] sm:$0xff]
    %v190 = vld [vmem:[#allocation3 + $0x368] sm:$0xff]
    %v191 = vld [vmem:[#allocation3 + $0x370] sm:$0xff]
    %v192 = vld [vmem:[#allocation3 + $0x378] sm:$0xff]
    %v193 = vld [vmem:[#allocation3 + $0x380] sm:$0xff]
    %v194 = vld [vmem:[#allocation3 + $0x388] sm:$0xff]
    %v195 = vld [vmem:[#allocation3 + $0x390] sm:$0xff]
    %v196 = vld [vmem:[#allocation3 + $0x398] sm:$0xff]
    %v197 = vld [vmem:[#allocation3 + $0x3a0] sm:$0xff]
    %v198 = vld [vmem:[#allocation3 + $0x3a8] sm:$0xff]
    %v199 = vld [vmem:[#allocation3 + $0x3b0] sm:$0xff]
    %v200 = vld [vmem:[#allocation3 + $0x3b8] sm:$0xff]
    %v201 = vld [vmem:[#allocation3 + $0x3c0] sm:$0xff]
    %v202 = vld [vmem:[#allocation3 + $0x3c8] sm:$0xff]
    %v203 = vld [vmem:[#allocation3 + $0x3d0] sm:$0xff]
    %v204 = vld [vmem:[#allocation3 + $0x3d8] sm:$0xff]
    %v205 = vld [vmem:[#allocation3 + $0x3e0] sm:$0xff]
    %v206 = vld [vmem:[#allocation3 + $0x3e8] sm:$0xff]
    %v207 = vld [vmem:[#allocation3 + $0x3f0] sm:$0xff]
    %v208 = vld [vmem:[#allocation3 + $0x3f8] sm:$0xff]
    %v209 = vld [vmem:[#allocation5] sm:$0xff]
    %v211 = vlaneseq
    %v212 = vshrl.u32 %v211, 7
    %v213 = vsub.s32 0, %v212
    %v214 = vrot.slane %v209, %v213
    %v215 = vlaneseq
    %v216 = vshrl.u32 %v215, 7
    %v217 = vsub.s32 1, %v216
    %v218 = vrot.slane %v209, %v217
    %v219 = vlaneseq
    %v220 = vshrl.u32 %v219, 7
    %v221 = vsub.s32 2, %v220
    %v222 = vrot.slane %v209, %v221
    %v223 = vlaneseq
    %v224 = vshrl.u32 %v223, 7
    %v225 = vsub.s32 3, %v224
    %v226 = vrot.slane %v209, %v225
    %v227 = vlaneseq
    %v228 = vshrl.u32 %v227, 7
    %v229 = vsub.s32 4, %v228
    %v230 = vrot.slane %v209, %v229
    %v231 = vlaneseq
    %v232 = vshrl.u32 %v231, 7
    %v233 = vsub.s32 5, %v232
    %v234 = vrot.slane %v209, %v233
    %v235 = vlaneseq
    %v236 = vshrl.u32 %v235, 7
    %v237 = vsub.s32 6, %v236
    %v238 = vrot.slane %v209, %v237
    %v239 = vlaneseq
    %v240 = vshrl.u32 %v239, 7
    %v241 = vsub.s32 7, %v240
    %v242 = vrot.slane %v209, %v241
    %251 = vmatprep.subr.mxu0 %v202
    %252 = vmatpush1.msra.mxu0 %v201
    %253 = vmatprep.subr.mxu0 %v194
    %254 = vmatpush1.msra.mxu0 %v193
    %255 = vmatprep.subr.mxu0 %v186
    %256 = vmatpush1.msra.mxu0 %v185
    %257 = vmatprep.subr.mxu0 %v178
    %258 = vmatpush1.msra.mxu0 %v177
    %259 = vmatprep.subr.mxu0 %v170
    %260 = vmatpush1.msra.mxu0 %v169
    %261 = vmatprep.subr.mxu0 %v162
    %262 = vmatpush1.msra.mxu0 %v161
    %263 = vmatprep.subr.mxu0 %v154
    %264 = vmatpush1.msra.mxu0 %v153
    %265 = vmatprep.subr.mxu0 %v146
    %266 = vmatpush1.msra.mxu0 %v145
    %267 = vmatprep.subr.mxu0 %v138
    %268 = vmatpush1.msra.mxu0 %v137
    %269 = vmatprep.subr.mxu0 %v130
    %270 = vmatpush1.msra.mxu0 %v129
    %271 = vmatprep.subr.mxu0 %v122
    %272 = vmatpush1.msra.mxu0 %v121
    %273 = vmatprep.subr.mxu0 %v114
    %274 = vmatpush1.msra.mxu0 %v113
    %275 = vmatprep.subr.mxu0 %v106
    %276 = vmatpush1.msra.mxu0 %v105
    %277 = vmatprep.subr.mxu0 %v98
    %278 = vmatpush1.msra.mxu0 %v97
    %279 = vmatprep.subr.mxu0 %v90
    %280 = vmatpush1.msra.mxu0 %v89
    %281 = vmatprep.subr.mxu0 %v82
    %282 = vmatpush1.msra.mxu0 %v81
    %283 = vmatprep.subr.mxu0 0.0
    %284 = vmatpush2.msra.mxu0 0.0
    %285 = vmatprep.subr.mxu0 0.0
    %286 = vmatpush2.msra.mxu0 0.0
    %287 = vmatprep.subr.mxu0 0.0
    %288 = vmatpush2.msra.mxu0 0.0
    %289 = vmatprep.subr.mxu0 0.0
    %290 = vmatpush2.msra.mxu0 0.0
    %291 = vmatprep.subr.mxu0 0.0
    %292 = vmatpush2.msra.mxu0 0.0
    %293 = vmatprep.subr.mxu0 0.0
    %294 = vmatpush2.msra.mxu0 0.0
    %295 = vmatprep.subr.mxu0 0.0
    %296 = vmatpush2.msra.mxu0 0.0
    %297 = vmatprep.subr.mxu0 0.0
    %298 = vmatpush2.msra.mxu0 0.0
    %299 = vmatprep.subr.mxu0 0.0
    %300 = vmatpush2.msra.mxu0 0.0
    %301 = vmatprep.subr.mxu0 0.0
    %302 = vmatpush2.msra.mxu0 0.0
    %303 = vmatprep.subr.mxu0 0.0
    %304 = vmatpush2.msra.mxu0 0.0
    %305 = vmatprep.subr.mxu0 0.0
    %306 = vmatpush2.msra.mxu0 0.0
    %307 = vmatprep.subr.mxu0 0.0
    %308 = vmatpush2.msra.mxu0 0.0
    %309 = vmatprep.subr.mxu0 0.0
    %310 = vmatpush2.msra.mxu0 0.0
    %311 = vmatprep.subr.mxu0 0.0
    %312 = vmatpush2.msra.mxu0 0.0
    %313 = vmatprep.subr.mxu0 0.0
    %314 = vmatpush2.msra.mxu0 0.0
    %315 = vmatprep.mubr.f32.mxu0 0.0
    %316 = vmatmul.mubr.f32.gmra.mxu0 %v73
    %v317 = vpop.f32.mrf.mxu0
    %v318 = vadd.f32 %v214, %v317
    %v319 = vpop.f32.mrf.mxu0
    %v320 = vadd.f32 %v218, %v319
    %321 = vmatprep.mubr.f32.mxu0 0.0
    %322 = vmatmul.mubr.f32.gmra.mxu0 %v74
    %v323 = vpop.f32.mrf.mxu0
    %v324 = vadd.f32 %v214, %v323
    %v325 = vpop.f32.mrf.mxu0
    %v326 = vadd.f32 %v218, %v325
    %327 = vmatprep.mubr.f32.mxu0 0.0
    %328 = vmatmul.mubr.f32.gmra.mxu0 %v75
    %v329 = vpop.f32.mrf.mxu0
    %v330 = vadd.f32 %v214, %v329
    %v331 = vpop.f32.mrf.mxu0
    %v332 = vadd.f32 %v218, %v331
    %333 = vmatprep.mubr.f32.mxu0 0.0
    %334 = vmatmul.mubr.f32.gmra.mxu0 %v76
    %v335 = vpop.f32.mrf.mxu0
    %v336 = vadd.f32 %v214, %v335
    %v337 = vpop.f32.mrf.mxu0
    %v338 = vadd.f32 %v218, %v337
    %339 = vmatprep.mubr.f32.mxu0 0.0
    %340 = vmatmul.mubr.f32.gmra.mxu0 %v77
    %v341 = vpop.f32.mrf.mxu0
    %v342 = vadd.f32 %v214, %v341
    %v343 = vpop.f32.mrf.mxu0
    %v344 = vadd.f32 %v218, %v343
    %345 = vmatprep.mubr.f32.mxu0 0.0
    %346 = vmatmul.mubr.f32.gmra.mxu0 %v78
    %v347 = vpop.f32.mrf.mxu0
    %v348 = vadd.f32 %v214, %v347
    %v349 = vpop.f32.mrf.mxu0
    %v350 = vadd.f32 %v218, %v349
    %351 = vmatprep.mubr.f32.mxu0 0.0
    %352 = vmatmul.mubr.f32.gmra.mxu0 %v79
    %v353 = vpop.f32.mrf.mxu0
    %v354 = vadd.f32 %v214, %v353
    %v355 = vpop.f32.mrf.mxu0
    %v356 = vadd.f32 %v218, %v355
    %357 = vmatprep.mubr.f32.mxu0 0.0
    %358 = vmatmul.mubr.f32.gmra.mxu0 %v80
    %v359 = vpop.f32.mrf.mxu0
    %v360 = vadd.f32 %v214, %v359
    %v361 = vpop.f32.mrf.mxu0
    %v362 = vadd.f32 %v218, %v361
    %363 = vdwg.mxu0
    %364 = vmatprep.subr.mxu0 %v204
    %365 = vmatpush1.msra.mxu0 %v203
    %366 = vmatprep.subr.mxu0 %v196
    %367 = vmatpush1.msra.mxu0 %v195
    %368 = vmatprep.subr.mxu0 %v188
    %369 = vmatpush1.msra.mxu0 %v187
    %370 = vmatprep.subr.mxu0 %v180
    %371 = vmatpush1.msra.mxu0 %v179
    %372 = vmatprep.subr.mxu0 %v172
    %373 = vmatpush1.msra.mxu0 %v171
    %374 = vmatprep.subr.mxu0 %v164
    %375 = vmatpush1.msra.mxu0 %v163
    %376 = vmatprep.subr.mxu0 %v156
    %377 = vmatpush1.msra.mxu0 %v155
    %378 = vmatprep.subr.mxu0 %v148
    %379 = vmatpush1.msra.mxu0 %v147
    %380 = vmatprep.subr.mxu0 %v140
    %381 = vmatpush1.msra.mxu0 %v139
    %382 = vmatprep.subr.mxu0 %v132
    %383 = vmatpush1.msra.mxu0 %v131
    %384 = vmatprep.subr.mxu0 %v124
    %385 = vmatpush1.msra.mxu0 %v123
    %386 = vmatprep.subr.mxu0 %v116
    %387 = vmatpush1.msra.mxu0 %v115
    %388 = vmatprep.subr.mxu0 %v108
    %389 = vmatpush1.msra.mxu0 %v107
    %390 = vmatprep.subr.mxu0 %v100
    %391 = vmatpush1.msra.mxu0 %v99
    %392 = vmatprep.subr.mxu0 %v92
    %393 = vmatpush1.msra.mxu0 %v91
    %394 = vmatprep.subr.mxu0 %v84
    %395 = vmatpush1.msra.mxu0 %v83
    %396 = vmatprep.subr.mxu0 0.0
    %397 = vmatpush2.msra.mxu0 0.0
    %398 = vmatprep.subr.mxu0 0.0
    %399 = vmatpush2.msra.mxu0 0.0
    %400 = vmatprep.subr.mxu0 0.0
    %401 = vmatpush2.msra.mxu0 0.0
    %402 = vmatprep.subr.mxu0 0.0
    %403 = vmatpush2.msra.mxu0 0.0
    %404 = vmatprep.subr.mxu0 0.0
    %405 = vmatpush2.msra.mxu0 0.0
    %406 = vmatprep.subr.mxu0 0.0
    %407 = vmatpush2.msra.mxu0 0.0
    %408 = vmatprep.subr.mxu0 0.0
    %409 = vmatpush2.msra.mxu0 0.0
    %410 = vmatprep.subr.mxu0 0.0
    %411 = vmatpush2.msra.mxu0 0.0
    %412 = vmatprep.subr.mxu0 0.0
    %413 = vmatpush2.msra.mxu0 0.0
    %414 = vmatprep.subr.mxu0 0.0
    %415 = vmatpush2.msra.mxu0 0.0
    %416 = vmatprep.subr.mxu0 0.0
    %417 = vmatpush2.msra.mxu0 0.0
    %418 = vmatprep.subr.mxu0 0.0
    %419 = vmatpush2.msra.mxu0 0.0
    %420 = vmatprep.subr.mxu0 0.0
    %421 = vmatpush2.msra.mxu0 0.0
    %422 = vmatprep.subr.mxu0 0.0
    %423 = vmatpush2.msra.mxu0 0.0
    %424 = vmatprep.subr.mxu0 0.0
    %425 = vmatpush2.msra.mxu0 0.0
    %426 = vmatprep.subr.mxu0 0.0
    %427 = vmatpush2.msra.mxu0 0.0
    %428 = vmatprep.mubr.f32.mxu0 0.0
    %429 = vmatmul.mubr.f32.gmra.mxu0 %v73
    %v430 = vpop.f32.mrf.mxu0
    %v431 = vadd.f32 %v222, %v430
    %v432 = vpop.f32.mrf.mxu0
    %v433 = vadd.f32 %v226, %v432
    %434 = vmatprep.mubr.f32.mxu0 0.0
    %435 = vmatmul.mubr.f32.gmra.mxu0 %v74
    %v436 = vpop.f32.mrf.mxu0
    %v437 = vadd.f32 %v222, %v436
    %v438 = vpop.f32.mrf.mxu0
    %v439 = vadd.f32 %v226, %v438
    %440 = vmatprep.mubr.f32.mxu0 0.0
    %441 = vmatmul.mubr.f32.gmra.mxu0 %v75
    %v442 = vpop.f32.mrf.mxu0
    %v443 = vadd.f32 %v222, %v442
    %v444 = vpop.f32.mrf.mxu0
    %v445 = vadd.f32 %v226, %v444
    %446 = vmatprep.mubr.f32.mxu0 0.0
    %447 = vmatmul.mubr.f32.gmra.mxu0 %v76
    %v448 = vpop.f32.mrf.mxu0
    %v449 = vadd.f32 %v222, %v448
    %v450 = vpop.f32.mrf.mxu0
    %v451 = vadd.f32 %v226, %v450
    %452 = vmatprep.mubr.f32.mxu0 0.0
    %453 = vmatmul.mubr.f32.gmra.mxu0 %v77
    %v454 = vpop.f32.mrf.mxu0
    %v455 = vadd.f32 %v222, %v454
    %v456 = vpop.f32.mrf.mxu0
    %v457 = vadd.f32 %v226, %v456
    %458 = vmatprep.mubr.f32.mxu0 0.0
    %459 = vmatmul.mubr.f32.gmra.mxu0 %v78
    %v460 = vpop.f32.mrf.mxu0
    %v461 = vadd.f32 %v222, %v460
    %v462 = vpop.f32.mrf.mxu0
    %v463 = vadd.f32 %v226, %v462
    %464 = vmatprep.mubr.f32.mxu0 0.0
    %465 = vmatmul.mubr.f32.gmra.mxu0 %v79
    %v466 = vpop.f32.mrf.mxu0
    %v467 = vadd.f32 %v222, %v466
    %v468 = vpop.f32.mrf.mxu0
    %v469 = vadd.f32 %v226, %v468
    %470 = vmatprep.mubr.f32.mxu0 0.0
    %471 = vmatmul.mubr.f32.gmra.mxu0 %v80
    %v472 = vpop.f32.mrf.mxu0
    %v473 = vadd.f32 %v222, %v472
    %v474 = vpop.f32.mrf.mxu0
    %v475 = vadd.f32 %v226, %v474
    %476 = vdwg.mxu0
    %477 = vmatprep.subr.mxu0 %v206
    %478 = vmatpush1.msra.mxu0 %v205
    %479 = vmatprep.subr.mxu0 %v198
    %480 = vmatpush1.msra.mxu0 %v197
    %481 = vmatprep.subr.mxu0 %v190
    %482 = vmatpush1.msra.mxu0 %v189
    %483 = vmatprep.subr.mxu0 %v182
    %484 = vmatpush1.msra.mxu0 %v181
    %485 = vmatprep.subr.mxu0 %v174
    %486 = vmatpush1.msra.mxu0 %v173
    %487 = vmatprep.subr.mxu0 %v166
    %488 = vmatpush1.msra.mxu0 %v165
    %489 = vmatprep.subr.mxu0 %v158
    %490 = vmatpush1.msra.mxu0 %v157
    %491 = vmatprep.subr.mxu0 %v150
    %492 = vmatpush1.msra.mxu0 %v149
    %493 = vmatprep.subr.mxu0 %v142
    %494 = vmatpush1.msra.mxu0 %v141
    %495 = vmatprep.subr.mxu0 %v134
    %496 = vmatpush1.msra.mxu0 %v133
    %497 = vmatprep.subr.mxu0 %v126
    %498 = vmatpush1.msra.mxu0 %v125
    %499 = vmatprep.subr.mxu0 %v118
    %500 = vmatpush1.msra.mxu0 %v117
    %501 = vmatprep.subr.mxu0 %v110
    %502 = vmatpush1.msra.mxu0 %v109
    %503 = vmatprep.subr.mxu0 %v102
    %504 = vmatpush1.msra.mxu0 %v101
    %505 = vmatprep.subr.mxu0 %v94
    %506 = vmatpush1.msra.mxu0 %v93
    %507 = vmatprep.subr.mxu0 %v86
    %508 = vmatpush1.msra.mxu0 %v85
    %509 = vmatprep.subr.mxu0 0.0
    %510 = vmatpush2.msra.mxu0 0.0
    %511 = vmatprep.subr.mxu0 0.0
    %512 = vmatpush2.msra.mxu0 0.0
    %513 = vmatprep.subr.mxu0 0.0
    %514 = vmatpush2.msra.mxu0 0.0
    %515 = vmatprep.subr.mxu0 0.0
    %516 = vmatpush2.msra.mxu0 0.0
    %517 = vmatprep.subr.mxu0 0.0
    %518 = vmatpush2.msra.mxu0 0.0
    %519 = vmatprep.subr.mxu0 0.0
    %520 = vmatpush2.msra.mxu0 0.0
    %521 = vmatprep.subr.mxu0 0.0
    %522 = vmatpush2.msra.mxu0 0.0
    %523 = vmatprep.subr.mxu0 0.0
    %524 = vmatpush2.msra.mxu0 0.0
    %525 = vmatprep.subr.mxu0 0.0
    %526 = vmatpush2.msra.mxu0 0.0
    %527 = vmatprep.subr.mxu0 0.0
    %528 = vmatpush2.msra.mxu0 0.0
    %529 = vmatprep.subr.mxu0 0.0
    %530 = vmatpush2.msra.mxu0 0.0
    %531 = vmatprep.subr.mxu0 0.0
    %532 = vmatpush2.msra.mxu0 0.0
    %533 = vmatprep.subr.mxu0 0.0
    %534 = vmatpush2.msra.mxu0 0.0
    %535 = vmatprep.subr.mxu0 0.0
    %536 = vmatpush2.msra.mxu0 0.0
    %537 = vmatprep.subr.mxu0 0.0
    %538 = vmatpush2.msra.mxu0 0.0
    %539 = vmatprep.subr.mxu0 0.0
    %540 = vmatpush2.msra.mxu0 0.0
    %541 = vmatprep.mubr.f32.mxu0 0.0
    %542 = vmatmul.mubr.f32.gmra.mxu0 %v73
    %v543 = vpop.f32.mrf.mxu0
    %v544 = vadd.f32 %v230, %v543
    %v545 = vpop.f32.mrf.mxu0
    %v546 = vadd.f32 %v234, %v545
    %547 = vmatprep.mubr.f32.mxu0 0.0
    %548 = vmatmul.mubr.f32.gmra.mxu0 %v74
    %v549 = vpop.f32.mrf.mxu0
    %v550 = vadd.f32 %v230, %v549
    %v551 = vpop.f32.mrf.mxu0
    %v552 = vadd.f32 %v234, %v551
    %553 = vmatprep.mubr.f32.mxu0 0.0
    %554 = vmatmul.mubr.f32.gmra.mxu0 %v75
    %v555 = vpop.f32.mrf.mxu0
    %v556 = vadd.f32 %v230, %v555
    %v557 = vpop.f32.mrf.mxu0
    %v558 = vadd.f32 %v234, %v557
    %559 = vmatprep.mubr.f32.mxu0 0.0
    %560 = vmatmul.mubr.f32.gmra.mxu0 %v76
    %v561 = vpop.f32.mrf.mxu0
    %v562 = vadd.f32 %v230, %v561
    %v563 = vpop.f32.mrf.mxu0
    %v564 = vadd.f32 %v234, %v563
    %565 = vmatprep.mubr.f32.mxu0 0.0
    %566 = vmatmul.mubr.f32.gmra.mxu0 %v77
    %v567 = vpop.f32.mrf.mxu0
    %v568 = vadd.f32 %v230, %v567
    %v569 = vpop.f32.mrf.mxu0
    %v570 = vadd.f32 %v234, %v569
    %571 = vmatprep.mubr.f32.mxu0 0.0
    %572 = vmatmul.mubr.f32.gmra.mxu0 %v78
    %v573 = vpop.f32.mrf.mxu0
    %v574 = vadd.f32 %v230, %v573
    %v575 = vpop.f32.mrf.mxu0
    %v576 = vadd.f32 %v234, %v575
    %577 = vmatprep.mubr.f32.mxu0 0.0
    %578 = vmatmul.mubr.f32.gmra.mxu0 %v79
    %v579 = vpop.f32.mrf.mxu0
    %v580 = vadd.f32 %v230, %v579
    %v581 = vpop.f32.mrf.mxu0
    %v582 = vadd.f32 %v234, %v581
    %583 = vmatprep.mubr.f32.mxu0 0.0
    %584 = vmatmul.mubr.f32.gmra.mxu0 %v80
    %v585 = vpop.f32.mrf.mxu0
    %v586 = vadd.f32 %v230, %v585
    %v587 = vpop.f32.mrf.mxu0
    %v588 = vadd.f32 %v234, %v587
    %589 = vdwg.mxu0
    %590 = vmatprep.subr.mxu0 %v208
    %591 = vmatpush1.msra.mxu0 %v207
    %592 = vmatprep.subr.mxu0 %v200
    %593 = vmatpush1.msra.mxu0 %v199
    %594 = vmatprep.subr.mxu0 %v192
    %595 = vmatpush1.msra.mxu0 %v191
    %596 = vmatprep.subr.mxu0 %v184
    %597 = vmatpush1.msra.mxu0 %v183
    %598 = vmatprep.subr.mxu0 %v176
    %599 = vmatpush1.msra.mxu0 %v175
    %600 = vmatprep.subr.mxu0 %v168
    %601 = vmatpush1.msra.mxu0 %v167
    %602 = vmatprep.subr.mxu0 %v160
    %603 = vmatpush1.msra.mxu0 %v159
    %604 = vmatprep.subr.mxu0 %v152
    %605 = vmatpush1.msra.mxu0 %v151
    %606 = vmatprep.subr.mxu0 %v144
    %607 = vmatpush1.msra.mxu0 %v143
    %608 = vmatprep.subr.mxu0 %v136
    %609 = vmatpush1.msra.mxu0 %v135
    %610 = vmatprep.subr.mxu0 %v128
    %611 = vmatpush1.msra.mxu0 %v127
    %612 = vmatprep.subr.mxu0 %v120
    %613 = vmatpush1.msra.mxu0 %v119
    %614 = vmatprep.subr.mxu0 %v112
    %615 = vmatpush1.msra.mxu0 %v111
    %616 = vmatprep.subr.mxu0 %v104
    %617 = vmatpush1.msra.mxu0 %v103
    %618 = vmatprep.subr.mxu0 %v96
    %619 = vmatpush1.msra.mxu0 %v95
    %620 = vmatprep.subr.mxu0 %v88
    %621 = vmatpush1.msra.mxu0 %v87
    %622 = vmatprep.subr.mxu0 0.0
    %623 = vmatpush2.msra.mxu0 0.0
    %624 = vmatprep.subr.mxu0 0.0
    %625 = vmatpush2.msra.mxu0 0.0
    %626 = vmatprep.subr.mxu0 0.0
    %627 = vmatpush2.msra.mxu0 0.0
    %628 = vmatprep.subr.mxu0 0.0
    %629 = vmatpush2.msra.mxu0 0.0
    %630 = vmatprep.subr.mxu0 0.0
    %631 = vmatpush2.msra.mxu0 0.0
    %632 = vmatprep.subr.mxu0 0.0
    %633 = vmatpush2.msra.mxu0 0.0
    %634 = vmatprep.subr.mxu0 0.0
    %635 = vmatpush2.msra.mxu0 0.0
    %636 = vmatprep.subr.mxu0 0.0
    %637 = vmatpush2.msra.mxu0 0.0
    %638 = vmatprep.subr.mxu0 0.0
    %639 = vmatpush2.msra.mxu0 0.0
    %640 = vmatprep.subr.mxu0 0.0
    %641 = vmatpush2.msra.mxu0 0.0
    %642 = vmatprep.subr.mxu0 0.0
    %643 = vmatpush2.msra.mxu0 0.0
    %644 = vmatprep.subr.mxu0 0.0
    %645 = vmatpush2.msra.mxu0 0.0
    %646 = vmatprep.subr.mxu0 0.0
    %647 = vmatpush2.msra.mxu0 0.0
    %648 = vmatprep.subr.mxu0 0.0
    %649 = vmatpush2.msra.mxu0 0.0
    %650 = vmatprep.subr.mxu0 0.0
    %651 = vmatpush2.msra.mxu0 0.0
    %652 = vmatprep.subr.mxu0 0.0
    %653 = vmatpush2.msra.mxu0 0.0
    %654 = vmatprep.mubr.f32.mxu0 0.0
    %655 = vmatmul.mubr.f32.gmra.mxu0 %v73
    %v656 = vpop.f32.mrf.mxu0
    %v657 = vadd.f32 %v238, %v656
    %v658 = vpop.f32.mrf.mxu0
    %v659 = vadd.f32 %v242, %v658
    %660 = vmatprep.mubr.f32.mxu0 0.0
    %661 = vmatmul.mubr.f32.gmra.mxu0 %v74
    %v662 = vpop.f32.mrf.mxu0
    %v663 = vadd.f32 %v238, %v662
    %v664 = vpop.f32.mrf.mxu0
    %v665 = vadd.f32 %v242, %v664
    %666 = vmatprep.mubr.f32.mxu0 0.0
    %667 = vmatmul.mubr.f32.gmra.mxu0 %v75
    %v668 = vpop.f32.mrf.mxu0
    %v669 = vadd.f32 %v238, %v668
    %v670 = vpop.f32.mrf.mxu0
    %v671 = vadd.f32 %v242, %v670
    %672 = vmatprep.mubr.f32.mxu0 0.0
    %673 = vmatmul.mubr.f32.gmra.mxu0 %v76
    %v674 = vpop.f32.mrf.mxu0
    %v675 = vadd.f32 %v238, %v674
    %v676 = vpop.f32.mrf.mxu0
    %v677 = vadd.f32 %v242, %v676
    %678 = vmatprep.mubr.f32.mxu0 0.0
    %679 = vmatmul.mubr.f32.gmra.mxu0 %v77
    %v680 = vpop.f32.mrf.mxu0
    %v681 = vadd.f32 %v238, %v680
    %v682 = vpop.f32.mrf.mxu0
    %v683 = vadd.f32 %v242, %v682
    %684 = vmatprep.mubr.f32.mxu0 0.0
    %685 = vmatmul.mubr.f32.gmra.mxu0 %v78
    %v686 = vpop.f32.mrf.mxu0
    %v687 = vadd.f32 %v238, %v686
    %v688 = vpop.f32.mrf.mxu0
    %v689 = vadd.f32 %v242, %v688
    %690 = vmatprep.mubr.f32.mxu0 0.0
    %691 = vmatmul.mubr.f32.gmra.mxu0 %v79
    %v692 = vpop.f32.mrf.mxu0
    %v693 = vadd.f32 %v238, %v692
    %v694 = vpop.f32.mrf.mxu0
    %v695 = vadd.f32 %v242, %v694
    %696 = vmatprep.mubr.f32.mxu0 0.0
    %697 = vmatmul.mubr.f32.gmra.mxu0 %v80
    %v698 = vpop.f32.mrf.mxu0
    %v699 = vadd.f32 %v238, %v698
    %v700 = vpop.f32.mrf.mxu0
    %v701 = vadd.f32 %v242, %v700
    %702 = vdwg.mxu0
    %703 = vst [vmem:[#allocation2] sm:$0xff] %v318
    %704 = vst [vmem:[#allocation2 + $0x8] sm:$0xff] %v320
    %705 = vst [vmem:[#allocation2 + $0x10] sm:$0xff] %v431
    %706 = vst [vmem:[#allocation2 + $0x18] sm:$0xff] %v433
    %707 = vst [vmem:[#allocation2 + $0x20] sm:$0xff] %v544
    %708 = vst [vmem:[#allocation2 + $0x28] sm:$0xff] %v546
    %709 = vst [vmem:[#allocation2 + $0x30] sm:$0xff] %v657
    %710 = vst [vmem:[#allocation2 + $0x38] sm:$0xff] %v659
    %711 = vst [vmem:[#allocation2 + $0x40] sm:$0xff] %v324
    %712 = vst [vmem:[#allocation2 + $0x48] sm:$0xff] %v326
    %713 = vst [vmem:[#allocation2 + $0x50] sm:$0xff] %v437
    %714 = vst [vmem:[#allocation2 + $0x58] sm:$0xff] %v439
    %715 = vst [vmem:[#allocation2 + $0x60] sm:$0xff] %v550
    %716 = vst [vmem:[#allocation2 + $0x68] sm:$0xff] %v552
    %717 = vst [vmem:[#allocation2 + $0x70] sm:$0xff] %v663
    %718 = vst [vmem:[#allocation2 + $0x78] sm:$0xff] %v665
    %719 = vst [vmem:[#allocation2 + $0x80] sm:$0xff] %v330
    %720 = vst [vmem:[#allocation2 + $0x88] sm:$0xff] %v332
    %721 = vst [vmem:[#allocation2 + $0x90] sm:$0xff] %v443
    %722 = vst [vmem:[#allocation2 + $0x98] sm:$0xff] %v445
    %723 = vst [vmem:[#allocation2 + $0xa0] sm:$0xff] %v556
    %724 = vst [vmem:[#allocation2 + $0xa8] sm:$0xff] %v558
    %725 = vst [vmem:[#allocation2 + $0xb0] sm:$0xff] %v669
    %726 = vst [vmem:[#allocation2 + $0xb8] sm:$0xff] %v671
    %727 = vst [vmem:[#allocation2 + $0xc0] sm:$0xff] %v336
    %728 = vst [vmem:[#allocation2 + $0xc8] sm:$0xff] %v338
    %729 = vst [vmem:[#allocation2 + $0xd0] sm:$0xff] %v449
    %730 = vst [vmem:[#allocation2 + $0xd8] sm:$0xff] %v451
    %731 = vst [vmem:[#allocation2 + $0xe0] sm:$0xff] %v562
    %732 = vst [vmem:[#allocation2 + $0xe8] sm:$0xff] %v564
    %733 = vst [vmem:[#allocation2 + $0xf0] sm:$0xff] %v675
    %734 = vst [vmem:[#allocation2 + $0xf8] sm:$0xff] %v677
    %735 = vst [vmem:[#allocation2 + $0x100] sm:$0xff] %v342
    %736 = vst [vmem:[#allocation2 + $0x108] sm:$0xff] %v344
    %737 = vst [vmem:[#allocation2 + $0x110] sm:$0xff] %v455
    %738 = vst [vmem:[#allocation2 + $0x118] sm:$0xff] %v457
    %739 = vst [vmem:[#allocation2 + $0x120] sm:$0xff] %v568
    %740 = vst [vmem:[#allocation2 + $0x128] sm:$0xff] %v570
    %741 = vst [vmem:[#allocation2 + $0x130] sm:$0xff] %v681
    %742 = vst [vmem:[#allocation2 + $0x138] sm:$0xff] %v683
    %743 = vst [vmem:[#allocation2 + $0x140] sm:$0xff] %v348
    %744 = vst [vmem:[#allocation2 + $0x148] sm:$0xff] %v350
    %745 = vst [vmem:[#allocation2 + $0x150] sm:$0xff] %v461
    %746 = vst [vmem:[#allocation2 + $0x158] sm:$0xff] %v463
    %747 = vst [vmem:[#allocation2 + $0x160] sm:$0xff] %v574
    %748 = vst [vmem:[#allocation2 + $0x168] sm:$0xff] %v576
    %749 = vst [vmem:[#allocation2 + $0x170] sm:$0xff] %v687
    %750 = vst [vmem:[#allocation2 + $0x178] sm:$0xff] %v689
    %751 = vst [vmem:[#allocation2 + $0x180] sm:$0xff] %v354
    %752 = vst [vmem:[#allocation2 + $0x188] sm:$0xff] %v356
    %753 = vst [vmem:[#allocation2 + $0x190] sm:$0xff] %v467
    %754 = vst [vmem:[#allocation2 + $0x198] sm:$0xff] %v469
    %755 = vst [vmem:[#allocation2 + $0x1a0] sm:$0xff] %v580
    %756 = vst [vmem:[#allocation2 + $0x1a8] sm:$0xff] %v582
    %757 = vst [vmem:[#allocation2 + $0x1b0] sm:$0xff] %v693
    %758 = vst [vmem:[#allocation2 + $0x1b8] sm:$0xff] %v695
    %759 = vst [vmem:[#allocation2 + $0x1c0] sm:$0xff] %v360
    %760 = vst [vmem:[#allocation2 + $0x1c8] sm:$0xff] %v362
    %761 = vst [vmem:[#allocation2 + $0x1d0] sm:$0xff] %v473
    %762 = vst [vmem:[#allocation2 + $0x1d8] sm:$0xff] %v475
    %763 = vst [vmem:[#allocation2 + $0x1e0] sm:$0xff] %v586
    %764 = vst [vmem:[#allocation2 + $0x1e8] sm:$0xff] %v588
    %765 = vst [vmem:[#allocation2 + $0x1f0] sm:$0xff] %v699
    %766 = vst [vmem:[#allocation2 + $0x1f8] sm:$0xff] %v701
    %v767 = vld [vmem:[#allocation7] sm:$0xff]
    %v768 = vld [vmem:[#allocation7 + $0x8] sm:$0xff]
    %v769 = vld [vmem:[#allocation7 + $0x10] sm:$0xff]
    %v770 = vld [vmem:[#allocation7 + $0x18] sm:$0xff]
    %v771 = vld [vmem:[#allocation7 + $0x20] sm:$0xff]
    %v772 = vld [vmem:[#allocation7 + $0x28] sm:$0xff]
    %v773 = vld [vmem:[#allocation7 + $0x30] sm:$0xff]
    %v774 = vld [vmem:[#allocation7 + $0x38] sm:$0xff]
    %v775 = vld [vmem:[#allocation7 + $0x40] sm:$0xff]
    %v776 = vld [vmem:[#allocation7 + $0x48] sm:$0xff]
    %v777 = vld [vmem:[#allocation7 + $0x50] sm:$0xff]
    %v778 = vld [vmem:[#allocation7 + $0x58] sm:$0xff]
    %v779 = vld [vmem:[#allocation7 + $0x60] sm:$0xff]
    %v780 = vld [vmem:[#allocation7 + $0x68] sm:$0xff]
    %v781 = vld [vmem:[#allocation7 + $0x70] sm:$0xff]
    %v782 = vld [vmem:[#allocation7 + $0x78] sm:$0xff]
    %v783 = vld [vmem:[#allocation7 + $0x80] sm:$0xff]
    %v784 = vld [vmem:[#allocation7 + $0x88] sm:$0xff]
    %v785 = vld [vmem:[#allocation7 + $0x90] sm:$0xff]
    %v786 = vld [vmem:[#allocation7 + $0x98] sm:$0xff]
    %v787 = vld [vmem:[#allocation7 + $0xa0] sm:$0xff]
    %v788 = vld [vmem:[#allocation7 + $0xa8] sm:$0xff]
    %v789 = vld [vmem:[#allocation7 + $0xb0] sm:$0xff]
    %v790 = vld [vmem:[#allocation7 + $0xb8] sm:$0xff]
    %v791 = vld [vmem:[#allocation7 + $0xc0] sm:$0xff]
    %v792 = vld [vmem:[#allocation7 + $0xc8] sm:$0xff]
    %v793 = vld [vmem:[#allocation7 + $0xd0] sm:$0xff]
    %v794 = vld [vmem:[#allocation7 + $0xd8] sm:$0xff]
    %v795 = vld [vmem:[#allocation7 + $0xe0] sm:$0xff]
    %v796 = vld [vmem:[#allocation7 + $0xe8] sm:$0xff]
    %v797 = vld [vmem:[#allocation7 + $0xf0] sm:$0xff]
    %v798 = vld [vmem:[#allocation7 + $0xf8] sm:$0xff]
    %v799 = vld [vmem:[#allocation7 + $0x100] sm:$0xff]
    %v800 = vld [vmem:[#allocation7 + $0x108] sm:$0xff]
    %v801 = vld [vmem:[#allocation7 + $0x110] sm:$0xff]
    %v802 = vld [vmem:[#allocation7 + $0x118] sm:$0xff]
    %v803 = vld [vmem:[#allocation7 + $0x120] sm:$0xff]
    %v804 = vld [vmem:[#allocation7 + $0x128] sm:$0xff]
    %v805 = vld [vmem:[#allocation7 + $0x130] sm:$0xff]
    %v806 = vld [vmem:[#allocation7 + $0x138] sm:$0xff]
    %v807 = vld [vmem:[#allocation7 + $0x140] sm:$0xff]
    %v808 = vld [vmem:[#allocation7 + $0x148] sm:$0xff]
    %v809 = vld [vmem:[#allocation7 + $0x150] sm:$0xff]
    %v810 = vld [vmem:[#allocation7 + $0x158] sm:$0xff]
    %v811 = vld [vmem:[#allocation7 + $0x160] sm:$0xff]
    %v812 = vld [vmem:[#allocation7 + $0x168] sm:$0xff]
    %v813 = vld [vmem:[#allocation7 + $0x170] sm:$0xff]
    %v814 = vld [vmem:[#allocation7 + $0x178] sm:$0xff]
    %v815 = vld [vmem:[#allocation7 + $0x180] sm:$0xff]
    %v816 = vld [vmem:[#allocation7 + $0x188] sm:$0xff]
    %v817 = vld [vmem:[#allocation7 + $0x190] sm:$0xff]
    %v818 = vld [vmem:[#allocation7 + $0x198] sm:$0xff]
    %v819 = vld [vmem:[#allocation7 + $0x1a0] sm:$0xff]
    %v820 = vld [vmem:[#allocation7 + $0x1a8] sm:$0xff]
    %v821 = vld [vmem:[#allocation7 + $0x1b0] sm:$0xff]
    %v822 = vld [vmem:[#allocation7 + $0x1b8] sm:$0xff]
    %v823 = vld [vmem:[#allocation7 + $0x1c0] sm:$0xff]
    %v824 = vld [vmem:[#allocation7 + $0x1c8] sm:$0xff]
    %v825 = vld [vmem:[#allocation7 + $0x1d0] sm:$0xff]
    %v826 = vld [vmem:[#allocation7 + $0x1d8] sm:$0xff]
    %v827 = vld [vmem:[#allocation7 + $0x1e0] sm:$0xff]
    %v828 = vld [vmem:[#allocation7 + $0x1e8] sm:$0xff]
    %v829 = vld [vmem:[#allocation7 + $0x1f0] sm:$0xff]
    %v830 = vld [vmem:[#allocation7 + $0x1f8] sm:$0xff]
    %v831 = vld [vmem:[#allocation8] sm:$0xff]
    %v832 = vld [vmem:[#allocation8 + $0x8] sm:$0xff]
    %v833 = vld [vmem:[#allocation8 + $0x10] sm:$0xff]
    %v834 = vld [vmem:[#allocation8 + $0x18] sm:$0xff]
    %v835 = vld [vmem:[#allocation8 + $0x20] sm:$0xff]
    %v836 = vld [vmem:[#allocation8 + $0x28] sm:$0xff]
    %v837 = vld [vmem:[#allocation8 + $0x30] sm:$0xff]
    %v838 = vld [vmem:[#allocation8 + $0x38] sm:$0xff]
    %v839 = vld [vmem:[#allocation8 + $0x40] sm:$0xff]
    %v840 = vld [vmem:[#allocation8 + $0x48] sm:$0xff]
    %v841 = vld [vmem:[#allocation8 + $0x50] sm:$0xff]
    %v842 = vld [vmem:[#allocation8 + $0x58] sm:$0xff]
    %v843 = vld [vmem:[#allocation8 + $0x60] sm:$0xff]
    %v844 = vld [vmem:[#allocation8 + $0x68] sm:$0xff]
    %v845 = vld [vmem:[#allocation8 + $0x70] sm:$0xff]
    %v846 = vld [vmem:[#allocation8 + $0x78] sm:$0xff]
    %v847 = vld [vmem:[#allocation8 + $0x80] sm:$0xff]
    %v848 = vld [vmem:[#allocation8 + $0x88] sm:$0xff]
    %v849 = vld [vmem:[#allocation8 + $0x90] sm:$0xff]
    %v850 = vld [vmem:[#allocation8 + $0x98] sm:$0xff]
    %v851 = vld [vmem:[#allocation8 + $0xa0] sm:$0xff]
    %v852 = vld [vmem:[#allocation8 + $0xa8] sm:$0xff]
    %v853 = vld [vmem:[#allocation8 + $0xb0] sm:$0xff]
    %v854 = vld [vmem:[#allocation8 + $0xb8] sm:$0xff]
    %v855 = vld [vmem:[#allocation8 + $0xc0] sm:$0xff]
    %v856 = vld [vmem:[#allocation8 + $0xc8] sm:$0xff]
    %v857 = vld [vmem:[#allocation8 + $0xd0] sm:$0xff]
    %v858 = vld [vmem:[#allocation8 + $0xd8] sm:$0xff]
    %v859 = vld [vmem:[#allocation8 + $0xe0] sm:$0xff]
    %v860 = vld [vmem:[#allocation8 + $0xe8] sm:$0xff]
    %v861 = vld [vmem:[#allocation8 + $0xf0] sm:$0xff]
    %v862 = vld [vmem:[#allocation8 + $0xf8] sm:$0xff]
    %v863 = vld [vmem:[#allocation8 + $0x100] sm:$0xff]
    %v864 = vld [vmem:[#allocation8 + $0x108] sm:$0xff]
    %v865 = vld [vmem:[#allocation8 + $0x110] sm:$0xff]
    %v866 = vld [vmem:[#allocation8 + $0x118] sm:$0xff]
    %v867 = vld [vmem:[#allocation8 + $0x120] sm:$0xff]
    %v868 = vld [vmem:[#allocation8 + $0x128] sm:$0xff]
    %v869 = vld [vmem:[#allocation8 + $0x130] sm:$0xff]
    %v870 = vld [vmem:[#allocation8 + $0x138] sm:$0xff]
    %v871 = vld [vmem:[#allocation8 + $0x140] sm:$0xff]
    %v872 = vld [vmem:[#allocation8 + $0x148] sm:$0xff]
    %v873 = vld [vmem:[#allocation8 + $0x150] sm:$0xff]
    %v874 = vld [vmem:[#allocation8 + $0x158] sm:$0xff]
    %v875 = vld [vmem:[#allocation8 + $0x160] sm:$0xff]
    %v876 = vld [vmem:[#allocation8 + $0x168] sm:$0xff]
    %v877 = vld [vmem:[#allocation8 + $0x170] sm:$0xff]
    %v878 = vld [vmem:[#allocation8 + $0x178] sm:$0xff]
    %v879 = vld [vmem:[#allocation8 + $0x180] sm:$0xff]
    %v880 = vld [vmem:[#allocation8 + $0x188] sm:$0xff]
    %v881 = vld [vmem:[#allocation8 + $0x190] sm:$0xff]
    %v882 = vld [vmem:[#allocation8 + $0x198] sm:$0xff]
    %v883 = vld [vmem:[#allocation8 + $0x1a0] sm:$0xff]
    %v884 = vld [vmem:[#allocation8 + $0x1a8] sm:$0xff]
    %v885 = vld [vmem:[#allocation8 + $0x1b0] sm:$0xff]
    %v886 = vld [vmem:[#allocation8 + $0x1b8] sm:$0xff]
    %v887 = vld [vmem:[#allocation8 + $0x1c0] sm:$0xff]
    %v888 = vld [vmem:[#allocation8 + $0x1c8] sm:$0xff]
    %v889 = vld [vmem:[#allocation8 + $0x1d0] sm:$0xff]
    %v890 = vld [vmem:[#allocation8 + $0x1d8] sm:$0xff]
    %v891 = vld [vmem:[#allocation8 + $0x1e0] sm:$0xff]
    %v892 = vld [vmem:[#allocation8 + $0x1e8] sm:$0xff]
    %v893 = vld [vmem:[#allocation8 + $0x1f0] sm:$0xff]
    %v894 = vld [vmem:[#allocation8 + $0x1f8] sm:$0xff]
    %v895 = vld [vmem:[#allocation2] sm:$0xff]
    %v896 = vld [vmem:[#allocation2 + $0x8] sm:$0xff]
    %v897 = vld [vmem:[#allocation2 + $0x10] sm:$0xff]
    %v898 = vld [vmem:[#allocation2 + $0x18] sm:$0xff]
    %899 = vmatprep.subr.mxu0 %v828
    %900 = vmatpush1.msra.mxu0 %v827
    %901 = vmatprep.subr.mxu0 %v824
    %902 = vmatpush1.msra.mxu0 %v823
    %903 = vmatprep.subr.mxu0 %v820
    %904 = vmatpush1.msra.mxu0 %v819
    %905 = vmatprep.subr.mxu0 %v816
    %906 = vmatpush1.msra.mxu0 %v815
    %907 = vmatprep.subr.mxu0 %v812
    %908 = vmatpush1.msra.mxu0 %v811
    %909 = vmatprep.subr.mxu0 %v808
    %910 = vmatpush1.msra.mxu0 %v807
    %911 = vmatprep.subr.mxu0 %v804
    %912 = vmatpush1.msra.mxu0 %v803
    %913 = vmatprep.subr.mxu0 %v800
    %914 = vmatpush1.msra.mxu0 %v799
    %915 = vmatprep.subr.mxu0 %v796
    %916 = vmatpush1.msra.mxu0 %v795
    %917 = vmatprep.subr.mxu0 %v792
    %918 = vmatpush1.msra.mxu0 %v791
    %919 = vmatprep.subr.mxu0 %v788
    %920 = vmatpush1.msra.mxu0 %v787
    %921 = vmatprep.subr.mxu0 %v784
    %922 = vmatpush1.msra.mxu0 %v783
    %923 = vmatprep.subr.mxu0 %v780
    %924 = vmatpush1.msra.mxu0 %v779
    %925 = vmatprep.subr.mxu0 %v776
    %926 = vmatpush1.msra.mxu0 %v775
    %927 = vmatprep.subr.mxu0 %v772
    %928 = vmatpush1.msra.mxu0 %v771
    %929 = vmatprep.subr.mxu0 %v768
    %930 = vmatpush1.msra.mxu0 %v767
    %931 = vmatprep.subr.mxu0 0.0
    %932 = vmatpush2.msra.mxu0 0.0
    %933 = vmatprep.subr.mxu0 0.0
    %934 = vmatpush2.msra.mxu0 0.0
    %935 = vmatprep.subr.mxu0 0.0
    %936 = vmatpush2.msra.mxu0 0.0
    %937 = vmatprep.subr.mxu0 0.0
    %938 = vmatpush2.msra.mxu0 0.0
    %939 = vmatprep.subr.mxu0 0.0
    %940 = vmatpush2.msra.mxu0 0.0
    %941 = vmatprep.subr.mxu0 0.0
    %942 = vmatpush2.msra.mxu0 0.0
    %943 = vmatprep.subr.mxu0 0.0
    %944 = vmatpush2.msra.mxu0 0.0
    %945 = vmatprep.subr.mxu0 0.0
    %946 = vmatpush2.msra.mxu0 0.0
    %947 = vmatprep.subr.mxu0 0.0
    %948 = vmatpush2.msra.mxu0 0.0
    %949 = vmatprep.subr.mxu0 0.0
    %950 = vmatpush2.msra.mxu0 0.0
    %951 = vmatprep.subr.mxu0 0.0
    %952 = vmatpush2.msra.mxu0 0.0
    %953 = vmatprep.subr.mxu0 0.0
    %954 = vmatpush2.msra.mxu0 0.0
    %955 = vmatprep.subr.mxu0 0.0
    %956 = vmatpush2.msra.mxu0 0.0
    %957 = vmatprep.subr.mxu0 0.0
    %958 = vmatpush2.msra.mxu0 0.0
    %959 = vmatprep.subr.mxu0 0.0
    %960 = vmatpush2.msra.mxu0 0.0
    %961 = vmatprep.subr.mxu0 0.0
    %962 = vmatpush2.msra.mxu0 0.0
    %963 = vmatprep.mubr.f32.mxu0 0.0
    %964 = vmatmul.mubr.f32.gmra.mxu0 0.0
    %v965 = vpop.f32.mrf.mxu0
    %v966 = vadd.f32 0.0, %v965
    %v967 = vpop.f32.mrf.mxu0
    %v968 = vadd.f32 0.0, %v967
    %969 = vdwg.mxu0
    %970 = vmatprep.subr.mxu0 %v830
    %971 = vmatpush1.msra.mxu0 %v829
    %972 = vmatprep.subr.mxu0 %v826
    %973 = vmatpush1.msra.mxu0 %v825
    %974 = vmatprep.subr.mxu0 %v822
    %975 = vmatpush1.msra.mxu0 %v821
    %976 = vmatprep.subr.mxu0 %v818
    %977 = vmatpush1.msra.mxu0 %v817
    %978 = vmatprep.subr.mxu0 %v814
    %979 = vmatpush1.msra.mxu0 %v813
    %980 = vmatprep.subr.mxu0 %v810
    %981 = vmatpush1.msra.mxu0 %v809
    %982 = vmatprep.subr.mxu0 %v806
    %983 = vmatpush1.msra.mxu0 %v805
    %984 = vmatprep.subr.mxu0 %v802
    %985 = vmatpush1.msra.mxu0 %v801
    %986 = vmatprep.subr.mxu0 %v798
    %987 = vmatpush1.msra.mxu0 %v797
    %988 = vmatprep.subr.mxu0 %v794
    %989 = vmatpush1.msra.mxu0 %v793
    %990 = vmatprep.subr.mxu0 %v790
    %991 = vmatpush1.msra.mxu0 %v789
    %992 = vmatprep.subr.mxu0 %v786
    %993 = vmatpush1.msra.mxu0 %v785
    %994 = vmatprep.subr.mxu0 %v782
    %995 = vmatpush1.msra.mxu0 %v781
    %996 = vmatprep.subr.mxu0 %v778
    %997 = vmatpush1.msra.mxu0 %v777
    %998 = vmatprep.subr.mxu0 %v774
    %999 = vmatpush1.msra.mxu0 %v773
    %1000 = vmatprep.subr.mxu0 %v770
    %1001 = vmatpush1.msra.mxu0 %v769
    %1002 = vmatprep.subr.mxu0 0.0
    %1003 = vmatpush2.msra.mxu0 0.0
    %1004 = vmatprep.subr.mxu0 0.0
    %1005 = vmatpush2.msra.mxu0 0.0
    %1006 = vmatprep.subr.mxu0 0.0
    %1007 = vmatpush2.msra.mxu0 0.0
    %1008 = vmatprep.subr.mxu0 0.0
    %1009 = vmatpush2.msra.mxu0 0.0
    %1010 = vmatprep.subr.mxu0 0.0
    %1011 = vmatpush2.msra.mxu0 0.0
    %1012 = vmatprep.subr.mxu0 0.0
    %1013 = vmatpush2.msra.mxu0 0.0
    %1014 = vmatprep.subr.mxu0 0.0
    %1015 = vmatpush2.msra.mxu0 0.0
    %1016 = vmatprep.subr.mxu0 0.0
    %1017 = vmatpush2.msra.mxu0 0.0
    %1018 = vmatprep.subr.mxu0 0.0
    %1019 = vmatpush2.msra.mxu0 0.0
    %1020 = vmatprep.subr.mxu0 0.0
    %1021 = vmatpush2.msra.mxu0 0.0
    %1022 = vmatprep.subr.mxu0 0.0
    %1023 = vmatpush2.msra.mxu0 0.0
    %1024 = vmatprep.subr.mxu0 0.0
    %1025 = vmatpush2.msra.mxu0 0.0
    %1026 = vmatprep.subr.mxu0 0.0
    %1027 = vmatpush2.msra.mxu0 0.0
    %1028 = vmatprep.subr.mxu0 0.0
    %1029 = vmatpush2.msra.mxu0 0.0
    %1030 = vmatprep.subr.mxu0 0.0
    %1031 = vmatpush2.msra.mxu0 0.0
    %1032 = vmatprep.subr.mxu0 0.0
    %1033 = vmatpush2.msra.mxu0 0.0
    %1034 = vmatprep.mubr.f32.mxu0 0.0
    %1035 = vmatmul.mubr.f32.gmra.mxu0 0.0
    %v1036 = vpop.f32.mrf.mxu0
    %v1037 = vadd.f32 0.0, %v1036
    %v1038 = vpop.f32.mrf.mxu0
    %v1039 = vadd.f32 0.0, %v1038
    %1040 = vdwg.mxu0
    %v1041 = vadd.f32 %v895, %v966
    %v1042 = vadd.f32 %v896, %v968
    %v1043 = vadd.f32 %v897, %v1037
    %v1044 = vadd.f32 %v898, %v1039
    %s1045 = scalar_lea.vmem [#allocation2], 448
    %v1046 = vld [vmem:[%s1045 + $0x20] sm:$0xff]
    %v1047 = vld [vmem:[%s1045 + $0x28] sm:$0xff]
    %v1048 = vld [vmem:[%s1045 + $0x30] sm:$0xff]
    %v1049 = vld [vmem:[%s1045 + $0x38] sm:$0xff]
    %1050 = vmatprep.subr.mxu0 %v892
    %1051 = vmatpush1.msra.mxu0 %v891
    %1052 = vmatprep.subr.mxu0 %v888
    %1053 = vmatpush1.msra.mxu0 %v887
    %1054 = vmatprep.subr.mxu0 %v884
    %1055 = vmatpush1.msra.mxu0 %v883
    %1056 = vmatprep.subr.mxu0 %v880
    %1057 = vmatpush1.msra.mxu0 %v879
    %1058 = vmatprep.subr.mxu0 %v876
    %1059 = vmatpush1.msra.mxu0 %v875
    %1060 = vmatprep.subr.mxu0 %v872
    %1061 = vmatpush1.msra.mxu0 %v871
    %1062 = vmatprep.subr.mxu0 %v868
    %1063 = vmatpush1.msra.mxu0 %v867
    %1064 = vmatprep.subr.mxu0 %v864
    %1065 = vmatpush1.msra.mxu0 %v863
    %1066 = vmatprep.subr.mxu0 %v860
    %1067 = vmatpush1.msra.mxu0 %v859
    %1068 = vmatprep.subr.mxu0 %v856
    %1069 = vmatpush1.msra.mxu0 %v855
    %1070 = vmatprep.subr.mxu0 %v852
    %1071 = vmatpush1.msra.mxu0 %v851
    %1072 = vmatprep.subr.mxu0 %v848
    %1073 = vmatpush1.msra.mxu0 %v847
    %1074 = vmatprep.subr.mxu0 %v844
    %1075 = vmatpush1.msra.mxu0 %v843
    %1076 = vmatprep.subr.mxu0 %v840
    %1077 = vmatpush1.msra.mxu0 %v839
    %1078 = vmatprep.subr.mxu0 %v836
    %1079 = vmatpush1.msra.mxu0 %v835
    %1080 = vmatprep.subr.mxu0 %v832
    %1081 = vmatpush1.msra.mxu0 %v831
    %1082 = vmatprep.subr.mxu0 0.0
    %1083 = vmatpush2.msra.mxu0 0.0
    %1084 = vmatprep.subr.mxu0 0.0
    %1085 = vmatpush2.msra.mxu0 0.0
    %1086 = vmatprep.subr.mxu0 0.0
    %1087 = vmatpush2.msra.mxu0 0.0
    %1088 = vmatprep.subr.mxu0 0.0
    %1089 = vmatpush2.msra.mxu0 0.0
    %1090 = vmatprep.subr.mxu0 0.0
    %1091 = vmatpush2.msra.mxu0 0.0
    %1092 = vmatprep.subr.mxu0 0.0
    %1093 = vmatpush2.msra.mxu0 0.0
    %1094 = vmatprep.subr.mxu0 0.0
    %1095 = vmatpush2.msra.mxu0 0.0
    %1096 = vmatprep.subr.mxu0 0.0
    %1097 = vmatpush2.msra.mxu0 0.0
    %1098 = vmatprep.subr.mxu0 0.0
    %1099 = vmatpush2.msra.mxu0 0.0
    %1100 = vmatprep.subr.mxu0 0.0
    %1101 = vmatpush2.msra.mxu0 0.0
    %1102 = vmatprep.subr.mxu0 0.0
    %1103 = vmatpush2.msra.mxu0 0.0
    %1104 = vmatprep.subr.mxu0 0.0
    %1105 = vmatpush2.msra.mxu0 0.0
    %1106 = vmatprep.subr.mxu0 0.0
    %1107 = vmatpush2.msra.mxu0 0.0
    %1108 = vmatprep.subr.mxu0 0.0
    %1109 = vmatpush2.msra.mxu0 0.0
    %1110 = vmatprep.subr.mxu0 0.0
    %1111 = vmatpush2.msra.mxu0 0.0
    %1112 = vmatprep.subr.mxu0 0.0
    %1113 = vmatpush2.msra.mxu0 0.0
    %1114 = vmatprep.mubr.f32.mxu0 0.0
    %1115 = vmatmul.mubr.f32.gmra.mxu0 0.0
    %v1116 = vpop.f32.mrf.mxu0
    %v1117 = vadd.f32 0.0, %v1116
    %v1118 = vpop.f32.mrf.mxu0
    %v1119 = vadd.f32 0.0, %v1118
    %1120 = vdwg.mxu0
    %1121 = vmatprep.subr.mxu0 %v894
    %1122 = vmatpush1.msra.mxu0 %v893
    %1123 = vmatprep.subr.mxu0 %v890
    %1124 = vmatpush1.msra.mxu0 %v889
    %1125 = vmatprep.subr.mxu0 %v886
    %1126 = vmatpush1.msra.mxu0 %v885
    %1127 = vmatprep.subr.mxu0 %v882
    %1128 = vmatpush1.msra.mxu0 %v881
    %1129 = vmatprep.subr.mxu0 %v878
    %1130 = vmatpush1.msra.mxu0 %v877
    %1131 = vmatprep.subr.mxu0 %v874
    %1132 = vmatpush1.msra.mxu0 %v873
    %1133 = vmatprep.subr.mxu0 %v870
    %1134 = vmatpush1.msra.mxu0 %v869
    %1135 = vmatprep.subr.mxu0 %v866
    %1136 = vmatpush1.msra.mxu0 %v865
    %1137 = vmatprep.subr.mxu0 %v862
    %1138 = vmatpush1.msra.mxu0 %v861
    %1139 = vmatprep.subr.mxu0 %v858
    %1140 = vmatpush1.msra.mxu0 %v857
    %1141 = vmatprep.subr.mxu0 %v854
    %1142 = vmatpush1.msra.mxu0 %v853
    %1143 = vmatprep.subr.mxu0 %v850
    %1144 = vmatpush1.msra.mxu0 %v849
    %1145 = vmatprep.subr.mxu0 %v846
    %1146 = vmatpush1.msra.mxu0 %v845
    %1147 = vmatprep.subr.mxu0 %v842
    %1148 = vmatpush1.msra.mxu0 %v841
    %1149 = vmatprep.subr.mxu0 %v838
    %1150 = vmatpush1.msra.mxu0 %v837
    %1151 = vmatprep.subr.mxu0 %v834
    %1152 = vmatpush1.msra.mxu0 %v833
    %1153 = vmatprep.subr.mxu0 0.0
    %1154 = vmatpush2.msra.mxu0 0.0
    %1155 = vmatprep.subr.mxu0 0.0
    %1156 = vmatpush2.msra.mxu0 0.0
    %1157 = vmatprep.subr.mxu0 0.0
    %1158 = vmatpush2.msra.mxu0 0.0
    %1159 = vmatprep.subr.mxu0 0.0
    %1160 = vmatpush2.msra.mxu0 0.0
    %1161 = vmatprep.subr.mxu0 0.0
    %1162 = vmatpush2.msra.mxu0 0.0
    %1163 = vmatprep.subr.mxu0 0.0
    %1164 = vmatpush2.msra.mxu0 0.0
    %1165 = vmatprep.subr.mxu0 0.0
    %1166 = vmatpush2.msra.mxu0 0.0
    %1167 = vmatprep.subr.mxu0 0.0
    %1168 = vmatpush2.msra.mxu0 0.0
    %1169 = vmatprep.subr.mxu0 0.0
    %1170 = vmatpush2.msra.mxu0 0.0
    %1171 = vmatprep.subr.mxu0 0.0
    %1172 = vmatpush2.msra.mxu0 0.0
    %1173 = vmatprep.subr.mxu0 0.0
    %1174 = vmatpush2.msra.mxu0 0.0
    %1175 = vmatprep.subr.mxu0 0.0
    %1176 = vmatpush2.msra.mxu0 0.0
    %1177 = vmatprep.subr.mxu0 0.0
    %1178 = vmatpush2.msra.mxu0 0.0
    %1179 = vmatprep.subr.mxu0 0.0
    %1180 = vmatpush2.msra.mxu0 0.0
    %1181 = vmatprep.subr.mxu0 0.0
    %1182 = vmatpush2.msra.mxu0 0.0
    %1183 = vmatprep.subr.mxu0 0.0
    %1184 = vmatpush2.msra.mxu0 0.0
    %1185 = vmatprep.mubr.f32.mxu0 0.0
    %1186 = vmatmul.mubr.f32.gmra.mxu0 0.0
    %v1187 = vpop.f32.mrf.mxu0
    %v1188 = vadd.f32 0.0, %v1187
    %v1189 = vpop.f32.mrf.mxu0
    %v1190 = vadd.f32 0.0, %v1189
    %1191 = vdwg.mxu0
    %v1192 = vadd.f32 %v1046, %v1117
    %v1193 = vadd.f32 %v1047, %v1119
    %v1194 = vadd.f32 %v1048, %v1188
    %v1195 = vadd.f32 %v1049, %v1190
    %v1196 = vmul.f32 %v1041, 0.5
    %v1197 = vtanh.pop %v1196
    %v1198 = vmul.f32 %v1197, 0.5
    %v1199 = vadd.f32 %v1198, 0.5
    %v1200 = vmul.f32 %v1042, 0.5
    %v1201 = vtanh.pop %v1200
    %v1202 = vmul.f32 %v1201, 0.5
    %v1203 = vadd.f32 %v1202, 0.5
    %v1204 = vtanh.pop %v1043
    %v1205 = vmul.f32 %v1044, 0.5
    %v1206 = vtanh.pop %v1205
    %v1207 = vmul.f32 %v1206, 0.5
    %v1208 = vadd.f32 %v1207, 0.5
    %v1209 = vmul.f32 %v1203, 0.0
    %v1210 = vmul.f32 %v1199, %v1204
    %v1211 = vadd.f32 %v1209, %v1210
    %v1212 = vtanh.pop %v1211
    %v1213 = vmul.f32 %v1208, %v1212
    %v1214 = vmul.f32 %v1192, 0.5
    %v1215 = vtanh.pop %v1214
    %v1216 = vmul.f32 %v1215, 0.5
    %v1217 = vadd.f32 %v1216, 0.5
    %v1218 = vmul.f32 %v1193, 0.5
    %v1219 = vtanh.pop %v1218
    %v1220 = vmul.f32 %v1219, 0.5
    %v1221 = vadd.f32 %v1220, 0.5
    %v1222 = vtanh.pop %v1194
    %v1223 = vmul.f32 %v1195, 0.5
    %v1224 = vtanh.pop %v1223
    %v1225 = vmul.f32 %v1224, 0.5
    %v1226 = vadd.f32 %v1225, 0.5
    %v1227 = vmul.f32 %v1221, 0.0
    %v1228 = vmul.f32 %v1217, %v1222
    %v1229 = vadd.f32 %v1227, %v1228
    %v1230 = vtanh.pop %v1229
    %v1231 = vmul.f32 %v1226, %v1230
    %1232 = vst [vmem:[%s5] sm:$0xff] %v1213
    %s1233 = scalar_lea.vmem %s5, 112
    %1234 = vst [vmem:[%s1233 + $0x8] sm:$0xff] %v1231
    %s1235 = scalar_lea.vmem [#allocation2], 64
    %v1236 = vld [vmem:[%s1235] sm:$0xff]
    %v1237 = vld [vmem:[%s1235 + $0x8] sm:$0xff]
    %v1238 = vld [vmem:[%s1235 + $0x10] sm:$0xff]
    %v1239 = vld [vmem:[%s1235 + $0x18] sm:$0xff]
    %1240 = vmatprep.subr.mxu0 %v828
    %1241 = vmatpush1.msra.mxu0 %v827
    %1242 = vmatprep.subr.mxu0 %v824
    %1243 = vmatpush1.msra.mxu0 %v823
    %1244 = vmatprep.subr.mxu0 %v820
    %1245 = vmatpush1.msra.mxu0 %v819
    %1246 = vmatprep.subr.mxu0 %v816
    %1247 = vmatpush1.msra.mxu0 %v815
    %1248 = vmatprep.subr.mxu0 %v812
    %1249 = vmatpush1.msra.mxu0 %v811
    %1250 = vmatprep.subr.mxu0 %v808
    %1251 = vmatpush1.msra.mxu0 %v807
    %1252 = vmatprep.subr.mxu0 %v804
    %1253 = vmatpush1.msra.mxu0 %v803
    %1254 = vmatprep.subr.mxu0 %v800
    %1255 = vmatpush1.msra.mxu0 %v799
    %1256 = vmatprep.subr.mxu0 %v796
    %1257 = vmatpush1.msra.mxu0 %v795
    %1258 = vmatprep.subr.mxu0 %v792
    %1259 = vmatpush1.msra.mxu0 %v791
    %1260 = vmatprep.subr.mxu0 %v788
    %1261 = vmatpush1.msra.mxu0 %v787
    %1262 = vmatprep.subr.mxu0 %v784
    %1263 = vmatpush1.msra.mxu0 %v783
    %1264 = vmatprep.subr.mxu0 %v780
    %1265 = vmatpush1.msra.mxu0 %v779
    %1266 = vmatprep.subr.mxu0 %v776
    %1267 = vmatpush1.msra.mxu0 %v775
    %1268 = vmatprep.subr.mxu0 %v772
    %1269 = vmatpush1.msra.mxu0 %v771
    %1270 = vmatprep.subr.mxu0 %v768
    %1271 = vmatpush1.msra.mxu0 %v767
    %1272 = vmatprep.subr.mxu0 0.0
    %1273 = vmatpush2.msra.mxu0 0.0
    %1274 = vmatprep.subr.mxu0 0.0
    %1275 = vmatpush2.msra.mxu0 0.0
    %1276 = vmatprep.subr.mxu0 0.0
    %1277 = vmatpush2.msra.mxu0 0.0
    %1278 = vmatprep.subr.mxu0 0.0
    %1279 = vmatpush2.msra.mxu0 0.0
    %1280 = vmatprep.subr.mxu0 0.0
    %1281 = vmatpush2.msra.mxu0 0.0
    %1282 = vmatprep.subr.mxu0 0.0
    %1283 = vmatpush2.msra.mxu0 0.0
    %1284 = vmatprep.subr.mxu0 0.0
    %1285 = vmatpush2.msra.mxu0 0.0
    %1286 = vmatprep.subr.mxu0 0.0
    %1287 = vmatpush2.msra.mxu0 0.0
    %1288 = vmatprep.subr.mxu0 0.0
    %1289 = vmatpush2.msra.mxu0 0.0
    %1290 = vmatprep.subr.mxu0 0.0
    %1291 = vmatpush2.msra.mxu0 0.0
    %1292 = vmatprep.subr.mxu0 0.0
    %1293 = vmatpush2.msra.mxu0 0.0
    %1294 = vmatprep.subr.mxu0 0.0
    %1295 = vmatpush2.msra.mxu0 0.0
    %1296 = vmatprep.subr.mxu0 0.0
    %1297 = vmatpush2.msra.mxu0 0.0
    %1298 = vmatprep.subr.mxu0 0.0
    %1299 = vmatpush2.msra.mxu0 0.0
    %1300 = vmatprep.subr.mxu0 0.0
    %1301 = vmatpush2.msra.mxu0 0.0
    %1302 = vmatprep.subr.mxu0 0.0
    %1303 = vmatpush2.msra.mxu0 0.0
    %1304 = vmatprep.mubr.f32.mxu0 0.0
    %1305 = vmatmul.mubr.f32.gmra.mxu0 %v1213
    %v1306 = vpop.f32.mrf.mxu0
    %v1307 = vadd.f32 0.0, %v1306
    %v1308 = vpop.f32.mrf.mxu0
    %v1309 = vadd.f32 0.0, %v1308
    %1310 = vdwg.mxu0
    %1311 = vmatprep.subr.mxu0 %v830
    %1312 = vmatpush1.msra.mxu0 %v829
    %1313 = vmatprep.subr.mxu0 %v826
    %1314 = vmatpush1.msra.mxu0 %v825
    %1315 = vmatprep.subr.mxu0 %v822
    %1316 = vmatpush1.msra.mxu0 %v821
    %1317 = vmatprep.subr.mxu0 %v818
    %1318 = vmatpush1.msra.mxu0 %v817
    %1319 = vmatprep.subr.mxu0 %v814
    %1320 = vmatpush1.msra.mxu0 %v813
    %1321 = vmatprep.subr.mxu0 %v810
    %1322 = vmatpush1.msra.mxu0 %v809
    %1323 = vmatprep.subr.mxu0 %v806
    %1324 = vmatpush1.msra.mxu0 %v805
    %1325 = vmatprep.subr.mxu0 %v802
    %1326 = vmatpush1.msra.mxu0 %v801
    %1327 = vmatprep.subr.mxu0 %v798
    %1328 = vmatpush1.msra.mxu0 %v797
    %1329 = vmatprep.subr.mxu0 %v794
    %1330 = vmatpush1.msra.mxu0 %v793
    %1331 = vmatprep.subr.mxu0 %v790
    %1332 = vmatpush1.msra.mxu0 %v789
    %1333 = vmatprep.subr.mxu0 %v786
    %1334 = vmatpush1.msra.mxu0 %v785
    %1335 = vmatprep.subr.mxu0 %v782
    %1336 = vmatpush1.msra.mxu0 %v781
    %1337 = vmatprep.subr.mxu0 %v778
    %1338 = vmatpush1.msra.mxu0 %v777
    %1339 = vmatprep.subr.mxu0 %v774
    %1340 = vmatpush1.msra.mxu0 %v773
    %1341 = vmatprep.subr.mxu0 %v770
    %1342 = vmatpush1.msra.mxu0 %v769
    %1343 = vmatprep.subr.mxu0 0.0
    %1344 = vmatpush2.msra.mxu0 0.0
    %1345 = vmatprep.subr.mxu0 0.0
    %1346 = vmatpush2.msra.mxu0 0.0
    %1347 = vmatprep.subr.mxu0 0.0
    %1348 = vmatpush2.msra.mxu0 0.0
    %1349 = vmatprep.subr.mxu0 0.0
    %1350 = vmatpush2.msra.mxu0 0.0
    %1351 = vmatprep.subr.mxu0 0.0
    %1352 = vmatpush2.msra.mxu0 0.0
    %1353 = vmatprep.subr.mxu0 0.0
    %1354 = vmatpush2.msra.mxu0 0.0
    %1355 = vmatprep.subr.mxu0 0.0
    %1356 = vmatpush2.msra.mxu0 0.0
    %1357 = vmatprep.subr.mxu0 0.0
    %1358 = vmatpush2.msra.mxu0 0.0
    %1359 = vmatprep.subr.mxu0 0.0
    %1360 = vmatpush2.msra.mxu0 0.0
    %1361 = vmatprep.subr.mxu0 0.0
    %1362 = vmatpush2.msra.mxu0 0.0
    %1363 = vmatprep.subr.mxu0 0.0
    %1364 = vmatpush2.msra.mxu0 0.0
    %1365 = vmatprep.subr.mxu0 0.0
    %1366 = vmatpush2.msra.mxu0 0.0
    %1367 = vmatprep.subr.mxu0 0.0
    %1368 = vmatpush2.msra.mxu0 0.0
    %1369 = vmatprep.subr.mxu0 0.0
    %1370 = vmatpush2.msra.mxu0 0.0
    %1371 = vmatprep.subr.mxu0 0.0
    %1372 = vmatpush2.msra.mxu0 0.0
    %1373 = vmatprep.subr.mxu0 0.0
    %1374 = vmatpush2.msra.mxu0 0.0
    %1375 = vmatprep.mubr.f32.mxu0 0.0
    %1376 = vmatmul.mubr.f32.gmra.mxu0 %v1213
    %v1377 = vpop.f32.mrf.mxu0
    %v1378 = vadd.f32 0.0, %v1377
    %v1379 = vpop.f32.mrf.mxu0
    %v1380 = vadd.f32 0.0, %v1379
    %1381 = vdwg.mxu0
    %v1382 = vadd.f32 %v1236, %v1307
    %v1383 = vadd.f32 %v1237, %v1309
    %v1384 = vadd.f32 %v1238, %v1378
    %v1385 = vadd.f32 %v1239, %v1380
    %s1386 = scalar_lea.vmem [#allocation2], 384
    %v1387 = vld [vmem:[%s1386 + $0x20] sm:$0xff]
    %v1388 = vld [vmem:[%s1386 + $0x28] sm:$0xff]
    %v1389 = vld [vmem:[%s1386 + $0x30] sm:$0xff]
    %v1390 = vld [vmem:[%s1386 + $0x38] sm:$0xff]
    %1391 = vmatprep.subr.mxu0 %v892
    %1392 = vmatpush1.msra.mxu0 %v891
    %1393 = vmatprep.subr.mxu0 %v888
    %1394 = vmatpush1.msra.mxu0 %v887
    %1395 = vmatprep.subr.mxu0 %v884
    %1396 = vmatpush1.msra.mxu0 %v883
    %1397 = vmatprep.subr.mxu0 %v880
    %1398 = vmatpush1.msra.mxu0 %v879
    %1399 = vmatprep.subr.mxu0 %v876
    %1400 = vmatpush1.msra.mxu0 %v875
    %1401 = vmatprep.subr.mxu0 %v872
    %1402 = vmatpush1.msra.mxu0 %v871
    %1403 = vmatprep.subr.mxu0 %v868
    %1404 = vmatpush1.msra.mxu0 %v867
    %1405 = vmatprep.subr.mxu0 %v864
    %1406 = vmatpush1.msra.mxu0 %v863
    %1407 = vmatprep.subr.mxu0 %v860
    %1408 = vmatpush1.msra.mxu0 %v859
    %1409 = vmatprep.subr.mxu0 %v856
    %1410 = vmatpush1.msra.mxu0 %v855
    %1411 = vmatprep.subr.mxu0 %v852
    %1412 = vmatpush1.msra.mxu0 %v851
    %1413 = vmatprep.subr.mxu0 %v848
    %1414 = vmatpush1.msra.mxu0 %v847
    %1415 = vmatprep.subr.mxu0 %v844
    %1416 = vmatpush1.msra.mxu0 %v843
    %1417 = vmatprep.subr.mxu0 %v840
    %1418 = vmatpush1.msra.mxu0 %v839
    %1419 = vmatprep.subr.mxu0 %v836
    %1420 = vmatpush1.msra.mxu0 %v835
    %1421 = vmatprep.subr.mxu0 %v832
    %1422 = vmatpush1.msra.mxu0 %v831
    %1423 = vmatprep.subr.mxu0 0.0
    %1424 = vmatpush2.msra.mxu0 0.0
    %1425 = vmatprep.subr.mxu0 0.0
    %1426 = vmatpush2.msra.mxu0 0.0
    %1427 = vmatprep.subr.mxu0 0.0
    %1428 = vmatpush2.msra.mxu0 0.0
    %1429 = vmatprep.subr.mxu0 0.0
    %1430 = vmatpush2.msra.mxu0 0.0
    %1431 = vmatprep.subr.mxu0 0.0
    %1432 = vmatpush2.msra.mxu0 0.0
    %1433 = vmatprep.subr.mxu0 0.0
    %1434 = vmatpush2.msra.mxu0 0.0
    %1435 = vmatprep.subr.mxu0 0.0
    %1436 = vmatpush2.msra.mxu0 0.0
    %1437 = vmatprep.subr.mxu0 0.0
    %1438 = vmatpush2.msra.mxu0 0.0
    %1439 = vmatprep.subr.mxu0 0.0
    %1440 = vmatpush2.msra.mxu0 0.0
    %1441 = vmatprep.subr.mxu0 0.0
    %1442 = vmatpush2.msra.mxu0 0.0
    %1443 = vmatprep.subr.mxu0 0.0
    %1444 = vmatpush2.msra.mxu0 0.0
    %1445 = vmatprep.subr.mxu0 0.0
    %1446 = vmatpush2.msra.mxu0 0.0
    %1447 = vmatprep.subr.mxu0 0.0
    %1448 = vmatpush2.msra.mxu0 0.0
    %1449 = vmatprep.subr.mxu0 0.0
    %1450 = vmatpush2.msra.mxu0 0.0
    %1451 = vmatprep.subr.mxu0 0.0
    %1452 = vmatpush2.msra.mxu0 0.0
    %1453 = vmatprep.subr.mxu0 0.0
    %1454 = vmatpush2.msra.mxu0 0.0
    %1455 = vmatprep.mubr.f32.mxu0 0.0
    %1456 = vmatmul.mubr.f32.gmra.mxu0 %v1231
    %v1457 = vpop.f32.mrf.mxu0
    %v1458 = vadd.f32 0.0, %v1457
    %v1459 = vpop.f32.mrf.mxu0
    %v1460 = vadd.f32 0.0, %v1459
    %1461 = vdwg.mxu0
    %1462 = vmatprep.subr.mxu0 %v894
    %1463 = vmatpush1.msra.mxu0 %v893
    %1464 = vmatprep.subr.mxu0 %v890
    %1465 = vmatpush1.msra.mxu0 %v889
    %1466 = vmatprep.subr.mxu0 %v886
    %1467 = vmatpush1.msra.mxu0 %v885
    %1468 = vmatprep.subr.mxu0 %v882
    %1469 = vmatpush1.msra.mxu0 %v881
    %1470 = vmatprep.subr.mxu0 %v878
    %1471 = vmatpush1.msra.mxu0 %v877
    %1472 = vmatprep.subr.mxu0 %v874
    %1473 = vmatpush1.msra.mxu0 %v873
    %1474 = vmatprep.subr.mxu0 %v870
    %1475 = vmatpush1.msra.mxu0 %v869
    %1476 = vmatprep.subr.mxu0 %v866
    %1477 = vmatpush1.msra.mxu0 %v865
    %1478 = vmatprep.subr.mxu0 %v862
    %1479 = vmatpush1.msra.mxu0 %v861
    %1480 = vmatprep.subr.mxu0 %v858
    %1481 = vmatpush1.msra.mxu0 %v857
    %1482 = vmatprep.subr.mxu0 %v854
    %1483 = vmatpush1.msra.mxu0 %v853
    %1484 = vmatprep.subr.mxu0 %v850
    %1485 = vmatpush1.msra.mxu0 %v849
    %1486 = vmatprep.subr.mxu0 %v846
    %1487 = vmatpush1.msra.mxu0 %v845
    %1488 = vmatprep.subr.mxu0 %v842
    %1489 = vmatpush1.msra.mxu0 %v841
    %1490 = vmatprep.subr.mxu0 %v838
    %1491 = vmatpush1.msra.mxu0 %v837
    %1492 = vmatprep.subr.mxu0 %v834
    %1493 = vmatpush1.msra.mxu0 %v833
    %1494 = vmatprep.subr.mxu0 0.0
    %1495 = vmatpush2.msra.mxu0 0.0
    %1496 = vmatprep.subr.mxu0 0.0
    %1497 = vmatpush2.msra.mxu0 0.0
    %1498 = vmatprep.subr.mxu0 0.0
    %1499 = vmatpush2.msra.mxu0 0.0
    %1500 = vmatprep.subr.mxu0 0.0
    %1501 = vmatpush2.msra.mxu0 0.0
    %1502 = vmatprep.subr.mxu0 0.0
    %1503 = vmatpush2.msra.mxu0 0.0
    %1504 = vmatprep.subr.mxu0 0.0
    %1505 = vmatpush2.msra.mxu0 0.0
    %1506 = vmatprep.subr.mxu0 0.0
    %1507 = vmatpush2.msra.mxu0 0.0
    %1508 = vmatprep.subr.mxu0 0.0
    %1509 = vmatpush2.msra.mxu0 0.0
    %1510 = vmatprep.subr.mxu0 0.0
    %1511 = vmatpush2.msra.mxu0 0.0
    %1512 = vmatprep.subr.mxu0 0.0
    %1513 = vmatpush2.msra.mxu0 0.0
    %1514 = vmatprep.subr.mxu0 0.0
    %1515 = vmatpush2.msra.mxu0 0.0
    %1516 = vmatprep.subr.mxu0 0.0
    %1517 = vmatpush2.msra.mxu0 0.0
    %1518 = vmatprep.subr.mxu0 0.0
    %1519 = vmatpush2.msra.mxu0 0.0
    %1520 = vmatprep.subr.mxu0 0.0
    %1521 = vmatpush2.msra.mxu0 0.0
    %1522 = vmatprep.subr.mxu0 0.0
    %1523 = vmatpush2.msra.mxu0 0.0
    %1524 = vmatprep.subr.mxu0 0.0
    %1525 = vmatpush2.msra.mxu0 0.0
    %1526 = vmatprep.mubr.f32.mxu0 0.0
    %1527 = vmatmul.mubr.f32.gmra.mxu0 %v1231
    %v1528 = vpop.f32.mrf.mxu0
    %v1529 = vadd.f32 0.0, %v1528
    %v1530 = vpop.f32.mrf.mxu0
    %v1531 = vadd.f32 0.0, %v1530
    %1532 = vdwg.mxu0
    %v1533 = vadd.f32 %v1387, %v1458
    %v1534 = vadd.f32 %v1388, %v1460
    %v1535 = vadd.f32 %v1389, %v1529
    %v1536 = vadd.f32 %v1390, %v1531
    %v1537 = vmul.f32 %v1382, 0.5
    %v1538 = vtanh.pop %v1537
    %v1539 = vmul.f32 %v1538, 0.5
    %v1540 = vadd.f32 %v1539, 0.5
    %v1541 = vmul.f32 %v1383, 0.5
    %v1542 = vtanh.pop %v1541
    %v1543 = vmul.f32 %v1542, 0.5
    %v1544 = vadd.f32 %v1543, 0.5
    %v1545 = vtanh.pop %v1384
    %v1546 = vmul.f32 %v1385, 0.5
    %v1547 = vtanh.pop %v1546
    %v1548 = vmul.f32 %v1547, 0.5
    %v1549 = vadd.f32 %v1548, 0.5
    %v1550 = vmul.f32 %v1544, %v1211
    %v1551 = vmul.f32 %v1540, %v1545
    %v1552 = vadd.f32 %v1550, %v1551
    %v1553 = vtanh.pop %v1552
    %v1554 = vmul.f32 %v1549, %v1553
    %v1555 = vmul.f32 %v1533, 0.5
    %v1556 = vtanh.pop %v1555
    %v1557 = vmul.f32 %v1556, 0.5
    %v1558 = vadd.f32 %v1557, 0.5
    %v1559 = vmul.f32 %v1534, 0.5
    %v1560 = vtanh.pop %v1559
    %v1561 = vmul.f32 %v1560, 0.5
    %v1562 = vadd.f32 %v1561, 0.5
    %v1563 = vtanh.pop %v1535
    %v1564 = vmul.f32 %v1536, 0.5
    %v1565 = vtanh.pop %v1564
    %v1566 = vmul.f32 %v1565, 0.5
    %v1567 = vadd.f32 %v1566, 0.5
    %v1568 = vmul.f32 %v1562, %v1229
    %v1569 = vmul.f32 %v1558, %v1563
    %v1570 = vadd.f32 %v1568, %v1569
    %v1571 = vtanh.pop %v1570
    %v1572 = vmul.f32 %v1567, %v1571
    %s1573 = scalar_lea.vmem %s5, 16
    %1574 = vst [vmem:[%s1573] sm:$0xff] %v1554
    %s1575 = scalar_lea.vmem %s5, 96
    %1576 = vst [vmem:[%s1575 + $0x8] sm:$0xff] %v1572
    %s1577 = scalar_lea.vmem [#allocation2], 128
    %v1578 = vld [vmem:[%s1577] sm:$0xff]
    %v1579 = vld [vmem:[%s1577 + $0x8] sm:$0xff]
    %v1580 = vld [vmem:[%s1577 + $0x10] sm:$0xff]
    %v1581 = vld [vmem:[%s1577 + $0x18] sm:$0xff]
    %1582 = vmatprep.subr.mxu0 %v828
    %1583 = vmatpush1.msra.mxu0 %v827
    %1584 = vmatprep.subr.mxu0 %v824
    %1585 = vmatpush1.msra.mxu0 %v823
    %1586 = vmatprep.subr.mxu0 %v820
    %1587 = vmatpush1.msra.mxu0 %v819
    %1588 = vmatprep.subr.mxu0 %v816
    %1589 = vmatpush1.msra.mxu0 %v815
    %1590 = vmatprep.subr.mxu0 %v812
    %1591 = vmatpush1.msra.mxu0 %v811
    %1592 = vmatprep.subr.mxu0 %v808
    %1593 = vmatpush1.msra.mxu0 %v807
    %1594 = vmatprep.subr.mxu0 %v804
    %1595 = vmatpush1.msra.mxu0 %v803
    %1596 = vmatprep.subr.mxu0 %v800
    %1597 = vmatpush1.msra.mxu0 %v799
    %1598 = vmatprep.subr.mxu0 %v796
    %1599 = vmatpush1.msra.mxu0 %v795
    %1600 = vmatprep.subr.mxu0 %v792
    %1601 = vmatpush1.msra.mxu0 %v791
    %1602 = vmatprep.subr.mxu0 %v788
    %1603 = vmatpush1.msra.mxu0 %v787
    %1604 = vmatprep.subr.mxu0 %v784
    %1605 = vmatpush1.msra.mxu0 %v783
    %1606 = vmatprep.subr.mxu0 %v780
    %1607 = vmatpush1.msra.mxu0 %v779
    %1608 = vmatprep.subr.mxu0 %v776
    %1609 = vmatpush1.msra.mxu0 %v775
    %1610 = vmatprep.subr.mxu0 %v772
    %1611 = vmatpush1.msra.mxu0 %v771
    %1612 = vmatprep.subr.mxu0 %v768
    %1613 = vmatpush1.msra.mxu0 %v767
    %1614 = vmatprep.subr.mxu0 0.0
    %1615 = vmatpush2.msra.mxu0 0.0
    %1616 = vmatprep.subr.mxu0 0.0
    %1617 = vmatpush2.msra.mxu0 0.0
    %1618 = vmatprep.subr.mxu0 0.0
    %1619 = vmatpush2.msra.mxu0 0.0
    %1620 = vmatprep.subr.mxu0 0.0
    %1621 = vmatpush2.msra.mxu0 0.0
    %1622 = vmatprep.subr.mxu0 0.0
    %1623 = vmatpush2.msra.mxu0 0.0
    %1624 = vmatprep.subr.mxu0 0.0
    %1625 = vmatpush2.msra.mxu0 0.0
    %1626 = vmatprep.subr.mxu0 0.0
    %1627 = vmatpush2.msra.mxu0 0.0
    %1628 = vmatprep.subr.mxu0 0.0
    %1629 = vmatpush2.msra.mxu0 0.0
    %1630 = vmatprep.subr.mxu0 0.0
    %1631 = vmatpush2.msra.mxu0 0.0
    %1632 = vmatprep.subr.mxu0 0.0
    %1633 = vmatpush2.msra.mxu0 0.0
    %1634 = vmatprep.subr.mxu0 0.0
    %1635 = vmatpush2.msra.mxu0 0.0
    %1636 = vmatprep.subr.mxu0 0.0
    %1637 = vmatpush2.msra.mxu0 0.0
    %1638 = vmatprep.subr.mxu0 0.0
    %1639 = vmatpush2.msra.mxu0 0.0
    %1640 = vmatprep.subr.mxu0 0.0
    %1641 = vmatpush2.msra.mxu0 0.0
    %1642 = vmatprep.subr.mxu0 0.0
    %1643 = vmatpush2.msra.mxu0 0.0
    %1644 = vmatprep.subr.mxu0 0.0
    %1645 = vmatpush2.msra.mxu0 0.0
    %1646 = vmatprep.mubr.f32.mxu0 0.0
    %1647 = vmatmul.mubr.f32.gmra.mxu0 %v1554
    %v1648 = vpop.f32.mrf.mxu0
    %v1649 = vadd.f32 0.0, %v1648
    %v1650 = vpop.f32.mrf.mxu0
    %v1651 = vadd.f32 0.0, %v1650
    %1652 = vdwg.mxu0
    %1653 = vmatprep.subr.mxu0 %v830
    %1654 = vmatpush1.msra.mxu0 %v829
    %1655 = vmatprep.subr.mxu0 %v826
    %1656 = vmatpush1.msra.mxu0 %v825
    %1657 = vmatprep.subr.mxu0 %v822
    %1658 = vmatpush1.msra.mxu0 %v821
    %1659 = vmatprep.subr.mxu0 %v818
    %1660 = vmatpush1.msra.mxu0 %v817
    %1661 = vmatprep.subr.mxu0 %v814
    %1662 = vmatpush1.msra.mxu0 %v813
    %1663 = vmatprep.subr.mxu0 %v810
    %1664 = vmatpush1.msra.mxu0 %v809
    %1665 = vmatprep.subr.mxu0 %v806
    %1666 = vmatpush1.msra.mxu0 %v805
    %1667 = vmatprep.subr.mxu0 %v802
    %1668 = vmatpush1.msra.mxu0 %v801
    %1669 = vmatprep.subr.mxu0 %v798
    %1670 = vmatpush1.msra.mxu0 %v797
    %1671 = vmatprep.subr.mxu0 %v794
    %1672 = vmatpush1.msra.mxu0 %v793
    %1673 = vmatprep.subr.mxu0 %v790
    %1674 = vmatpush1.msra.mxu0 %v789
    %1675 = vmatprep.subr.mxu0 %v786
    %1676 = vmatpush1.msra.mxu0 %v785
    %1677 = vmatprep.subr.mxu0 %v782
    %1678 = vmatpush1.msra.mxu0 %v781
    %1679 = vmatprep.subr.mxu0 %v778
    %1680 = vmatpush1.msra.mxu0 %v777
    %1681 = vmatprep.subr.mxu0 %v774
    %1682 = vmatpush1.msra.mxu0 %v773
    %1683 = vmatprep.subr.mxu0 %v770
    %1684 = vmatpush1.msra.mxu0 %v769
    %1685 = vmatprep.subr.mxu0 0.0
    %1686 = vmatpush2.msra.mxu0 0.0
    %1687 = vmatprep.subr.mxu0 0.0
    %1688 = vmatpush2.msra.mxu0 0.0
    %1689 = vmatprep.subr.mxu0 0.0
    %1690 = vmatpush2.msra.mxu0 0.0
    %1691 = vmatprep.subr.mxu0 0.0
    %1692 = vmatpush2.msra.mxu0 0.0
    %1693 = vmatprep.subr.mxu0 0.0
    %1694 = vmatpush2.msra.mxu0 0.0
    %1695 = vmatprep.subr.mxu0 0.0
    %1696 = vmatpush2.msra.mxu0 0.0
    %1697 = vmatprep.subr.mxu0 0.0
    %1698 = vmatpush2.msra.mxu0 0.0
    %1699 = vmatprep.subr.mxu0 0.0
    %1700 = vmatpush2.msra.mxu0 0.0
    %1701 = vmatprep.subr.mxu0 0.0
    %1702 = vmatpush2.msra.mxu0 0.0
    %1703 = vmatprep.subr.mxu0 0.0
    %1704 = vmatpush2.msra.mxu0 0.0
    %1705 = vmatprep.subr.mxu0 0.0
    %1706 = vmatpush2.msra.mxu0 0.0
    %1707 = vmatprep.subr.mxu0 0.0
    %1708 = vmatpush2.msra.mxu0 0.0
    %1709 = vmatprep.subr.mxu0 0.0
    %1710 = vmatpush2.msra.mxu0 0.0
    %1711 = vmatprep.subr.mxu0 0.0
    %1712 = vmatpush2.msra.mxu0 0.0
    %1713 = vmatprep.subr.mxu0 0.0
    %1714 = vmatpush2.msra.mxu0 0.0
    %1715 = vmatprep.subr.mxu0 0.0
    %1716 = vmatpush2.msra.mxu0 0.0
    %1717 = vmatprep.mubr.f32.mxu0 0.0
    %1718 = vmatmul.mubr.f32.gmra.mxu0 %v1554
    %v1719 = vpop.f32.mrf.mxu0
    %v1720 = vadd.f32 0.0, %v1719
    %v1721 = vpop.f32.mrf.mxu0
    %v1722 = vadd.f32 0.0, %v1721
    %1723 = vdwg.mxu0
    %v1724 = vadd.f32 %v1578, %v1649
    %v1725 = vadd.f32 %v1579, %v1651
    %v1726 = vadd.f32 %v1580, %v1720
    %v1727 = vadd.f32 %v1581, %v1722
    %s1728 = scalar_lea.vmem [#allocation2], 320
    %v1729 = vld [vmem:[%s1728 + $0x20] sm:$0xff]
    %v1730 = vld [vmem:[%s1728 + $0x28] sm:$0xff]
    %v1731 = vld [vmem:[%s1728 + $0x30] sm:$0xff]
    %v1732 = vld [vmem:[%s1728 + $0x38] sm:$0xff]
    %1733 = vmatprep.subr.mxu0 %v892
    %1734 = vmatpush1.msra.mxu0 %v891
    %1735 = vmatprep.subr.mxu0 %v888
    %1736 = vmatpush1.msra.mxu0 %v887
    %1737 = vmatprep.subr.mxu0 %v884
    %1738 = vmatpush1.msra.mxu0 %v883
    %1739 = vmatprep.subr.mxu0 %v880
    %1740 = vmatpush1.msra.mxu0 %v879
    %1741 = vmatprep.subr.mxu0 %v876
    %1742 = vmatpush1.msra.mxu0 %v875
    %1743 = vmatprep.subr.mxu0 %v872
    %1744 = vmatpush1.msra.mxu0 %v871
    %1745 = vmatprep.subr.mxu0 %v868
    %1746 = vmatpush1.msra.mxu0 %v867
    %1747 = vmatprep.subr.mxu0 %v864
    %1748 = vmatpush1.msra.mxu0 %v863
    %1749 = vmatprep.subr.mxu0 %v860
    %1750 = vmatpush1.msra.mxu0 %v859
    %1751 = vmatprep.subr.mxu0 %v856
    %1752 = vmatpush1.msra.mxu0 %v855
    %1753 = vmatprep.subr.mxu0 %v852
    %1754 = vmatpush1.msra.mxu0 %v851
    %1755 = vmatprep.subr.mxu0 %v848
    %1756 = vmatpush1.msra.mxu0 %v847
    %1757 = vmatprep.subr.mxu0 %v844
    %1758 = vmatpush1.msra.mxu0 %v843
    %1759 = vmatprep.subr.mxu0 %v840
    %1760 = vmatpush1.msra.mxu0 %v839
    %1761 = vmatprep.subr.mxu0 %v836
    %1762 = vmatpush1.msra.mxu0 %v835
    %1763 = vmatprep.subr.mxu0 %v832
    %1764 = vmatpush1.msra.mxu0 %v831
    %1765 = vmatprep.subr.mxu0 0.0
    %1766 = vmatpush2.msra.mxu0 0.0
    %1767 = vmatprep.subr.mxu0 0.0
    %1768 = vmatpush2.msra.mxu0 0.0
    %1769 = vmatprep.subr.mxu0 0.0
    %1770 = vmatpush2.msra.mxu0 0.0
    %1771 = vmatprep.subr.mxu0 0.0
    %1772 = vmatpush2.msra.mxu0 0.0
    %1773 = vmatprep.subr.mxu0 0.0
    %1774 = vmatpush2.msra.mxu0 0.0
    %1775 = vmatprep.subr.mxu0 0.0
    %1776 = vmatpush2.msra.mxu0 0.0
    %1777 = vmatprep.subr.mxu0 0.0
    %1778 = vmatpush2.msra.mxu0 0.0
    %1779 = vmatprep.subr.mxu0 0.0
    %1780 = vmatpush2.msra.mxu0 0.0
    %1781 = vmatprep.subr.mxu0 0.0
    %1782 = vmatpush2.msra.mxu0 0.0
    %1783 = vmatprep.subr.mxu0 0.0
    %1784 = vmatpush2.msra.mxu0 0.0
    %1785 = vmatprep.subr.mxu0 0.0
    %1786 = vmatpush2.msra.mxu0 0.0
    %1787 = vmatprep.subr.mxu0 0.0
    %1788 = vmatpush2.msra.mxu0 0.0
    %1789 = vmatprep.subr.mxu0 0.0
    %1790 = vmatpush2.msra.mxu0 0.0
    %1791 = vmatprep.subr.mxu0 0.0
    %1792 = vmatpush2.msra.mxu0 0.0
    %1793 = vmatprep.subr.mxu0 0.0
    %1794 = vmatpush2.msra.mxu0 0.0
    %1795 = vmatprep.subr.mxu0 0.0
    %1796 = vmatpush2.msra.mxu0 0.0
    %1797 = vmatprep.mubr.f32.mxu0 0.0
    %1798 = vmatmul.mubr.f32.gmra.mxu0 %v1572
    %v1799 = vpop.f32.mrf.mxu0
    %v1800 = vadd.f32 0.0, %v1799
    %v1801 = vpop.f32.mrf.mxu0
    %v1802 = vadd.f32 0.0, %v1801
    %1803 = vdwg.mxu0
    %1804 = vmatprep.subr.mxu0 %v894
    %1805 = vmatpush1.msra.mxu0 %v893
    %1806 = vmatprep.subr.mxu0 %v890
    %1807 = vmatpush1.msra.mxu0 %v889
    %1808 = vmatprep.subr.mxu0 %v886
    %1809 = vmatpush1.msra.mxu0 %v885
    %1810 = vmatprep.subr.mxu0 %v882
    %1811 = vmatpush1.msra.mxu0 %v881
    %1812 = vmatprep.subr.mxu0 %v878
    %1813 = vmatpush1.msra.mxu0 %v877
    %1814 = vmatprep.subr.mxu0 %v874
    %1815 = vmatpush1.msra.mxu0 %v873
    %1816 = vmatprep.subr.mxu0 %v870
    %1817 = vmatpush1.msra.mxu0 %v869
    %1818 = vmatprep.subr.mxu0 %v866
    %1819 = vmatpush1.msra.mxu0 %v865
    %1820 = vmatprep.subr.mxu0 %v862
    %1821 = vmatpush1.msra.mxu0 %v861
    %1822 = vmatprep.subr.mxu0 %v858
    %1823 = vmatpush1.msra.mxu0 %v857
    %1824 = vmatprep.subr.mxu0 %v854
    %1825 = vmatpush1.msra.mxu0 %v853
    %1826 = vmatprep.subr.mxu0 %v850
    %1827 = vmatpush1.msra.mxu0 %v849
    %1828 = vmatprep.subr.mxu0 %v846
    %1829 = vmatpush1.msra.mxu0 %v845
    %1830 = vmatprep.subr.mxu0 %v842
    %1831 = vmatpush1.msra.mxu0 %v841
    %1832 = vmatprep.subr.mxu0 %v838
    %1833 = vmatpush1.msra.mxu0 %v837
    %1834 = vmatprep.subr.mxu0 %v834
    %1835 = vmatpush1.msra.mxu0 %v833
    %1836 = vmatprep.subr.mxu0 0.0
    %1837 = vmatpush2.msra.mxu0 0.0
    %1838 = vmatprep.subr.mxu0 0.0
    %1839 = vmatpush2.msra.mxu0 0.0
    %1840 = vmatprep.subr.mxu0 0.0
    %1841 = vmatpush2.msra.mxu0 0.0
    %1842 = vmatprep.subr.mxu0 0.0
    %1843 = vmatpush2.msra.mxu0 0.0
    %1844 = vmatprep.subr.mxu0 0.0
    %1845 = vmatpush2.msra.mxu0 0.0
    %1846 = vmatprep.subr.mxu0 0.0
    %1847 = vmatpush2.msra.mxu0 0.0
    %1848 = vmatprep.subr.mxu0 0.0
    %1849 = vmatpush2.msra.mxu0 0.0
    %1850 = vmatprep.subr.mxu0 0.0
    %1851 = vmatpush2.msra.mxu0 0.0
    %1852 = vmatprep.subr.mxu0 0.0
    %1853 = vmatpush2.msra.mxu0 0.0
    %1854 = vmatprep.subr.mxu0 0.0
    %1855 = vmatpush2.msra.mxu0 0.0
    %1856 = vmatprep.subr.mxu0 0.0
    %1857 = vmatpush2.msra.mxu0 0.0
    %1858 = vmatprep.subr.mxu0 0.0
    %1859 = vmatpush2.msra.mxu0 0.0
    %1860 = vmatprep.subr.mxu0 0.0
    %1861 = vmatpush2.msra.mxu0 0.0
    %1862 = vmatprep.subr.mxu0 0.0
    %1863 = vmatpush2.msra.mxu0 0.0
    %1864 = vmatprep.subr.mxu0 0.0
    %1865 = vmatpush2.msra.mxu0 0.0
    %1866 = vmatprep.subr.mxu0 0.0
    %1867 = vmatpush2.msra.mxu0 0.0
    %1868 = vmatprep.mubr.f32.mxu0 0.0
    %1869 = vmatmul.mubr.f32.gmra.mxu0 %v1572
    %v1870 = vpop.f32.mrf.mxu0
    %v1871 = vadd.f32 0.0, %v1870
    %v1872 = vpop.f32.mrf.mxu0
    %v1873 = vadd.f32 0.0, %v1872
    %1874 = vdwg.mxu0
    %v1875 = vadd.f32 %v1729, %v1800
    %v1876 = vadd.f32 %v1730, %v1802
    %v1877 = vadd.f32 %v1731, %v1871
    %v1878 = vadd.f32 %v1732, %v1873
    %v1879 = vmul.f32 %v1724, 0.5
    %v1880 = vtanh.pop %v1879
    %v1881 = vmul.f32 %v1880, 0.5
    %v1882 = vadd.f32 %v1881, 0.5
    %v1883 = vmul.f32 %v1725, 0.5
    %v1884 = vtanh.pop %v1883
    %v1885 = vmul.f32 %v1884, 0.5
    %v1886 = vadd.f32 %v1885, 0.5
    %v1887 = vtanh.pop %v1726
    %v1888 = vmul.f32 %v1727, 0.5
    %v1889 = vtanh.pop %v1888
    %v1890 = vmul.f32 %v1889, 0.5
    %v1891 = vadd.f32 %v1890, 0.5
    %v1892 = vmul.f32 %v1886, %v1552
    %v1893 = vmul.f32 %v1882, %v1887
    %v1894 = vadd.f32 %v1892, %v1893
    %v1895 = vtanh.pop %v1894
    %v1896 = vmul.f32 %v1891, %v1895
    %v1897 = vmul.f32 %v1875, 0.5
    %v1898 = vtanh.pop %v1897
    %v1899 = vmul.f32 %v1898, 0.5
    %v1900 = vadd.f32 %v1899, 0.5
    %v1901 = vmul.f32 %v1876, 0.5
    %v1902 = vtanh.pop %v1901
    %v1903 = vmul.f32 %v1902, 0.5
    %v1904 = vadd.f32 %v1903, 0.5
    %v1905 = vtanh.pop %v1877
    %v1906 = vmul.f32 %v1878, 0.5
    %v1907 = vtanh.pop %v1906
    %v1908 = vmul.f32 %v1907, 0.5
    %v1909 = vadd.f32 %v1908, 0.5
    %v1910 = vmul.f32 %v1904, %v1570
    %v1911 = vmul.f32 %v1900, %v1905
    %v1912 = vadd.f32 %v1910, %v1911
    %v1913 = vtanh.pop %v1912
    %v1914 = vmul.f32 %v1909, %v1913
    %s1915 = scalar_lea.vmem %s5, 32
    %1916 = vst [vmem:[%s1915] sm:$0xff] %v1896
    %s1917 = scalar_lea.vmem %s5, 80
    %1918 = vst [vmem:[%s1917 + $0x8] sm:$0xff] %v1914
    %s1919 = scalar_lea.vmem [#allocation2], 192
    %v1920 = vld [vmem:[%s1919] sm:$0xff]
    %v1921 = vld [vmem:[%s1919 + $0x8] sm:$0xff]
    %v1922 = vld [vmem:[%s1919 + $0x10] sm:$0xff]
    %v1923 = vld [vmem:[%s1919 + $0x18] sm:$0xff]
    %1924 = vmatprep.subr.mxu0 %v828
    %1925 = vmatpush1.msra.mxu0 %v827
    %1926 = vmatprep.subr.mxu0 %v824
    %1927 = vmatpush1.msra.mxu0 %v823
    %1928 = vmatprep.subr.mxu0 %v820
    %1929 = vmatpush1.msra.mxu0 %v819
    %1930 = vmatprep.subr.mxu0 %v816
    %1931 = vmatpush1.msra.mxu0 %v815
    %1932 = vmatprep.subr.mxu0 %v812
    %1933 = vmatpush1.msra.mxu0 %v811
    %1934 = vmatprep.subr.mxu0 %v808
    %1935 = vmatpush1.msra.mxu0 %v807
    %1936 = vmatprep.subr.mxu0 %v804
    %1937 = vmatpush1.msra.mxu0 %v803
    %1938 = vmatprep.subr.mxu0 %v800
    %1939 = vmatpush1.msra.mxu0 %v799
    %1940 = vmatprep.subr.mxu0 %v796
    %1941 = vmatpush1.msra.mxu0 %v795
    %1942 = vmatprep.subr.mxu0 %v792
    %1943 = vmatpush1.msra.mxu0 %v791
    %1944 = vmatprep.subr.mxu0 %v788
    %1945 = vmatpush1.msra.mxu0 %v787
    %1946 = vmatprep.subr.mxu0 %v784
    %1947 = vmatpush1.msra.mxu0 %v783
    %1948 = vmatprep.subr.mxu0 %v780
    %1949 = vmatpush1.msra.mxu0 %v779
    %1950 = vmatprep.subr.mxu0 %v776
    %1951 = vmatpush1.msra.mxu0 %v775
    %1952 = vmatprep.subr.mxu0 %v772
    %1953 = vmatpush1.msra.mxu0 %v771
    %1954 = vmatprep.subr.mxu0 %v768
    %1955 = vmatpush1.msra.mxu0 %v767
    %1956 = vmatprep.subr.mxu0 0.0
    %1957 = vmatpush2.msra.mxu0 0.0
    %1958 = vmatprep.subr.mxu0 0.0
    %1959 = vmatpush2.msra.mxu0 0.0
    %1960 = vmatprep.subr.mxu0 0.0
    %1961 = vmatpush2.msra.mxu0 0.0
    %1962 = vmatprep.subr.mxu0 0.0
    %1963 = vmatpush2.msra.mxu0 0.0
    %1964 = vmatprep.subr.mxu0 0.0
    %1965 = vmatpush2.msra.mxu0 0.0
    %1966 = vmatprep.subr.mxu0 0.0
    %1967 = vmatpush2.msra.mxu0 0.0
    %1968 = vmatprep.subr.mxu0 0.0
    %1969 = vmatpush2.msra.mxu0 0.0
    %1970 = vmatprep.subr.mxu0 0.0
    %1971 = vmatpush2.msra.mxu0 0.0
    %1972 = vmatprep.subr.mxu0 0.0
    %1973 = vmatpush2.msra.mxu0 0.0
    %1974 = vmatprep.subr.mxu0 0.0
    %1975 = vmatpush2.msra.mxu0 0.0
    %1976 = vmatprep.subr.mxu0 0.0
    %1977 = vmatpush2.msra.mxu0 0.0
    %1978 = vmatprep.subr.mxu0 0.0
    %1979 = vmatpush2.msra.mxu0 0.0
    %1980 = vmatprep.subr.mxu0 0.0
    %1981 = vmatpush2.msra.mxu0 0.0
    %1982 = vmatprep.subr.mxu0 0.0
    %1983 = vmatpush2.msra.mxu0 0.0
    %1984 = vmatprep.subr.mxu0 0.0
    %1985 = vmatpush2.msra.mxu0 0.0
    %1986 = vmatprep.subr.mxu0 0.0
    %1987 = vmatpush2.msra.mxu0 0.0
    %1988 = vmatprep.mubr.f32.mxu0 0.0
    %1989 = vmatmul.mubr.f32.gmra.mxu0 %v1896
    %v1990 = vpop.f32.mrf.mxu0
    %v1991 = vadd.f32 0.0, %v1990
    %v1992 = vpop.f32.mrf.mxu0
    %v1993 = vadd.f32 0.0, %v1992
    %1994 = vdwg.mxu0
    %1995 = vmatprep.subr.mxu0 %v830
    %1996 = vmatpush1.msra.mxu0 %v829
    %1997 = vmatprep.subr.mxu0 %v826
    %1998 = vmatpush1.msra.mxu0 %v825
    %1999 = vmatprep.subr.mxu0 %v822
    %2000 = vmatpush1.msra.mxu0 %v821
    %2001 = vmatprep.subr.mxu0 %v818
    %2002 = vmatpush1.msra.mxu0 %v817
    %2003 = vmatprep.subr.mxu0 %v814
    %2004 = vmatpush1.msra.mxu0 %v813
    %2005 = vmatprep.subr.mxu0 %v810
    %2006 = vmatpush1.msra.mxu0 %v809
    %2007 = vmatprep.subr.mxu0 %v806
    %2008 = vmatpush1.msra.mxu0 %v805
    %2009 = vmatprep.subr.mxu0 %v802
    %2010 = vmatpush1.msra.mxu0 %v801
    %2011 = vmatprep.subr.mxu0 %v798
    %2012 = vmatpush1.msra.mxu0 %v797
    %2013 = vmatprep.subr.mxu0 %v794
    %2014 = vmatpush1.msra.mxu0 %v793
    %2015 = vmatprep.subr.mxu0 %v790
    %2016 = vmatpush1.msra.mxu0 %v789
    %2017 = vmatprep.subr.mxu0 %v786
    %2018 = vmatpush1.msra.mxu0 %v785
    %2019 = vmatprep.subr.mxu0 %v782
    %2020 = vmatpush1.msra.mxu0 %v781
    %2021 = vmatprep.subr.mxu0 %v778
    %2022 = vmatpush1.msra.mxu0 %v777
    %2023 = vmatprep.subr.mxu0 %v774
    %2024 = vmatpush1.msra.mxu0 %v773
    %2025 = vmatprep.subr.mxu0 %v770
    %2026 = vmatpush1.msra.mxu0 %v769
    %2027 = vmatprep.subr.mxu0 0.0
    %2028 = vmatpush2.msra.mxu0 0.0
    %2029 = vmatprep.subr.mxu0 0.0
    %2030 = vmatpush2.msra.mxu0 0.0
    %2031 = vmatprep.subr.mxu0 0.0
    %2032 = vmatpush2.msra.mxu0 0.0
    %2033 = vmatprep.subr.mxu0 0.0
    %2034 = vmatpush2.msra.mxu0 0.0
    %2035 = vmatprep.subr.mxu0 0.0
    %2036 = vmatpush2.msra.mxu0 0.0
    %2037 = vmatprep.subr.mxu0 0.0
    %2038 = vmatpush2.msra.mxu0 0.0
    %2039 = vmatprep.subr.mxu0 0.0
    %2040 = vmatpush2.msra.mxu0 0.0
    %2041 = vmatprep.subr.mxu0 0.0
    %2042 = vmatpush2.msra.mxu0 0.0
    %2043 = vmatprep.subr.mxu0 0.0
    %2044 = vmatpush2.msra.mxu0 0.0
    %2045 = vmatprep.subr.mxu0 0.0
    %2046 = vmatpush2.msra.mxu0 0.0
    %2047 = vmatprep.subr.mxu0 0.0
    %2048 = vmatpush2.msra.mxu0 0.0
    %2049 = vmatprep.subr.mxu0 0.0
    %2050 = vmatpush2.msra.mxu0 0.0
    %2051 = vmatprep.subr.mxu0 0.0
    %2052 = vmatpush2.msra.mxu0 0.0
    %2053 = vmatprep.subr.mxu0 0.0
    %2054 = vmatpush2.msra.mxu0 0.0
    %2055 = vmatprep.subr.mxu0 0.0
    %2056 = vmatpush2.msra.mxu0 0.0
    %2057 = vmatprep.subr.mxu0 0.0
    %2058 = vmatpush2.msra.mxu0 0.0
    %2059 = vmatprep.mubr.f32.mxu0 0.0
    %2060 = vmatmul.mubr.f32.gmra.mxu0 %v1896
    %v2061 = vpop.f32.mrf.mxu0
    %v2062 = vadd.f32 0.0, %v2061
    %v2063 = vpop.f32.mrf.mxu0
    %v2064 = vadd.f32 0.0, %v2063
    %2065 = vdwg.mxu0
    %v2066 = vadd.f32 %v1920, %v1991
    %v2067 = vadd.f32 %v1921, %v1993
    %v2068 = vadd.f32 %v1922, %v2062
    %v2069 = vadd.f32 %v1923, %v2064
    %s2070 = scalar_lea.vmem [#allocation2], 256
    %v2071 = vld [vmem:[%s2070 + $0x20] sm:$0xff]
    %v2072 = vld [vmem:[%s2070 + $0x28] sm:$0xff]
    %v2073 = vld [vmem:[%s2070 + $0x30] sm:$0xff]
    %v2074 = vld [vmem:[%s2070 + $0x38] sm:$0xff]
    %2075 = vmatprep.subr.mxu0 %v892
    %2076 = vmatpush1.msra.mxu0 %v891
    %2077 = vmatprep.subr.mxu0 %v888
    %2078 = vmatpush1.msra.mxu0 %v887
    %2079 = vmatprep.subr.mxu0 %v884
    %2080 = vmatpush1.msra.mxu0 %v883
    %2081 = vmatprep.subr.mxu0 %v880
    %2082 = vmatpush1.msra.mxu0 %v879
    %2083 = vmatprep.subr.mxu0 %v876
    %2084 = vmatpush1.msra.mxu0 %v875
    %2085 = vmatprep.subr.mxu0 %v872
    %2086 = vmatpush1.msra.mxu0 %v871
    %2087 = vmatprep.subr.mxu0 %v868
    %2088 = vmatpush1.msra.mxu0 %v867
    %2089 = vmatprep.subr.mxu0 %v864
    %2090 = vmatpush1.msra.mxu0 %v863
    %2091 = vmatprep.subr.mxu0 %v860
    %2092 = vmatpush1.msra.mxu0 %v859
    %2093 = vmatprep.subr.mxu0 %v856
    %2094 = vmatpush1.msra.mxu0 %v855
    %2095 = vmatprep.subr.mxu0 %v852
    %2096 = vmatpush1.msra.mxu0 %v851
    %2097 = vmatprep.subr.mxu0 %v848
    %2098 = vmatpush1.msra.mxu0 %v847
    %2099 = vmatprep.subr.mxu0 %v844
    %2100 = vmatpush1.msra.mxu0 %v843
    %2101 = vmatprep.subr.mxu0 %v840
    %2102 = vmatpush1.msra.mxu0 %v839
    %2103 = vmatprep.subr.mxu0 %v836
    %2104 = vmatpush1.msra.mxu0 %v835
    %2105 = vmatprep.subr.mxu0 %v832
    %2106 = vmatpush1.msra.mxu0 %v831
    %2107 = vmatprep.subr.mxu0 0.0
    %2108 = vmatpush2.msra.mxu0 0.0
    %2109 = vmatprep.subr.mxu0 0.0
    %2110 = vmatpush2.msra.mxu0 0.0
    %2111 = vmatprep.subr.mxu0 0.0
    %2112 = vmatpush2.msra.mxu0 0.0
    %2113 = vmatprep.subr.mxu0 0.0
    %2114 = vmatpush2.msra.mxu0 0.0
    %2115 = vmatprep.subr.mxu0 0.0
    %2116 = vmatpush2.msra.mxu0 0.0
    %2117 = vmatprep.subr.mxu0 0.0
    %2118 = vmatpush2.msra.mxu0 0.0
    %2119 = vmatprep.subr.mxu0 0.0
    %2120 = vmatpush2.msra.mxu0 0.0
    %2121 = vmatprep.subr.mxu0 0.0
    %2122 = vmatpush2.msra.mxu0 0.0
    %2123 = vmatprep.subr.mxu0 0.0
    %2124 = vmatpush2.msra.mxu0 0.0
    %2125 = vmatprep.subr.mxu0 0.0
    %2126 = vmatpush2.msra.mxu0 0.0
    %2127 = vmatprep.subr.mxu0 0.0
    %2128 = vmatpush2.msra.mxu0 0.0
    %2129 = vmatprep.subr.mxu0 0.0
    %2130 = vmatpush2.msra.mxu0 0.0
    %2131 = vmatprep.subr.mxu0 0.0
    %2132 = vmatpush2.msra.mxu0 0.0
    %2133 = vmatprep.subr.mxu0 0.0
    %2134 = vmatpush2.msra.mxu0 0.0
    %2135 = vmatprep.subr.mxu0 0.0
    %2136 = vmatpush2.msra.mxu0 0.0
    %2137 = vmatprep.subr.mxu0 0.0
    %2138 = vmatpush2.msra.mxu0 0.0
    %2139 = vmatprep.mubr.f32.mxu0 0.0
    %2140 = vmatmul.mubr.f32.gmra.mxu0 %v1914
    %v2141 = vpop.f32.mrf.mxu0
    %v2142 = vadd.f32 0.0, %v2141
    %v2143 = vpop.f32.mrf.mxu0
    %v2144 = vadd.f32 0.0, %v2143
    %2145 = vdwg.mxu0
    %2146 = vmatprep.subr.mxu0 %v894
    %2147 = vmatpush1.msra.mxu0 %v893
    %2148 = vmatprep.subr.mxu0 %v890
    %2149 = vmatpush1.msra.mxu0 %v889
    %2150 = vmatprep.subr.mxu0 %v886
    %2151 = vmatpush1.msra.mxu0 %v885
    %2152 = vmatprep.subr.mxu0 %v882
    %2153 = vmatpush1.msra.mxu0 %v881
    %2154 = vmatprep.subr.mxu0 %v878
    %2155 = vmatpush1.msra.mxu0 %v877
    %2156 = vmatprep.subr.mxu0 %v874
    %2157 = vmatpush1.msra.mxu0 %v873
    %2158 = vmatprep.subr.mxu0 %v870
    %2159 = vmatpush1.msra.mxu0 %v869
    %2160 = vmatprep.subr.mxu0 %v866
    %2161 = vmatpush1.msra.mxu0 %v865
    %2162 = vmatprep.subr.mxu0 %v862
    %2163 = vmatpush1.msra.mxu0 %v861
    %2164 = vmatprep.subr.mxu0 %v858
    %2165 = vmatpush1.msra.mxu0 %v857
    %2166 = vmatprep.subr.mxu0 %v854
    %2167 = vmatpush1.msra.mxu0 %v853
    %2168 = vmatprep.subr.mxu0 %v850
    %2169 = vmatpush1.msra.mxu0 %v849
    %2170 = vmatprep.subr.mxu0 %v846
    %2171 = vmatpush1.msra.mxu0 %v845
    %2172 = vmatprep.subr.mxu0 %v842
    %2173 = vmatpush1.msra.mxu0 %v841
    %2174 = vmatprep.subr.mxu0 %v838
    %2175 = vmatpush1.msra.mxu0 %v837
    %2176 = vmatprep.subr.mxu0 %v834
    %2177 = vmatpush1.msra.mxu0 %v833
    %2178 = vmatprep.subr.mxu0 0.0
    %2179 = vmatpush2.msra.mxu0 0.0
    %2180 = vmatprep.subr.mxu0 0.0
    %2181 = vmatpush2.msra.mxu0 0.0
    %2182 = vmatprep.subr.mxu0 0.0
    %2183 = vmatpush2.msra.mxu0 0.0
    %2184 = vmatprep.subr.mxu0 0.0
    %2185 = vmatpush2.msra.mxu0 0.0
    %2186 = vmatprep.subr.mxu0 0.0
    %2187 = vmatpush2.msra.mxu0 0.0
    %2188 = vmatprep.subr.mxu0 0.0
    %2189 = vmatpush2.msra.mxu0 0.0
    %2190 = vmatprep.subr.mxu0 0.0
    %2191 = vmatpush2.msra.mxu0 0.0
    %2192 = vmatprep.subr.mxu0 0.0
    %2193 = vmatpush2.msra.mxu0 0.0
    %2194 = vmatprep.subr.mxu0 0.0
    %2195 = vmatpush2.msra.mxu0 0.0
    %2196 = vmatprep.subr.mxu0 0.0
    %2197 = vmatpush2.msra.mxu0 0.0
    %2198 = vmatprep.subr.mxu0 0.0
    %2199 = vmatpush2.msra.mxu0 0.0
    %2200 = vmatprep.subr.mxu0 0.0
    %2201 = vmatpush2.msra.mxu0 0.0
    %2202 = vmatprep.subr.mxu0 0.0
    %2203 = vmatpush2.msra.mxu0 0.0
    %2204 = vmatprep.subr.mxu0 0.0
    %2205 = vmatpush2.msra.mxu0 0.0
    %2206 = vmatprep.subr.mxu0 0.0
    %2207 = vmatpush2.msra.mxu0 0.0
    %2208 = vmatprep.subr.mxu0 0.0
    %2209 = vmatpush2.msra.mxu0 0.0
    %2210 = vmatprep.mubr.f32.mxu0 0.0
    %2211 = vmatmul.mubr.f32.gmra.mxu0 %v1914
    %v2212 = vpop.f32.mrf.mxu0
    %v2213 = vadd.f32 0.0, %v2212
    %v2214 = vpop.f32.mrf.mxu0
    %v2215 = vadd.f32 0.0, %v2214
    %2216 = vdwg.mxu0
    %v2217 = vadd.f32 %v2071, %v2142
    %v2218 = vadd.f32 %v2072, %v2144
    %v2219 = vadd.f32 %v2073, %v2213
    %v2220 = vadd.f32 %v2074, %v2215
    %v2221 = vmul.f32 %v2066, 0.5
    %v2222 = vtanh.pop %v2221
    %v2223 = vmul.f32 %v2222, 0.5
    %v2224 = vadd.f32 %v2223, 0.5
    %v2225 = vmul.f32 %v2067, 0.5
    %v2226 = vtanh.pop %v2225
    %v2227 = vmul.f32 %v2226, 0.5
    %v2228 = vadd.f32 %v2227, 0.5
    %v2229 = vtanh.pop %v2068
    %v2230 = vmul.f32 %v2069, 0.5
    %v2231 = vtanh.pop %v2230
    %v2232 = vmul.f32 %v2231, 0.5
    %v2233 = vadd.f32 %v2232, 0.5
    %v2234 = vmul.f32 %v2228, %v1894
    %v2235 = vmul.f32 %v2224, %v2229
    %v2236 = vadd.f32 %v2234, %v2235
    %v2237 = vtanh.pop %v2236
    %v2238 = vmul.f32 %v2233, %v2237
    %v2239 = vmul.f32 %v2217, 0.5
    %v2240 = vtanh.pop %v2239
    %v2241 = vmul.f32 %v2240, 0.5
    %v2242 = vadd.f32 %v2241, 0.5
    %v2243 = vmul.f32 %v2218, 0.5
    %v2244 = vtanh.pop %v2243
    %v2245 = vmul.f32 %v2244, 0.5
    %v2246 = vadd.f32 %v2245, 0.5
    %v2247 = vtanh.pop %v2219
    %v2248 = vmul.f32 %v2220, 0.5
    %v2249 = vtanh.pop %v2248
    %v2250 = vmul.f32 %v2249, 0.5
    %v2251 = vadd.f32 %v2250, 0.5
    %v2252 = vmul.f32 %v2246, %v1912
    %v2253 = vmul.f32 %v2242, %v2247
    %v2254 = vadd.f32 %v2252, %v2253
    %v2255 = vtanh.pop %v2254
    %v2256 = vmul.f32 %v2251, %v2255
    %s2257 = scalar_lea.vmem %s5, 48
    %2258 = vst [vmem:[%s2257] sm:$0xff] %v2238
    %s2259 = scalar_lea.vmem %s5, 64
    %2260 = vst [vmem:[%s2259 + $0x8] sm:$0xff] %v2256
    %v2261 = vld [vmem:[%s2070] sm:$0xff]
    %v2262 = vld [vmem:[%s2070 + $0x8] sm:$0xff]
    %v2263 = vld [vmem:[%s2070 + $0x10] sm:$0xff]
    %v2264 = vld [vmem:[%s2070 + $0x18] sm:$0xff]
    %2265 = vmatprep.subr.mxu0 %v828
    %2266 = vmatpush1.msra.mxu0 %v827
    %2267 = vmatprep.subr.mxu0 %v824
    %2268 = vmatpush1.msra.mxu0 %v823
    %2269 = vmatprep.subr.mxu0 %v820
    %2270 = vmatpush1.msra.mxu0 %v819
    %2271 = vmatprep.subr.mxu0 %v816
    %2272 = vmatpush1.msra.mxu0 %v815
    %2273 = vmatprep.subr.mxu0 %v812
    %2274 = vmatpush1.msra.mxu0 %v811
    %2275 = vmatprep.subr.mxu0 %v808
    %2276 = vmatpush1.msra.mxu0 %v807
    %2277 = vmatprep.subr.mxu0 %v804
    %2278 = vmatpush1.msra.mxu0 %v803
    %2279 = vmatprep.subr.mxu0 %v800
    %2280 = vmatpush1.msra.mxu0 %v799
    %2281 = vmatprep.subr.mxu0 %v796
    %2282 = vmatpush1.msra.mxu0 %v795
    %2283 = vmatprep.subr.mxu0 %v792
    %2284 = vmatpush1.msra.mxu0 %v791
    %2285 = vmatprep.subr.mxu0 %v788
    %2286 = vmatpush1.msra.mxu0 %v787
    %2287 = vmatprep.subr.mxu0 %v784
    %2288 = vmatpush1.msra.mxu0 %v783
    %2289 = vmatprep.subr.mxu0 %v780
    %2290 = vmatpush1.msra.mxu0 %v779
    %2291 = vmatprep.subr.mxu0 %v776
    %2292 = vmatpush1.msra.mxu0 %v775
    %2293 = vmatprep.subr.mxu0 %v772
    %2294 = vmatpush1.msra.mxu0 %v771
    %2295 = vmatprep.subr.mxu0 %v768
    %2296 = vmatpush1.msra.mxu0 %v767
    %2297 = vmatprep.subr.mxu0 0.0
    %2298 = vmatpush2.msra.mxu0 0.0
    %2299 = vmatprep.subr.mxu0 0.0
    %2300 = vmatpush2.msra.mxu0 0.0
    %2301 = vmatprep.subr.mxu0 0.0
    %2302 = vmatpush2.msra.mxu0 0.0
    %2303 = vmatprep.subr.mxu0 0.0
    %2304 = vmatpush2.msra.mxu0 0.0
    %2305 = vmatprep.subr.mxu0 0.0
    %2306 = vmatpush2.msra.mxu0 0.0
    %2307 = vmatprep.subr.mxu0 0.0
    %2308 = vmatpush2.msra.mxu0 0.0
    %2309 = vmatprep.subr.mxu0 0.0
    %2310 = vmatpush2.msra.mxu0 0.0
    %2311 = vmatprep.subr.mxu0 0.0
    %2312 = vmatpush2.msra.mxu0 0.0
    %2313 = vmatprep.subr.mxu0 0.0
    %2314 = vmatpush2.msra.mxu0 0.0
    %2315 = vmatprep.subr.mxu0 0.0
    %2316 = vmatpush2.msra.mxu0 0.0
    %2317 = vmatprep.subr.mxu0 0.0
    %2318 = vmatpush2.msra.mxu0 0.0
    %2319 = vmatprep.subr.mxu0 0.0
    %2320 = vmatpush2.msra.mxu0 0.0
    %2321 = vmatprep.subr.mxu0 0.0
    %2322 = vmatpush2.msra.mxu0 0.0
    %2323 = vmatprep.subr.mxu0 0.0
    %2324 = vmatpush2.msra.mxu0 0.0
    %2325 = vmatprep.subr.mxu0 0.0
    %2326 = vmatpush2.msra.mxu0 0.0
    %2327 = vmatprep.subr.mxu0 0.0
    %2328 = vmatpush2.msra.mxu0 0.0
    %2329 = vmatprep.mubr.f32.mxu0 0.0
    %2330 = vmatmul.mubr.f32.gmra.mxu0 %v2238
    %v2331 = vpop.f32.mrf.mxu0
    %v2332 = vadd.f32 0.0, %v2331
    %v2333 = vpop.f32.mrf.mxu0
    %v2334 = vadd.f32 0.0, %v2333
    %2335 = vdwg.mxu0
    %2336 = vmatprep.subr.mxu0 %v830
    %2337 = vmatpush1.msra.mxu0 %v829
    %2338 = vmatprep.subr.mxu0 %v826
    %2339 = vmatpush1.msra.mxu0 %v825
    %2340 = vmatprep.subr.mxu0 %v822
    %2341 = vmatpush1.msra.mxu0 %v821
    %2342 = vmatprep.subr.mxu0 %v818
    %2343 = vmatpush1.msra.mxu0 %v817
    %2344 = vmatprep.subr.mxu0 %v814
    %2345 = vmatpush1.msra.mxu0 %v813
    %2346 = vmatprep.subr.mxu0 %v810
    %2347 = vmatpush1.msra.mxu0 %v809
    %2348 = vmatprep.subr.mxu0 %v806
    %2349 = vmatpush1.msra.mxu0 %v805
    %2350 = vmatprep.subr.mxu0 %v802
    %2351 = vmatpush1.msra.mxu0 %v801
    %2352 = vmatprep.subr.mxu0 %v798
    %2353 = vmatpush1.msra.mxu0 %v797
    %2354 = vmatprep.subr.mxu0 %v794
    %2355 = vmatpush1.msra.mxu0 %v793
    %2356 = vmatprep.subr.mxu0 %v790
    %2357 = vmatpush1.msra.mxu0 %v789
    %2358 = vmatprep.subr.mxu0 %v786
    %2359 = vmatpush1.msra.mxu0 %v785
    %2360 = vmatprep.subr.mxu0 %v782
    %2361 = vmatpush1.msra.mxu0 %v781
    %2362 = vmatprep.subr.mxu0 %v778
    %2363 = vmatpush1.msra.mxu0 %v777
    %2364 = vmatprep.subr.mxu0 %v774
    %2365 = vmatpush1.msra.mxu0 %v773
    %2366 = vmatprep.subr.mxu0 %v770
    %2367 = vmatpush1.msra.mxu0 %v769
    %2368 = vmatprep.subr.mxu0 0.0
    %2369 = vmatpush2.msra.mxu0 0.0
    %2370 = vmatprep.subr.mxu0 0.0
    %2371 = vmatpush2.msra.mxu0 0.0
    %2372 = vmatprep.subr.mxu0 0.0
    %2373 = vmatpush2.msra.mxu0 0.0
    %2374 = vmatprep.subr.mxu0 0.0
    %2375 = vmatpush2.msra.mxu0 0.0
    %2376 = vmatprep.subr.mxu0 0.0
    %2377 = vmatpush2.msra.mxu0 0.0
    %2378 = vmatprep.subr.mxu0 0.0
    %2379 = vmatpush2.msra.mxu0 0.0
    %2380 = vmatprep.subr.mxu0 0.0
    %2381 = vmatpush2.msra.mxu0 0.0
    %2382 = vmatprep.subr.mxu0 0.0
    %2383 = vmatpush2.msra.mxu0 0.0
    %2384 = vmatprep.subr.mxu0 0.0
    %2385 = vmatpush2.msra.mxu0 0.0
    %2386 = vmatprep.subr.mxu0 0.0
    %2387 = vmatpush2.msra.mxu0 0.0
    %2388 = vmatprep.subr.mxu0 0.0
    %2389 = vmatpush2.msra.mxu0 0.0
    %2390 = vmatprep.subr.mxu0 0.0
    %2391 = vmatpush2.msra.mxu0 0.0
    %2392 = vmatprep.subr.mxu0 0.0
    %2393 = vmatpush2.msra.mxu0 0.0
    %2394 = vmatprep.subr.mxu0 0.0
    %2395 = vmatpush2.msra.mxu0 0.0
    %2396 = vmatprep.subr.mxu0 0.0
    %2397 = vmatpush2.msra.mxu0 0.0
    %2398 = vmatprep.subr.mxu0 0.0
    %2399 = vmatpush2.msra.mxu0 0.0
    %2400 = vmatprep.mubr.f32.mxu0 0.0
    %2401 = vmatmul.mubr.f32.gmra.mxu0 %v2238
    %v2402 = vpop.f32.mrf.mxu0
    %v2403 = vadd.f32 0.0, %v2402
    %v2404 = vpop.f32.mrf.mxu0
    %v2405 = vadd.f32 0.0, %v2404
    %2406 = vdwg.mxu0
    %v2407 = vadd.f32 %v2261, %v2332
    %v2408 = vadd.f32 %v2262, %v2334
    %v2409 = vadd.f32 %v2263, %v2403
    %v2410 = vadd.f32 %v2264, %v2405
    %v2411 = vld [vmem:[%s1919 + $0x20] sm:$0xff]
    %v2412 = vld [vmem:[%s1919 + $0x28] sm:$0xff]
    %v2413 = vld [vmem:[%s1919 + $0x30] sm:$0xff]
    %v2414 = vld [vmem:[%s1919 + $0x38] sm:$0xff]
    %2415 = vmatprep.subr.mxu0 %v892
    %2416 = vmatpush1.msra.mxu0 %v891
    %2417 = vmatprep.subr.mxu0 %v888
    %2418 = vmatpush1.msra.mxu0 %v887
    %2419 = vmatprep.subr.mxu0 %v884
    %2420 = vmatpush1.msra.mxu0 %v883
    %2421 = vmatprep.subr.mxu0 %v880
    %2422 = vmatpush1.msra.mxu0 %v879
    %2423 = vmatprep.subr.mxu0 %v876
    %2424 = vmatpush1.msra.mxu0 %v875
    %2425 = vmatprep.subr.mxu0 %v872
    %2426 = vmatpush1.msra.mxu0 %v871
    %2427 = vmatprep.subr.mxu0 %v868
    %2428 = vmatpush1.msra.mxu0 %v867
    %2429 = vmatprep.subr.mxu0 %v864
    %2430 = vmatpush1.msra.mxu0 %v863
    %2431 = vmatprep.subr.mxu0 %v860
    %2432 = vmatpush1.msra.mxu0 %v859
    %2433 = vmatprep.subr.mxu0 %v856
    %2434 = vmatpush1.msra.mxu0 %v855
    %2435 = vmatprep.subr.mxu0 %v852
    %2436 = vmatpush1.msra.mxu0 %v851
    %2437 = vmatprep.subr.mxu0 %v848
    %2438 = vmatpush1.msra.mxu0 %v847
    %2439 = vmatprep.subr.mxu0 %v844
    %2440 = vmatpush1.msra.mxu0 %v843
    %2441 = vmatprep.subr.mxu0 %v840
    %2442 = vmatpush1.msra.mxu0 %v839
    %2443 = vmatprep.subr.mxu0 %v836
    %2444 = vmatpush1.msra.mxu0 %v835
    %2445 = vmatprep.subr.mxu0 %v832
    %2446 = vmatpush1.msra.mxu0 %v831
    %2447 = vmatprep.subr.mxu0 0.0
    %2448 = vmatpush2.msra.mxu0 0.0
    %2449 = vmatprep.subr.mxu0 0.0
    %2450 = vmatpush2.msra.mxu0 0.0
    %2451 = vmatprep.subr.mxu0 0.0
    %2452 = vmatpush2.msra.mxu0 0.0
    %2453 = vmatprep.subr.mxu0 0.0
    %2454 = vmatpush2.msra.mxu0 0.0
    %2455 = vmatprep.subr.mxu0 0.0
    %2456 = vmatpush2.msra.mxu0 0.0
    %2457 = vmatprep.subr.mxu0 0.0
    %2458 = vmatpush2.msra.mxu0 0.0
    %2459 = vmatprep.subr.mxu0 0.0
    %2460 = vmatpush2.msra.mxu0 0.0
    %2461 = vmatprep.subr.mxu0 0.0
    %2462 = vmatpush2.msra.mxu0 0.0
    %2463 = vmatprep.subr.mxu0 0.0
    %2464 = vmatpush2.msra.mxu0 0.0
    %2465 = vmatprep.subr.mxu0 0.0
    %2466 = vmatpush2.msra.mxu0 0.0
    %2467 = vmatprep.subr.mxu0 0.0
    %2468 = vmatpush2.msra.mxu0 0.0
    %2469 = vmatprep.subr.mxu0 0.0
    %2470 = vmatpush2.msra.mxu0 0.0
    %2471 = vmatprep.subr.mxu0 0.0
    %2472 = vmatpush2.msra.mxu0 0.0
    %2473 = vmatprep.subr.mxu0 0.0
    %2474 = vmatpush2.msra.mxu0 0.0
    %2475 = vmatprep.subr.mxu0 0.0
    %2476 = vmatpush2.msra.mxu0 0.0
    %2477 = vmatprep.subr.mxu0 0.0
    %2478 = vmatpush2.msra.mxu0 0.0
    %2479 = vmatprep.mubr.f32.mxu0 0.0
    %2480 = vmatmul.mubr.f32.gmra.mxu0 %v2256
    %v2481 = vpop.f32.mrf.mxu0
    %v2482 = vadd.f32 0.0, %v2481
    %v2483 = vpop.f32.mrf.mxu0
    %v2484 = vadd.f32 0.0, %v2483
    %2485 = vdwg.mxu0
    %2486 = vmatprep.subr.mxu0 %v894
    %2487 = vmatpush1.msra.mxu0 %v893
    %2488 = vmatprep.subr.mxu0 %v890
    %2489 = vmatpush1.msra.mxu0 %v889
    %2490 = vmatprep.subr.mxu0 %v886
    %2491 = vmatpush1.msra.mxu0 %v885
    %2492 = vmatprep.subr.mxu0 %v882
    %2493 = vmatpush1.msra.mxu0 %v881
    %2494 = vmatprep.subr.mxu0 %v878
    %2495 = vmatpush1.msra.mxu0 %v877
    %2496 = vmatprep.subr.mxu0 %v874
    %2497 = vmatpush1.msra.mxu0 %v873
    %2498 = vmatprep.subr.mxu0 %v870
    %2499 = vmatpush1.msra.mxu0 %v869
    %2500 = vmatprep.subr.mxu0 %v866
    %2501 = vmatpush1.msra.mxu0 %v865
    %2502 = vmatprep.subr.mxu0 %v862
    %2503 = vmatpush1.msra.mxu0 %v861
    %2504 = vmatprep.subr.mxu0 %v858
    %2505 = vmatpush1.msra.mxu0 %v857
    %2506 = vmatprep.subr.mxu0 %v854
    %2507 = vmatpush1.msra.mxu0 %v853
    %2508 = vmatprep.subr.mxu0 %v850
    %2509 = vmatpush1.msra.mxu0 %v849
    %2510 = vmatprep.subr.mxu0 %v846
    %2511 = vmatpush1.msra.mxu0 %v845
    %2512 = vmatprep.subr.mxu0 %v842
    %2513 = vmatpush1.msra.mxu0 %v841
    %2514 = vmatprep.subr.mxu0 %v838
    %2515 = vmatpush1.msra.mxu0 %v837
    %2516 = vmatprep.subr.mxu0 %v834
    %2517 = vmatpush1.msra.mxu0 %v833
    %2518 = vmatprep.subr.mxu0 0.0
    %2519 = vmatpush2.msra.mxu0 0.0
    %2520 = vmatprep.subr.mxu0 0.0
    %2521 = vmatpush2.msra.mxu0 0.0
    %2522 = vmatprep.subr.mxu0 0.0
    %2523 = vmatpush2.msra.mxu0 0.0
    %2524 = vmatprep.subr.mxu0 0.0
    %2525 = vmatpush2.msra.mxu0 0.0
    %2526 = vmatprep.subr.mxu0 0.0
    %2527 = vmatpush2.msra.mxu0 0.0
    %2528 = vmatprep.subr.mxu0 0.0
    %2529 = vmatpush2.msra.mxu0 0.0
    %2530 = vmatprep.subr.mxu0 0.0
    %2531 = vmatpush2.msra.mxu0 0.0
    %2532 = vmatprep.subr.mxu0 0.0
    %2533 = vmatpush2.msra.mxu0 0.0
    %2534 = vmatprep.subr.mxu0 0.0
    %2535 = vmatpush2.msra.mxu0 0.0
    %2536 = vmatprep.subr.mxu0 0.0
    %2537 = vmatpush2.msra.mxu0 0.0
    %2538 = vmatprep.subr.mxu0 0.0
    %2539 = vmatpush2.msra.mxu0 0.0
    %2540 = vmatprep.subr.mxu0 0.0
    %2541 = vmatpush2.msra.mxu0 0.0
    %2542 = vmatprep.subr.mxu0 0.0
    %2543 = vmatpush2.msra.mxu0 0.0
    %2544 = vmatprep.subr.mxu0 0.0
    %2545 = vmatpush2.msra.mxu0 0.0
    %2546 = vmatprep.subr.mxu0 0.0
    %2547 = vmatpush2.msra.mxu0 0.0
    %2548 = vmatprep.subr.mxu0 0.0
    %2549 = vmatpush2.msra.mxu0 0.0
    %2550 = vmatprep.mubr.f32.mxu0 0.0
    %2551 = vmatmul.mubr.f32.gmra.mxu0 %v2256
    %v2552 = vpop.f32.mrf.mxu0
    %v2553 = vadd.f32 0.0, %v2552
    %v2554 = vpop.f32.mrf.mxu0
    %v2555 = vadd.f32 0.0, %v2554
    %2556 = vdwg.mxu0
    %v2557 = vadd.f32 %v2411, %v2482
    %v2558 = vadd.f32 %v2412, %v2484
    %v2559 = vadd.f32 %v2413, %v2553
    %v2560 = vadd.f32 %v2414, %v2555
    %v2561 = vmul.f32 %v2407, 0.5
    %v2562 = vtanh.pop %v2561
    %v2563 = vmul.f32 %v2562, 0.5
    %v2564 = vadd.f32 %v2563, 0.5
    %v2565 = vmul.f32 %v2408, 0.5
    %v2566 = vtanh.pop %v2565
    %v2567 = vmul.f32 %v2566, 0.5
    %v2568 = vadd.f32 %v2567, 0.5
    %v2569 = vtanh.pop %v2409
    %v2570 = vmul.f32 %v2410, 0.5
    %v2571 = vtanh.pop %v2570
    %v2572 = vmul.f32 %v2571, 0.5
    %v2573 = vadd.f32 %v2572, 0.5
    %v2574 = vmul.f32 %v2568, %v2236
    %v2575 = vmul.f32 %v2564, %v2569
    %v2576 = vadd.f32 %v2574, %v2575
    %v2577 = vtanh.pop %v2576
    %v2578 = vmul.f32 %v2573, %v2577
    %v2579 = vmul.f32 %v2557, 0.5
    %v2580 = vtanh.pop %v2579
    %v2581 = vmul.f32 %v2580, 0.5
    %v2582 = vadd.f32 %v2581, 0.5
    %v2583 = vmul.f32 %v2558, 0.5
    %v2584 = vtanh.pop %v2583
    %v2585 = vmul.f32 %v2584, 0.5
    %v2586 = vadd.f32 %v2585, 0.5
    %v2587 = vtanh.pop %v2559
    %v2588 = vmul.f32 %v2560, 0.5
    %v2589 = vtanh.pop %v2588
    %v2590 = vmul.f32 %v2589, 0.5
    %v2591 = vadd.f32 %v2590, 0.5
    %v2592 = vmul.f32 %v2586, %v2254
    %v2593 = vmul.f32 %v2582, %v2587
    %v2594 = vadd.f32 %v2592, %v2593
    %v2595 = vtanh.pop %v2594
    %v2596 = vmul.f32 %v2591, %v2595
    %2597 = vst [vmem:[%s2259] sm:$0xff] %v2578
    %2598 = vst [vmem:[%s2257 + $0x8] sm:$0xff] %v2596
    %v2599 = vld [vmem:[%s1728] sm:$0xff]
    %v2600 = vld [vmem:[%s1728 + $0x8] sm:$0xff]
    %v2601 = vld [vmem:[%s1728 + $0x10] sm:$0xff]
    %v2602 = vld [vmem:[%s1728 + $0x18] sm:$0xff]
    %2603 = vmatprep.subr.mxu0 %v828
    %2604 = vmatpush1.msra.mxu0 %v827
    %2605 = vmatprep.subr.mxu0 %v824
    %2606 = vmatpush1.msra.mxu0 %v823
    %2607 = vmatprep.subr.mxu0 %v820
    %2608 = vmatpush1.msra.mxu0 %v819
    %2609 = vmatprep.subr.mxu0 %v816
    %2610 = vmatpush1.msra.mxu0 %v815
    %2611 = vmatprep.subr.mxu0 %v812
    %2612 = vmatpush1.msra.mxu0 %v811
    %2613 = vmatprep.subr.mxu0 %v808
    %2614 = vmatpush1.msra.mxu0 %v807
    %2615 = vmatprep.subr.mxu0 %v804
    %2616 = vmatpush1.msra.mxu0 %v803
    %2617 = vmatprep.subr.mxu0 %v800
    %2618 = vmatpush1.msra.mxu0 %v799
    %2619 = vmatprep.subr.mxu0 %v796
    %2620 = vmatpush1.msra.mxu0 %v795
    %2621 = vmatprep.subr.mxu0 %v792
    %2622 = vmatpush1.msra.mxu0 %v791
    %2623 = vmatprep.subr.mxu0 %v788
    %2624 = vmatpush1.msra.mxu0 %v787
    %2625 = vmatprep.subr.mxu0 %v784
    %2626 = vmatpush1.msra.mxu0 %v783
    %2627 = vmatprep.subr.mxu0 %v780
    %2628 = vmatpush1.msra.mxu0 %v779
    %2629 = vmatprep.subr.mxu0 %v776
    %2630 = vmatpush1.msra.mxu0 %v775
    %2631 = vmatprep.subr.mxu0 %v772
    %2632 = vmatpush1.msra.mxu0 %v771
    %2633 = vmatprep.subr.mxu0 %v768
    %2634 = vmatpush1.msra.mxu0 %v767
    %2635 = vmatprep.subr.mxu0 0.0
    %2636 = vmatpush2.msra.mxu0 0.0
    %2637 = vmatprep.subr.mxu0 0.0
    %2638 = vmatpush2.msra.mxu0 0.0
    %2639 = vmatprep.subr.mxu0 0.0
    %2640 = vmatpush2.msra.mxu0 0.0
    %2641 = vmatprep.subr.mxu0 0.0
    %2642 = vmatpush2.msra.mxu0 0.0
    %2643 = vmatprep.subr.mxu0 0.0
    %2644 = vmatpush2.msra.mxu0 0.0
    %2645 = vmatprep.subr.mxu0 0.0
    %2646 = vmatpush2.msra.mxu0 0.0
    %2647 = vmatprep.subr.mxu0 0.0
    %2648 = vmatpush2.msra.mxu0 0.0
    %2649 = vmatprep.subr.mxu0 0.0
    %2650 = vmatpush2.msra.mxu0 0.0
    %2651 = vmatprep.subr.mxu0 0.0
    %2652 = vmatpush2.msra.mxu0 0.0
    %2653 = vmatprep.subr.mxu0 0.0
    %2654 = vmatpush2.msra.mxu0 0.0
    %2655 = vmatprep.subr.mxu0 0.0
    %2656 = vmatpush2.msra.mxu0 0.0
    %2657 = vmatprep.subr.mxu0 0.0
    %2658 = vmatpush2.msra.mxu0 0.0
    %2659 = vmatprep.subr.mxu0 0.0
    %2660 = vmatpush2.msra.mxu0 0.0
    %2661 = vmatprep.subr.mxu0 0.0
    %2662 = vmatpush2.msra.mxu0 0.0
    %2663 = vmatprep.subr.mxu0 0.0
    %2664 = vmatpush2.msra.mxu0 0.0
    %2665 = vmatprep.subr.mxu0 0.0
    %2666 = vmatpush2.msra.mxu0 0.0
    %2667 = vmatprep.mubr.f32.mxu0 0.0
    %2668 = vmatmul.mubr.f32.gmra.mxu0 %v2578
    %v2669 = vpop.f32.mrf.mxu0
    %v2670 = vadd.f32 0.0, %v2669
    %v2671 = vpop.f32.mrf.mxu0
    %v2672 = vadd.f32 0.0, %v2671
    %2673 = vdwg.mxu0
    %2674 = vmatprep.subr.mxu0 %v830
    %2675 = vmatpush1.msra.mxu0 %v829
    %2676 = vmatprep.subr.mxu0 %v826
    %2677 = vmatpush1.msra.mxu0 %v825
    %2678 = vmatprep.subr.mxu0 %v822
    %2679 = vmatpush1.msra.mxu0 %v821
    %2680 = vmatprep.subr.mxu0 %v818
    %2681 = vmatpush1.msra.mxu0 %v817
    %2682 = vmatprep.subr.mxu0 %v814
    %2683 = vmatpush1.msra.mxu0 %v813
    %2684 = vmatprep.subr.mxu0 %v810
    %2685 = vmatpush1.msra.mxu0 %v809
    %2686 = vmatprep.subr.mxu0 %v806
    %2687 = vmatpush1.msra.mxu0 %v805
    %2688 = vmatprep.subr.mxu0 %v802
    %2689 = vmatpush1.msra.mxu0 %v801
    %2690 = vmatprep.subr.mxu0 %v798
    %2691 = vmatpush1.msra.mxu0 %v797
    %2692 = vmatprep.subr.mxu0 %v794
    %2693 = vmatpush1.msra.mxu0 %v793
    %2694 = vmatprep.subr.mxu0 %v790
    %2695 = vmatpush1.msra.mxu0 %v789
    %2696 = vmatprep.subr.mxu0 %v786
    %2697 = vmatpush1.msra.mxu0 %v785
    %2698 = vmatprep.subr.mxu0 %v782
    %2699 = vmatpush1.msra.mxu0 %v781
    %2700 = vmatprep.subr.mxu0 %v778
    %2701 = vmatpush1.msra.mxu0 %v777
    %2702 = vmatprep.subr.mxu0 %v774
    %2703 = vmatpush1.msra.mxu0 %v773
    %2704 = vmatprep.subr.mxu0 %v770
    %2705 = vmatpush1.msra.mxu0 %v769
    %2706 = vmatprep.subr.mxu0 0.0
    %2707 = vmatpush2.msra.mxu0 0.0
    %2708 = vmatprep.subr.mxu0 0.0
    %2709 = vmatpush2.msra.mxu0 0.0
    %2710 = vmatprep.subr.mxu0 0.0
    %2711 = vmatpush2.msra.mxu0 0.0
    %2712 = vmatprep.subr.mxu0 0.0
    %2713 = vmatpush2.msra.mxu0 0.0
    %2714 = vmatprep.subr.mxu0 0.0
    %2715 = vmatpush2.msra.mxu0 0.0
    %2716 = vmatprep.subr.mxu0 0.0
    %2717 = vmatpush2.msra.mxu0 0.0
    %2718 = vmatprep.subr.mxu0 0.0
    %2719 = vmatpush2.msra.mxu0 0.0
    %2720 = vmatprep.subr.mxu0 0.0
    %2721 = vmatpush2.msra.mxu0 0.0
    %2722 = vmatprep.subr.mxu0 0.0
    %2723 = vmatpush2.msra.mxu0 0.0
    %2724 = vmatprep.subr.mxu0 0.0
    %2725 = vmatpush2.msra.mxu0 0.0
    %2726 = vmatprep.subr.mxu0 0.0
    %2727 = vmatpush2.msra.mxu0 0.0
    %2728 = vmatprep.subr.mxu0 0.0
    %2729 = vmatpush2.msra.mxu0 0.0
    %2730 = vmatprep.subr.mxu0 0.0
    %2731 = vmatpush2.msra.mxu0 0.0
    %2732 = vmatprep.subr.mxu0 0.0
    %2733 = vmatpush2.msra.mxu0 0.0
    %2734 = vmatprep.subr.mxu0 0.0
    %2735 = vmatpush2.msra.mxu0 0.0
    %2736 = vmatprep.subr.mxu0 0.0
    %2737 = vmatpush2.msra.mxu0 0.0
    %2738 = vmatprep.mubr.f32.mxu0 0.0
    %2739 = vmatmul.mubr.f32.gmra.mxu0 %v2578
    %v2740 = vpop.f32.mrf.mxu0
    %v2741 = vadd.f32 0.0, %v2740
    %v2742 = vpop.f32.mrf.mxu0
    %v2743 = vadd.f32 0.0, %v2742
    %2744 = vdwg.mxu0
    %v2745 = vadd.f32 %v2599, %v2670
    %v2746 = vadd.f32 %v2600, %v2672
    %v2747 = vadd.f32 %v2601, %v2741
    %v2748 = vadd.f32 %v2602, %v2743
    %v2749 = vld [vmem:[%s1577 + $0x20] sm:$0xff]
    %v2750 = vld [vmem:[%s1577 + $0x28] sm:$0xff]
    %v2751 = vld [vmem:[%s1577 + $0x30] sm:$0xff]
    %v2752 = vld [vmem:[%s1577 + $0x38] sm:$0xff]
    %2753 = vmatprep.subr.mxu0 %v892
    %2754 = vmatpush1.msra.mxu0 %v891
    %2755 = vmatprep.subr.mxu0 %v888
    %2756 = vmatpush1.msra.mxu0 %v887
    %2757 = vmatprep.subr.mxu0 %v884
    %2758 = vmatpush1.msra.mxu0 %v883
    %2759 = vmatprep.subr.mxu0 %v880
    %2760 = vmatpush1.msra.mxu0 %v879
    %2761 = vmatprep.subr.mxu0 %v876
    %2762 = vmatpush1.msra.mxu0 %v875
    %2763 = vmatprep.subr.mxu0 %v872
    %2764 = vmatpush1.msra.mxu0 %v871
    %2765 = vmatprep.subr.mxu0 %v868
    %2766 = vmatpush1.msra.mxu0 %v867
    %2767 = vmatprep.subr.mxu0 %v864
    %2768 = vmatpush1.msra.mxu0 %v863
    %2769 = vmatprep.subr.mxu0 %v860
    %2770 = vmatpush1.msra.mxu0 %v859
    %2771 = vmatprep.subr.mxu0 %v856
    %2772 = vmatpush1.msra.mxu0 %v855
    %2773 = vmatprep.subr.mxu0 %v852
    %2774 = vmatpush1.msra.mxu0 %v851
    %2775 = vmatprep.subr.mxu0 %v848
    %2776 = vmatpush1.msra.mxu0 %v847
    %2777 = vmatprep.subr.mxu0 %v844
    %2778 = vmatpush1.msra.mxu0 %v843
    %2779 = vmatprep.subr.mxu0 %v840
    %2780 = vmatpush1.msra.mxu0 %v839
    %2781 = vmatprep.subr.mxu0 %v836
    %2782 = vmatpush1.msra.mxu0 %v835
    %2783 = vmatprep.subr.mxu0 %v832
    %2784 = vmatpush1.msra.mxu0 %v831
    %2785 = vmatprep.subr.mxu0 0.0
    %2786 = vmatpush2.msra.mxu0 0.0
    %2787 = vmatprep.subr.mxu0 0.0
    %2788 = vmatpush2.msra.mxu0 0.0
    %2789 = vmatprep.subr.mxu0 0.0
    %2790 = vmatpush2.msra.mxu0 0.0
    %2791 = vmatprep.subr.mxu0 0.0
    %2792 = vmatpush2.msra.mxu0 0.0
    %2793 = vmatprep.subr.mxu0 0.0
    %2794 = vmatpush2.msra.mxu0 0.0
    %2795 = vmatprep.subr.mxu0 0.0
    %2796 = vmatpush2.msra.mxu0 0.0
    %2797 = vmatprep.subr.mxu0 0.0
    %2798 = vmatpush2.msra.mxu0 0.0
    %2799 = vmatprep.subr.mxu0 0.0
    %2800 = vmatpush2.msra.mxu0 0.0
    %2801 = vmatprep.subr.mxu0 0.0
    %2802 = vmatpush2.msra.mxu0 0.0
    %2803 = vmatprep.subr.mxu0 0.0
    %2804 = vmatpush2.msra.mxu0 0.0
    %2805 = vmatprep.subr.mxu0 0.0
    %2806 = vmatpush2.msra.mxu0 0.0
    %2807 = vmatprep.subr.mxu0 0.0
    %2808 = vmatpush2.msra.mxu0 0.0
    %2809 = vmatprep.subr.mxu0 0.0
    %2810 = vmatpush2.msra.mxu0 0.0
    %2811 = vmatprep.subr.mxu0 0.0
    %2812 = vmatpush2.msra.mxu0 0.0
    %2813 = vmatprep.subr.mxu0 0.0
    %2814 = vmatpush2.msra.mxu0 0.0
    %2815 = vmatprep.subr.mxu0 0.0
    %2816 = vmatpush2.msra.mxu0 0.0
    %2817 = vmatprep.mubr.f32.mxu0 0.0
    %2818 = vmatmul.mubr.f32.gmra.mxu0 %v2596
    %v2819 = vpop.f32.mrf.mxu0
    %v2820 = vadd.f32 0.0, %v2819
    %v2821 = vpop.f32.mrf.mxu0
    %v2822 = vadd.f32 0.0, %v2821
    %2823 = vdwg.mxu0
    %2824 = vmatprep.subr.mxu0 %v894
    %2825 = vmatpush1.msra.mxu0 %v893
    %2826 = vmatprep.subr.mxu0 %v890
    %2827 = vmatpush1.msra.mxu0 %v889
    %2828 = vmatprep.subr.mxu0 %v886
    %2829 = vmatpush1.msra.mxu0 %v885
    %2830 = vmatprep.subr.mxu0 %v882
    %2831 = vmatpush1.msra.mxu0 %v881
    %2832 = vmatprep.subr.mxu0 %v878
    %2833 = vmatpush1.msra.mxu0 %v877
    %2834 = vmatprep.subr.mxu0 %v874
    %2835 = vmatpush1.msra.mxu0 %v873
    %2836 = vmatprep.subr.mxu0 %v870
    %2837 = vmatpush1.msra.mxu0 %v869
    %2838 = vmatprep.subr.mxu0 %v866
    %2839 = vmatpush1.msra.mxu0 %v865
    %2840 = vmatprep.subr.mxu0 %v862
    %2841 = vmatpush1.msra.mxu0 %v861
    %2842 = vmatprep.subr.mxu0 %v858
    %2843 = vmatpush1.msra.mxu0 %v857
    %2844 = vmatprep.subr.mxu0 %v854
    %2845 = vmatpush1.msra.mxu0 %v853
    %2846 = vmatprep.subr.mxu0 %v850
    %2847 = vmatpush1.msra.mxu0 %v849
    %2848 = vmatprep.subr.mxu0 %v846
    %2849 = vmatpush1.msra.mxu0 %v845
    %2850 = vmatprep.subr.mxu0 %v842
    %2851 = vmatpush1.msra.mxu0 %v841
    %2852 = vmatprep.subr.mxu0 %v838
    %2853 = vmatpush1.msra.mxu0 %v837
    %2854 = vmatprep.subr.mxu0 %v834
    %2855 = vmatpush1.msra.mxu0 %v833
    %2856 = vmatprep.subr.mxu0 0.0
    %2857 = vmatpush2.msra.mxu0 0.0
    %2858 = vmatprep.subr.mxu0 0.0
    %2859 = vmatpush2.msra.mxu0 0.0
    %2860 = vmatprep.subr.mxu0 0.0
    %2861 = vmatpush2.msra.mxu0 0.0
    %2862 = vmatprep.subr.mxu0 0.0
    %2863 = vmatpush2.msra.mxu0 0.0
    %2864 = vmatprep.subr.mxu0 0.0
    %2865 = vmatpush2.msra.mxu0 0.0
    %2866 = vmatprep.subr.mxu0 0.0
    %2867 = vmatpush2.msra.mxu0 0.0
    %2868 = vmatprep.subr.mxu0 0.0
    %2869 = vmatpush2.msra.mxu0 0.0
    %2870 = vmatprep.subr.mxu0 0.0
    %2871 = vmatpush2.msra.mxu0 0.0
    %2872 = vmatprep.subr.mxu0 0.0
    %2873 = vmatpush2.msra.mxu0 0.0
    %2874 = vmatprep.subr.mxu0 0.0
    %2875 = vmatpush2.msra.mxu0 0.0
    %2876 = vmatprep.subr.mxu0 0.0
    %2877 = vmatpush2.msra.mxu0 0.0
    %2878 = vmatprep.subr.mxu0 0.0
    %2879 = vmatpush2.msra.mxu0 0.0
    %2880 = vmatprep.subr.mxu0 0.0
    %2881 = vmatpush2.msra.mxu0 0.0
    %2882 = vmatprep.subr.mxu0 0.0
    %2883 = vmatpush2.msra.mxu0 0.0
    %2884 = vmatprep.subr.mxu0 0.0
    %2885 = vmatpush2.msra.mxu0 0.0
    %2886 = vmatprep.subr.mxu0 0.0
    %2887 = vmatpush2.msra.mxu0 0.0
    %2888 = vmatprep.mubr.f32.mxu0 0.0
    %2889 = vmatmul.mubr.f32.gmra.mxu0 %v2596
    %v2890 = vpop.f32.mrf.mxu0
    %v2891 = vadd.f32 0.0, %v2890
    %v2892 = vpop.f32.mrf.mxu0
    %v2893 = vadd.f32 0.0, %v2892
    %2894 = vdwg.mxu0
    %v2895 = vadd.f32 %v2749, %v2820
    %v2896 = vadd.f32 %v2750, %v2822
    %v2897 = vadd.f32 %v2751, %v2891
    %v2898 = vadd.f32 %v2752, %v2893
    %v2899 = vmul.f32 %v2745, 0.5
    %v2900 = vtanh.pop %v2899
    %v2901 = vmul.f32 %v2900, 0.5
    %v2902 = vadd.f32 %v2901, 0.5
    %v2903 = vmul.f32 %v2746, 0.5
    %v2904 = vtanh.pop %v2903
    %v2905 = vmul.f32 %v2904, 0.5
    %v2906 = vadd.f32 %v2905, 0.5
    %v2907 = vtanh.pop %v2747
    %v2908 = vmul.f32 %v2748, 0.5
    %v2909 = vtanh.pop %v2908
    %v2910 = vmul.f32 %v2909, 0.5
    %v2911 = vadd.f32 %v2910, 0.5
    %v2912 = vmul.f32 %v2906, %v2576
    %v2913 = vmul.f32 %v2902, %v2907
    %v2914 = vadd.f32 %v2912, %v2913
    %v2915 = vtanh.pop %v2914
    %v2916 = vmul.f32 %v2911, %v2915
    %v2917 = vmul.f32 %v2895, 0.5
    %v2918 = vtanh.pop %v2917
    %v2919 = vmul.f32 %v2918, 0.5
    %v2920 = vadd.f32 %v2919, 0.5
    %v2921 = vmul.f32 %v2896, 0.5
    %v2922 = vtanh.pop %v2921
    %v2923 = vmul.f32 %v2922, 0.5
    %v2924 = vadd.f32 %v2923, 0.5
    %v2925 = vtanh.pop %v2897
    %v2926 = vmul.f32 %v2898, 0.5
    %v2927 = vtanh.pop %v2926
    %v2928 = vmul.f32 %v2927, 0.5
    %v2929 = vadd.f32 %v2928, 0.5
    %v2930 = vmul.f32 %v2924, %v2594
    %v2931 = vmul.f32 %v2920, %v2925
    %v2932 = vadd.f32 %v2930, %v2931
    %v2933 = vtanh.pop %v2932
    %v2934 = vmul.f32 %v2929, %v2933
    %2935 = vst [vmem:[%s1917] sm:$0xff] %v2916
    %2936 = vst [vmem:[%s1915 + $0x8] sm:$0xff] %v2934
    %v2937 = vld [vmem:[%s1386] sm:$0xff]
    %v2938 = vld [vmem:[%s1386 + $0x8] sm:$0xff]
    %v2939 = vld [vmem:[%s1386 + $0x10] sm:$0xff]
    %v2940 = vld [vmem:[%s1386 + $0x18] sm:$0xff]
    %2941 = vmatprep.subr.mxu0 %v828
    %2942 = vmatpush1.msra.mxu0 %v827
    %2943 = vmatprep.subr.mxu0 %v824
    %2944 = vmatpush1.msra.mxu0 %v823
    %2945 = vmatprep.subr.mxu0 %v820
    %2946 = vmatpush1.msra.mxu0 %v819
    %2947 = vmatprep.subr.mxu0 %v816
    %2948 = vmatpush1.msra.mxu0 %v815
    %2949 = vmatprep.subr.mxu0 %v812
    %2950 = vmatpush1.msra.mxu0 %v811
    %2951 = vmatprep.subr.mxu0 %v808
    %2952 = vmatpush1.msra.mxu0 %v807
    %2953 = vmatprep.subr.mxu0 %v804
    %2954 = vmatpush1.msra.mxu0 %v803
    %2955 = vmatprep.subr.mxu0 %v800
    %2956 = vmatpush1.msra.mxu0 %v799
    %2957 = vmatprep.subr.mxu0 %v796
    %2958 = vmatpush1.msra.mxu0 %v795
    %2959 = vmatprep.subr.mxu0 %v792
    %2960 = vmatpush1.msra.mxu0 %v791
    %2961 = vmatprep.subr.mxu0 %v788
    %2962 = vmatpush1.msra.mxu0 %v787
    %2963 = vmatprep.subr.mxu0 %v784
    %2964 = vmatpush1.msra.mxu0 %v783
    %2965 = vmatprep.subr.mxu0 %v780
    %2966 = vmatpush1.msra.mxu0 %v779
    %2967 = vmatprep.subr.mxu0 %v776
    %2968 = vmatpush1.msra.mxu0 %v775
    %2969 = vmatprep.subr.mxu0 %v772
    %2970 = vmatpush1.msra.mxu0 %v771
    %2971 = vmatprep.subr.mxu0 %v768
    %2972 = vmatpush1.msra.mxu0 %v767
    %2973 = vmatprep.subr.mxu0 0.0
    %2974 = vmatpush2.msra.mxu0 0.0
    %2975 = vmatprep.subr.mxu0 0.0
    %2976 = vmatpush2.msra.mxu0 0.0
    %2977 = vmatprep.subr.mxu0 0.0
    %2978 = vmatpush2.msra.mxu0 0.0
    %2979 = vmatprep.subr.mxu0 0.0
    %2980 = vmatpush2.msra.mxu0 0.0
    %2981 = vmatprep.subr.mxu0 0.0
    %2982 = vmatpush2.msra.mxu0 0.0
    %2983 = vmatprep.subr.mxu0 0.0
    %2984 = vmatpush2.msra.mxu0 0.0
    %2985 = vmatprep.subr.mxu0 0.0
    %2986 = vmatpush2.msra.mxu0 0.0
    %2987 = vmatprep.subr.mxu0 0.0
    %2988 = vmatpush2.msra.mxu0 0.0
    %2989 = vmatprep.subr.mxu0 0.0
    %2990 = vmatpush2.msra.mxu0 0.0
    %2991 = vmatprep.subr.mxu0 0.0
    %2992 = vmatpush2.msra.mxu0 0.0
    %2993 = vmatprep.subr.mxu0 0.0
    %2994 = vmatpush2.msra.mxu0 0.0
    %2995 = vmatprep.subr.mxu0 0.0
    %2996 = vmatpush2.msra.mxu0 0.0
    %2997 = vmatprep.subr.mxu0 0.0
    %2998 = vmatpush2.msra.mxu0 0.0
    %2999 = vmatprep.subr.mxu0 0.0
    %3000 = vmatpush2.msra.mxu0 0.0
    %3001 = vmatprep.subr.mxu0 0.0
    %3002 = vmatpush2.msra.mxu0 0.0
    %3003 = vmatprep.subr.mxu0 0.0
    %3004 = vmatpush2.msra.mxu0 0.0
    %3005 = vmatprep.mubr.f32.mxu0 0.0
    %3006 = vmatmul.mubr.f32.gmra.mxu0 %v2916
    %v3007 = vpop.f32.mrf.mxu0
    %v3008 = vadd.f32 0.0, %v3007
    %v3009 = vpop.f32.mrf.mxu0
    %v3010 = vadd.f32 0.0, %v3009
    %3011 = vdwg.mxu0
    %3012 = vmatprep.subr.mxu0 %v830
    %3013 = vmatpush1.msra.mxu0 %v829
    %3014 = vmatprep.subr.mxu0 %v826
    %3015 = vmatpush1.msra.mxu0 %v825
    %3016 = vmatprep.subr.mxu0 %v822
    %3017 = vmatpush1.msra.mxu0 %v821
    %3018 = vmatprep.subr.mxu0 %v818
    %3019 = vmatpush1.msra.mxu0 %v817
    %3020 = vmatprep.subr.mxu0 %v814
    %3021 = vmatpush1.msra.mxu0 %v813
    %3022 = vmatprep.subr.mxu0 %v810
    %3023 = vmatpush1.msra.mxu0 %v809
    %3024 = vmatprep.subr.mxu0 %v806
    %3025 = vmatpush1.msra.mxu0 %v805
    %3026 = vmatprep.subr.mxu0 %v802
    %3027 = vmatpush1.msra.mxu0 %v801
    %3028 = vmatprep.subr.mxu0 %v798
    %3029 = vmatpush1.msra.mxu0 %v797
    %3030 = vmatprep.subr.mxu0 %v794
    %3031 = vmatpush1.msra.mxu0 %v793
    %3032 = vmatprep.subr.mxu0 %v790
    %3033 = vmatpush1.msra.mxu0 %v789
    %3034 = vmatprep.subr.mxu0 %v786
    %3035 = vmatpush1.msra.mxu0 %v785
    %3036 = vmatprep.subr.mxu0 %v782
    %3037 = vmatpush1.msra.mxu0 %v781
    %3038 = vmatprep.subr.mxu0 %v778
    %3039 = vmatpush1.msra.mxu0 %v777
    %3040 = vmatprep.subr.mxu0 %v774
    %3041 = vmatpush1.msra.mxu0 %v773
    %3042 = vmatprep.subr.mxu0 %v770
    %3043 = vmatpush1.msra.mxu0 %v769
    %3044 = vmatprep.subr.mxu0 0.0
    %3045 = vmatpush2.msra.mxu0 0.0
    %3046 = vmatprep.subr.mxu0 0.0
    %3047 = vmatpush2.msra.mxu0 0.0
    %3048 = vmatprep.subr.mxu0 0.0
    %3049 = vmatpush2.msra.mxu0 0.0
    %3050 = vmatprep.subr.mxu0 0.0
    %3051 = vmatpush2.msra.mxu0 0.0
    %3052 = vmatprep.subr.mxu0 0.0
    %3053 = vmatpush2.msra.mxu0 0.0
    %3054 = vmatprep.subr.mxu0 0.0
    %3055 = vmatpush2.msra.mxu0 0.0
    %3056 = vmatprep.subr.mxu0 0.0
    %3057 = vmatpush2.msra.mxu0 0.0
    %3058 = vmatprep.subr.mxu0 0.0
    %3059 = vmatpush2.msra.mxu0 0.0
    %3060 = vmatprep.subr.mxu0 0.0
    %3061 = vmatpush2.msra.mxu0 0.0
    %3062 = vmatprep.subr.mxu0 0.0
    %3063 = vmatpush2.msra.mxu0 0.0
    %3064 = vmatprep.subr.mxu0 0.0
    %3065 = vmatpush2.msra.mxu0 0.0
    %3066 = vmatprep.subr.mxu0 0.0
    %3067 = vmatpush2.msra.mxu0 0.0
    %3068 = vmatprep.subr.mxu0 0.0
    %3069 = vmatpush2.msra.mxu0 0.0
    %3070 = vmatprep.subr.mxu0 0.0
    %3071 = vmatpush2.msra.mxu0 0.0
    %3072 = vmatprep.subr.mxu0 0.0
    %3073 = vmatpush2.msra.mxu0 0.0
    %3074 = vmatprep.subr.mxu0 0.0
    %3075 = vmatpush2.msra.mxu0 0.0
    %3076 = vmatprep.mubr.f32.mxu0 0.0
    %3077 = vmatmul.mubr.f32.gmra.mxu0 %v2916
    %v3078 = vpop.f32.mrf.mxu0
    %v3079 = vadd.f32 0.0, %v3078
    %v3080 = vpop.f32.mrf.mxu0
    %v3081 = vadd.f32 0.0, %v3080
    %3082 = vdwg.mxu0
    %v3083 = vadd.f32 %v2937, %v3008
    %v3084 = vadd.f32 %v2938, %v3010
    %v3085 = vadd.f32 %v2939, %v3079
    %v3086 = vadd.f32 %v2940, %v3081
    %v3087 = vld [vmem:[%s1235 + $0x20] sm:$0xff]
    %v3088 = vld [vmem:[%s1235 + $0x28] sm:$0xff]
    %v3089 = vld [vmem:[%s1235 + $0x30] sm:$0xff]
    %v3090 = vld [vmem:[%s1235 + $0x38] sm:$0xff]
    %3091 = vmatprep.subr.mxu0 %v892
    %3092 = vmatpush1.msra.mxu0 %v891
    %3093 = vmatprep.subr.mxu0 %v888
    %3094 = vmatpush1.msra.mxu0 %v887
    %3095 = vmatprep.subr.mxu0 %v884
    %3096 = vmatpush1.msra.mxu0 %v883
    %3097 = vmatprep.subr.mxu0 %v880
    %3098 = vmatpush1.msra.mxu0 %v879
    %3099 = vmatprep.subr.mxu0 %v876
    %3100 = vmatpush1.msra.mxu0 %v875
    %3101 = vmatprep.subr.mxu0 %v872
    %3102 = vmatpush1.msra.mxu0 %v871
    %3103 = vmatprep.subr.mxu0 %v868
    %3104 = vmatpush1.msra.mxu0 %v867
    %3105 = vmatprep.subr.mxu0 %v864
    %3106 = vmatpush1.msra.mxu0 %v863
    %3107 = vmatprep.subr.mxu0 %v860
    %3108 = vmatpush1.msra.mxu0 %v859
    %3109 = vmatprep.subr.mxu0 %v856
    %3110 = vmatpush1.msra.mxu0 %v855
    %3111 = vmatprep.subr.mxu0 %v852
    %3112 = vmatpush1.msra.mxu0 %v851
    %3113 = vmatprep.subr.mxu0 %v848
    %3114 = vmatpush1.msra.mxu0 %v847
    %3115 = vmatprep.subr.mxu0 %v844
    %3116 = vmatpush1.msra.mxu0 %v843
    %3117 = vmatprep.subr.mxu0 %v840
    %3118 = vmatpush1.msra.mxu0 %v839
    %3119 = vmatprep.subr.mxu0 %v836
    %3120 = vmatpush1.msra.mxu0 %v835
    %3121 = vmatprep.subr.mxu0 %v832
    %3122 = vmatpush1.msra.mxu0 %v831
    %3123 = vmatprep.subr.mxu0 0.0
    %3124 = vmatpush2.msra.mxu0 0.0
    %3125 = vmatprep.subr.mxu0 0.0
    %3126 = vmatpush2.msra.mxu0 0.0
    %3127 = vmatprep.subr.mxu0 0.0
    %3128 = vmatpush2.msra.mxu0 0.0
    %3129 = vmatprep.subr.mxu0 0.0
    %3130 = vmatpush2.msra.mxu0 0.0
    %3131 = vmatprep.subr.mxu0 0.0
    %3132 = vmatpush2.msra.mxu0 0.0
    %3133 = vmatprep.subr.mxu0 0.0
    %3134 = vmatpush2.msra.mxu0 0.0
    %3135 = vmatprep.subr.mxu0 0.0
    %3136 = vmatpush2.msra.mxu0 0.0
    %3137 = vmatprep.subr.mxu0 0.0
    %3138 = vmatpush2.msra.mxu0 0.0
    %3139 = vmatprep.subr.mxu0 0.0
    %3140 = vmatpush2.msra.mxu0 0.0
    %3141 = vmatprep.subr.mxu0 0.0
    %3142 = vmatpush2.msra.mxu0 0.0
    %3143 = vmatprep.subr.mxu0 0.0
    %3144 = vmatpush2.msra.mxu0 0.0
    %3145 = vmatprep.subr.mxu0 0.0
    %3146 = vmatpush2.msra.mxu0 0.0
    %3147 = vmatprep.subr.mxu0 0.0
    %3148 = vmatpush2.msra.mxu0 0.0
    %3149 = vmatprep.subr.mxu0 0.0
    %3150 = vmatpush2.msra.mxu0 0.0
    %3151 = vmatprep.subr.mxu0 0.0
    %3152 = vmatpush2.msra.mxu0 0.0
    %3153 = vmatprep.subr.mxu0 0.0
    %3154 = vmatpush2.msra.mxu0 0.0
    %3155 = vmatprep.mubr.f32.mxu0 0.0
    %3156 = vmatmul.mubr.f32.gmra.mxu0 %v2934
    %v3157 = vpop.f32.mrf.mxu0
    %v3158 = vadd.f32 0.0, %v3157
    %v3159 = vpop.f32.mrf.mxu0
    %v3160 = vadd.f32 0.0, %v3159
    %3161 = vdwg.mxu0
    %3162 = vmatprep.subr.mxu0 %v894
    %3163 = vmatpush1.msra.mxu0 %v893
    %3164 = vmatprep.subr.mxu0 %v890
    %3165 = vmatpush1.msra.mxu0 %v889
    %3166 = vmatprep.subr.mxu0 %v886
    %3167 = vmatpush1.msra.mxu0 %v885
    %3168 = vmatprep.subr.mxu0 %v882
    %3169 = vmatpush1.msra.mxu0 %v881
    %3170 = vmatprep.subr.mxu0 %v878
    %3171 = vmatpush1.msra.mxu0 %v877
    %3172 = vmatprep.subr.mxu0 %v874
    %3173 = vmatpush1.msra.mxu0 %v873
    %3174 = vmatprep.subr.mxu0 %v870
    %3175 = vmatpush1.msra.mxu0 %v869
    %3176 = vmatprep.subr.mxu0 %v866
    %3177 = vmatpush1.msra.mxu0 %v865
    %3178 = vmatprep.subr.mxu0 %v862
    %3179 = vmatpush1.msra.mxu0 %v861
    %3180 = vmatprep.subr.mxu0 %v858
    %3181 = vmatpush1.msra.mxu0 %v857
    %3182 = vmatprep.subr.mxu0 %v854
    %3183 = vmatpush1.msra.mxu0 %v853
    %3184 = vmatprep.subr.mxu0 %v850
    %3185 = vmatpush1.msra.mxu0 %v849
    %3186 = vmatprep.subr.mxu0 %v846
    %3187 = vmatpush1.msra.mxu0 %v845
    %3188 = vmatprep.subr.mxu0 %v842
    %3189 = vmatpush1.msra.mxu0 %v841
    %3190 = vmatprep.subr.mxu0 %v838
    %3191 = vmatpush1.msra.mxu0 %v837
    %3192 = vmatprep.subr.mxu0 %v834
    %3193 = vmatpush1.msra.mxu0 %v833
    %3194 = vmatprep.subr.mxu0 0.0
    %3195 = vmatpush2.msra.mxu0 0.0
    %3196 = vmatprep.subr.mxu0 0.0
    %3197 = vmatpush2.msra.mxu0 0.0
    %3198 = vmatprep.subr.mxu0 0.0
    %3199 = vmatpush2.msra.mxu0 0.0
    %3200 = vmatprep.subr.mxu0 0.0
    %3201 = vmatpush2.msra.mxu0 0.0
    %3202 = vmatprep.subr.mxu0 0.0
    %3203 = vmatpush2.msra.mxu0 0.0
    %3204 = vmatprep.subr.mxu0 0.0
    %3205 = vmatpush2.msra.mxu0 0.0
    %3206 = vmatprep.subr.mxu0 0.0
    %3207 = vmatpush2.msra.mxu0 0.0
    %3208 = vmatprep.subr.mxu0 0.0
    %3209 = vmatpush2.msra.mxu0 0.0
    %3210 = vmatprep.subr.mxu0 0.0
    %3211 = vmatpush2.msra.mxu0 0.0
    %3212 = vmatprep.subr.mxu0 0.0
    %3213 = vmatpush2.msra.mxu0 0.0
    %3214 = vmatprep.subr.mxu0 0.0
    %3215 = vmatpush2.msra.mxu0 0.0
    %3216 = vmatprep.subr.mxu0 0.0
    %3217 = vmatpush2.msra.mxu0 0.0
    %3218 = vmatprep.subr.mxu0 0.0
    %3219 = vmatpush2.msra.mxu0 0.0
    %3220 = vmatprep.subr.mxu0 0.0
    %3221 = vmatpush2.msra.mxu0 0.0
    %3222 = vmatprep.subr.mxu0 0.0
    %3223 = vmatpush2.msra.mxu0 0.0
    %3224 = vmatprep.subr.mxu0 0.0
    %3225 = vmatpush2.msra.mxu0 0.0
    %3226 = vmatprep.mubr.f32.mxu0 0.0
    %3227 = vmatmul.mubr.f32.gmra.mxu0 %v2934
    %v3228 = vpop.f32.mrf.mxu0
    %v3229 = vadd.f32 0.0, %v3228
    %v3230 = vpop.f32.mrf.mxu0
    %v3231 = vadd.f32 0.0, %v3230
    %3232 = vdwg.mxu0
    %v3233 = vadd.f32 %v3087, %v3158
    %v3234 = vadd.f32 %v3088, %v3160
    %v3235 = vadd.f32 %v3089, %v3229
    %v3236 = vadd.f32 %v3090, %v3231
    %v3237 = vmul.f32 %v3083, 0.5
    %v3238 = vtanh.pop %v3237
    %v3239 = vmul.f32 %v3238, 0.5
    %v3240 = vadd.f32 %v3239, 0.5
    %v3241 = vmul.f32 %v3084, 0.5
    %v3242 = vtanh.pop %v3241
    %v3243 = vmul.f32 %v3242, 0.5
    %v3244 = vadd.f32 %v3243, 0.5
    %v3245 = vtanh.pop %v3085
    %v3246 = vmul.f32 %v3086, 0.5
    %v3247 = vtanh.pop %v3246
    %v3248 = vmul.f32 %v3247, 0.5
    %v3249 = vadd.f32 %v3248, 0.5
    %v3250 = vmul.f32 %v3244, %v2914
    %v3251 = vmul.f32 %v3240, %v3245
    %v3252 = vadd.f32 %v3250, %v3251
    %v3253 = vtanh.pop %v3252
    %v3254 = vmul.f32 %v3249, %v3253
    %v3255 = vmul.f32 %v3233, 0.5
    %v3256 = vtanh.pop %v3255
    %v3257 = vmul.f32 %v3256, 0.5
    %v3258 = vadd.f32 %v3257, 0.5
    %v3259 = vmul.f32 %v3234, 0.5
    %v3260 = vtanh.pop %v3259
    %v3261 = vmul.f32 %v3260, 0.5
    %v3262 = vadd.f32 %v3261, 0.5
    %v3263 = vtanh.pop %v3235
    %v3264 = vmul.f32 %v3236, 0.5
    %v3265 = vtanh.pop %v3264
    %v3266 = vmul.f32 %v3265, 0.5
    %v3267 = vadd.f32 %v3266, 0.5
    %v3268 = vmul.f32 %v3262, %v2932
    %v3269 = vmul.f32 %v3258, %v3263
    %v3270 = vadd.f32 %v3268, %v3269
    %v3271 = vtanh.pop %v3270
    %v3272 = vmul.f32 %v3267, %v3271
    %3273 = vst [vmem:[%s1575] sm:$0xff] %v3254
    %3274 = vst [vmem:[%s1573 + $0x8] sm:$0xff] %v3272
    %v3275 = vld [vmem:[%s1045] sm:$0xff]
    %v3276 = vld [vmem:[%s1045 + $0x8] sm:$0xff]
    %v3277 = vld [vmem:[%s1045 + $0x10] sm:$0xff]
    %v3278 = vld [vmem:[%s1045 + $0x18] sm:$0xff]
    %3279 = vmatprep.subr.mxu0 %v828
    %3280 = vmatpush1.msra.mxu0 %v827
    %3281 = vmatprep.subr.mxu0 %v824
    %3282 = vmatpush1.msra.mxu0 %v823
    %3283 = vmatprep.subr.mxu0 %v820
    %3284 = vmatpush1.msra.mxu0 %v819
    %3285 = vmatprep.subr.mxu0 %v816
    %3286 = vmatpush1.msra.mxu0 %v815
    %3287 = vmatprep.subr.mxu0 %v812
    %3288 = vmatpush1.msra.mxu0 %v811
    %3289 = vmatprep.subr.mxu0 %v808
    %3290 = vmatpush1.msra.mxu0 %v807
    %3291 = vmatprep.subr.mxu0 %v804
    %3292 = vmatpush1.msra.mxu0 %v803
    %3293 = vmatprep.subr.mxu0 %v800
    %3294 = vmatpush1.msra.mxu0 %v799
    %3295 = vmatprep.subr.mxu0 %v796
    %3296 = vmatpush1.msra.mxu0 %v795
    %3297 = vmatprep.subr.mxu0 %v792
    %3298 = vmatpush1.msra.mxu0 %v791
    %3299 = vmatprep.subr.mxu0 %v788
    %3300 = vmatpush1.msra.mxu0 %v787
    %3301 = vmatprep.subr.mxu0 %v784
    %3302 = vmatpush1.msra.mxu0 %v783
    %3303 = vmatprep.subr.mxu0 %v780
    %3304 = vmatpush1.msra.mxu0 %v779
    %3305 = vmatprep.subr.mxu0 %v776
    %3306 = vmatpush1.msra.mxu0 %v775
    %3307 = vmatprep.subr.mxu0 %v772
    %3308 = vmatpush1.msra.mxu0 %v771
    %3309 = vmatprep.subr.mxu0 %v768
    %3310 = vmatpush1.msra.mxu0 %v767
    %3311 = vmatprep.subr.mxu0 0.0
    %3312 = vmatpush2.msra.mxu0 0.0
    %3313 = vmatprep.subr.mxu0 0.0
    %3314 = vmatpush2.msra.mxu0 0.0
    %3315 = vmatprep.subr.mxu0 0.0
    %3316 = vmatpush2.msra.mxu0 0.0
    %3317 = vmatprep.subr.mxu0 0.0
    %3318 = vmatpush2.msra.mxu0 0.0
    %3319 = vmatprep.subr.mxu0 0.0
    %3320 = vmatpush2.msra.mxu0 0.0
    %3321 = vmatprep.subr.mxu0 0.0
    %3322 = vmatpush2.msra.mxu0 0.0
    %3323 = vmatprep.subr.mxu0 0.0
    %3324 = vmatpush2.msra.mxu0 0.0
    %3325 = vmatprep.subr.mxu0 0.0
    %3326 = vmatpush2.msra.mxu0 0.0
    %3327 = vmatprep.subr.mxu0 0.0
    %3328 = vmatpush2.msra.mxu0 0.0
    %3329 = vmatprep.subr.mxu0 0.0
    %3330 = vmatpush2.msra.mxu0 0.0
    %3331 = vmatprep.subr.mxu0 0.0
    %3332 = vmatpush2.msra.mxu0 0.0
    %3333 = vmatprep.subr.mxu0 0.0
    %3334 = vmatpush2.msra.mxu0 0.0
    %3335 = vmatprep.subr.mxu0 0.0
    %3336 = vmatpush2.msra.mxu0 0.0
    %3337 = vmatprep.subr.mxu0 0.0
    %3338 = vmatpush2.msra.mxu0 0.0
    %3339 = vmatprep.subr.mxu0 0.0
    %3340 = vmatpush2.msra.mxu0 0.0
    %3341 = vmatprep.subr.mxu0 0.0
    %3342 = vmatpush2.msra.mxu0 0.0
    %3343 = vmatprep.mubr.f32.mxu0 0.0
    %3344 = vmatmul.mubr.f32.gmra.mxu0 %v3254
    %v3345 = vpop.f32.mrf.mxu0
    %v3346 = vadd.f32 0.0, %v3345
    %v3347 = vpop.f32.mrf.mxu0
    %v3348 = vadd.f32 0.0, %v3347
    %3349 = vdwg.mxu0
    %3350 = vmatprep.subr.mxu0 %v830
    %3351 = vmatpush1.msra.mxu0 %v829
    %3352 = vmatprep.subr.mxu0 %v826
    %3353 = vmatpush1.msra.mxu0 %v825
    %3354 = vmatprep.subr.mxu0 %v822
    %3355 = vmatpush1.msra.mxu0 %v821
    %3356 = vmatprep.subr.mxu0 %v818
    %3357 = vmatpush1.msra.mxu0 %v817
    %3358 = vmatprep.subr.mxu0 %v814
    %3359 = vmatpush1.msra.mxu0 %v813
    %3360 = vmatprep.subr.mxu0 %v810
    %3361 = vmatpush1.msra.mxu0 %v809
    %3362 = vmatprep.subr.mxu0 %v806
    %3363 = vmatpush1.msra.mxu0 %v805
    %3364 = vmatprep.subr.mxu0 %v802
    %3365 = vmatpush1.msra.mxu0 %v801
    %3366 = vmatprep.subr.mxu0 %v798
    %3367 = vmatpush1.msra.mxu0 %v797
    %3368 = vmatprep.subr.mxu0 %v794
    %3369 = vmatpush1.msra.mxu0 %v793
    %3370 = vmatprep.subr.mxu0 %v790
    %3371 = vmatpush1.msra.mxu0 %v789
    %3372 = vmatprep.subr.mxu0 %v786
    %3373 = vmatpush1.msra.mxu0 %v785
    %3374 = vmatprep.subr.mxu0 %v782
    %3375 = vmatpush1.msra.mxu0 %v781
    %3376 = vmatprep.subr.mxu0 %v778
    %3377 = vmatpush1.msra.mxu0 %v777
    %3378 = vmatprep.subr.mxu0 %v774
    %3379 = vmatpush1.msra.mxu0 %v773
    %3380 = vmatprep.subr.mxu0 %v770
    %3381 = vmatpush1.msra.mxu0 %v769
    %3382 = vmatprep.subr.mxu0 0.0
    %3383 = vmatpush2.msra.mxu0 0.0
    %3384 = vmatprep.subr.mxu0 0.0
    %3385 = vmatpush2.msra.mxu0 0.0
    %3386 = vmatprep.subr.mxu0 0.0
    %3387 = vmatpush2.msra.mxu0 0.0
    %3388 = vmatprep.subr.mxu0 0.0
    %3389 = vmatpush2.msra.mxu0 0.0
    %3390 = vmatprep.subr.mxu0 0.0
    %3391 = vmatpush2.msra.mxu0 0.0
    %3392 = vmatprep.subr.mxu0 0.0
    %3393 = vmatpush2.msra.mxu0 0.0
    %3394 = vmatprep.subr.mxu0 0.0
    %3395 = vmatpush2.msra.mxu0 0.0
    %3396 = vmatprep.subr.mxu0 0.0
    %3397 = vmatpush2.msra.mxu0 0.0
    %3398 = vmatprep.subr.mxu0 0.0
    %3399 = vmatpush2.msra.mxu0 0.0
    %3400 = vmatprep.subr.mxu0 0.0
    %3401 = vmatpush2.msra.mxu0 0.0
    %3402 = vmatprep.subr.mxu0 0.0
    %3403 = vmatpush2.msra.mxu0 0.0
    %3404 = vmatprep.subr.mxu0 0.0
    %3405 = vmatpush2.msra.mxu0 0.0
    %3406 = vmatprep.subr.mxu0 0.0
    %3407 = vmatpush2.msra.mxu0 0.0
    %3408 = vmatprep.subr.mxu0 0.0
    %3409 = vmatpush2.msra.mxu0 0.0
    %3410 = vmatprep.subr.mxu0 0.0
    %3411 = vmatpush2.msra.mxu0 0.0
    %3412 = vmatprep.subr.mxu0 0.0
    %3413 = vmatpush2.msra.mxu0 0.0
    %3414 = vmatprep.mubr.f32.mxu0 0.0
    %3415 = vmatmul.mubr.f32.gmra.mxu0 %v3254
    %v3416 = vpop.f32.mrf.mxu0
    %v3417 = vadd.f32 0.0, %v3416
    %v3418 = vpop.f32.mrf.mxu0
    %v3419 = vadd.f32 0.0, %v3418
    %3420 = vdwg.mxu0
    %v3421 = vadd.f32 %v3275, %v3346
    %v3422 = vadd.f32 %v3276, %v3348
    %v3423 = vadd.f32 %v3277, %v3417
    %v3424 = vadd.f32 %v3278, %v3419
    %v3425 = vld [vmem:[#allocation2 + $0x20] sm:$0xff]
    %v3426 = vld [vmem:[#allocation2 + $0x28] sm:$0xff]
    %v3427 = vld [vmem:[#allocation2 + $0x30] sm:$0xff]
    %v3428 = vld [vmem:[#allocation2 + $0x38] sm:$0xff]
    %3429 = vmatprep.subr.mxu0 %v892
    %3430 = vmatpush1.msra.mxu0 %v891
    %3431 = vmatprep.subr.mxu0 %v888
    %3432 = vmatpush1.msra.mxu0 %v887
    %3433 = vmatprep.subr.mxu0 %v884
    %3434 = vmatpush1.msra.mxu0 %v883
    %3435 = vmatprep.subr.mxu0 %v880
    %3436 = vmatpush1.msra.mxu0 %v879
    %3437 = vmatprep.subr.mxu0 %v876
    %3438 = vmatpush1.msra.mxu0 %v875
    %3439 = vmatprep.subr.mxu0 %v872
    %3440 = vmatpush1.msra.mxu0 %v871
    %3441 = vmatprep.subr.mxu0 %v868
    %3442 = vmatpush1.msra.mxu0 %v867
    %3443 = vmatprep.subr.mxu0 %v864
    %3444 = vmatpush1.msra.mxu0 %v863
    %3445 = vmatprep.subr.mxu0 %v860
    %3446 = vmatpush1.msra.mxu0 %v859
    %3447 = vmatprep.subr.mxu0 %v856
    %3448 = vmatpush1.msra.mxu0 %v855
    %3449 = vmatprep.subr.mxu0 %v852
    %3450 = vmatpush1.msra.mxu0 %v851
    %3451 = vmatprep.subr.mxu0 %v848
    %3452 = vmatpush1.msra.mxu0 %v847
    %3453 = vmatprep.subr.mxu0 %v844
    %3454 = vmatpush1.msra.mxu0 %v843
    %3455 = vmatprep.subr.mxu0 %v840
    %3456 = vmatpush1.msra.mxu0 %v839
    %3457 = vmatprep.subr.mxu0 %v836
    %3458 = vmatpush1.msra.mxu0 %v835
    %3459 = vmatprep.subr.mxu0 %v832
    %3460 = vmatpush1.msra.mxu0 %v831
    %3461 = vmatprep.subr.mxu0 0.0
    %3462 = vmatpush2.msra.mxu0 0.0
    %3463 = vmatprep.subr.mxu0 0.0
    %3464 = vmatpush2.msra.mxu0 0.0
    %3465 = vmatprep.subr.mxu0 0.0
    %3466 = vmatpush2.msra.mxu0 0.0
    %3467 = vmatprep.subr.mxu0 0.0
    %3468 = vmatpush2.msra.mxu0 0.0
    %3469 = vmatprep.subr.mxu0 0.0
    %3470 = vmatpush2.msra.mxu0 0.0
    %3471 = vmatprep.subr.mxu0 0.0
    %3472 = vmatpush2.msra.mxu0 0.0
    %3473 = vmatprep.subr.mxu0 0.0
    %3474 = vmatpush2.msra.mxu0 0.0
    %3475 = vmatprep.subr.mxu0 0.0
    %3476 = vmatpush2.msra.mxu0 0.0
    %3477 = vmatprep.subr.mxu0 0.0
    %3478 = vmatpush2.msra.mxu0 0.0
    %3479 = vmatprep.subr.mxu0 0.0
    %3480 = vmatpush2.msra.mxu0 0.0
    %3481 = vmatprep.subr.mxu0 0.0
    %3482 = vmatpush2.msra.mxu0 0.0
    %3483 = vmatprep.subr.mxu0 0.0
    %3484 = vmatpush2.msra.mxu0 0.0
    %3485 = vmatprep.subr.mxu0 0.0
    %3486 = vmatpush2.msra.mxu0 0.0
    %3487 = vmatprep.subr.mxu0 0.0
    %3488 = vmatpush2.msra.mxu0 0.0
    %3489 = vmatprep.subr.mxu0 0.0
    %3490 = vmatpush2.msra.mxu0 0.0
    %3491 = vmatprep.subr.mxu0 0.0
    %3492 = vmatpush2.msra.mxu0 0.0
    %3493 = vmatprep.mubr.f32.mxu0 0.0
    %3494 = vmatmul.mubr.f32.gmra.mxu0 %v3272
    %v3495 = vpop.f32.mrf.mxu0
    %v3496 = vadd.f32 0.0, %v3495
    %v3497 = vpop.f32.mrf.mxu0
    %v3498 = vadd.f32 0.0, %v3497
    %3499 = vdwg.mxu0
    %3500 = vmatprep.subr.mxu0 %v894
    %3501 = vmatpush1.msra.mxu0 %v893
    %3502 = vmatprep.subr.mxu0 %v890
    %3503 = vmatpush1.msra.mxu0 %v889
    %3504 = vmatprep.subr.mxu0 %v886
    %3505 = vmatpush1.msra.mxu0 %v885
    %3506 = vmatprep.subr.mxu0 %v882
    %3507 = vmatpush1.msra.mxu0 %v881
    %3508 = vmatprep.subr.mxu0 %v878
    %3509 = vmatpush1.msra.mxu0 %v877
    %3510 = vmatprep.subr.mxu0 %v874
    %3511 = vmatpush1.msra.mxu0 %v873
    %3512 = vmatprep.subr.mxu0 %v870
    %3513 = vmatpush1.msra.mxu0 %v869
    %3514 = vmatprep.subr.mxu0 %v866
    %3515 = vmatpush1.msra.mxu0 %v865
    %3516 = vmatprep.subr.mxu0 %v862
    %3517 = vmatpush1.msra.mxu0 %v861
    %3518 = vmatprep.subr.mxu0 %v858
    %3519 = vmatpush1.msra.mxu0 %v857
    %3520 = vmatprep.subr.mxu0 %v854
    %3521 = vmatpush1.msra.mxu0 %v853
    %3522 = vmatprep.subr.mxu0 %v850
    %3523 = vmatpush1.msra.mxu0 %v849
    %3524 = vmatprep.subr.mxu0 %v846
    %3525 = vmatpush1.msra.mxu0 %v845
    %3526 = vmatprep.subr.mxu0 %v842
    %3527 = vmatpush1.msra.mxu0 %v841
    %3528 = vmatprep.subr.mxu0 %v838
    %3529 = vmatpush1.msra.mxu0 %v837
    %3530 = vmatprep.subr.mxu0 %v834
    %3531 = vmatpush1.msra.mxu0 %v833
    %3532 = vmatprep.subr.mxu0 0.0
    %3533 = vmatpush2.msra.mxu0 0.0
    %3534 = vmatprep.subr.mxu0 0.0
    %3535 = vmatpush2.msra.mxu0 0.0
    %3536 = vmatprep.subr.mxu0 0.0
    %3537 = vmatpush2.msra.mxu0 0.0
    %3538 = vmatprep.subr.mxu0 0.0
    %3539 = vmatpush2.msra.mxu0 0.0
    %3540 = vmatprep.subr.mxu0 0.0
    %3541 = vmatpush2.msra.mxu0 0.0
    %3542 = vmatprep.subr.mxu0 0.0
    %3543 = vmatpush2.msra.mxu0 0.0
    %3544 = vmatprep.subr.mxu0 0.0
    %3545 = vmatpush2.msra.mxu0 0.0
    %3546 = vmatprep.subr.mxu0 0.0
    %3547 = vmatpush2.msra.mxu0 0.0
    %3548 = vmatprep.subr.mxu0 0.0
    %3549 = vmatpush2.msra.mxu0 0.0
    %3550 = vmatprep.subr.mxu0 0.0
    %3551 = vmatpush2.msra.mxu0 0.0
    %3552 = vmatprep.subr.mxu0 0.0
    %3553 = vmatpush2.msra.mxu0 0.0
    %3554 = vmatprep.subr.mxu0 0.0
    %3555 = vmatpush2.msra.mxu0 0.0
    %3556 = vmatprep.subr.mxu0 0.0
    %3557 = vmatpush2.msra.mxu0 0.0
    %3558 = vmatprep.subr.mxu0 0.0
    %3559 = vmatpush2.msra.mxu0 0.0
    %3560 = vmatprep.subr.mxu0 0.0
    %3561 = vmatpush2.msra.mxu0 0.0
    %3562 = vmatprep.subr.mxu0 0.0
    %3563 = vmatpush2.msra.mxu0 0.0
    %3564 = vmatprep.mubr.f32.mxu0 0.0
    %3565 = vmatmul.mubr.f32.gmra.mxu0 %v3272
    %v3566 = vpop.f32.mrf.mxu0
    %v3567 = vadd.f32 0.0, %v3566
    %v3568 = vpop.f32.mrf.mxu0
    %v3569 = vadd.f32 0.0, %v3568
    %3570 = vdwg.mxu0
    %v3571 = vadd.f32 %v3425, %v3496
    %v3572 = vadd.f32 %v3426, %v3498
    %v3573 = vadd.f32 %v3427, %v3567
    %v3574 = vadd.f32 %v3428, %v3569
    %v3575 = vmul.f32 %v3421, 0.5
    %v3576 = vtanh.pop %v3575
    %v3577 = vmul.f32 %v3576, 0.5
    %v3578 = vadd.f32 %v3577, 0.5
    %v3579 = vmul.f32 %v3422, 0.5
    %v3580 = vtanh.pop %v3579
    %v3581 = vmul.f32 %v3580, 0.5
    %v3582 = vadd.f32 %v3581, 0.5
    %v3583 = vtanh.pop %v3423
    %v3584 = vmul.f32 %v3424, 0.5
    %v3585 = vtanh.pop %v3584
    %v3586 = vmul.f32 %v3585, 0.5
    %v3587 = vadd.f32 %v3586, 0.5
    %v3588 = vmul.f32 %v3582, %v3252
    %v3589 = vmul.f32 %v3578, %v3583
    %v3590 = vadd.f32 %v3588, %v3589
    %v3591 = vtanh.pop %v3590
    %v3592 = vmul.f32 %v3587, %v3591
    %v3593 = vmul.f32 %v3571, 0.5
    %v3594 = vtanh.pop %v3593
    %v3595 = vmul.f32 %v3594, 0.5
    %v3596 = vadd.f32 %v3595, 0.5
    %v3597 = vmul.f32 %v3572, 0.5
    %v3598 = vtanh.pop %v3597
    %v3599 = vmul.f32 %v3598, 0.5
    %v3600 = vadd.f32 %v3599, 0.5
    %v3601 = vtanh.pop %v3573
    %v3602 = vmul.f32 %v3574, 0.5
    %v3603 = vtanh.pop %v3602
    %v3604 = vmul.f32 %v3603, 0.5
    %v3605 = vadd.f32 %v3604, 0.5
    %v3606 = vmul.f32 %v3600, %v3270
    %v3607 = vmul.f32 %v3596, %v3601
    %v3608 = vadd.f32 %v3606, %v3607
    %v3609 = vtanh.pop %v3608
    %v3610 = vmul.f32 %v3605, %v3609
    %3611 = vst [vmem:[%s1233] sm:$0xff] %v3592
    %3612 = vst [vmem:[%s5 + $0x8] sm:$0xff] %v3610
    // Predicated region
    $region38: #{brnn_forward.2} parent=1 // pred_check
      _
    $region39: #{brnn_forward.2} parent=1 // pred_check_branch
      %3614 = sbr.rel (0) target = $region41
    $region40: #{brnn_forward.2} parent=1 // pred_region
      _
    $region41: #{brnn_forward.2} parent=1 // pred_fallthru
      _
    // Predicated region
    $region42: #{brnn_forward.2} parent=1 // pred_check
      _
    $region43: #{brnn_forward.2} parent=1 // pred_check_branch
      %3616 = sbr.rel (0) target = $region45
    $region44: #{brnn_forward.2} parent=1 // pred_region
      _
    $region45: #{brnn_forward.2} parent=1 // pred_fallthru
      _
    %3617 = vsyncpa [#allocation4], 1
    %3618 = vsyncpa [#allocation6], 1
    %3619 = vsyncpa [#allocation9], 1

</llo_original>
